<compile_context>
chip_gen: v6e
topology: v6e:2x2x1
jax: 0.10.0
libtpu: 0.0.40
codegen_flags: <defaults>
</compile_context>

<pallas_src>
import jax
import jax.numpy as jnp
from jax import lax
from jax.experimental import pallas as pl
from jax.experimental.pallas import tpu as pltpu

_LANE = 128
_CHUNK = 8   # tokens per grid step; multiple of 8 -> sublane-dense output tiles


def _make_gru_chunk_kernel(T, C, Hp):
    """Kernel processing C GRU steps per grid iteration.

    Refs (in order):
      x_ref  : VMEM (C, Hp)     wdtype  embedded tokens of this chunk (pipelined)
      h0_ref : VMEM (1, Hp)     f32     initial hidden state (invariant)
      wx_ref : VMEM (Hp, 3Hp)   wdtype  x -> [r|z|n] weights (VMEM-resident)
      wh_ref : VMEM (Hp, 3Hp)   wdtype  h -> [r|z|n] weights (VMEM-resident)
      bx_ref : VMEM (1, 3Hp)    f32     [b_ir+b_hr | b_iz+b_hz | b_in]
      bh_ref : VMEM (1, 3Hp)    f32     [0 | 0 | b_hn]
      out_ref: VMEM (C, Hp)     f32     per-token hidden states of this chunk
      h_ref  : VMEM (1, Hp)     f32     carried hidden state (scratch, persists)
      gi_ref : VMEM (C, 3Hp)    f32     chunk input-gate staging (scratch)
    """

    def kernel(x_ref, h0_ref, wx_ref, wh_ref, bx_ref, bh_ref,
               out_ref, h_ref, gi_ref):
        c = pl.program_id(0)

        @pl.when(c == 0)
        def _():
            h_ref[...] = h0_ref[...]

        # Batched input projection for the whole chunk: (C, Hp) @ (Hp, 3Hp).
        # This fills MXU sublanes (M = C) and is off the per-token serial path.
        gi_ref[...] = jnp.dot(x_ref[...], wx_ref[...],
                              preferred_element_type=jnp.float32) + bx_ref[...]

        def step(i, h):
            gi = gi_ref[pl.ds(i, 1), :]                              # (1, 3Hp) f32
            # Serial per-token matmul: only the hidden projection remains here.
            gh = jnp.dot(h.astype(wh_ref.dtype), wh_ref[...],
                         preferred_element_type=jnp.float32) + bh_ref[...]
            r = jax.nn.sigmoid(gi[:, 0 * Hp:1 * Hp] + gh[:, 0 * Hp:1 * Hp])
            z = jax.nn.sigmoid(gi[:, 1 * Hp:2 * Hp] + gh[:, 1 * Hp:2 * Hp])
            n = jnp.tanh(gi[:, 2 * Hp:3 * Hp] + r * gh[:, 2 * Hp:3 * Hp])
            h_new = (1.0 - z) * n + z * h                            # f32 gate math
            # Padded tail steps (global index >= T) are identity updates so the
            # carried hidden state (and the final hidden) ignores the padding.
            h_new = jnp.where(c * C + i < T, h_new, h)
            out_ref[pl.ds(i, 1), :] = h_new
            return h_new

        h_ref[...] = lax.fori_loop(0, C, step, h_ref[...], unroll=True)

    return kernel


def make_params(vocab_size, hidden_size, key):
    """Synthetic parameters matching nn.Embedding + nn.GRU (gate order r|z|n)."""
    k1, k2, k3, k4, k5 = jax.random.split(key, 5)
    bound = 1.0 / (hidden_size ** 0.5)
    emb = jax.random.normal(k1, (vocab_size, hidden_size), jnp.float32)
    w_ih = jax.random.uniform(k2, (3 * hidden_size, hidden_size), jnp.float32, -bound, bound)
    w_hh = jax.random.uniform(k3, (3 * hidden_size, hidden_size), jnp.float32, -bound, bound)
    b_ih = jax.random.uniform(k4, (3 * hidden_size,), jnp.float32, -bound, bound)
    b_hh = jax.random.uniform(k5, (3 * hidden_size,), jnp.float32, -bound, bound)
    return dict(emb=emb, w_ih=w_ih, w_hh=w_hh, b_ih=b_ih, b_hh=b_hh)


def prepare_params(params, weight_dtype=jnp.bfloat16):
    """One-time weight packing (hoisted out of the forward path).

    W_x, W_h : (Hp, 3Hp) transposed per-gate blocks on 128-lane boundaries.
    b_x      : b_ih with b_hh folded in for the r/z gates (order-insensitive).
    b_h      : only b_hn (must stay separate: n = tanh(i_n + r*(h@W_hn + b_hn))).
    """
    V, H = params["emb"].shape
    Hp = ((H + _LANE - 1) // _LANE) * _LANE
    w_ih, w_hh = params["w_ih"], params["w_hh"]
    b_ih, b_hh = params["b_ih"], params["b_hh"]

    def gate_t(w, g):                      # (H, H) transposed block for gate g
        return w[g * H:(g + 1) * H, :].T

    Wx = jnp.zeros((Hp, 3 * Hp), jnp.float32)
    Wh = jnp.zeros((Hp, 3 * Hp), jnp.float32)
    for g in range(3):
        Wx = Wx.at[0:H, g * Hp:g * Hp + H].set(gate_t(w_ih, g))
        Wh = Wh.at[0:H, g * Hp:g * Hp + H].set(gate_t(w_hh, g))

    bx = jnp.zeros((1, 3 * Hp), jnp.float32)
    bh = jnp.zeros((1, 3 * Hp), jnp.float32)
    bx = bx.at[0, 0 * Hp:0 * Hp + H].set(b_ih[0:H] + b_hh[0:H])           # r
    bx = bx.at[0, 1 * Hp:1 * Hp + H].set(b_ih[H:2 * H] + b_hh[H:2 * H])   # z
    bx = bx.at[0, 2 * Hp:2 * Hp + H].set(b_ih[2 * H:3 * H])               # i_n
    bh = bh.at[0, 2 * Hp:2 * Hp + H].set(b_hh[2 * H:3 * H])               # h_n

    emb = jnp.zeros((V, Hp), jnp.float32).at[:, :H].set(params["emb"])

    return dict(emb=emb.astype(weight_dtype),
                w_x=Wx.astype(weight_dtype), w_h=Wh.astype(weight_dtype),
                b_x=bx, b_h=bh,
                H=H, Hp=Hp, V=V, weight_dtype=weight_dtype)


def encoder_rnn_forward_seq(tokens, hidden, prepared, chunk=_CHUNK):
    """Run the encoder over a whole token sequence in ONE pallas_call.

    tokens: (T,) int32; hidden: (1, 1, H) f32 (initHidden()).
    Returns (outputs (T, 1, H), final_hidden (1, 1, H)) — nn.GRU semantics.
    """
    H, Hp = prepared["H"], prepared["Hp"]
    wdtype = prepared["weight_dtype"]
    tok = jnp.asarray(tokens, jnp.int32).reshape(-1)
    T = int(tok.shape[0])
    C = int(chunk)
    n_chunks = (T + C - 1) // C
    Tp = n_chunks * C

    # Embedding lookup hoisted out of the recurrence: one XLA gather for all
    # tokens, padded up to a whole number of chunks.
    x = jnp.take(prepared["emb"], tok, axis=0)                     # (T, Hp)
    x = jnp.zeros((Tp, Hp), wdtype).at[:T].set(x)

    h0 = jnp.zeros((1, Hp), jnp.float32).at[0, :H].set(
        hidden.reshape(-1).astype(jnp.float32))

    kernel = _make_gru_chunk_kernel(T, C, Hp)

    def build(single_buffer):
        def inv(shape):
            # Grid-invariant input: constant index_map; single-buffer it so the
            # resident weights don't get a useless second VMEM copy.
            index_map = lambda c, _s=shape: (0,) * len(_s)
            if single_buffer:
                return pl.BlockSpec(shape, index_map,
                                    pipeline_mode=pl.Buffered(1))
            return pl.BlockSpec(shape, index_map)

        grid_spec = pltpu.PrefetchScalarGridSpec(
            num_scalar_prefetch=0,
            grid=(n_chunks,),
            in_specs=[
                pl.BlockSpec((C, Hp), lambda c: (c, 0)),    # x chunk (pipelined)
                inv((1, Hp)),                               # h0
                inv((Hp, 3 * Hp)),                          # W_x (VMEM-resident)
                inv((Hp, 3 * Hp)),                          # W_h (VMEM-resident)
                inv((1, 3 * Hp)),                           # b_x
                inv((1, 3 * Hp)),                           # b_h
            ],
            out_specs=pl.BlockSpec((C, Hp), lambda c: (c, 0)),
            scratch_shapes=[
                pltpu.VMEM((1, Hp), jnp.float32),           # carried hidden state
                pltpu.VMEM((C, 3 * Hp), jnp.float32),       # chunk input gates
            ],
        )
        return pl.pallas_call(
            kernel,
            out_shape=jax.ShapeDtypeStruct((Tp, Hp), jnp.float32),
            grid_spec=grid_spec,
            compiler_params=pltpu.CompilerParams(
                dimension_semantics=("arbitrary",)),        # serial recurrence
        )

    args = (x, h0, prepared["w_x"], prepared["w_h"],
            prepared["b_x"], prepared["b_h"])
    try:
        out_padded = build(single_buffer=True)(*args)
    except Exception:
        # pipeline_mode=pl.Buffered(1) not supported by this JAX build:
        # fall back to default (double-buffered) specs; kernel is identical.
        out_padded = build(single_buffer=False)(*args)

    outputs = out_padded[:T, :H].reshape(T, 1, H)                  # (T, 1, H)
    final_hidden = outputs[T - 1].reshape(1, 1, H)
    return outputs, final_hidden


def encoder_rnn_forward(token, hidden, prepared):
    """Mirrors EncoderRNN.forward(input, hidden) -> (output (1,1,H), hidden (1,1,H))."""
    out, hid = encoder_rnn_forward_seq(
        jnp.asarray(token, jnp.int32).reshape(1), hidden, prepared)
    H = prepared["H"]
    return out.reshape(1, 1, H), hid


def _reference_forward_seq(tokens, hidden, params, weight_dtype=jnp.bfloat16):
    """Pure-JAX PyTorch-GRU reference (scan over tokens), simulating the
    weight/operand dtype cast used by the kernel; gate math in f32."""
    H = params["emb"].shape[1]

    def cast(v):
        return v.astype(weight_dtype).astype(jnp.float32)

    emb = cast(params["emb"])
    w_ih = cast(params["w_ih"])
    w_hh = cast(params["w_hh"])
    b_ih, b_hh = params["b_ih"], params["b_hh"]

    def step(h, t):
        x = emb[t].reshape(1, H)
        h_c = cast(h)
        gi = x @ w_ih.T + b_ih
        gh = h_c @ w_hh.T + b_hh
        i_r, i_z, i_n = jnp.split(gi, 3, axis=1)
        h_r, h_z, h_n = jnp.split(gh, 3, axis=1)
        r = jax.nn.sigmoid(i_r + h_r)
        z = jax.nn.sigmoid(i_z + h_z)
        n = jnp.tanh(i_n + r * h_n)
        hn = (1.0 - z) * n + z * h
        return hn, hn

    h0 = hidden.reshape(1, H).astype(jnp.float32)
    h_last, outs = jax.lax.scan(step, h0, jnp.asarray(tokens, jnp.int32))
    return outs.reshape(-1, 1, H), h_last.reshape(1, 1, H)


if __name__ == "__main__":
    VOCAB = 20
    HIDDEN = 32
    SEQ = 10     # not a multiple of the chunk size: exercises chunk carry + padded tail

    key = jax.random.PRNGKey(0)
    pkey, tkey = jax.random.split(key)
    params = make_params(VOCAB, HIDDEN, pkey)
    prepared = prepare_params(params, weight_dtype=jnp.bfloat16)

    tokens = jax.random.randint(tkey, (SEQ,), 0, VOCAB, dtype=jnp.int32)
    hidden0 = jnp.zeros((1, 1, HIDDEN), jnp.float32)   # initHidden()

    # Fused-sequence encoder (one kernel launch for the whole sequence).
    outs, hid = encoder_rnn_forward_seq(tokens, hidden0, prepared)
    outs = jax.block_until_ready(outs)
    hid = jax.block_until_ready(hid)

    ref_outs, ref_hid = _reference_forward_seq(tokens, hidden0, params, jnp.bfloat16)
    assert outs.shape == (SEQ, 1, HIDDEN) and hid.shape == (1, 1, HIDDEN)
    assert jnp.allclose(outs, ref_outs, atol=2e-3, rtol=2e-3), \
        float(jnp.max(jnp.abs(outs - ref_outs)))
    assert jnp.allclose(hid, ref_hid, atol=2e-3, rtol=2e-3)

    # Single-step call matching the original EncoderRNN.forward signature.
    out1, hid1 = encoder_rnn_forward(tokens[0], hidden0, prepared)
    out1 = jax.block_until_ready(out1)
    assert out1.shape == (1, 1, HIDDEN) and hid1.shape == (1, 1, HIDDEN)
    assert jnp.allclose(out1, ref_outs[0].reshape(1, 1, HIDDEN), atol=2e-3, rtol=2e-3)

    print("KERNEL_OK")
</pallas_src>

<mosaic_0001>
module attributes {stable_mosaic.version = 11 : i64} {
  func.func @kernel(%arg0: i32, %arg1: memref<8x128xbf16, #tpu.memory_space<vmem>>, %arg2: memref<1x128xf32, #tpu.memory_space<vmem>>, %arg3: memref<128x384xbf16, #tpu.memory_space<vmem>>, %arg4: memref<128x384xbf16, #tpu.memory_space<vmem>>, %arg5: memref<1x384xf32, #tpu.memory_space<vmem>>, %arg6: memref<1x384xf32, #tpu.memory_space<vmem>>, %arg7: memref<8x128xf32, #tpu.memory_space<vmem>>, %arg8: memref<1x128xf32, #tpu.memory_space<vmem>>, %arg9: memref<8x384xf32, #tpu.memory_space<vmem>>) attributes {dimension_semantics = [#tpu.dimension_semantics<arbitrary>], iteration_bounds = array<i64: 2>, scalar_prefetch = 0 : i64, scratch_operands = 2 : i64, tpu.core_type = #tpu.core_type<tc>, window_params = [{transform_indices = @transform_0, window_bounds = array<i64: 8, 128>}, {pipeline_mode = #tpu.pipeline_mode<synchronous>, transform_indices = @transform_1, window_bounds = array<i64: 1, 128>}, {pipeline_mode = #tpu.pipeline_mode<synchronous>, transform_indices = @transform_2, window_bounds = array<i64: 128, 384>}, {pipeline_mode = #tpu.pipeline_mode<synchronous>, transform_indices = @transform_3, window_bounds = array<i64: 128, 384>}, {pipeline_mode = #tpu.pipeline_mode<synchronous>, transform_indices = @transform_4, window_bounds = array<i64: 1, 384>}, {pipeline_mode = #tpu.pipeline_mode<synchronous>, transform_indices = @transform_5, window_bounds = array<i64: 1, 384>}, {transform_indices = @transform_6, window_bounds = array<i64: 8, 128>}]} {
    %c0_i32 = arith.constant 0 : i32
    %0 = arith.cmpi eq, %arg0, %c0_i32 : i32
    %1 = arith.extui %0 : i1 to i32
    %c0_i32_0 = arith.constant 0 : i32
    %2 = arith.cmpi ne, %1, %c0_i32_0 : i32
    scf.if %2 {
      %c0_108 = arith.constant 0 : index
      %c0_109 = arith.constant 0 : index
      %324 = vector.load %arg2[%c0_108, %c0_109] : memref<1x128xf32, #tpu.memory_space<vmem>>, vector<1x128xf32>
      %c0_110 = arith.constant 0 : index
      %c0_111 = arith.constant 0 : index
      %325 = vector.load %arg8[%c0_110, %c0_111] : memref<1x128xf32, #tpu.memory_space<vmem>>, vector<1x128xf32>
      tpu.vector_store %arg8[%c0_110, %c0_111], %324 {strides = array<i32>} : memref<1x128xf32, #tpu.memory_space<vmem>>, vector<1x128xf32>,
    } else {
    }
    %c0 = arith.constant 0 : index
    %c0_1 = arith.constant 0 : index
    %3 = vector.load %arg1[%c0, %c0_1] : memref<8x128xbf16, #tpu.memory_space<vmem>>, vector<8x128xbf16>
    %c0_2 = arith.constant 0 : index
    %c0_3 = arith.constant 0 : index
    %4 = vector.load %arg3[%c0_2, %c0_3] : memref<128x384xbf16, #tpu.memory_space<vmem>>, vector<128x384xbf16>
    %cst = arith.constant dense<0.000000e+00> : vector<8x384xf32>
    %5 = tpu.matmul %3, %4, %cst {dimension_numbers = #tpu.dot_dimension_numbers<[1], [0], [0], [1], [0, 0, 1, 1], [], []>} : vector<8x128xbf16>, vector<128x384xbf16>, vector<8x384xf32> -> vector<8x384xf32>
    %c0_4 = arith.constant 0 : index
    %c0_5 = arith.constant 0 : index
    %6 = vector.load %arg5[%c0_4, %c0_5] : memref<1x384xf32, #tpu.memory_space<vmem>>, vector<1x384xf32>
    %7 = vector.broadcast %6 : vector<1x384xf32> to vector<8x384xf32>
    %8 = arith.addf %5, %7 : vector<8x384xf32>
    %c0_6 = arith.constant 0 : index
    %c0_7 = arith.constant 0 : index
    %9 = vector.load %arg9[%c0_6, %c0_7] : memref<8x384xf32, #tpu.memory_space<vmem>>, vector<8x384xf32>
    tpu.vector_store %arg9[%c0_6, %c0_7], %8 {strides = array<i32>} : memref<8x384xf32, #tpu.memory_space<vmem>>, vector<8x384xf32>,
    %c0_8 = arith.constant 0 : index
    %c0_9 = arith.constant 0 : index
    %10 = vector.load %arg8[%c0_8, %c0_9] : memref<1x128xf32, #tpu.memory_space<vmem>>, vector<1x128xf32>
    %c0_i32_10 = arith.constant 0 : i32
    %11 = arith.index_cast %c0_i32_10 : i32 to index
    %c0_11 = arith.constant 0 : index
    %12 = vector.load %arg9[%11, %c0_11] : memref<8x384xf32, #tpu.memory_space<vmem>>, vector<1x384xf32>
    %13 = arith.truncf %10 : vector<1x128xf32> to vector<1x128xbf16>
    %c0_12 = arith.constant 0 : index
    %c0_13 = arith.constant 0 : index
    %14 = vector.load %arg4[%c0_12, %c0_13] : memref<128x384xbf16, #tpu.memory_space<vmem>>, vector<128x384xbf16>
    %cst_14 = arith.constant dense<0.000000e+00> : vector<1x384xf32>
    %15 = tpu.matmul %13, %14, %cst_14 {dimension_numbers = #tpu.dot_dimension_numbers<[1], [0], [0], [1], [0, 0, 1, 1], [], []>} : vector<1x128xbf16>, vector<128x384xbf16>, vector<1x384xf32> -> vector<1x384xf32>
    %c0_15 = arith.constant 0 : index
    %c0_16 = arith.constant 0 : index
    %16 = vector.load %arg6[%c0_15, %c0_16] : memref<1x384xf32, #tpu.memory_space<vmem>>, vector<1x384xf32>
    %17 = arith.addf %15, %16 : vector<1x384xf32>
    %18 = vector.extract_strided_slice %12 {offsets = [0, 0], sizes = [1, 128], strides = [1, 1]} : vector<1x384xf32> to vector<1x128xf32>
    %19 = vector.extract_strided_slice %17 {offsets = [0, 0], sizes = [1, 128], strides = [1, 1]} : vector<1x384xf32> to vector<1x128xf32>
    %20 = arith.addf %18, %19 : vector<1x128xf32>
    %21 = arith.negf %20 : vector<1x128xf32>
    %22 = math.exp %21 : vector<1x128xf32>
    %cst_17 = arith.constant 1.000000e+00 : f32
    %23 = vector.broadcast %cst_17 : f32 to vector<1x128xf32>
    %24 = arith.addf %23, %22 : vector<1x128xf32>
    %25 = arith.divf %23, %24 : vector<1x128xf32>
    %26 = vector.extract_strided_slice %12 {offsets = [0, 128], sizes = [1, 128], strides = [1, 1]} : vector<1x384xf32> to vector<1x128xf32>
    %27 = vector.extract_strided_slice %17 {offsets = [0, 128], sizes = [1, 128], strides = [1, 1]} : vector<1x384xf32> to vector<1x128xf32>
    %28 = arith.addf %26, %27 : vector<1x128xf32>
    %29 = arith.negf %28 : vector<1x128xf32>
    %30 = math.exp %29 : vector<1x128xf32>
    %cst_18 = arith.constant 1.000000e+00 : f32
    %31 = vector.broadcast %cst_18 : f32 to vector<1x128xf32>
    %32 = arith.addf %31, %30 : vector<1x128xf32>
    %33 = arith.divf %31, %32 : vector<1x128xf32>
    %34 = vector.extract_strided_slice %12 {offsets = [0, 256], sizes = [1, 128], strides = [1, 1]} : vector<1x384xf32> to vector<1x128xf32>
    %35 = vector.extract_strided_slice %17 {offsets = [0, 256], sizes = [1, 128], strides = [1, 1]} : vector<1x384xf32> to vector<1x128xf32>
    %36 = arith.mulf %25, %35 : vector<1x128xf32>
    %37 = arith.addf %34, %36 : vector<1x128xf32>
    %38 = math.tanh %37 : vector<1x128xf32>
    %cst_19 = arith.constant 1.000000e+00 : f32
    %39 = vector.broadcast %cst_19 : f32 to vector<1x128xf32>
    %40 = arith.subf %39, %33 : vector<1x128xf32>
    %41 = arith.mulf %40, %38 : vector<1x128xf32>
    %42 = arith.mulf %33, %10 : vector<1x128xf32>
    %43 = arith.addf %41, %42 : vector<1x128xf32>
    %c8_i32 = arith.constant 8 : i32
    %44 = arith.muli %arg0, %c8_i32 : i32
    %45 = arith.addi %44, %c0_i32_10 : i32
    %c10_i32 = arith.constant 10 : i32
    %46 = arith.cmpi slt, %45, %c10_i32 : i32
    %47 = arith.select %46, %43, %10 : vector<1x128xf32>
    %48 = arith.index_cast %c0_i32_10 : i32 to index
    %c0_20 = arith.constant 0 : index
    %49 = vector.load %arg7[%48, %c0_20] : memref<8x128xf32, #tpu.memory_space<vmem>>, vector<1x128xf32>
    tpu.vector_store %arg7[%48, %c0_20], %47 {strides = array<i32>} : memref<8x128xf32, #tpu.memory_space<vmem>>, vector<1x128xf32>,
    %c1_i32 = arith.constant 1 : i32
    %50 = arith.index_cast %c1_i32 : i32 to index
    %c0_21 = arith.constant 0 : index
    %51 = vector.load %arg9[%50, %c0_21] : memref<8x384xf32, #tpu.memory_space<vmem>>, vector<1x384xf32>
    %52 = arith.truncf %47 : vector<1x128xf32> to vector<1x128xbf16>
    %c0_22 = arith.constant 0 : index
    %c0_23 = arith.constant 0 : index
    %53 = vector.load %arg4[%c0_22, %c0_23] : memref<128x384xbf16, #tpu.memory_space<vmem>>, vector<128x384xbf16>
    %cst_24 = arith.constant dense<0.000000e+00> : vector<1x384xf32>
    %54 = tpu.matmul %52, %53, %cst_24 {dimension_numbers = #tpu.dot_dimension_numbers<[1], [0], [0], [1], [0, 0, 1, 1], [], []>} : vector<1x128xbf16>, vector<128x384xbf16>, vector<1x384xf32> -> vector<1x384xf32>
    %c0_25 = arith.constant 0 : index
    %c0_26 = arith.constant 0 : index
    %55 = vector.load %arg6[%c0_25, %c0_26] : memref<1x384xf32, #tpu.memory_space<vmem>>, vector<1x384xf32>
    %56 = arith.addf %54, %55 : vector<1x384xf32>
    %57 = vector.extract_strided_slice %51 {offsets = [0, 0], sizes = [1, 128], strides = [1, 1]} : vector<1x384xf32> to vector<1x128xf32>
    %58 = vector.extract_strided_slice %56 {offsets = [0, 0], sizes = [1, 128], strides = [1, 1]} : vector<1x384xf32> to vector<1x128xf32>
    %59 = arith.addf %57, %58 : vector<1x128xf32>
    %60 = arith.negf %59 : vector<1x128xf32>
    %61 = math.exp %60 : vector<1x128xf32>
    %cst_27 = arith.constant 1.000000e+00 : f32
    %62 = vector.broadcast %cst_27 : f32 to vector<1x128xf32>
    %63 = arith.addf %62, %61 : vector<1x128xf32>
    %64 = arith.divf %62, %63 : vector<1x128xf32>
    %65 = vector.extract_strided_slice %51 {offsets = [0, 128], sizes = [1, 128], strides = [1, 1]} : vector<1x384xf32> to vector<1x128xf32>
    %66 = vector.extract_strided_slice %56 {offsets = [0, 128], sizes = [1, 128], strides = [1, 1]} : vector<1x384xf32> to vector<1x128xf32>
    %67 = arith.addf %65, %66 : vector<1x128xf32>
    %68 = arith.negf %67 : vector<1x128xf32>
    %69 = math.exp %68 : vector<1x128xf32>
    %cst_28 = arith.constant 1.000000e+00 : f32
    %70 = vector.broadcast %cst_28 : f32 to vector<1x128xf32>
    %71 = arith.addf %70, %69 : vector<1x128xf32>
    %72 = arith.divf %70, %71 : vector<1x128xf32>
    %73 = vector.extract_strided_slice %51 {offsets = [0, 256], sizes = [1, 128], strides = [1, 1]} : vector<1x384xf32> to vector<1x128xf32>
    %74 = vector.extract_strided_slice %56 {offsets = [0, 256], sizes = [1, 128], strides = [1, 1]} : vector<1x384xf32> to vector<1x128xf32>
    %75 = arith.mulf %64, %74 : vector<1x128xf32>
    %76 = arith.addf %73, %75 : vector<1x128xf32>
    %77 = math.tanh %76 : vector<1x128xf32>
    %cst_29 = arith.constant 1.000000e+00 : f32
    %78 = vector.broadcast %cst_29 : f32 to vector<1x128xf32>
    %79 = arith.subf %78, %72 : vector<1x128xf32>
    %80 = arith.mulf %79, %77 : vector<1x128xf32>
    %81 = arith.mulf %72, %47 : vector<1x128xf32>
    %82 = arith.addf %80, %81 : vector<1x128xf32>
    %c8_i32_30 = arith.constant 8 : i32
    %83 = arith.muli %arg0, %c8_i32_30 : i32
    %84 = arith.addi %83, %c1_i32 : i32
    %c10_i32_31 = arith.constant 10 : i32
    %85 = arith.cmpi slt, %84, %c10_i32_31 : i32
    %86 = arith.select %85, %82, %47 : vector<1x128xf32>
    %87 = arith.index_cast %c1_i32 : i32 to index
    %c0_32 = arith.constant 0 : index
    %88 = vector.load %arg7[%87, %c0_32] : memref<8x128xf32, #tpu.memory_space<vmem>>, vector<1x128xf32>
    tpu.vector_store %arg7[%87, %c0_32], %86 {strides = array<i32>} : memref<8x128xf32, #tpu.memory_space<vmem>>, vector<1x128xf32>,
    %c2_i32 = arith.constant 2 : i32
    %89 = arith.index_cast %c2_i32 : i32 to index
    %c0_33 = arith.constant 0 : index
    %90 = vector.load %arg9[%89, %c0_33] : memref<8x384xf32, #tpu.memory_space<vmem>>, vector<1x384xf32>
    %91 = arith.truncf %86 : vector<1x128xf32> to vector<1x128xbf16>
    %c0_34 = arith.constant 0 : index
    %c0_35 = arith.constant 0 : index
    %92 = vector.load %arg4[%c0_34, %c0_35] : memref<128x384xbf16, #tpu.memory_space<vmem>>, vector<128x384xbf16>
    %cst_36 = arith.constant dense<0.000000e+00> : vector<1x384xf32>
    %93 = tpu.matmul %91, %92, %cst_36 {dimension_numbers = #tpu.dot_dimension_numbers<[1], [0], [0], [1], [0, 0, 1, 1], [], []>} : vector<1x128xbf16>, vector<128x384xbf16>, vector<1x384xf32> -> vector<1x384xf32>
    %c0_37 = arith.constant 0 : index
    %c0_38 = arith.constant 0 : index
    %94 = vector.load %arg6[%c0_37, %c0_38] : memref<1x384xf32, #tpu.memory_space<vmem>>, vector<1x384xf32>
    %95 = arith.addf %93, %94 : vector<1x384xf32>
    %96 = vector.extract_strided_slice %90 {offsets = [0, 0], sizes = [1, 128], strides = [1, 1]} : vector<1x384xf32> to vector<1x128xf32>
    %97 = vector.extract_strided_slice %95 {offsets = [0, 0], sizes = [1, 128], strides = [1, 1]} : vector<1x384xf32> to vector<1x128xf32>
    %98 = arith.addf %96, %97 : vector<1x128xf32>
    %99 = arith.negf %98 : vector<1x128xf32>
    %100 = math.exp %99 : vector<1x128xf32>
    %cst_39 = arith.constant 1.000000e+00 : f32
    %101 = vector.broadcast %cst_39 : f32 to vector<1x128xf32>
    %102 = arith.addf %101, %100 : vector<1x128xf32>
    %103 = arith.divf %101, %102 : vector<1x128xf32>
    %104 = vector.extract_strided_slice %90 {offsets = [0, 128], sizes = [1, 128], strides = [1, 1]} : vector<1x384xf32> to vector<1x128xf32>
    %105 = vector.extract_strided_slice %95 {offsets = [0, 128], sizes = [1, 128], strides = [1, 1]} : vector<1x384xf32> to vector<1x128xf32>
    %106 = arith.addf %104, %105 : vector<1x128xf32>
    %107 = arith.negf %106 : vector<1x128xf32>
    %108 = math.exp %107 : vector<1x128xf32>
    %cst_40 = arith.constant 1.000000e+00 : f32
    %109 = vector.broadcast %cst_40 : f32 to vector<1x128xf32>
    %110 = arith.addf %109, %108 : vector<1x128xf32>
    %111 = arith.divf %109, %110 : vector<1x128xf32>
    %112 = vector.extract_strided_slice %90 {offsets = [0, 256], sizes = [1, 128], strides = [1, 1]} : vector<1x384xf32> to vector<1x128xf32>
    %113 = vector.extract_strided_slice %95 {offsets = [0, 256], sizes = [1, 128], strides = [1, 1]} : vector<1x384xf32> to vector<1x128xf32>
    %114 = arith.mulf %103, %113 : vector<1x128xf32>
    %115 = arith.addf %112, %114 : vector<1x128xf32>
    %116 = math.tanh %115 : vector<1x128xf32>
    %cst_41 = arith.constant 1.000000e+00 : f32
    %117 = vector.broadcast %cst_41 : f32 to vector<1x128xf32>
    %118 = arith.subf %117, %111 : vector<1x128xf32>
    %119 = arith.mulf %118, %116 : vector<1x128xf32>
    %120 = arith.mulf %111, %86 : vector<1x128xf32>
    %121 = arith.addf %119, %120 : vector<1x128xf32>
    %c8_i32_42 = arith.constant 8 : i32
    %122 = arith.muli %arg0, %c8_i32_42 : i32
    %123 = arith.addi %122, %c2_i32 : i32
    %c10_i32_43 = arith.constant 10 : i32
    %124 = arith.cmpi slt, %123, %c10_i32_43 : i32
    %125 = arith.select %124, %121, %86 : vector<1x128xf32>
    %126 = arith.index_cast %c2_i32 : i32 to index
    %c0_44 = arith.constant 0 : index
    %127 = vector.load %arg7[%126, %c0_44] : memref<8x128xf32, #tpu.memory_space<vmem>>, vector<1x128xf32>
    tpu.vector_store %arg7[%126, %c0_44], %125 {strides = array<i32>} : memref<8x128xf32, #tpu.memory_space<vmem>>, vector<1x128xf32>,
    %c3_i32 = arith.constant 3 : i32
    %128 = arith.index_cast %c3_i32 : i32 to index
    %c0_45 = arith.constant 0 : index
    %129 = vector.load %arg9[%128, %c0_45] : memref<8x384xf32, #tpu.memory_space<vmem>>, vector<1x384xf32>
    %130 = arith.truncf %125 : vector<1x128xf32> to vector<1x128xbf16>
    %c0_46 = arith.constant 0 : index
    %c0_47 = arith.constant 0 : index
    %131 = vector.load %arg4[%c0_46, %c0_47] : memref<128x384xbf16, #tpu.memory_space<vmem>>, vector<128x384xbf16>
    %cst_48 = arith.constant dense<0.000000e+00> : vector<1x384xf32>
    %132 = tpu.matmul %130, %131, %cst_48 {dimension_numbers = #tpu.dot_dimension_numbers<[1], [0], [0], [1], [0, 0, 1, 1], [], []>} : vector<1x128xbf16>, vector<128x384xbf16>, vector<1x384xf32> -> vector<1x384xf32>
    %c0_49 = arith.constant 0 : index
    %c0_50 = arith.constant 0 : index
    %133 = vector.load %arg6[%c0_49, %c0_50] : memref<1x384xf32, #tpu.memory_space<vmem>>, vector<1x384xf32>
    %134 = arith.addf %132, %133 : vector<1x384xf32>
    %135 = vector.extract_strided_slice %129 {offsets = [0, 0], sizes = [1, 128], strides = [1, 1]} : vector<1x384xf32> to vector<1x128xf32>
    %136 = vector.extract_strided_slice %134 {offsets = [0, 0], sizes = [1, 128], strides = [1, 1]} : vector<1x384xf32> to vector<1x128xf32>
    %137 = arith.addf %135, %136 : vector<1x128xf32>
    %138 = arith.negf %137 : vector<1x128xf32>
    %139 = math.exp %138 : vector<1x128xf32>
    %cst_51 = arith.constant 1.000000e+00 : f32
    %140 = vector.broadcast %cst_51 : f32 to vector<1x128xf32>
    %141 = arith.addf %140, %139 : vector<1x128xf32>
    %142 = arith.divf %140, %141 : vector<1x128xf32>
    %143 = vector.extract_strided_slice %129 {offsets = [0, 128], sizes = [1, 128], strides = [1, 1]} : vector<1x384xf32> to vector<1x128xf32>
    %144 = vector.extract_strided_slice %134 {offsets = [0, 128], sizes = [1, 128], strides = [1, 1]} : vector<1x384xf32> to vector<1x128xf32>
    %145 = arith.addf %143, %144 : vector<1x128xf32>
    %146 = arith.negf %145 : vector<1x128xf32>
    %147 = math.exp %146 : vector<1x128xf32>
    %cst_52 = arith.constant 1.000000e+00 : f32
    %148 = vector.broadcast %cst_52 : f32 to vector<1x128xf32>
    %149 = arith.addf %148, %147 : vector<1x128xf32>
    %150 = arith.divf %148, %149 : vector<1x128xf32>
    %151 = vector.extract_strided_slice %129 {offsets = [0, 256], sizes = [1, 128], strides = [1, 1]} : vector<1x384xf32> to vector<1x128xf32>
    %152 = vector.extract_strided_slice %134 {offsets = [0, 256], sizes = [1, 128], strides = [1, 1]} : vector<1x384xf32> to vector<1x128xf32>
    %153 = arith.mulf %142, %152 : vector<1x128xf32>
    %154 = arith.addf %151, %153 : vector<1x128xf32>
    %155 = math.tanh %154 : vector<1x128xf32>
    %cst_53 = arith.constant 1.000000e+00 : f32
    %156 = vector.broadcast %cst_53 : f32 to vector<1x128xf32>
    %157 = arith.subf %156, %150 : vector<1x128xf32>
    %158 = arith.mulf %157, %155 : vector<1x128xf32>
    %159 = arith.mulf %150, %125 : vector<1x128xf32>
    %160 = arith.addf %158, %159 : vector<1x128xf32>
    %c8_i32_54 = arith.constant 8 : i32
    %161 = arith.muli %arg0, %c8_i32_54 : i32
    %162 = arith.addi %161, %c3_i32 : i32
    %c10_i32_55 = arith.constant 10 : i32
    %163 = arith.cmpi slt, %162, %c10_i32_55 : i32
    %164 = arith.select %163, %160, %125 : vector<1x128xf32>
    %165 = arith.index_cast %c3_i32 : i32 to index
    %c0_56 = arith.constant 0 : index
    %166 = vector.load %arg7[%165, %c0_56] : memref<8x128xf32, #tpu.memory_space<vmem>>, vector<1x128xf32>
    tpu.vector_store %arg7[%165, %c0_56], %164 {strides = array<i32>} : memref<8x128xf32, #tpu.memory_space<vmem>>, vector<1x128xf32>,
    %c4_i32 = arith.constant 4 : i32
    %167 = arith.index_cast %c4_i32 : i32 to index
    %c0_57 = arith.constant 0 : index
    %168 = vector.load %arg9[%167, %c0_57] : memref<8x384xf32, #tpu.memory_space<vmem>>, vector<1x384xf32>
    %169 = arith.truncf %164 : vector<1x128xf32> to vector<1x128xbf16>
    %c0_58 = arith.constant 0 : index
    %c0_59 = arith.constant 0 : index
    %170 = vector.load %arg4[%c0_58, %c0_59] : memref<128x384xbf16, #tpu.memory_space<vmem>>, vector<128x384xbf16>
    %cst_60 = arith.constant dense<0.000000e+00> : vector<1x384xf32>
    %171 = tpu.matmul %169, %170, %cst_60 {dimension_numbers = #tpu.dot_dimension_numbers<[1], [0], [0], [1], [0, 0, 1, 1], [], []>} : vector<1x128xbf16>, vector<128x384xbf16>, vector<1x384xf32> -> vector<1x384xf32>
    %c0_61 = arith.constant 0 : index
    %c0_62 = arith.constant 0 : index
    %172 = vector.load %arg6[%c0_61, %c0_62] : memref<1x384xf32, #tpu.memory_space<vmem>>, vector<1x384xf32>
    %173 = arith.addf %171, %172 : vector<1x384xf32>
    %174 = vector.extract_strided_slice %168 {offsets = [0, 0], sizes = [1, 128], strides = [1, 1]} : vector<1x384xf32> to vector<1x128xf32>
    %175 = vector.extract_strided_slice %173 {offsets = [0, 0], sizes = [1, 128], strides = [1, 1]} : vector<1x384xf32> to vector<1x128xf32>
    %176 = arith.addf %174, %175 : vector<1x128xf32>
    %177 = arith.negf %176 : vector<1x128xf32>
    %178 = math.exp %177 : vector<1x128xf32>
    %cst_63 = arith.constant 1.000000e+00 : f32
    %179 = vector.broadcast %cst_63 : f32 to vector<1x128xf32>
    %180 = arith.addf %179, %178 : vector<1x128xf32>
    %181 = arith.divf %179, %180 : vector<1x128xf32>
    %182 = vector.extract_strided_slice %168 {offsets = [0, 128], sizes = [1, 128], strides = [1, 1]} : vector<1x384xf32> to vector<1x128xf32>
    %183 = vector.extract_strided_slice %173 {offsets = [0, 128], sizes = [1, 128], strides = [1, 1]} : vector<1x384xf32> to vector<1x128xf32>
    %184 = arith.addf %182, %183 : vector<1x128xf32>
    %185 = arith.negf %184 : vector<1x128xf32>
    %186 = math.exp %185 : vector<1x128xf32>
    %cst_64 = arith.constant 1.000000e+00 : f32
    %187 = vector.broadcast %cst_64 : f32 to vector<1x128xf32>
    %188 = arith.addf %187, %186 : vector<1x128xf32>
    %189 = arith.divf %187, %188 : vector<1x128xf32>
    %190 = vector.extract_strided_slice %168 {offsets = [0, 256], sizes = [1, 128], strides = [1, 1]} : vector<1x384xf32> to vector<1x128xf32>
    %191 = vector.extract_strided_slice %173 {offsets = [0, 256], sizes = [1, 128], strides = [1, 1]} : vector<1x384xf32> to vector<1x128xf32>
    %192 = arith.mulf %181, %191 : vector<1x128xf32>
    %193 = arith.addf %190, %192 : vector<1x128xf32>
    %194 = math.tanh %193 : vector<1x128xf32>
    %cst_65 = arith.constant 1.000000e+00 : f32
    %195 = vector.broadcast %cst_65 : f32 to vector<1x128xf32>
    %196 = arith.subf %195, %189 : vector<1x128xf32>
    %197 = arith.mulf %196, %194 : vector<1x128xf32>
    %198 = arith.mulf %189, %164 : vector<1x128xf32>
    %199 = arith.addf %197, %198 : vector<1x128xf32>
    %c8_i32_66 = arith.constant 8 : i32
    %200 = arith.muli %arg0, %c8_i32_66 : i32
    %201 = arith.addi %200, %c4_i32 : i32
    %c10_i32_67 = arith.constant 10 : i32
    %202 = arith.cmpi slt, %201, %c10_i32_67 : i32
    %203 = arith.select %202, %199, %164 : vector<1x128xf32>
    %204 = arith.index_cast %c4_i32 : i32 to index
    %c0_68 = arith.constant 0 : index
    %205 = vector.load %arg7[%204, %c0_68] : memref<8x128xf32, #tpu.memory_space<vmem>>, vector<1x128xf32>
    tpu.vector_store %arg7[%204, %c0_68], %203 {strides = array<i32>} : memref<8x128xf32, #tpu.memory_space<vmem>>, vector<1x128xf32>,
    %c5_i32 = arith.constant 5 : i32
    %206 = arith.index_cast %c5_i32 : i32 to index
    %c0_69 = arith.constant 0 : index
    %207 = vector.load %arg9[%206, %c0_69] : memref<8x384xf32, #tpu.memory_space<vmem>>, vector<1x384xf32>
    %208 = arith.truncf %203 : vector<1x128xf32> to vector<1x128xbf16>
    %c0_70 = arith.constant 0 : index
    %c0_71 = arith.constant 0 : index
    %209 = vector.load %arg4[%c0_70, %c0_71] : memref<128x384xbf16, #tpu.memory_space<vmem>>, vector<128x384xbf16>
    %cst_72 = arith.constant dense<0.000000e+00> : vector<1x384xf32>
    %210 = tpu.matmul %208, %209, %cst_72 {dimension_numbers = #tpu.dot_dimension_numbers<[1], [0], [0], [1], [0, 0, 1, 1], [], []>} : vector<1x128xbf16>, vector<128x384xbf16>, vector<1x384xf32> -> vector<1x384xf32>
    %c0_73 = arith.constant 0 : index
    %c0_74 = arith.constant 0 : index
    %211 = vector.load %arg6[%c0_73, %c0_74] : memref<1x384xf32, #tpu.memory_space<vmem>>, vector<1x384xf32>
    %212 = arith.addf %210, %211 : vector<1x384xf32>
    %213 = vector.extract_strided_slice %207 {offsets = [0, 0], sizes = [1, 128], strides = [1, 1]} : vector<1x384xf32> to vector<1x128xf32>
    %214 = vector.extract_strided_slice %212 {offsets = [0, 0], sizes = [1, 128], strides = [1, 1]} : vector<1x384xf32> to vector<1x128xf32>
    %215 = arith.addf %213, %214 : vector<1x128xf32>
    %216 = arith.negf %215 : vector<1x128xf32>
    %217 = math.exp %216 : vector<1x128xf32>
    %cst_75 = arith.constant 1.000000e+00 : f32
    %218 = vector.broadcast %cst_75 : f32 to vector<1x128xf32>
    %219 = arith.addf %218, %217 : vector<1x128xf32>
    %220 = arith.divf %218, %219 : vector<1x128xf32>
    %221 = vector.extract_strided_slice %207 {offsets = [0, 128], sizes = [1, 128], strides = [1, 1]} : vector<1x384xf32> to vector<1x128xf32>
    %222 = vector.extract_strided_slice %212 {offsets = [0, 128], sizes = [1, 128], strides = [1, 1]} : vector<1x384xf32> to vector<1x128xf32>
    %223 = arith.addf %221, %222 : vector<1x128xf32>
    %224 = arith.negf %223 : vector<1x128xf32>
    %225 = math.exp %224 : vector<1x128xf32>
    %cst_76 = arith.constant 1.000000e+00 : f32
    %226 = vector.broadcast %cst_76 : f32 to vector<1x128xf32>
    %227 = arith.addf %226, %225 : vector<1x128xf32>
    %228 = arith.divf %226, %227 : vector<1x128xf32>
    %229 = vector.extract_strided_slice %207 {offsets = [0, 256], sizes = [1, 128], strides = [1, 1]} : vector<1x384xf32> to vector<1x128xf32>
    %230 = vector.extract_strided_slice %212 {offsets = [0, 256], sizes = [1, 128], strides = [1, 1]} : vector<1x384xf32> to vector<1x128xf32>
    %231 = arith.mulf %220, %230 : vector<1x128xf32>
    %232 = arith.addf %229, %231 : vector<1x128xf32>
    %233 = math.tanh %232 : vector<1x128xf32>
    %cst_77 = arith.constant 1.000000e+00 : f32
    %234 = vector.broadcast %cst_77 : f32 to vector<1x128xf32>
    %235 = arith.subf %234, %228 : vector<1x128xf32>
    %236 = arith.mulf %235, %233 : vector<1x128xf32>
    %237 = arith.mulf %228, %203 : vector<1x128xf32>
    %238 = arith.addf %236, %237 : vector<1x128xf32>
    %c8_i32_78 = arith.constant 8 : i32
    %239 = arith.muli %arg0, %c8_i32_78 : i32
    %240 = arith.addi %239, %c5_i32 : i32
    %c10_i32_79 = arith.constant 10 : i32
    %241 = arith.cmpi slt, %240, %c10_i32_79 : i32
    %242 = arith.select %241, %238, %203 : vector<1x128xf32>
    %243 = arith.index_cast %c5_i32 : i32 to index
    %c0_80 = arith.constant 0 : index
    %244 = vector.load %arg7[%243, %c0_80] : memref<8x128xf32, #tpu.memory_space<vmem>>, vector<1x128xf32>
    tpu.vector_store %arg7[%243, %c0_80], %242 {strides = array<i32>} : memref<8x128xf32, #tpu.memory_space<vmem>>, vector<1x128xf32>,
    %c6_i32 = arith.constant 6 : i32
    %245 = arith.index_cast %c6_i32 : i32 to index
    %c0_81 = arith.constant 0 : index
    %246 = vector.load %arg9[%245, %c0_81] : memref<8x384xf32, #tpu.memory_space<vmem>>, vector<1x384xf32>
    %247 = arith.truncf %242 : vector<1x128xf32> to vector<1x128xbf16>
    %c0_82 = arith.constant 0 : index
    %c0_83 = arith.constant 0 : index
    %248 = vector.load %arg4[%c0_82, %c0_83] : memref<128x384xbf16, #tpu.memory_space<vmem>>, vector<128x384xbf16>
    %cst_84 = arith.constant dense<0.000000e+00> : vector<1x384xf32>
    %249 = tpu.matmul %247, %248, %cst_84 {dimension_numbers = #tpu.dot_dimension_numbers<[1], [0], [0], [1], [0, 0, 1, 1], [], []>} : vector<1x128xbf16>, vector<128x384xbf16>, vector<1x384xf32> -> vector<1x384xf32>
    %c0_85 = arith.constant 0 : index
    %c0_86 = arith.constant 0 : index
    %250 = vector.load %arg6[%c0_85, %c0_86] : memref<1x384xf32, #tpu.memory_space<vmem>>, vector<1x384xf32>
    %251 = arith.addf %249, %250 : vector<1x384xf32>
    %252 = vector.extract_strided_slice %246 {offsets = [0, 0], sizes = [1, 128], strides = [1, 1]} : vector<1x384xf32> to vector<1x128xf32>
    %253 = vector.extract_strided_slice %251 {offsets = [0, 0], sizes = [1, 128], strides = [1, 1]} : vector<1x384xf32> to vector<1x128xf32>
    %254 = arith.addf %252, %253 : vector<1x128xf32>
    %255 = arith.negf %254 : vector<1x128xf32>
    %256 = math.exp %255 : vector<1x128xf32>
    %cst_87 = arith.constant 1.000000e+00 : f32
    %257 = vector.broadcast %cst_87 : f32 to vector<1x128xf32>
    %258 = arith.addf %257, %256 : vector<1x128xf32>
    %259 = arith.divf %257, %258 : vector<1x128xf32>
    %260 = vector.extract_strided_slice %246 {offsets = [0, 128], sizes = [1, 128], strides = [1, 1]} : vector<1x384xf32> to vector<1x128xf32>
    %261 = vector.extract_strided_slice %251 {offsets = [0, 128], sizes = [1, 128], strides = [1, 1]} : vector<1x384xf32> to vector<1x128xf32>
    %262 = arith.addf %260, %261 : vector<1x128xf32>
    %263 = arith.negf %262 : vector<1x128xf32>
    %264 = math.exp %263 : vector<1x128xf32>
    %cst_88 = arith.constant 1.000000e+00 : f32
    %265 = vector.broadcast %cst_88 : f32 to vector<1x128xf32>
    %266 = arith.addf %265, %264 : vector<1x128xf32>
    %267 = arith.divf %265, %266 : vector<1x128xf32>
    %268 = vector.extract_strided_slice %246 {offsets = [0, 256], sizes = [1, 128], strides = [1, 1]} : vector<1x384xf32> to vector<1x128xf32>
    %269 = vector.extract_strided_slice %251 {offsets = [0, 256], sizes = [1, 128], strides = [1, 1]} : vector<1x384xf32> to vector<1x128xf32>
    %270 = arith.mulf %259, %269 : vector<1x128xf32>
    %271 = arith.addf %268, %270 : vector<1x128xf32>
    %272 = math.tanh %271 : vector<1x128xf32>
    %cst_89 = arith.constant 1.000000e+00 : f32
    %273 = vector.broadcast %cst_89 : f32 to vector<1x128xf32>
    %274 = arith.subf %273, %267 : vector<1x128xf32>
    %275 = arith.mulf %274, %272 : vector<1x128xf32>
    %276 = arith.mulf %267, %242 : vector<1x128xf32>
    %277 = arith.addf %275, %276 : vector<1x128xf32>
    %c8_i32_90 = arith.constant 8 : i32
    %278 = arith.muli %arg0, %c8_i32_90 : i32
    %279 = arith.addi %278, %c6_i32 : i32
    %c10_i32_91 = arith.constant 10 : i32
    %280 = arith.cmpi slt, %279, %c10_i32_91 : i32
    %281 = arith.select %280, %277, %242 : vector<1x128xf32>
    %282 = arith.index_cast %c6_i32 : i32 to index
    %c0_92 = arith.constant 0 : index
    %283 = vector.load %arg7[%282, %c0_92] : memref<8x128xf32, #tpu.memory_space<vmem>>, vector<1x128xf32>
    tpu.vector_store %arg7[%282, %c0_92], %281 {strides = array<i32>} : memref<8x128xf32, #tpu.memory_space<vmem>>, vector<1x128xf32>,
    %c7_i32 = arith.constant 7 : i32
    %284 = arith.index_cast %c7_i32 : i32 to index
    %c0_93 = arith.constant 0 : index
    %285 = vector.load %arg9[%284, %c0_93] : memref<8x384xf32, #tpu.memory_space<vmem>>, vector<1x384xf32>
    %286 = arith.truncf %281 : vector<1x128xf32> to vector<1x128xbf16>
    %c0_94 = arith.constant 0 : index
    %c0_95 = arith.constant 0 : index
    %287 = vector.load %arg4[%c0_94, %c0_95] : memref<128x384xbf16, #tpu.memory_space<vmem>>, vector<128x384xbf16>
    %cst_96 = arith.constant dense<0.000000e+00> : vector<1x384xf32>
    %288 = tpu.matmul %286, %287, %cst_96 {dimension_numbers = #tpu.dot_dimension_numbers<[1], [0], [0], [1], [0, 0, 1, 1], [], []>} : vector<1x128xbf16>, vector<128x384xbf16>, vector<1x384xf32> -> vector<1x384xf32>
    %c0_97 = arith.constant 0 : index
    %c0_98 = arith.constant 0 : index
    %289 = vector.load %arg6[%c0_97, %c0_98] : memref<1x384xf32, #tpu.memory_space<vmem>>, vector<1x384xf32>
    %290 = arith.addf %288, %289 : vector<1x384xf32>
    %291 = vector.extract_strided_slice %285 {offsets = [0, 0], sizes = [1, 128], strides = [1, 1]} : vector<1x384xf32> to vector<1x128xf32>
    %292 = vector.extract_strided_slice %290 {offsets = [0, 0], sizes = [1, 128], strides = [1, 1]} : vector<1x384xf32> to vector<1x128xf32>
    %293 = arith.addf %291, %292 : vector<1x128xf32>
    %294 = arith.negf %293 : vector<1x128xf32>
    %295 = math.exp %294 : vector<1x128xf32>
    %cst_99 = arith.constant 1.000000e+00 : f32
    %296 = vector.broadcast %cst_99 : f32 to vector<1x128xf32>
    %297 = arith.addf %296, %295 : vector<1x128xf32>
    %298 = arith.divf %296, %297 : vector<1x128xf32>
    %299 = vector.extract_strided_slice %285 {offsets = [0, 128], sizes = [1, 128], strides = [1, 1]} : vector<1x384xf32> to vector<1x128xf32>
    %300 = vector.extract_strided_slice %290 {offsets = [0, 128], sizes = [1, 128], strides = [1, 1]} : vector<1x384xf32> to vector<1x128xf32>
    %301 = arith.addf %299, %300 : vector<1x128xf32>
    %302 = arith.negf %301 : vector<1x128xf32>
    %303 = math.exp %302 : vector<1x128xf32>
    %cst_100 = arith.constant 1.000000e+00 : f32
    %304 = vector.broadcast %cst_100 : f32 to vector<1x128xf32>
    %305 = arith.addf %304, %303 : vector<1x128xf32>
    %306 = arith.divf %304, %305 : vector<1x128xf32>
    %307 = vector.extract_strided_slice %285 {offsets = [0, 256], sizes = [1, 128], strides = [1, 1]} : vector<1x384xf32> to vector<1x128xf32>
    %308 = vector.extract_strided_slice %290 {offsets = [0, 256], sizes = [1, 128], strides = [1, 1]} : vector<1x384xf32> to vector<1x128xf32>
    %309 = arith.mulf %298, %308 : vector<1x128xf32>
    %310 = arith.addf %307, %309 : vector<1x128xf32>
    %311 = math.tanh %310 : vector<1x128xf32>
    %cst_101 = arith.constant 1.000000e+00 : f32
    %312 = vector.broadcast %cst_101 : f32 to vector<1x128xf32>
    %313 = arith.subf %312, %306 : vector<1x128xf32>
    %314 = arith.mulf %313, %311 : vector<1x128xf32>
    %315 = arith.mulf %306, %281 : vector<1x128xf32>
    %316 = arith.addf %314, %315 : vector<1x128xf32>
    %c8_i32_102 = arith.constant 8 : i32
    %317 = arith.muli %arg0, %c8_i32_102 : i32
    %318 = arith.addi %317, %c7_i32 : i32
    %c10_i32_103 = arith.constant 10 : i32
    %319 = arith.cmpi slt, %318, %c10_i32_103 : i32
    %320 = arith.select %319, %316, %281 : vector<1x128xf32>
    %321 = arith.index_cast %c7_i32 : i32 to index
    %c0_104 = arith.constant 0 : index
    %322 = vector.load %arg7[%321, %c0_104] : memref<8x128xf32, #tpu.memory_space<vmem>>, vector<1x128xf32>
    tpu.vector_store %arg7[%321, %c0_104], %320 {strides = array<i32>} : memref<8x128xf32, #tpu.memory_space<vmem>>, vector<1x128xf32>,
    %c8_i32_105 = arith.constant 8 : i32
    %c0_106 = arith.constant 0 : index
    %c0_107 = arith.constant 0 : index
    %323 = vector.load %arg8[%c0_106, %c0_107] : memref<1x128xf32, #tpu.memory_space<vmem>>, vector<1x128xf32>
    tpu.vector_store %arg8[%c0_106, %c0_107], %320 {strides = array<i32>} : memref<1x128xf32, #tpu.memory_space<vmem>>, vector<1x128xf32>,
    return
  }
  func.func @transform_0(%arg0: i32) -> (i32, i32) {
    %c0_i32 = arith.constant 0 : i32
    %c0_i32_0 = arith.constant 0 : i32
    return %arg0, %c0_i32 : i32, i32
  }
  func.func @transform_1(%arg0: i32) -> (i32, i32) {
    %c0_i32 = arith.constant 0 : i32
    %c0_i32_0 = arith.constant 0 : i32
    %c0_i32_1 = arith.constant 0 : i32
    return %c0_i32, %c0_i32_0 : i32, i32
  }
  func.func @transform_2(%arg0: i32) -> (i32, i32) {
    %c0_i32 = arith.constant 0 : i32
    %c0_i32_0 = arith.constant 0 : i32
    %c0_i32_1 = arith.constant 0 : i32
    return %c0_i32, %c0_i32_0 : i32, i32
  }
  func.func @transform_3(%arg0: i32) -> (i32, i32) {
    %c0_i32 = arith.constant 0 : i32
    %c0_i32_0 = arith.constant 0 : i32
    %c0_i32_1 = arith.constant 0 : i32
    return %c0_i32, %c0_i32_0 : i32, i32
  }
  func.func @transform_4(%arg0: i32) -> (i32, i32) {
    %c0_i32 = arith.constant 0 : i32
    %c0_i32_0 = arith.constant 0 : i32
    %c0_i32_1 = arith.constant 0 : i32
    return %c0_i32, %c0_i32_0 : i32, i32
  }
  func.func @transform_5(%arg0: i32) -> (i32, i32) {
    %c0_i32 = arith.constant 0 : i32
    %c0_i32_0 = arith.constant 0 : i32
    %c0_i32_1 = arith.constant 0 : i32
    return %c0_i32, %c0_i32_0 : i32, i32
  }
  func.func @transform_6(%arg0: i32) -> (i32, i32) {
    %c0_i32 = arith.constant 0 : i32
    %c0_i32_0 = arith.constant 0 : i32
    return %arg0, %c0_i32 : i32, i32
  }
}

module attributes {stable_mosaic.version = 11 : i64} {
  func.func @kernel(%arg0: i32, %arg1: memref<8x128xbf16, #tpu.memory_space<vmem>>, %arg2: memref<1x128xf32, #tpu.memory_space<vmem>>, %arg3: memref<128x384xbf16, #tpu.memory_space<vmem>>, %arg4: memref<128x384xbf16, #tpu.memory_space<vmem>>, %arg5: memref<1x384xf32, #tpu.memory_space<vmem>>, %arg6: memref<1x384xf32, #tpu.memory_space<vmem>>, %arg7: memref<8x128xf32, #tpu.memory_space<vmem>>, %arg8: memref<1x128xf32, #tpu.memory_space<vmem>>, %arg9: memref<8x384xf32, #tpu.memory_space<vmem>>) attributes {dimension_semantics = [#tpu.dimension_semantics<arbitrary>], iteration_bounds = array<i64: 2>, scalar_prefetch = 0 : i64, scratch_operands = 2 : i64, tpu.core_type = #tpu.core_type<tc>, window_params = [{transform_indices = @transform_0, window_bounds = array<i64: 8, 128>}, {pipeline_mode = #tpu.pipeline_mode<synchronous>, transform_indices = @transform_1, window_bounds = array<i64: 1, 128>}, {pipeline_mode = #tpu.pipeline_mode<synchronous>, transform_indices = @transform_2, window_bounds = array<i64: 128, 384>}, {pipeline_mode = #tpu.pipeline_mode<synchronous>, transform_indices = @transform_3, window_bounds = array<i64: 128, 384>}, {pipeline_mode = #tpu.pipeline_mode<synchronous>, transform_indices = @transform_4, window_bounds = array<i64: 1, 384>}, {pipeline_mode = #tpu.pipeline_mode<synchronous>, transform_indices = @transform_5, window_bounds = array<i64: 1, 384>}, {transform_indices = @transform_6, window_bounds = array<i64: 8, 128>}]} {
    %c0_i32 = arith.constant 0 : i32
    %0 = arith.cmpi eq, %arg0, %c0_i32 : i32
    %1 = arith.extui %0 : i1 to i32
    %c0_i32_0 = arith.constant 0 : i32
    %2 = arith.cmpi ne, %1, %c0_i32_0 : i32
    scf.if %2 {
      %c0_108 = arith.constant 0 : index
      %c0_109 = arith.constant 0 : index
      %324 = vector.load %arg2[%c0_108, %c0_109] : memref<1x128xf32, #tpu.memory_space<vmem>>, vector<1x128xf32>
      %c0_110 = arith.constant 0 : index
      %c0_111 = arith.constant 0 : index
      %325 = vector.load %arg8[%c0_110, %c0_111] : memref<1x128xf32, #tpu.memory_space<vmem>>, vector<1x128xf32>
      tpu.vector_store %arg8[%c0_110, %c0_111], %324 {strides = array<i32>} : memref<1x128xf32, #tpu.memory_space<vmem>>, vector<1x128xf32>,
    } else {
    }
    %c0 = arith.constant 0 : index
    %c0_1 = arith.constant 0 : index
    %3 = vector.load %arg1[%c0, %c0_1] : memref<8x128xbf16, #tpu.memory_space<vmem>>, vector<8x128xbf16>
    %c0_2 = arith.constant 0 : index
    %c0_3 = arith.constant 0 : index
    %4 = vector.load %arg3[%c0_2, %c0_3] : memref<128x384xbf16, #tpu.memory_space<vmem>>, vector<128x384xbf16>
    %cst = arith.constant dense<0.000000e+00> : vector<8x384xf32>
    %5 = tpu.matmul %3, %4, %cst {dimension_numbers = #tpu.dot_dimension_numbers<[1], [0], [0], [1], [0, 0, 1, 1], [], []>} : vector<8x128xbf16>, vector<128x384xbf16>, vector<8x384xf32> -> vector<8x384xf32>
    %c0_4 = arith.constant 0 : index
    %c0_5 = arith.constant 0 : index
    %6 = vector.load %arg5[%c0_4, %c0_5] : memref<1x384xf32, #tpu.memory_space<vmem>>, vector<1x384xf32>
    %7 = vector.broadcast %6 : vector<1x384xf32> to vector<8x384xf32>
    %8 = arith.addf %5, %7 : vector<8x384xf32>
    %c0_6 = arith.constant 0 : index
    %c0_7 = arith.constant 0 : index
    %9 = vector.load %arg9[%c0_6, %c0_7] : memref<8x384xf32, #tpu.memory_space<vmem>>, vector<8x384xf32>
    tpu.vector_store %arg9[%c0_6, %c0_7], %8 {strides = array<i32>} : memref<8x384xf32, #tpu.memory_space<vmem>>, vector<8x384xf32>,
    %c0_8 = arith.constant 0 : index
    %c0_9 = arith.constant 0 : index
    %10 = vector.load %arg8[%c0_8, %c0_9] : memref<1x128xf32, #tpu.memory_space<vmem>>, vector<1x128xf32>
    %c0_i32_10 = arith.constant 0 : i32
    %11 = arith.index_cast %c0_i32_10 : i32 to index
    %c0_11 = arith.constant 0 : index
    %12 = vector.load %arg9[%11, %c0_11] : memref<8x384xf32, #tpu.memory_space<vmem>>, vector<1x384xf32>
    %13 = arith.truncf %10 : vector<1x128xf32> to vector<1x128xbf16>
    %c0_12 = arith.constant 0 : index
    %c0_13 = arith.constant 0 : index
    %14 = vector.load %arg4[%c0_12, %c0_13] : memref<128x384xbf16, #tpu.memory_space<vmem>>, vector<128x384xbf16>
    %cst_14 = arith.constant dense<0.000000e+00> : vector<1x384xf32>
    %15 = tpu.matmul %13, %14, %cst_14 {dimension_numbers = #tpu.dot_dimension_numbers<[1], [0], [0], [1], [0, 0, 1, 1], [], []>} : vector<1x128xbf16>, vector<128x384xbf16>, vector<1x384xf32> -> vector<1x384xf32>
    %c0_15 = arith.constant 0 : index
    %c0_16 = arith.constant 0 : index
    %16 = vector.load %arg6[%c0_15, %c0_16] : memref<1x384xf32, #tpu.memory_space<vmem>>, vector<1x384xf32>
    %17 = arith.addf %15, %16 : vector<1x384xf32>
    %18 = vector.extract_strided_slice %12 {offsets = [0, 0], sizes = [1, 128], strides = [1, 1]} : vector<1x384xf32> to vector<1x128xf32>
    %19 = vector.extract_strided_slice %17 {offsets = [0, 0], sizes = [1, 128], strides = [1, 1]} : vector<1x384xf32> to vector<1x128xf32>
    %20 = arith.addf %18, %19 : vector<1x128xf32>
    %21 = arith.negf %20 : vector<1x128xf32>
    %22 = math.exp %21 : vector<1x128xf32>
    %cst_17 = arith.constant 1.000000e+00 : f32
    %23 = vector.broadcast %cst_17 : f32 to vector<1x128xf32>
    %24 = arith.addf %23, %22 : vector<1x128xf32>
    %25 = arith.divf %23, %24 : vector<1x128xf32>
    %26 = vector.extract_strided_slice %12 {offsets = [0, 128], sizes = [1, 128], strides = [1, 1]} : vector<1x384xf32> to vector<1x128xf32>
    %27 = vector.extract_strided_slice %17 {offsets = [0, 128], sizes = [1, 128], strides = [1, 1]} : vector<1x384xf32> to vector<1x128xf32>
    %28 = arith.addf %26, %27 : vector<1x128xf32>
    %29 = arith.negf %28 : vector<1x128xf32>
    %30 = math.exp %29 : vector<1x128xf32>
    %cst_18 = arith.constant 1.000000e+00 : f32
    %31 = vector.broadcast %cst_18 : f32 to vector<1x128xf32>
    %32 = arith.addf %31, %30 : vector<1x128xf32>
    %33 = arith.divf %31, %32 : vector<1x128xf32>
    %34 = vector.extract_strided_slice %12 {offsets = [0, 256], sizes = [1, 128], strides = [1, 1]} : vector<1x384xf32> to vector<1x128xf32>
    %35 = vector.extract_strided_slice %17 {offsets = [0, 256], sizes = [1, 128], strides = [1, 1]} : vector<1x384xf32> to vector<1x128xf32>
    %36 = arith.mulf %25, %35 : vector<1x128xf32>
    %37 = arith.addf %34, %36 : vector<1x128xf32>
    %38 = math.tanh %37 : vector<1x128xf32>
    %cst_19 = arith.constant 1.000000e+00 : f32
    %39 = vector.broadcast %cst_19 : f32 to vector<1x128xf32>
    %40 = arith.subf %39, %33 : vector<1x128xf32>
    %41 = arith.mulf %40, %38 : vector<1x128xf32>
    %42 = arith.mulf %33, %10 : vector<1x128xf32>
    %43 = arith.addf %41, %42 : vector<1x128xf32>
    %c8_i32 = arith.constant 8 : i32
    %44 = arith.muli %arg0, %c8_i32 : i32
    %45 = arith.addi %44, %c0_i32_10 : i32
    %c10_i32 = arith.constant 10 : i32
    %46 = arith.cmpi slt, %45, %c10_i32 : i32
    %47 = arith.select %46, %43, %10 : vector<1x128xf32>
    %48 = arith.index_cast %c0_i32_10 : i32 to index
    %c0_20 = arith.constant 0 : index
    %49 = vector.load %arg7[%48, %c0_20] : memref<8x128xf32, #tpu.memory_space<vmem>>, vector<1x128xf32>
    tpu.vector_store %arg7[%48, %c0_20], %47 {strides = array<i32>} : memref<8x128xf32, #tpu.memory_space<vmem>>, vector<1x128xf32>,
    %c1_i32 = arith.constant 1 : i32
    %50 = arith.index_cast %c1_i32 : i32 to index
    %c0_21 = arith.constant 0 : index
    %51 = vector.load %arg9[%50, %c0_21] : memref<8x384xf32, #tpu.memory_space<vmem>>, vector<1x384xf32>
    %52 = arith.truncf %47 : vector<1x128xf32> to vector<1x128xbf16>
    %c0_22 = arith.constant 0 : index
    %c0_23 = arith.constant 0 : index
    %53 = vector.load %arg4[%c0_22, %c0_23] : memref<128x384xbf16, #tpu.memory_space<vmem>>, vector<128x384xbf16>
    %cst_24 = arith.constant dense<0.000000e+00> : vector<1x384xf32>
    %54 = tpu.matmul %52, %53, %cst_24 {dimension_numbers = #tpu.dot_dimension_numbers<[1], [0], [0], [1], [0, 0, 1, 1], [], []>} : vector<1x128xbf16>, vector<128x384xbf16>, vector<1x384xf32> -> vector<1x384xf32>
    %c0_25 = arith.constant 0 : index
    %c0_26 = arith.constant 0 : index
    %55 = vector.load %arg6[%c0_25, %c0_26] : memref<1x384xf32, #tpu.memory_space<vmem>>, vector<1x384xf32>
    %56 = arith.addf %54, %55 : vector<1x384xf32>
    %57 = vector.extract_strided_slice %51 {offsets = [0, 0], sizes = [1, 128], strides = [1, 1]} : vector<1x384xf32> to vector<1x128xf32>
    %58 = vector.extract_strided_slice %56 {offsets = [0, 0], sizes = [1, 128], strides = [1, 1]} : vector<1x384xf32> to vector<1x128xf32>
    %59 = arith.addf %57, %58 : vector<1x128xf32>
    %60 = arith.negf %59 : vector<1x128xf32>
    %61 = math.exp %60 : vector<1x128xf32>
    %cst_27 = arith.constant 1.000000e+00 : f32
    %62 = vector.broadcast %cst_27 : f32 to vector<1x128xf32>
    %63 = arith.addf %62, %61 : vector<1x128xf32>
    %64 = arith.divf %62, %63 : vector<1x128xf32>
    %65 = vector.extract_strided_slice %51 {offsets = [0, 128], sizes = [1, 128], strides = [1, 1]} : vector<1x384xf32> to vector<1x128xf32>
    %66 = vector.extract_strided_slice %56 {offsets = [0, 128], sizes = [1, 128], strides = [1, 1]} : vector<1x384xf32> to vector<1x128xf32>
    %67 = arith.addf %65, %66 : vector<1x128xf32>
    %68 = arith.negf %67 : vector<1x128xf32>
    %69 = math.exp %68 : vector<1x128xf32>
    %cst_28 = arith.constant 1.000000e+00 : f32
    %70 = vector.broadcast %cst_28 : f32 to vector<1x128xf32>
    %71 = arith.addf %70, %69 : vector<1x128xf32>
    %72 = arith.divf %70, %71 : vector<1x128xf32>
    %73 = vector.extract_strided_slice %51 {offsets = [0, 256], sizes = [1, 128], strides = [1, 1]} : vector<1x384xf32> to vector<1x128xf32>
    %74 = vector.extract_strided_slice %56 {offsets = [0, 256], sizes = [1, 128], strides = [1, 1]} : vector<1x384xf32> to vector<1x128xf32>
    %75 = arith.mulf %64, %74 : vector<1x128xf32>
    %76 = arith.addf %73, %75 : vector<1x128xf32>
    %77 = math.tanh %76 : vector<1x128xf32>
    %cst_29 = arith.constant 1.000000e+00 : f32
    %78 = vector.broadcast %cst_29 : f32 to vector<1x128xf32>
    %79 = arith.subf %78, %72 : vector<1x128xf32>
    %80 = arith.mulf %79, %77 : vector<1x128xf32>
    %81 = arith.mulf %72, %47 : vector<1x128xf32>
    %82 = arith.addf %80, %81 : vector<1x128xf32>
    %c8_i32_30 = arith.constant 8 : i32
    %83 = arith.muli %arg0, %c8_i32_30 : i32
    %84 = arith.addi %83, %c1_i32 : i32
    %c10_i32_31 = arith.constant 10 : i32
    %85 = arith.cmpi slt, %84, %c10_i32_31 : i32
    %86 = arith.select %85, %82, %47 : vector<1x128xf32>
    %87 = arith.index_cast %c1_i32 : i32 to index
    %c0_32 = arith.constant 0 : index
    %88 = vector.load %arg7[%87, %c0_32] : memref<8x128xf32, #tpu.memory_space<vmem>>, vector<1x128xf32>
    tpu.vector_store %arg7[%87, %c0_32], %86 {strides = array<i32>} : memref<8x128xf32, #tpu.memory_space<vmem>>, vector<1x128xf32>,
    %c2_i32 = arith.constant 2 : i32
    %89 = arith.index_cast %c2_i32 : i32 to index
    %c0_33 = arith.constant 0 : index
    %90 = vector.load %arg9[%89, %c0_33] : memref<8x384xf32, #tpu.memory_space<vmem>>, vector<1x384xf32>
    %91 = arith.truncf %86 : vector<1x128xf32> to vector<1x128xbf16>
    %c0_34 = arith.constant 0 : index
    %c0_35 = arith.constant 0 : index
    %92 = vector.load %arg4[%c0_34, %c0_35] : memref<128x384xbf16, #tpu.memory_space<vmem>>, vector<128x384xbf16>
    %cst_36 = arith.constant dense<0.000000e+00> : vector<1x384xf32>
    %93 = tpu.matmul %91, %92, %cst_36 {dimension_numbers = #tpu.dot_dimension_numbers<[1], [0], [0], [1], [0, 0, 1, 1], [], []>} : vector<1x128xbf16>, vector<128x384xbf16>, vector<1x384xf32> -> vector<1x384xf32>
    %c0_37 = arith.constant 0 : index
    %c0_38 = arith.constant 0 : index
    %94 = vector.load %arg6[%c0_37, %c0_38] : memref<1x384xf32, #tpu.memory_space<vmem>>, vector<1x384xf32>
    %95 = arith.addf %93, %94 : vector<1x384xf32>
    %96 = vector.extract_strided_slice %90 {offsets = [0, 0], sizes = [1, 128], strides = [1, 1]} : vector<1x384xf32> to vector<1x128xf32>
    %97 = vector.extract_strided_slice %95 {offsets = [0, 0], sizes = [1, 128], strides = [1, 1]} : vector<1x384xf32> to vector<1x128xf32>
    %98 = arith.addf %96, %97 : vector<1x128xf32>
    %99 = arith.negf %98 : vector<1x128xf32>
    %100 = math.exp %99 : vector<1x128xf32>
    %cst_39 = arith.constant 1.000000e+00 : f32
    %101 = vector.broadcast %cst_39 : f32 to vector<1x128xf32>
    %102 = arith.addf %101, %100 : vector<1x128xf32>
    %103 = arith.divf %101, %102 : vector<1x128xf32>
    %104 = vector.extract_strided_slice %90 {offsets = [0, 128], sizes = [1, 128], strides = [1, 1]} : vector<1x384xf32> to vector<1x128xf32>
    %105 = vector.extract_strided_slice %95 {offsets = [0, 128], sizes = [1, 128], strides = [1, 1]} : vector<1x384xf32> to vector<1x128xf32>
    %106 = arith.addf %104, %105 : vector<1x128xf32>
    %107 = arith.negf %106 : vector<1x128xf32>
    %108 = math.exp %107 : vector<1x128xf32>
    %cst_40 = arith.constant 1.000000e+00 : f32
    %109 = vector.broadcast %cst_40 : f32 to vector<1x128xf32>
    %110 = arith.addf %109, %108 : vector<1x128xf32>
    %111 = arith.divf %109, %110 : vector<1x128xf32>
    %112 = vector.extract_strided_slice %90 {offsets = [0, 256], sizes = [1, 128], strides = [1, 1]} : vector<1x384xf32> to vector<1x128xf32>
    %113 = vector.extract_strided_slice %95 {offsets = [0, 256], sizes = [1, 128], strides = [1, 1]} : vector<1x384xf32> to vector<1x128xf32>
    %114 = arith.mulf %103, %113 : vector<1x128xf32>
    %115 = arith.addf %112, %114 : vector<1x128xf32>
    %116 = math.tanh %115 : vector<1x128xf32>
    %cst_41 = arith.constant 1.000000e+00 : f32
    %117 = vector.broadcast %cst_41 : f32 to vector<1x128xf32>
    %118 = arith.subf %117, %111 : vector<1x128xf32>
    %119 = arith.mulf %118, %116 : vector<1x128xf32>
    %120 = arith.mulf %111, %86 : vector<1x128xf32>
    %121 = arith.addf %119, %120 : vector<1x128xf32>
    %c8_i32_42 = arith.constant 8 : i32
    %122 = arith.muli %arg0, %c8_i32_42 : i32
    %123 = arith.addi %122, %c2_i32 : i32
    %c10_i32_43 = arith.constant 10 : i32
    %124 = arith.cmpi slt, %123, %c10_i32_43 : i32
    %125 = arith.select %124, %121, %86 : vector<1x128xf32>
    %126 = arith.index_cast %c2_i32 : i32 to index
    %c0_44 = arith.constant 0 : index
    %127 = vector.load %arg7[%126, %c0_44] : memref<8x128xf32, #tpu.memory_space<vmem>>, vector<1x128xf32>
    tpu.vector_store %arg7[%126, %c0_44], %125 {strides = array<i32>} : memref<8x128xf32, #tpu.memory_space<vmem>>, vector<1x128xf32>,
    %c3_i32 = arith.constant 3 : i32
    %128 = arith.index_cast %c3_i32 : i32 to index
    %c0_45 = arith.constant 0 : index
    %129 = vector.load %arg9[%128, %c0_45] : memref<8x384xf32, #tpu.memory_space<vmem>>, vector<1x384xf32>
    %130 = arith.truncf %125 : vector<1x128xf32> to vector<1x128xbf16>
    %c0_46 = arith.constant 0 : index
    %c0_47 = arith.constant 0 : index
    %131 = vector.load %arg4[%c0_46, %c0_47] : memref<128x384xbf16, #tpu.memory_space<vmem>>, vector<128x384xbf16>
    %cst_48 = arith.constant dense<0.000000e+00> : vector<1x384xf32>
    %132 = tpu.matmul %130, %131, %cst_48 {dimension_numbers = #tpu.dot_dimension_numbers<[1], [0], [0], [1], [0, 0, 1, 1], [], []>} : vector<1x128xbf16>, vector<128x384xbf16>, vector<1x384xf32> -> vector<1x384xf32>
    %c0_49 = arith.constant 0 : index
    %c0_50 = arith.constant 0 : index
    %133 = vector.load %arg6[%c0_49, %c0_50] : memref<1x384xf32, #tpu.memory_space<vmem>>, vector<1x384xf32>
    %134 = arith.addf %132, %133 : vector<1x384xf32>
    %135 = vector.extract_strided_slice %129 {offsets = [0, 0], sizes = [1, 128], strides = [1, 1]} : vector<1x384xf32> to vector<1x128xf32>
    %136 = vector.extract_strided_slice %134 {offsets = [0, 0], sizes = [1, 128], strides = [1, 1]} : vector<1x384xf32> to vector<1x128xf32>
    %137 = arith.addf %135, %136 : vector<1x128xf32>
    %138 = arith.negf %137 : vector<1x128xf32>
    %139 = math.exp %138 : vector<1x128xf32>
    %cst_51 = arith.constant 1.000000e+00 : f32
    %140 = vector.broadcast %cst_51 : f32 to vector<1x128xf32>
    %141 = arith.addf %140, %139 : vector<1x128xf32>
    %142 = arith.divf %140, %141 : vector<1x128xf32>
    %143 = vector.extract_strided_slice %129 {offsets = [0, 128], sizes = [1, 128], strides = [1, 1]} : vector<1x384xf32> to vector<1x128xf32>
    %144 = vector.extract_strided_slice %134 {offsets = [0, 128], sizes = [1, 128], strides = [1, 1]} : vector<1x384xf32> to vector<1x128xf32>
    %145 = arith.addf %143, %144 : vector<1x128xf32>
    %146 = arith.negf %145 : vector<1x128xf32>
    %147 = math.exp %146 : vector<1x128xf32>
    %cst_52 = arith.constant 1.000000e+00 : f32
    %148 = vector.broadcast %cst_52 : f32 to vector<1x128xf32>
    %149 = arith.addf %148, %147 : vector<1x128xf32>
    %150 = arith.divf %148, %149 : vector<1x128xf32>
    %151 = vector.extract_strided_slice %129 {offsets = [0, 256], sizes = [1, 128], strides = [1, 1]} : vector<1x384xf32> to vector<1x128xf32>
    %152 = vector.extract_strided_slice %134 {offsets = [0, 256], sizes = [1, 128], strides = [1, 1]} : vector<1x384xf32> to vector<1x128xf32>
    %153 = arith.mulf %142, %152 : vector<1x128xf32>
    %154 = arith.addf %151, %153 : vector<1x128xf32>
    %155 = math.tanh %154 : vector<1x128xf32>
    %cst_53 = arith.constant 1.000000e+00 : f32
    %156 = vector.broadcast %cst_53 : f32 to vector<1x128xf32>
    %157 = arith.subf %156, %150 : vector<1x128xf32>
    %158 = arith.mulf %157, %155 : vector<1x128xf32>
    %159 = arith.mulf %150, %125 : vector<1x128xf32>
    %160 = arith.addf %158, %159 : vector<1x128xf32>
    %c8_i32_54 = arith.constant 8 : i32
    %161 = arith.muli %arg0, %c8_i32_54 : i32
    %162 = arith.addi %161, %c3_i32 : i32
    %c10_i32_55 = arith.constant 10 : i32
    %163 = arith.cmpi slt, %162, %c10_i32_55 : i32
    %164 = arith.select %163, %160, %125 : vector<1x128xf32>
    %165 = arith.index_cast %c3_i32 : i32 to index
    %c0_56 = arith.constant 0 : index
    %166 = vector.load %arg7[%165, %c0_56] : memref<8x128xf32, #tpu.memory_space<vmem>>, vector<1x128xf32>
    tpu.vector_store %arg7[%165, %c0_56], %164 {strides = array<i32>} : memref<8x128xf32, #tpu.memory_space<vmem>>, vector<1x128xf32>,
    %c4_i32 = arith.constant 4 : i32
    %167 = arith.index_cast %c4_i32 : i32 to index
    %c0_57 = arith.constant 0 : index
    %168 = vector.load %arg9[%167, %c0_57] : memref<8x384xf32, #tpu.memory_space<vmem>>, vector<1x384xf32>
    %169 = arith.truncf %164 : vector<1x128xf32> to vector<1x128xbf16>
    %c0_58 = arith.constant 0 : index
    %c0_59 = arith.constant 0 : index
    %170 = vector.load %arg4[%c0_58, %c0_59] : memref<128x384xbf16, #tpu.memory_space<vmem>>, vector<128x384xbf16>
    %cst_60 = arith.constant dense<0.000000e+00> : vector<1x384xf32>
    %171 = tpu.matmul %169, %170, %cst_60 {dimension_numbers = #tpu.dot_dimension_numbers<[1], [0], [0], [1], [0, 0, 1, 1], [], []>} : vector<1x128xbf16>, vector<128x384xbf16>, vector<1x384xf32> -> vector<1x384xf32>
    %c0_61 = arith.constant 0 : index
    %c0_62 = arith.constant 0 : index
    %172 = vector.load %arg6[%c0_61, %c0_62] : memref<1x384xf32, #tpu.memory_space<vmem>>, vector<1x384xf32>
    %173 = arith.addf %171, %172 : vector<1x384xf32>
    %174 = vector.extract_strided_slice %168 {offsets = [0, 0], sizes = [1, 128], strides = [1, 1]} : vector<1x384xf32> to vector<1x128xf32>
    %175 = vector.extract_strided_slice %173 {offsets = [0, 0], sizes = [1, 128], strides = [1, 1]} : vector<1x384xf32> to vector<1x128xf32>
    %176 = arith.addf %174, %175 : vector<1x128xf32>
    %177 = arith.negf %176 : vector<1x128xf32>
    %178 = math.exp %177 : vector<1x128xf32>
    %cst_63 = arith.constant 1.000000e+00 : f32
    %179 = vector.broadcast %cst_63 : f32 to vector<1x128xf32>
    %180 = arith.addf %179, %178 : vector<1x128xf32>
    %181 = arith.divf %179, %180 : vector<1x128xf32>
    %182 = vector.extract_strided_slice %168 {offsets = [0, 128], sizes = [1, 128], strides = [1, 1]} : vector<1x384xf32> to vector<1x128xf32>
    %183 = vector.extract_strided_slice %173 {offsets = [0, 128], sizes = [1, 128], strides = [1, 1]} : vector<1x384xf32> to vector<1x128xf32>
    %184 = arith.addf %182, %183 : vector<1x128xf32>
    %185 = arith.negf %184 : vector<1x128xf32>
    %186 = math.exp %185 : vector<1x128xf32>
    %cst_64 = arith.constant 1.000000e+00 : f32
    %187 = vector.broadcast %cst_64 : f32 to vector<1x128xf32>
    %188 = arith.addf %187, %186 : vector<1x128xf32>
    %189 = arith.divf %187, %188 : vector<1x128xf32>
    %190 = vector.extract_strided_slice %168 {offsets = [0, 256], sizes = [1, 128], strides = [1, 1]} : vector<1x384xf32> to vector<1x128xf32>
    %191 = vector.extract_strided_slice %173 {offsets = [0, 256], sizes = [1, 128], strides = [1, 1]} : vector<1x384xf32> to vector<1x128xf32>
    %192 = arith.mulf %181, %191 : vector<1x128xf32>
    %193 = arith.addf %190, %192 : vector<1x128xf32>
    %194 = math.tanh %193 : vector<1x128xf32>
    %cst_65 = arith.constant 1.000000e+00 : f32
    %195 = vector.broadcast %cst_65 : f32 to vector<1x128xf32>
    %196 = arith.subf %195, %189 : vector<1x128xf32>
    %197 = arith.mulf %196, %194 : vector<1x128xf32>
    %198 = arith.mulf %189, %164 : vector<1x128xf32>
    %199 = arith.addf %197, %198 : vector<1x128xf32>
    %c8_i32_66 = arith.constant 8 : i32
    %200 = arith.muli %arg0, %c8_i32_66 : i32
    %201 = arith.addi %200, %c4_i32 : i32
    %c10_i32_67 = arith.constant 10 : i32
    %202 = arith.cmpi slt, %201, %c10_i32_67 : i32
    %203 = arith.select %202, %199, %164 : vector<1x128xf32>
    %204 = arith.index_cast %c4_i32 : i32 to index
    %c0_68 = arith.constant 0 : index
    %205 = vector.load %arg7[%204, %c0_68] : memref<8x128xf32, #tpu.memory_space<vmem>>, vector<1x128xf32>
    tpu.vector_store %arg7[%204, %c0_68], %203 {strides = array<i32>} : memref<8x128xf32, #tpu.memory_space<vmem>>, vector<1x128xf32>,
    %c5_i32 = arith.constant 5 : i32
    %206 = arith.index_cast %c5_i32 : i32 to index
    %c0_69 = arith.constant 0 : index
    %207 = vector.load %arg9[%206, %c0_69] : memref<8x384xf32, #tpu.memory_space<vmem>>, vector<1x384xf32>
    %208 = arith.truncf %203 : vector<1x128xf32> to vector<1x128xbf16>
    %c0_70 = arith.constant 0 : index
    %c0_71 = arith.constant 0 : index
    %209 = vector.load %arg4[%c0_70, %c0_71] : memref<128x384xbf16, #tpu.memory_space<vmem>>, vector<128x384xbf16>
    %cst_72 = arith.constant dense<0.000000e+00> : vector<1x384xf32>
    %210 = tpu.matmul %208, %209, %cst_72 {dimension_numbers = #tpu.dot_dimension_numbers<[1], [0], [0], [1], [0, 0, 1, 1], [], []>} : vector<1x128xbf16>, vector<128x384xbf16>, vector<1x384xf32> -> vector<1x384xf32>
    %c0_73 = arith.constant 0 : index
    %c0_74 = arith.constant 0 : index
    %211 = vector.load %arg6[%c0_73, %c0_74] : memref<1x384xf32, #tpu.memory_space<vmem>>, vector<1x384xf32>
    %212 = arith.addf %210, %211 : vector<1x384xf32>
    %213 = vector.extract_strided_slice %207 {offsets = [0, 0], sizes = [1, 128], strides = [1, 1]} : vector<1x384xf32> to vector<1x128xf32>
    %214 = vector.extract_strided_slice %212 {offsets = [0, 0], sizes = [1, 128], strides = [1, 1]} : vector<1x384xf32> to vector<1x128xf32>
    %215 = arith.addf %213, %214 : vector<1x128xf32>
    %216 = arith.negf %215 : vector<1x128xf32>
    %217 = math.exp %216 : vector<1x128xf32>
    %cst_75 = arith.constant 1.000000e+00 : f32
    %218 = vector.broadcast %cst_75 : f32 to vector<1x128xf32>
    %219 = arith.addf %218, %217 : vector<1x128xf32>
    %220 = arith.divf %218, %219 : vector<1x128xf32>
    %221 = vector.extract_strided_slice %207 {offsets = [0, 128], sizes = [1, 128], strides = [1, 1]} : vector<1x384xf32> to vector<1x128xf32>
    %222 = vector.extract_strided_slice %212 {offsets = [0, 128], sizes = [1, 128], strides = [1, 1]} : vector<1x384xf32> to vector<1x128xf32>
    %223 = arith.addf %221, %222 : vector<1x128xf32>
    %224 = arith.negf %223 : vector<1x128xf32>
    %225 = math.exp %224 : vector<1x128xf32>
    %cst_76 = arith.constant 1.000000e+00 : f32
    %226 = vector.broadcast %cst_76 : f32 to vector<1x128xf32>
    %227 = arith.addf %226, %225 : vector<1x128xf32>
    %228 = arith.divf %226, %227 : vector<1x128xf32>
    %229 = vector.extract_strided_slice %207 {offsets = [0, 256], sizes = [1, 128], strides = [1, 1]} : vector<1x384xf32> to vector<1x128xf32>
    %230 = vector.extract_strided_slice %212 {offsets = [0, 256], sizes = [1, 128], strides = [1, 1]} : vector<1x384xf32> to vector<1x128xf32>
    %231 = arith.mulf %220, %230 : vector<1x128xf32>
    %232 = arith.addf %229, %231 : vector<1x128xf32>
    %233 = math.tanh %232 : vector<1x128xf32>
    %cst_77 = arith.constant 1.000000e+00 : f32
    %234 = vector.broadcast %cst_77 : f32 to vector<1x128xf32>
    %235 = arith.subf %234, %228 : vector<1x128xf32>
    %236 = arith.mulf %235, %233 : vector<1x128xf32>
    %237 = arith.mulf %228, %203 : vector<1x128xf32>
    %238 = arith.addf %236, %237 : vector<1x128xf32>
    %c8_i32_78 = arith.constant 8 : i32
    %239 = arith.muli %arg0, %c8_i32_78 : i32
    %240 = arith.addi %239, %c5_i32 : i32
    %c10_i32_79 = arith.constant 10 : i32
    %241 = arith.cmpi slt, %240, %c10_i32_79 : i32
    %242 = arith.select %241, %238, %203 : vector<1x128xf32>
    %243 = arith.index_cast %c5_i32 : i32 to index
    %c0_80 = arith.constant 0 : index
    %244 = vector.load %arg7[%243, %c0_80] : memref<8x128xf32, #tpu.memory_space<vmem>>, vector<1x128xf32>
    tpu.vector_store %arg7[%243, %c0_80], %242 {strides = array<i32>} : memref<8x128xf32, #tpu.memory_space<vmem>>, vector<1x128xf32>,
    %c6_i32 = arith.constant 6 : i32
    %245 = arith.index_cast %c6_i32 : i32 to index
    %c0_81 = arith.constant 0 : index
    %246 = vector.load %arg9[%245, %c0_81] : memref<8x384xf32, #tpu.memory_space<vmem>>, vector<1x384xf32>
    %247 = arith.truncf %242 : vector<1x128xf32> to vector<1x128xbf16>
    %c0_82 = arith.constant 0 : index
    %c0_83 = arith.constant 0 : index
    %248 = vector.load %arg4[%c0_82, %c0_83] : memref<128x384xbf16, #tpu.memory_space<vmem>>, vector<128x384xbf16>
    %cst_84 = arith.constant dense<0.000000e+00> : vector<1x384xf32>
    %249 = tpu.matmul %247, %248, %cst_84 {dimension_numbers = #tpu.dot_dimension_numbers<[1], [0], [0], [1], [0, 0, 1, 1], [], []>} : vector<1x128xbf16>, vector<128x384xbf16>, vector<1x384xf32> -> vector<1x384xf32>
    %c0_85 = arith.constant 0 : index
    %c0_86 = arith.constant 0 : index
    %250 = vector.load %arg6[%c0_85, %c0_86] : memref<1x384xf32, #tpu.memory_space<vmem>>, vector<1x384xf32>
    %251 = arith.addf %249, %250 : vector<1x384xf32>
    %252 = vector.extract_strided_slice %246 {offsets = [0, 0], sizes = [1, 128], strides = [1, 1]} : vector<1x384xf32> to vector<1x128xf32>
    %253 = vector.extract_strided_slice %251 {offsets = [0, 0], sizes = [1, 128], strides = [1, 1]} : vector<1x384xf32> to vector<1x128xf32>
    %254 = arith.addf %252, %253 : vector<1x128xf32>
    %255 = arith.negf %254 : vector<1x128xf32>
    %256 = math.exp %255 : vector<1x128xf32>
    %cst_87 = arith.constant 1.000000e+00 : f32
    %257 = vector.broadcast %cst_87 : f32 to vector<1x128xf32>
    %258 = arith.addf %257, %256 : vector<1x128xf32>
    %259 = arith.divf %257, %258 : vector<1x128xf32>
    %260 = vector.extract_strided_slice %246 {offsets = [0, 128], sizes = [1, 128], strides = [1, 1]} : vector<1x384xf32> to vector<1x128xf32>
    %261 = vector.extract_strided_slice %251 {offsets = [0, 128], sizes = [1, 128], strides = [1, 1]} : vector<1x384xf32> to vector<1x128xf32>
    %262 = arith.addf %260, %261 : vector<1x128xf32>
    %263 = arith.negf %262 : vector<1x128xf32>
    %264 = math.exp %263 : vector<1x128xf32>
    %cst_88 = arith.constant 1.000000e+00 : f32
    %265 = vector.broadcast %cst_88 : f32 to vector<1x128xf32>
    %266 = arith.addf %265, %264 : vector<1x128xf32>
    %267 = arith.divf %265, %266 : vector<1x128xf32>
    %268 = vector.extract_strided_slice %246 {offsets = [0, 256], sizes = [1, 128], strides = [1, 1]} : vector<1x384xf32> to vector<1x128xf32>
    %269 = vector.extract_strided_slice %251 {offsets = [0, 256], sizes = [1, 128], strides = [1, 1]} : vector<1x384xf32> to vector<1x128xf32>
    %270 = arith.mulf %259, %269 : vector<1x128xf32>
    %271 = arith.addf %268, %270 : vector<1x128xf32>
    %272 = math.tanh %271 : vector<1x128xf32>
    %cst_89 = arith.constant 1.000000e+00 : f32
    %273 = vector.broadcast %cst_89 : f32 to vector<1x128xf32>
    %274 = arith.subf %273, %267 : vector<1x128xf32>
    %275 = arith.mulf %274, %272 : vector<1x128xf32>
    %276 = arith.mulf %267, %242 : vector<1x128xf32>
    %277 = arith.addf %275, %276 : vector<1x128xf32>
    %c8_i32_90 = arith.constant 8 : i32
    %278 = arith.muli %arg0, %c8_i32_90 : i32
    %279 = arith.addi %278, %c6_i32 : i32
    %c10_i32_91 = arith.constant 10 : i32
    %280 = arith.cmpi slt, %279, %c10_i32_91 : i32
    %281 = arith.select %280, %277, %242 : vector<1x128xf32>
    %282 = arith.index_cast %c6_i32 : i32 to index
    %c0_92 = arith.constant 0 : index
    %283 = vector.load %arg7[%282, %c0_92] : memref<8x128xf32, #tpu.memory_space<vmem>>, vector<1x128xf32>
    tpu.vector_store %arg7[%282, %c0_92], %281 {strides = array<i32>} : memref<8x128xf32, #tpu.memory_space<vmem>>, vector<1x128xf32>,
    %c7_i32 = arith.constant 7 : i32
    %284 = arith.index_cast %c7_i32 : i32 to index
    %c0_93 = arith.constant 0 : index
    %285 = vector.load %arg9[%284, %c0_93] : memref<8x384xf32, #tpu.memory_space<vmem>>, vector<1x384xf32>
    %286 = arith.truncf %281 : vector<1x128xf32> to vector<1x128xbf16>
    %c0_94 = arith.constant 0 : index
    %c0_95 = arith.constant 0 : index
    %287 = vector.load %arg4[%c0_94, %c0_95] : memref<128x384xbf16, #tpu.memory_space<vmem>>, vector<128x384xbf16>
    %cst_96 = arith.constant dense<0.000000e+00> : vector<1x384xf32>
    %288 = tpu.matmul %286, %287, %cst_96 {dimension_numbers = #tpu.dot_dimension_numbers<[1], [0], [0], [1], [0, 0, 1, 1], [], []>} : vector<1x128xbf16>, vector<128x384xbf16>, vector<1x384xf32> -> vector<1x384xf32>
    %c0_97 = arith.constant 0 : index
    %c0_98 = arith.constant 0 : index
    %289 = vector.load %arg6[%c0_97, %c0_98] : memref<1x384xf32, #tpu.memory_space<vmem>>, vector<1x384xf32>
    %290 = arith.addf %288, %289 : vector<1x384xf32>
    %291 = vector.extract_strided_slice %285 {offsets = [0, 0], sizes = [1, 128], strides = [1, 1]} : vector<1x384xf32> to vector<1x128xf32>
    %292 = vector.extract_strided_slice %290 {offsets = [0, 0], sizes = [1, 128], strides = [1, 1]} : vector<1x384xf32> to vector<1x128xf32>
    %293 = arith.addf %291, %292 : vector<1x128xf32>
    %294 = arith.negf %293 : vector<1x128xf32>
    %295 = math.exp %294 : vector<1x128xf32>
    %cst_99 = arith.constant 1.000000e+00 : f32
    %296 = vector.broadcast %cst_99 : f32 to vector<1x128xf32>
    %297 = arith.addf %296, %295 : vector<1x128xf32>
    %298 = arith.divf %296, %297 : vector<1x128xf32>
    %299 = vector.extract_strided_slice %285 {offsets = [0, 128], sizes = [1, 128], strides = [1, 1]} : vector<1x384xf32> to vector<1x128xf32>
    %300 = vector.extract_strided_slice %290 {offsets = [0, 128], sizes = [1, 128], strides = [1, 1]} : vector<1x384xf32> to vector<1x128xf32>
    %301 = arith.addf %299, %300 : vector<1x128xf32>
    %302 = arith.negf %301 : vector<1x128xf32>
    %303 = math.exp %302 : vector<1x128xf32>
    %cst_100 = arith.constant 1.000000e+00 : f32
    %304 = vector.broadcast %cst_100 : f32 to vector<1x128xf32>
    %305 = arith.addf %304, %303 : vector<1x128xf32>
    %306 = arith.divf %304, %305 : vector<1x128xf32>
    %307 = vector.extract_strided_slice %285 {offsets = [0, 256], sizes = [1, 128], strides = [1, 1]} : vector<1x384xf32> to vector<1x128xf32>
    %308 = vector.extract_strided_slice %290 {offsets = [0, 256], sizes = [1, 128], strides = [1, 1]} : vector<1x384xf32> to vector<1x128xf32>
    %309 = arith.mulf %298, %308 : vector<1x128xf32>
    %310 = arith.addf %307, %309 : vector<1x128xf32>
    %311 = math.tanh %310 : vector<1x128xf32>
    %cst_101 = arith.constant 1.000000e+00 : f32
    %312 = vector.broadcast %cst_101 : f32 to vector<1x128xf32>
    %313 = arith.subf %312, %306 : vector<1x128xf32>
    %314 = arith.mulf %313, %311 : vector<1x128xf32>
    %315 = arith.mulf %306, %281 : vector<1x128xf32>
    %316 = arith.addf %314, %315 : vector<1x128xf32>
    %c8_i32_102 = arith.constant 8 : i32
    %317 = arith.muli %arg0, %c8_i32_102 : i32
    %318 = arith.addi %317, %c7_i32 : i32
    %c10_i32_103 = arith.constant 10 : i32
    %319 = arith.cmpi slt, %318, %c10_i32_103 : i32
    %320 = arith.select %319, %316, %281 : vector<1x128xf32>
    %321 = arith.index_cast %c7_i32 : i32 to index
    %c0_104 = arith.constant 0 : index
    %322 = vector.load %arg7[%321, %c0_104] : memref<8x128xf32, #tpu.memory_space<vmem>>, vector<1x128xf32>
    tpu.vector_store %arg7[%321, %c0_104], %320 {strides = array<i32>} : memref<8x128xf32, #tpu.memory_space<vmem>>, vector<1x128xf32>,
    %c8_i32_105 = arith.constant 8 : i32
    %c0_106 = arith.constant 0 : index
    %c0_107 = arith.constant 0 : index
    %323 = vector.load %arg8[%c0_106, %c0_107] : memref<1x128xf32, #tpu.memory_space<vmem>>, vector<1x128xf32>
    tpu.vector_store %arg8[%c0_106, %c0_107], %320 {strides = array<i32>} : memref<1x128xf32, #tpu.memory_space<vmem>>, vector<1x128xf32>,
    return
  }
  func.func @transform_0(%arg0: i32) -> (i32, i32) {
    %c0_i32 = arith.constant 0 : i32
    %c0_i32_0 = arith.constant 0 : i32
    return %arg0, %c0_i32 : i32, i32
  }
  func.func @transform_1(%arg0: i32) -> (i32, i32) {
    %c0_i32 = arith.constant 0 : i32
    %c0_i32_0 = arith.constant 0 : i32
    %c0_i32_1 = arith.constant 0 : i32
    return %c0_i32, %c0_i32_0 : i32, i32
  }
  func.func @transform_2(%arg0: i32) -> (i32, i32) {
    %c0_i32 = arith.constant 0 : i32
    %c0_i32_0 = arith.constant 0 : i32
    %c0_i32_1 = arith.constant 0 : i32
    return %c0_i32, %c0_i32_0 : i32, i32
  }
  func.func @transform_3(%arg0: i32) -> (i32, i32) {
    %c0_i32 = arith.constant 0 : i32
    %c0_i32_0 = arith.constant 0 : i32
    %c0_i32_1 = arith.constant 0 : i32
    return %c0_i32, %c0_i32_0 : i32, i32
  }
  func.func @transform_4(%arg0: i32) -> (i32, i32) {
    %c0_i32 = arith.constant 0 : i32
    %c0_i32_0 = arith.constant 0 : i32
    %c0_i32_1 = arith.constant 0 : i32
    return %c0_i32, %c0_i32_0 : i32, i32
  }
  func.func @transform_5(%arg0: i32) -> (i32, i32) {
    %c0_i32 = arith.constant 0 : i32
    %c0_i32_0 = arith.constant 0 : i32
    %c0_i32_1 = arith.constant 0 : i32
    return %c0_i32, %c0_i32_0 : i32, i32
  }
  func.func @transform_6(%arg0: i32) -> (i32, i32) {
    %c0_i32 = arith.constant 0 : i32
    %c0_i32_0 = arith.constant 0 : i32
    return %arg0, %c0_i32 : i32, i32
  }
}

</mosaic_0001>

<llo_original>
// kernel: tpu_custom_call.1
$region0: #{tpu_custom_call.1}
  #allocation0 [shape = 'u32[]', space=smem, size = 0x4, offset = 0x4, fixed_abs, tag = 'smem constant byte address 0x4 - core index']
  #allocation1 [shape = 'u32[144,128]{1,0:T(1,128)}', space=vmem, size = 0x12000, scoped, tag = 'internal scratch']
  #allocation2 [shape = 'f32[1,128]{1,0:T(1,128)}', space=vmem, size = 0x200, scoped, tag = 'scratch operand']
  #allocation3 [shape = 'f32[8,384]{1,0:T(8,128)}', space=vmem, size = 0x3000, scoped, tag = 'scratch operand']
  %s0 = inlined_call_operand.hbm [shape: bf16[16,128], index: 0, kind: input, shape index: {}]
  %s1 = inlined_call_operand.vmem [shape: f32[1,128], index: 1, kind: input, shape index: {}]
  %s2 = inlined_call_operand.hbm [shape: bf16[128,384], index: 2, kind: input, shape index: {}]
  %s3 = inlined_call_operand.hbm [shape: bf16[128,384], index: 3, kind: input, shape index: {}]
  %s4 = inlined_call_operand.vmem [shape: f32[1,384], index: 4, kind: input, shape index: {}]
  %s5 = inlined_call_operand.vmem [shape: f32[1,384], index: 5, kind: input, shape index: {}]
  %s6 = inlined_call_operand.hbm [shape: f32[16,128], index: 6, kind: output, shape index: {}]
  %s7 = sld [smem:[#allocation0]]
  $region73: #{tpu_custom_call.1} parent=0
    _
  %s9 = ssub.s32 1, %s7
  %s10 = scalar_select 0, %s9, %s7
  $region1: #{tpu_custom_call.1} parent=0
    #allocation4 [shape = 'u8[4096]{0}', space=vmem, size = 0x1000, scoped, tag = 'input window, operand 0']
    #allocation5 [shape = 's32[2]{0}', space=sflag, size = 0x8, scoped, tag = 'scoped memory for tpu_custom_call.1']
    #allocation6 [shape = 's32[2]{0}', space=sflag, size = 0x8, scoped, tag = 'scoped memory for tpu_custom_call.1']
    #allocation7 [shape = 'u8[98304]{0}', space=vmem, size = 0x18000, scoped, tag = 'input window, operand 2, single buffered']
    #allocation8 [shape = 's32[1]{0}', space=sflag, size = 0x4, scoped, tag = 'scoped memory for tpu_custom_call.1']
    #allocation9 [shape = 'u8[98304]{0}', space=vmem, size = 0x18000, scoped, tag = 'input window, operand 3, single buffered']
    #allocation10 [shape = 'u8[8192]{0}', space=vmem, size = 0x2000, scoped, tag = 'output window, operand 0']
    %11 = vsyncpa [#allocation5], 0
    %s12 = scalar_lea.sflag [#allocation5], 1
    %13 = vsyncpa %s12, 0
    %14 = vsyncpa [#allocation8], 0
    %15 = vsyncpa [#allocation6], 0
    %s16 = scalar_lea.sflag [#allocation6], 1
    %17 = vsyncpa %s16, 0
    loop: start=0, step=1, limit=4
    $region2: #{tpu_custom_call.1} parent=1 // loop_pre_header
      _
    $region3: #{tpu_custom_call.1} parent=1 // loop_header
      %s19 = sphi 0, %s23
      %p20 = scmp.ge.s32.totalorder %s19, 4
      %s29 = sphi 0, %s31
      %s32 = sphi 0, %s29
      %s33 = sphi 0, %s32
      %s49 = sphi 0, %s33
      %s53 = sphi 0, %s53
      %s55 = sphi 0, %s53
      %s56 = sphi 0, %s55
      %s70 = sphi 0, %s56
      %s74 = sphi 0, %s74
      %s76 = sphi 0, %s74
      %s77 = sphi 0, %s76
      %s91 = sphi 0, %s77
      %s95 = sphi 0, %s95
      %s97 = sphi 0, %s95
      %s98 = sphi 0, %s97
      %s112 = sphi 0, %s98
      %s116 = sphi 0, %s116
      %s118 = sphi 0, %s116
      %s119 = sphi 0, %s118
      %s133 = sphi 0, %s119
      %s137 = sphi 0, %s137
      %s139 = sphi 0, %s137
      %s140 = sphi 0, %s139
      %s154 = sphi 0, %s140
      %s160 = sphi 0, %s162
      %s163 = sphi 0, %s160
      %s164 = sphi 0, %s163
      %s180 = sphi 0, %s164
    $region4: #{tpu_custom_call.1} parent=1 // loop_header_branch
      %22 = sbr.rel (%p20) target = $region8
    $region5: #{tpu_custom_call.1} parent=1 // loop_body
      %s24 = ssub.s32 %s19, 1
      %s25 = ssub.s32 %s19, 2
      %s26 = sadd.s32 %s19, 1
      %s27 = ssub.s32 %s19, %s26
      %p28 = scmp.eq.s32.totalorder %s27, 0
      %s30 = sadd.s32 %s29, 1
      %s31 = scalar_select %p28, %s29, %s30
      %p34 = pneg %p28
      %p35 = scmp.eq.s32.totalorder %s19, 1
      %p36 = por %p34, %p35
      %p37 = scmp.ne.s32.totalorder %s29, %s32
      %p38 = scmp.eq.s32.totalorder %s19, 0
      %p39 = por %p37, %p38
      %p40 = scmp.ne.s32.totalorder %s29, %s32
      %p41 = scmp.eq.s32.totalorder %s24, 1
      %p42 = por %p40, %p41
      %p43 = scmp.ne.s32.totalorder %s32, %s33
      %p44 = scmp.eq.s32.totalorder %s24, 0
      %p45 = por %p43, %p44
      %p46 = scmp.ne.s32.totalorder %s32, %s33
      %p47 = scmp.eq.s32.totalorder %s25, 1
      %p48 = por %p46, %p47
      %p50 = scmp.ne.s32.totalorder %s33, %s49
      %p51 = scmp.eq.s32.totalorder %s25, 0
      %p52 = por %p50, %p51
      %s54 = sadd.s32 %s53, 1
      %p57 = scmp.eq.s32.totalorder %s19, 1
      %p58 = scmp.ne.s32.totalorder %s53, %s55
      %p59 = scmp.eq.s32.totalorder %s19, 0
      %p60 = por %p58, %p59
      %p61 = scmp.ne.s32.totalorder %s53, %s55
      %p62 = scmp.eq.s32.totalorder %s24, 1
      %p63 = por %p61, %p62
      %p64 = scmp.ne.s32.totalorder %s55, %s56
      %p65 = scmp.eq.s32.totalorder %s24, 0
      %p66 = por %p64, %p65
      %p67 = scmp.ne.s32.totalorder %s55, %s56
      %p68 = scmp.eq.s32.totalorder %s25, 1
      %p69 = por %p67, %p68
      %p71 = scmp.ne.s32.totalorder %s56, %s70
      %p72 = scmp.eq.s32.totalorder %s25, 0
      %p73 = por %p71, %p72
      %s75 = sadd.s32 %s74, 1
      %p78 = scmp.eq.s32.totalorder %s19, 1
      %p79 = scmp.ne.s32.totalorder %s74, %s76
      %p80 = scmp.eq.s32.totalorder %s19, 0
      %p81 = por %p79, %p80
      %p82 = scmp.ne.s32.totalorder %s74, %s76
      %p83 = scmp.eq.s32.totalorder %s24, 1
      %p84 = por %p82, %p83
      %p85 = scmp.ne.s32.totalorder %s76, %s77
      %p86 = scmp.eq.s32.totalorder %s24, 0
      %p87 = por %p85, %p86
      %p88 = scmp.ne.s32.totalorder %s76, %s77
      %p89 = scmp.eq.s32.totalorder %s25, 1
      %p90 = por %p88, %p89
      %p92 = scmp.ne.s32.totalorder %s77, %s91
      %p93 = scmp.eq.s32.totalorder %s25, 0
      %p94 = por %p92, %p93
      %s96 = sadd.s32 %s95, 1
      %p99 = scmp.eq.s32.totalorder %s19, 1
      %p100 = scmp.ne.s32.totalorder %s95, %s97
      %p101 = scmp.eq.s32.totalorder %s19, 0
      %p102 = por %p100, %p101
      %p103 = scmp.ne.s32.totalorder %s95, %s97
      %p104 = scmp.eq.s32.totalorder %s24, 1
      %p105 = por %p103, %p104
      %p106 = scmp.ne.s32.totalorder %s97, %s98
      %p107 = scmp.eq.s32.totalorder %s24, 0
      %p108 = por %p106, %p107
      %p109 = scmp.ne.s32.totalorder %s97, %s98
      %p110 = scmp.eq.s32.totalorder %s25, 1
      %p111 = por %p109, %p110
      %p113 = scmp.ne.s32.totalorder %s98, %s112
      %p114 = scmp.eq.s32.totalorder %s25, 0
      %p115 = por %p113, %p114
      %s117 = sadd.s32 %s116, 1
      %p120 = scmp.eq.s32.totalorder %s19, 1
      %p121 = scmp.ne.s32.totalorder %s116, %s118
      %p122 = scmp.eq.s32.totalorder %s19, 0
      %p123 = por %p121, %p122
      %p124 = scmp.ne.s32.totalorder %s116, %s118
      %p125 = scmp.eq.s32.totalorder %s24, 1
      %p126 = por %p124, %p125
      %p127 = scmp.ne.s32.totalorder %s118, %s119
      %p128 = scmp.eq.s32.totalorder %s24, 0
      %p129 = por %p127, %p128
      %p130 = scmp.ne.s32.totalorder %s118, %s119
      %p131 = scmp.eq.s32.totalorder %s25, 1
      %p132 = por %p130, %p131
      %p134 = scmp.ne.s32.totalorder %s119, %s133
      %p135 = scmp.eq.s32.totalorder %s25, 0
      %p136 = por %p134, %p135
      %s138 = sadd.s32 %s137, 1
      %p141 = scmp.eq.s32.totalorder %s19, 1
      %p142 = scmp.ne.s32.totalorder %s137, %s139
      %p143 = scmp.eq.s32.totalorder %s19, 0
      %p144 = por %p142, %p143
      %p145 = scmp.ne.s32.totalorder %s137, %s139
      %p146 = scmp.eq.s32.totalorder %s24, 1
      %p147 = por %p145, %p146
      %p148 = scmp.ne.s32.totalorder %s139, %s140
      %p149 = scmp.eq.s32.totalorder %s24, 0
      %p150 = por %p148, %p149
      %p151 = scmp.ne.s32.totalorder %s139, %s140
      %p152 = scmp.eq.s32.totalorder %s25, 1
      %p153 = por %p151, %p152
      %p155 = scmp.ne.s32.totalorder %s140, %s154
      %p156 = scmp.eq.s32.totalorder %s25, 0
      %p157 = por %p155, %p156
      %s158 = ssub.s32 %s19, %s26
      %p159 = scmp.eq.s32.totalorder %s158, 0
      %s161 = sadd.s32 %s160, 1
      %s162 = scalar_select %p159, %s160, %s161
      %p165 = pneg %p159
      %p166 = scmp.eq.s32.totalorder %s19, 1
      %p167 = por %p165, %p166
      %p168 = scmp.ne.s32.totalorder %s160, %s163
      %p169 = scmp.eq.s32.totalorder %s19, 0
      %p170 = por %p168, %p169
      %p171 = scmp.ne.s32.totalorder %s160, %s163
      %p172 = scmp.eq.s32.totalorder %s24, 1
      %p173 = por %p171, %p172
      %p174 = scmp.ne.s32.totalorder %s163, %s164
      %p175 = scmp.eq.s32.totalorder %s24, 0
      %p176 = por %p174, %p175
      %p177 = scmp.ne.s32.totalorder %s163, %s164
      %p178 = scmp.eq.s32.totalorder %s25, 1
      %p179 = por %p177, %p178
      %p181 = scmp.ne.s32.totalorder %s164, %s180
      %p182 = scmp.eq.s32.totalorder %s25, 0
      %p183 = por %p181, %p182
      %p184 = scmp.le.s32.totalorder 1, %s19
      %p185 = scmp.lt.s32.totalorder %s19, 3
      %p186 = pnand %p184, %p185
      %p187 = pneg %p186
      // Predicated region
      $region9: #{tpu_custom_call.1} parent=5 // pred_check
        _
      $region10: #{tpu_custom_call.1} parent=5 // pred_check_branch
        %189 = sbr.rel (%p186) target = $region12
      $region11: #{tpu_custom_call.1} parent=5 // pred_region
        %s190 = ssub.s32 %s19, 1
        // Predicated region
        $region13: #{tpu_custom_call.1} parent=11 // pred_check
          %p191 = pneg %p66
        $region14: #{tpu_custom_call.1} parent=11 // pred_check_branch
          %193 = sbr.rel (%p191) target = $region16
        $region15: #{tpu_custom_call.1} parent=11 // pred_region
          _
        $region16: #{tpu_custom_call.1} parent=11 // pred_fallthru
          _
        // Predicated region
        $region17: #{tpu_custom_call.1} parent=11 // pred_check
          %p194 = pneg %p87
        $region18: #{tpu_custom_call.1} parent=11 // pred_check_branch
          %196 = sbr.rel (%p194) target = $region20
        $region19: #{tpu_custom_call.1} parent=11 // pred_region
          %s198 = ssub.s32 3072, 3072
          %199 = vsyncadd [#allocation8], %s198
          %s200 = sshll.u32 [#allocation7], 4
          %s201 = int_to_ptr.vmem [resolvable:$true] %s200
          %206 = dma.hbm_to_vmem [thread:$0]  %s2, 3072, %s201, [#allocation8], 192, 192, 12
        $region20: #{tpu_custom_call.1} parent=11 // pred_fallthru
          _
        // Predicated region
        $region21: #{tpu_custom_call.1} parent=11 // pred_check
          %p207 = pneg %p108
        $region22: #{tpu_custom_call.1} parent=11 // pred_check_branch
          %209 = sbr.rel (%p207) target = $region24
        $region23: #{tpu_custom_call.1} parent=11 // pred_region
          %s211 = ssub.s32 3072, 3072
          %212 = vsyncadd [#allocation8], %s211
          %s213 = sshll.u32 [#allocation9], 4
          %s214 = int_to_ptr.vmem [resolvable:$true] %s213
          %219 = dma.hbm_to_vmem [thread:$0]  %s3, 3072, %s214, [#allocation8], 192, 192, 12
        $region24: #{tpu_custom_call.1} parent=11 // pred_fallthru
          _
        // Predicated region
        $region25: #{tpu_custom_call.1} parent=11 // pred_check
          %p220 = pneg %p129
        $region26: #{tpu_custom_call.1} parent=11 // pred_check_branch
          %222 = sbr.rel (%p220) target = $region28
        $region27: #{tpu_custom_call.1} parent=11 // pred_region
          _
        $region28: #{tpu_custom_call.1} parent=11 // pred_fallthru
          _
        // Predicated region
        $region29: #{tpu_custom_call.1} parent=11 // pred_check
          %p223 = pneg %p150
        $region30: #{tpu_custom_call.1} parent=11 // pred_check_branch
          %225 = sbr.rel (%p223) target = $region32
        $region31: #{tpu_custom_call.1} parent=11 // pred_region
          _
        $region32: #{tpu_custom_call.1} parent=11 // pred_fallthru
          _
      $region12: #{tpu_custom_call.1} parent=5 // pred_fallthru
        _
      %p226 = scmp.lt.s32.totalorder %s19, 2
      // Predicated region
      $region33: #{tpu_custom_call.1} parent=5 // pred_check
        %p227 = pneg %p226
      $region34: #{tpu_custom_call.1} parent=5 // pred_check_branch
        %229 = sbr.rel (%p227) target = $region36
      $region35: #{tpu_custom_call.1} parent=5 // pred_region
        // Predicated region
        $region37: #{tpu_custom_call.1} parent=35 // pred_check
          %p230 = pneg %p39
        $region38: #{tpu_custom_call.1} parent=35 // pred_check_branch
          %232 = sbr.rel (%p230) target = $region40
        $region39: #{tpu_custom_call.1} parent=35 // pred_region
          %s233 = sand.u32 %s29, 1
          %s234 = scalar_lea.sflag [#allocation5], %s233
          %s235 = sand.u32 %s29, 1
          %s236 = smul.addr %s235, 4
          %s237 = scalar_lea.vmem [#allocation4], %s236
          %s239 = ssub.s32 64, 64
          %240 = vsyncadd %s234, %s239
          %s241 = smul.addr %s19, 64
          %s242 = scalar_lea.hbm %s0, %s241
          %s244 = sshll.u32 %s237, 4
          %s245 = int_to_ptr.vmem [resolvable:$true] %s244
          %247 = dma.hbm_to_vmem [thread:$0]  %s242, 64, %s245, %s234
        $region40: #{tpu_custom_call.1} parent=35 // pred_fallthru
          _
      $region36: #{tpu_custom_call.1} parent=5 // pred_fallthru
        _
      %p248 = scmp.le.s32.totalorder 1, %s19
      %p249 = scmp.lt.s32.totalorder %s19, 3
      %p250 = pnand %p248, %p249
      %p251 = pneg %p250
      // Predicated region
      $region41: #{tpu_custom_call.1} parent=5 // pred_check
        _
      $region42: #{tpu_custom_call.1} parent=5 // pred_check_branch
        %253 = sbr.rel (%p250) target = $region44
      $region43: #{tpu_custom_call.1} parent=5 // pred_region
        %s254 = ssub.s32 %s19, 1
        %s255 = sand.u32 %s32, 1
        %s256 = scalar_lea.sflag [#allocation5], %s255
        %s257 = sand.u32 %s32, 1
        %s258 = smul.addr %s257, 4
        %s259 = scalar_lea.vmem [#allocation4], %s258
        // Predicated region
        $region45: #{tpu_custom_call.1} parent=43 // pred_check
          %p260 = pneg %p45
        $region46: #{tpu_custom_call.1} parent=43 // pred_check_branch
          %262 = sbr.rel (%p260) target = $region48
        $region47: #{tpu_custom_call.1} parent=43 // pred_region
          %263 = dma.done %s256, 64
        $region48: #{tpu_custom_call.1} parent=43 // pred_fallthru
          _
        // Predicated region
        $region49: #{tpu_custom_call.1} parent=43 // pred_check
          %p264 = pneg %p87
        $region50: #{tpu_custom_call.1} parent=43 // pred_check_branch
          %266 = sbr.rel (%p264) target = $region52
        $region51: #{tpu_custom_call.1} parent=43 // pred_region
          %267 = dma.done [#allocation8], 3072
        $region52: #{tpu_custom_call.1} parent=43 // pred_fallthru
          _
        // Predicated region
        $region53: #{tpu_custom_call.1} parent=43 // pred_check
          %p268 = pneg %p108
        $region54: #{tpu_custom_call.1} parent=43 // pred_check_branch
          %270 = sbr.rel (%p268) target = $region56
        $region55: #{tpu_custom_call.1} parent=43 // pred_region
          %271 = dma.done [#allocation8], 3072
        $region56: #{tpu_custom_call.1} parent=43 // pred_fallthru
          _
        %s272 = sand.u32 %s32, 1
        %s273 = scalar_lea.sflag [#allocation5], %s272
        %s274 = sand.u32 %s32, 1
        %s275 = smul.addr %s274, 4
        %s276 = scalar_lea.vmem [#allocation4], %s275
        %p277 = pneg %p45
        %p278 = pneg %p42
        %p279 = pneg %p66
        %p280 = pneg %p63
        %p281 = pneg %p87
        %p282 = pneg %p84
        %p283 = pneg %p108
        %p284 = pneg %p105
        %p285 = pneg %p129
        %p286 = pneg %p126
        %p287 = pneg %p150
        %p288 = pneg %p147
        %p289 = pneg %p176
        %p290 = pneg %p173
        %s291 = sand.u32 %s163, 1
        %s292 = scalar_lea.sflag [#allocation6], %s291
        %s293 = sand.u32 %s163, 1
        %s294 = smul.addr %s293, 8
        %s295 = scalar_lea.vmem [#allocation10], %s294
        %p297 = scmp.eq.s32.totalorder %s24, 0
        // Predicated region
        $region57: #{tpu_custom_call.1} parent=43 // pred_check
          %p298 = pneg %p297
        $region58: #{tpu_custom_call.1} parent=43 // pred_check_branch
          %300 = sbr.rel (%p298) target = $region60
        $region59: #{tpu_custom_call.1} parent=43 // pred_region
          %v301 = vld [vmem:[%s1] sm:$0x1]
          %302 = vst [vmem:[#allocation2] sm:$0x1] %v301
        $region60: #{tpu_custom_call.1} parent=43 // pred_fallthru
          _
        %v303 = vld [vmem:[%s259] sm:$0xf]
        %v304 = vld [vmem:[#allocation7] sm:$0xff]
        %v305 = vld [vmem:[#allocation7 + $0x8] sm:$0xf]
        %v306 = vld [vmem:[#allocation7 + $0xc] sm:$0xff]
        %v307 = vld [vmem:[#allocation7 + $0x14] sm:$0xf]
        %v308 = vld [vmem:[#allocation7 + $0x18] sm:$0xff]
        %v309 = vld [vmem:[#allocation7 + $0x20] sm:$0xf]
        %v310 = vld [vmem:[#allocation7 + $0x24] sm:$0xff]
        %v311 = vld [vmem:[#allocation7 + $0x2c] sm:$0xf]
        %v312 = vld [vmem:[#allocation7 + $0x30] sm:$0xff]
        %v313 = vld [vmem:[#allocation7 + $0x38] sm:$0xf]
        %v314 = vld [vmem:[#allocation7 + $0x3c] sm:$0xff]
        %v315 = vld [vmem:[#allocation7 + $0x44] sm:$0xf]
        %v316 = vld [vmem:[#allocation7 + $0x48] sm:$0xff]
        %v317 = vld [vmem:[#allocation7 + $0x50] sm:$0xf]
        %v318 = vld [vmem:[#allocation7 + $0x54] sm:$0xff]
        %v319 = vld [vmem:[#allocation7 + $0x5c] sm:$0xf]
        %v320 = vld [vmem:[#allocation7 + $0x60] sm:$0xff]
        %v321 = vld [vmem:[#allocation7 + $0x68] sm:$0xf]
        %v322 = vld [vmem:[#allocation7 + $0x6c] sm:$0xff]
        %v323 = vld [vmem:[#allocation7 + $0x74] sm:$0xf]
        %v324 = vld [vmem:[#allocation7 + $0x78] sm:$0xff]
        %v325 = vld [vmem:[#allocation7 + $0x80] sm:$0xf]
        %v326 = vld [vmem:[#allocation7 + $0x84] sm:$0xff]
        %v327 = vld [vmem:[#allocation7 + $0x8c] sm:$0xf]
        %v328 = vld [vmem:[#allocation7 + $0x90] sm:$0xff]
        %v329 = vld [vmem:[#allocation7 + $0x98] sm:$0xf]
        %v330 = vld [vmem:[#allocation7 + $0x9c] sm:$0xff]
        %v331 = vld [vmem:[#allocation7 + $0xa4] sm:$0xf]
        %v332 = vld [vmem:[#allocation7 + $0xa8] sm:$0xff]
        %v333 = vld [vmem:[#allocation7 + $0xb0] sm:$0xf]
        %v334 = vld [vmem:[#allocation7 + $0xb4] sm:$0xff]
        %v335 = vld [vmem:[#allocation7 + $0xbc] sm:$0xf]
        %v336 = vld [vmem:[%s4] sm:$0x7]
        %v338 = vlaneseq
        %v339 = vshrl.u32 %v338, 7
        %v340 = vsub.s32 0, %v339
        %v341 = vrot.slane %v336, %v340
        %v342 = vlaneseq
        %v343 = vshrl.u32 %v342, 7
        %v344 = vsub.s32 1, %v343
        %v345 = vrot.slane %v336, %v344
        %v346 = vlaneseq
        %v347 = vshrl.u32 %v346, 7
        %v348 = vsub.s32 2, %v347
        %v349 = vrot.slane %v336, %v348
        %v385 = vunpack.c.l.b16 %v304
        %v386 = vunpack.c.h.b16 %v304
        %v387 = vunpack.c.l.b16 %v305
        %v388 = vunpack.c.l.b16 %v306
        %v389 = vunpack.c.h.b16 %v306
        %v390 = vunpack.c.l.b16 %v307
        %v391 = vunpack.c.l.b16 %v308
        %v392 = vunpack.c.h.b16 %v308
        %v393 = vunpack.c.l.b16 %v309
        %v394 = vunpack.c.l.b16 %v310
        %v395 = vunpack.c.h.b16 %v310
        %v396 = vunpack.c.l.b16 %v311
        %v397 = vunpack.c.l.b16 %v312
        %v398 = vunpack.c.h.b16 %v312
        %v399 = vunpack.c.l.b16 %v313
        %v400 = vunpack.c.l.b16 %v314
        %v401 = vunpack.c.h.b16 %v314
        %v402 = vunpack.c.l.b16 %v315
        %v403 = vunpack.c.l.b16 %v316
        %v404 = vunpack.c.h.b16 %v316
        %v405 = vunpack.c.l.b16 %v317
        %v406 = vunpack.c.l.b16 %v318
        %v407 = vunpack.c.h.b16 %v318
        %v408 = vunpack.c.l.b16 %v319
        %v409 = vunpack.c.l.b16 %v320
        %v410 = vunpack.c.h.b16 %v320
        %v411 = vunpack.c.l.b16 %v321
        %v412 = vunpack.c.l.b16 %v322
        %v413 = vunpack.c.h.b16 %v322
        %v414 = vunpack.c.l.b16 %v323
        %v415 = vunpack.c.l.b16 %v324
        %v416 = vunpack.c.h.b16 %v324
        %v417 = vunpack.c.l.b16 %v325
        %v418 = vunpack.c.l.b16 %v326
        %v419 = vunpack.c.h.b16 %v326
        %v420 = vunpack.c.l.b16 %v327
        %v421 = vunpack.c.l.b16 %v328
        %v422 = vunpack.c.h.b16 %v328
        %v423 = vunpack.c.l.b16 %v329
        %v424 = vunpack.c.l.b16 %v330
        %v425 = vunpack.c.h.b16 %v330
        %v426 = vunpack.c.l.b16 %v331
        %v427 = vunpack.c.l.b16 %v332
        %v428 = vunpack.c.h.b16 %v332
        %v429 = vunpack.c.l.b16 %v333
        %v430 = vunpack.c.l.b16 %v334
        %v431 = vunpack.c.h.b16 %v334
        %v432 = vunpack.c.l.b16 %v335
        %v433 = vpack.c.b16 %v388, %v385
        %v434 = vpack.c.b16 %v389, %v386
        %v435 = vpack.c.b16 %v390, %v387
        %v436 = vpack.c.b16 %v394, %v391
        %v437 = vpack.c.b16 %v395, %v392
        %v438 = vpack.c.b16 %v396, %v393
        %v439 = vpack.c.b16 %v400, %v397
        %v440 = vpack.c.b16 %v401, %v398
        %v441 = vpack.c.b16 %v402, %v399
        %v442 = vpack.c.b16 %v406, %v403
        %v443 = vpack.c.b16 %v407, %v404
        %v444 = vpack.c.b16 %v408, %v405
        %v445 = vpack.c.b16 %v412, %v409
        %v446 = vpack.c.b16 %v413, %v410
        %v447 = vpack.c.b16 %v414, %v411
        %v448 = vpack.c.b16 %v418, %v415
        %v449 = vpack.c.b16 %v419, %v416
        %v450 = vpack.c.b16 %v420, %v417
        %v451 = vpack.c.b16 %v424, %v421
        %v452 = vpack.c.b16 %v425, %v422
        %v453 = vpack.c.b16 %v426, %v423
        %v454 = vpack.c.b16 %v430, %v427
        %v455 = vpack.c.b16 %v431, %v428
        %v456 = vpack.c.b16 %v432, %v429
        %481 = vmatprep.subr.bf16.mxu0 %v455
        %482 = vmatpush1.bf16.msra.mxu0 %v454
        %483 = vmatprep.subr.bf16.mxu0 %v452
        %484 = vmatpush1.bf16.msra.mxu0 %v451
        %485 = vmatprep.subr.bf16.mxu0 %v449
        %486 = vmatpush1.bf16.msra.mxu0 %v448
        %487 = vmatprep.subr.bf16.mxu0 %v446
        %488 = vmatpush1.bf16.msra.mxu0 %v445
        %489 = vmatprep.subr.bf16.mxu0 %v443
        %490 = vmatpush1.bf16.msra.mxu0 %v442
        %491 = vmatprep.subr.bf16.mxu0 %v440
        %492 = vmatpush1.bf16.msra.mxu0 %v439
        %493 = vmatprep.subr.bf16.mxu0 %v437
        %494 = vmatpush1.bf16.msra.mxu0 %v436
        %495 = vmatprep.subr.bf16.mxu0 %v434
        %496 = vmatpush1.bf16.msra.mxu0 %v433
        %497 = vmatprep.subr.bf16.mxu0 0
        %498 = vmatpush2.bf16.msra.mxu0 0
        %499 = vmatprep.subr.bf16.mxu0 0
        %500 = vmatpush2.bf16.msra.mxu0 0
        %501 = vmatprep.subr.bf16.mxu0 0
        %502 = vmatpush2.bf16.msra.mxu0 0
        %503 = vmatprep.subr.bf16.mxu0 0
        %504 = vmatpush2.bf16.msra.mxu0 0
        %505 = vmatprep.subr.bf16.mxu0 0
        %506 = vmatpush2.bf16.msra.mxu0 0
        %507 = vmatprep.subr.bf16.mxu0 0
        %508 = vmatpush2.bf16.msra.mxu0 0
        %509 = vmatprep.subr.bf16.mxu0 0
        %510 = vmatpush2.bf16.msra.mxu0 0
        %511 = vmatprep.subr.bf16.mxu0 0
        %512 = vmatpush2.bf16.msra.mxu0 0
        %513 = vmatprep.mubr.bf16.mxu0 0
        %514 = vmatmul.mubr.bf16.gmra.mxu0 %v303
        %v515 = vpop.f32.mrf.mxu0
        %v516 = vadd.f32 %v341, %v515
        %v517 = vpop.f32.mrf.mxu0
        %v518 = vadd.f32 %v345, %v517
        %v519 = vpop.f32.mrf.mxu0
        %v520 = vpop.f32.mrf.mxu0
        %521 = vdwg.mxu0
        %522 = vmatprep.subr.bf16.mxu0 0
        %523 = vmatpush1.bf16.msra.mxu0 %v456
        %524 = vmatprep.subr.bf16.mxu0 0
        %525 = vmatpush1.bf16.msra.mxu0 %v453
        %526 = vmatprep.subr.bf16.mxu0 0
        %527 = vmatpush1.bf16.msra.mxu0 %v450
        %528 = vmatprep.subr.bf16.mxu0 0
        %529 = vmatpush1.bf16.msra.mxu0 %v447
        %530 = vmatprep.subr.bf16.mxu0 0
        %531 = vmatpush1.bf16.msra.mxu0 %v444
        %532 = vmatprep.subr.bf16.mxu0 0
        %533 = vmatpush1.bf16.msra.mxu0 %v441
        %534 = vmatprep.subr.bf16.mxu0 0
        %535 = vmatpush1.bf16.msra.mxu0 %v438
        %536 = vmatprep.subr.bf16.mxu0 0
        %537 = vmatpush1.bf16.msra.mxu0 %v435
        %538 = vmatprep.subr.bf16.mxu0 0
        %539 = vmatpush2.bf16.msra.mxu0 0
        %540 = vmatprep.subr.bf16.mxu0 0
        %541 = vmatpush2.bf16.msra.mxu0 0
        %542 = vmatprep.subr.bf16.mxu0 0
        %543 = vmatpush2.bf16.msra.mxu0 0
        %544 = vmatprep.subr.bf16.mxu0 0
        %545 = vmatpush2.bf16.msra.mxu0 0
        %546 = vmatprep.subr.bf16.mxu0 0
        %547 = vmatpush2.bf16.msra.mxu0 0
        %548 = vmatprep.subr.bf16.mxu0 0
        %549 = vmatpush2.bf16.msra.mxu0 0
        %550 = vmatprep.subr.bf16.mxu0 0
        %551 = vmatpush2.bf16.msra.mxu0 0
        %552 = vmatprep.subr.bf16.mxu0 0
        %553 = vmatpush2.bf16.msra.mxu0 0
        %554 = vmatprep.mubr.bf16.mxu0 0
        %555 = vmatmul.mubr.bf16.gmra.mxu0 %v303
        %v556 = vpop.f32.mrf.mxu0
        %v557 = vadd.f32 %v349, %v556
        %v558 = vpop.f32.mrf.mxu0
        %v559 = vpop.f32.mrf.mxu0
        %v560 = vpop.f32.mrf.mxu0
        %561 = vdwg.mxu0
        %562 = vst [vmem:[#allocation3] sm:$0xff] %v516
        %563 = vst [vmem:[#allocation3 + $0x8] sm:$0xff] %v518
        %564 = vst [vmem:[#allocation3 + $0x10] sm:$0xff] %v557
        %v565 = vld [vmem:[#allocation2] sm:$0x1]
        %v566 = vld [vmem:[#allocation3] ss:$8 sm:$0x7]
        %v567 = vpack.c.bf16 %v565, %v565
        %v568 = vld [vmem:[#allocation9] sm:$0xff]
        %v569 = vld [vmem:[#allocation9 + $0x8] sm:$0xf]
        %v570 = vld [vmem:[#allocation9 + $0xc] sm:$0xff]
        %v571 = vld [vmem:[#allocation9 + $0x14] sm:$0xf]
        %v572 = vld [vmem:[#allocation9 + $0x18] sm:$0xff]
        %v573 = vld [vmem:[#allocation9 + $0x20] sm:$0xf]
        %v574 = vld [vmem:[#allocation9 + $0x24] sm:$0xff]
        %v575 = vld [vmem:[#allocation9 + $0x2c] sm:$0xf]
        %v576 = vld [vmem:[#allocation9 + $0x30] sm:$0xff]
        %v577 = vld [vmem:[#allocation9 + $0x38] sm:$0xf]
        %v578 = vld [vmem:[#allocation9 + $0x3c] sm:$0xff]
        %v579 = vld [vmem:[#allocation9 + $0x44] sm:$0xf]
        %v580 = vld [vmem:[#allocation9 + $0x48] sm:$0xff]
        %v581 = vld [vmem:[#allocation9 + $0x50] sm:$0xf]
        %v582 = vld [vmem:[#allocation9 + $0x54] sm:$0xff]
        %v583 = vld [vmem:[#allocation9 + $0x5c] sm:$0xf]
        %v584 = vld [vmem:[#allocation9 + $0x60] sm:$0xff]
        %v585 = vld [vmem:[#allocation9 + $0x68] sm:$0xf]
        %v586 = vld [vmem:[#allocation9 + $0x6c] sm:$0xff]
        %v587 = vld [vmem:[#allocation9 + $0x74] sm:$0xf]
        %v588 = vld [vmem:[#allocation9 + $0x78] sm:$0xff]
        %v589 = vld [vmem:[#allocation9 + $0x80] sm:$0xf]
        %v590 = vld [vmem:[#allocation9 + $0x84] sm:$0xff]
        %v591 = vld [vmem:[#allocation9 + $0x8c] sm:$0xf]
        %v592 = vld [vmem:[#allocation9 + $0x90] sm:$0xff]
        %v593 = vld [vmem:[#allocation9 + $0x98] sm:$0xf]
        %v594 = vld [vmem:[#allocation9 + $0x9c] sm:$0xff]
        %v595 = vld [vmem:[#allocation9 + $0xa4] sm:$0xf]
        %v596 = vld [vmem:[#allocation9 + $0xa8] sm:$0xff]
        %v597 = vld [vmem:[#allocation9 + $0xb0] sm:$0xf]
        %v598 = vld [vmem:[#allocation9 + $0xb4] sm:$0xff]
        %v599 = vld [vmem:[#allocation9 + $0xbc] sm:$0xf]
        %v600 = vld [vmem:[%s5] sm:$0x7]
        %v633 = vunpack.c.l.b16 %v568
        %v634 = vunpack.c.h.b16 %v568
        %v635 = vunpack.c.l.b16 %v569
        %v636 = vunpack.c.l.b16 %v570
        %v637 = vunpack.c.h.b16 %v570
        %v638 = vunpack.c.l.b16 %v571
        %v639 = vunpack.c.l.b16 %v572
        %v640 = vunpack.c.h.b16 %v572
        %v641 = vunpack.c.l.b16 %v573
        %v642 = vunpack.c.l.b16 %v574
        %v643 = vunpack.c.h.b16 %v574
        %v644 = vunpack.c.l.b16 %v575
        %v645 = vunpack.c.l.b16 %v576
        %v646 = vunpack.c.h.b16 %v576
        %v647 = vunpack.c.l.b16 %v577
        %v648 = vunpack.c.l.b16 %v578
        %v649 = vunpack.c.h.b16 %v578
        %v650 = vunpack.c.l.b16 %v579
        %v651 = vunpack.c.l.b16 %v580
        %v652 = vunpack.c.h.b16 %v580
        %v653 = vunpack.c.l.b16 %v581
        %v654 = vunpack.c.l.b16 %v582
        %v655 = vunpack.c.h.b16 %v582
        %v656 = vunpack.c.l.b16 %v583
        %v657 = vunpack.c.l.b16 %v584
        %v658 = vunpack.c.h.b16 %v584
        %v659 = vunpack.c.l.b16 %v585
        %v660 = vunpack.c.l.b16 %v586
        %v661 = vunpack.c.h.b16 %v586
        %v662 = vunpack.c.l.b16 %v587
        %v663 = vunpack.c.l.b16 %v588
        %v664 = vunpack.c.h.b16 %v588
        %v665 = vunpack.c.l.b16 %v589
        %v666 = vunpack.c.l.b16 %v590
        %v667 = vunpack.c.h.b16 %v590
        %v668 = vunpack.c.l.b16 %v591
        %v669 = vunpack.c.l.b16 %v592
        %v670 = vunpack.c.h.b16 %v592
        %v671 = vunpack.c.l.b16 %v593
        %v672 = vunpack.c.l.b16 %v594
        %v673 = vunpack.c.h.b16 %v594
        %v674 = vunpack.c.l.b16 %v595
        %v675 = vunpack.c.l.b16 %v596
        %v676 = vunpack.c.h.b16 %v596
        %v677 = vunpack.c.l.b16 %v597
        %v678 = vunpack.c.l.b16 %v598
        %v679 = vunpack.c.h.b16 %v598
        %v680 = vunpack.c.l.b16 %v599
        %v681 = vpack.c.b16 %v636, %v633
        %v682 = vpack.c.b16 %v637, %v634
        %v683 = vpack.c.b16 %v638, %v635
        %v684 = vpack.c.b16 %v642, %v639
        %v685 = vpack.c.b16 %v643, %v640
        %v686 = vpack.c.b16 %v644, %v641
        %v687 = vpack.c.b16 %v648, %v645
        %v688 = vpack.c.b16 %v649, %v646
        %v689 = vpack.c.b16 %v650, %v647
        %v690 = vpack.c.b16 %v654, %v651
        %v691 = vpack.c.b16 %v655, %v652
        %v692 = vpack.c.b16 %v656, %v653
        %v693 = vpack.c.b16 %v660, %v657
        %v694 = vpack.c.b16 %v661, %v658
        %v695 = vpack.c.b16 %v662, %v659
        %v696 = vpack.c.b16 %v666, %v663
        %v697 = vpack.c.b16 %v667, %v664
        %v698 = vpack.c.b16 %v668, %v665
        %v699 = vpack.c.b16 %v672, %v669
        %v700 = vpack.c.b16 %v673, %v670
        %v701 = vpack.c.b16 %v674, %v671
        %v702 = vpack.c.b16 %v678, %v675
        %v703 = vpack.c.b16 %v679, %v676
        %v704 = vpack.c.b16 %v680, %v677
        %v730 = vlaneseq
        %v731 = vshrl.u32 %v730, 7
        %v732 = vsub.s32 0, %v731
        %v733 = vrot.slane %v600, %v732
        %v734 = vlaneseq
        %v735 = vshrl.u32 %v734, 7
        %v736 = vsub.s32 1, %v735
        %v737 = vrot.slane %v600, %v736
        %v738 = vlaneseq
        %v739 = vshrl.u32 %v738, 7
        %v740 = vsub.s32 2, %v739
        %v741 = vrot.slane %v600, %v740
        %745 = vmatprep.subr.bf16.mxu0 %v703
        %746 = vmatpush1.bf16.msra.mxu0 %v702
        %747 = vmatprep.subr.bf16.mxu0 %v700
        %748 = vmatpush1.bf16.msra.mxu0 %v699
        %749 = vmatprep.subr.bf16.mxu0 %v697
        %750 = vmatpush1.bf16.msra.mxu0 %v696
        %751 = vmatprep.subr.bf16.mxu0 %v694
        %752 = vmatpush1.bf16.msra.mxu0 %v693
        %753 = vmatprep.subr.bf16.mxu0 %v691
        %754 = vmatpush1.bf16.msra.mxu0 %v690
        %755 = vmatprep.subr.bf16.mxu0 %v688
        %756 = vmatpush1.bf16.msra.mxu0 %v687
        %757 = vmatprep.subr.bf16.mxu0 %v685
        %758 = vmatpush1.bf16.msra.mxu0 %v684
        %759 = vmatprep.subr.bf16.mxu0 %v682
        %760 = vmatpush1.bf16.msra.mxu0 %v681
        %761 = vmatprep.subr.bf16.mxu0 0
        %762 = vmatpush2.bf16.msra.mxu0 0
        %763 = vmatprep.subr.bf16.mxu0 0
        %764 = vmatpush2.bf16.msra.mxu0 0
        %765 = vmatprep.subr.bf16.mxu0 0
        %766 = vmatpush2.bf16.msra.mxu0 0
        %767 = vmatprep.subr.bf16.mxu0 0
        %768 = vmatpush2.bf16.msra.mxu0 0
        %769 = vmatprep.subr.bf16.mxu0 0
        %770 = vmatpush2.bf16.msra.mxu0 0
        %771 = vmatprep.subr.bf16.mxu0 0
        %772 = vmatpush2.bf16.msra.mxu0 0
        %773 = vmatprep.subr.bf16.mxu0 0
        %774 = vmatpush2.bf16.msra.mxu0 0
        %775 = vmatprep.subr.bf16.mxu0 0
        %776 = vmatpush2.bf16.msra.mxu0 0
        %777 = vmatprep.mubr.bf16.mxu0 0
        %778 = vmatmul.mubr.bf16.gmra.mxu0 %v567
        %v779 = vpop.f32.mrf.mxu0
        %v780 = vadd.f32 %v733, %v779
        %v781 = vpop.f32.mrf.mxu0
        %v782 = vadd.f32 %v737, %v781
        %v783 = vpop.f32.mrf.mxu0
        %v784 = vpop.f32.mrf.mxu0
        %785 = vdwg.mxu0
        %786 = vmatprep.subr.bf16.mxu0 0
        %787 = vmatpush1.bf16.msra.mxu0 %v704
        %788 = vmatprep.subr.bf16.mxu0 0
        %789 = vmatpush1.bf16.msra.mxu0 %v701
        %790 = vmatprep.subr.bf16.mxu0 0
        %791 = vmatpush1.bf16.msra.mxu0 %v698
        %792 = vmatprep.subr.bf16.mxu0 0
        %793 = vmatpush1.bf16.msra.mxu0 %v695
        %794 = vmatprep.subr.bf16.mxu0 0
        %795 = vmatpush1.bf16.msra.mxu0 %v692
        %796 = vmatprep.subr.bf16.mxu0 0
        %797 = vmatpush1.bf16.msra.mxu0 %v689
        %798 = vmatprep.subr.bf16.mxu0 0
        %799 = vmatpush1.bf16.msra.mxu0 %v686
        %800 = vmatprep.subr.bf16.mxu0 0
        %801 = vmatpush1.bf16.msra.mxu0 %v683
        %802 = vmatprep.subr.bf16.mxu0 0
        %803 = vmatpush2.bf16.msra.mxu0 0
        %804 = vmatprep.subr.bf16.mxu0 0
        %805 = vmatpush2.bf16.msra.mxu0 0
        %806 = vmatprep.subr.bf16.mxu0 0
        %807 = vmatpush2.bf16.msra.mxu0 0
        %808 = vmatprep.subr.bf16.mxu0 0
        %809 = vmatpush2.bf16.msra.mxu0 0
        %810 = vmatprep.subr.bf16.mxu0 0
        %811 = vmatpush2.bf16.msra.mxu0 0
        %812 = vmatprep.subr.bf16.mxu0 0
        %813 = vmatpush2.bf16.msra.mxu0 0
        %814 = vmatprep.subr.bf16.mxu0 0
        %815 = vmatpush2.bf16.msra.mxu0 0
        %816 = vmatprep.subr.bf16.mxu0 0
        %817 = vmatpush2.bf16.msra.mxu0 0
        %818 = vmatprep.mubr.bf16.mxu0 0
        %819 = vmatmul.mubr.bf16.gmra.mxu0 %v567
        %v820 = vpop.f32.mrf.mxu0
        %v821 = vadd.f32 %v741, %v820
        %v822 = vpop.f32.mrf.mxu0
        %v823 = vpop.f32.mrf.mxu0
        %v824 = vpop.f32.mrf.mxu0
        %825 = vdwg.mxu0
        %v826 = vadd.f32 %v566, %v780
        %v827 = vxor.u32 %v826, 2147483648
        %v828 = vmul.f32 %v827, 1.442695
        %v829 = vpow.pop %v828
        %v830 = vadd.f32 %v829, 1.0
        %v831 = vrcp.pop %v830
        %v832 = vmul.f32 1.0, %v831
        %v834 = vrot.slane %v566, 1
        %v836 = vadd.f32 %v834, %v782
        %v837 = vxor.u32 %v836, 2147483648
        %v838 = vmul.f32 %v837, 1.442695
        %v839 = vpow.pop %v838
        %v840 = vadd.f32 %v839, 1.0
        %v841 = vrcp.pop %v840
        %v842 = vmul.f32 1.0, %v841
        %v843 = vmul.f32 %v832, %v821
        %v844 = vrot.slane %v566, 2
        %v846 = vadd.f32 %v844, %v843
        %v847 = vtanh.pop %v846
        %v848 = vsub.f32 1.0, %v842
        %v849 = vmul.f32 %v848, %v847
        %v850 = vmul.f32 %v842, %v565
        %v851 = vadd.f32 %v849, %v850
        %s852 = smul.u32 %s24, 8
        %p853 = scmp.lt.s32.totalorder %s852, 10
        %s854 = scalar_select %p853, 1, 0
        %v855 = vstv %s854
        %vm856 = vcmp.eq.s32.totalorder %v855, 1
        %v857 = vsel %vm856, %v851, %v565
        %858 = vst [vmem:[%s295] sm:$0x1] %v857
        %s859 = scalar_lea.vmem [#allocation3], 1
        %v860 = vld [vmem:[%s859] ss:$8 sm:$0x7]
        %v861 = vpack.c.bf16 %v857, %v857
        %v862 = vld [vmem:[#allocation9] sm:$0xff]
        %v863 = vld [vmem:[#allocation9 + $0x8] sm:$0xf]
        %v864 = vld [vmem:[#allocation9 + $0xc] sm:$0xff]
        %v865 = vld [vmem:[#allocation9 + $0x14] sm:$0xf]
        %v866 = vld [vmem:[#allocation9 + $0x18] sm:$0xff]
        %v867 = vld [vmem:[#allocation9 + $0x20] sm:$0xf]
        %v868 = vld [vmem:[#allocation9 + $0x24] sm:$0xff]
        %v869 = vld [vmem:[#allocation9 + $0x2c] sm:$0xf]
        %v870 = vld [vmem:[#allocation9 + $0x30] sm:$0xff]
        %v871 = vld [vmem:[#allocation9 + $0x38] sm:$0xf]
        %v872 = vld [vmem:[#allocation9 + $0x3c] sm:$0xff]
        %v873 = vld [vmem:[#allocation9 + $0x44] sm:$0xf]
        %v874 = vld [vmem:[#allocation9 + $0x48] sm:$0xff]
        %v875 = vld [vmem:[#allocation9 + $0x50] sm:$0xf]
        %v876 = vld [vmem:[#allocation9 + $0x54] sm:$0xff]
        %v877 = vld [vmem:[#allocation9 + $0x5c] sm:$0xf]
        %v878 = vld [vmem:[#allocation9 + $0x60] sm:$0xff]
        %v879 = vld [vmem:[#allocation9 + $0x68] sm:$0xf]
        %v880 = vld [vmem:[#allocation9 + $0x6c] sm:$0xff]
        %v881 = vld [vmem:[#allocation9 + $0x74] sm:$0xf]
        %v882 = vld [vmem:[#allocation9 + $0x78] sm:$0xff]
        %v883 = vld [vmem:[#allocation9 + $0x80] sm:$0xf]
        %v884 = vld [vmem:[#allocation9 + $0x84] sm:$0xff]
        %v885 = vld [vmem:[#allocation9 + $0x8c] sm:$0xf]
        %v886 = vld [vmem:[#allocation9 + $0x90] sm:$0xff]
        %v887 = vld [vmem:[#allocation9 + $0x98] sm:$0xf]
        %v888 = vld [vmem:[#allocation9 + $0x9c] sm:$0xff]
        %v889 = vld [vmem:[#allocation9 + $0xa4] sm:$0xf]
        %v890 = vld [vmem:[#allocation9 + $0xa8] sm:$0xff]
        %v891 = vld [vmem:[#allocation9 + $0xb0] sm:$0xf]
        %v892 = vld [vmem:[#allocation9 + $0xb4] sm:$0xff]
        %v893 = vld [vmem:[#allocation9 + $0xbc] sm:$0xf]
        %v894 = vld [vmem:[%s5] sm:$0x7]
        %v927 = vunpack.c.l.b16 %v862
        %v928 = vunpack.c.h.b16 %v862
        %v929 = vunpack.c.l.b16 %v863
        %v930 = vunpack.c.l.b16 %v864
        %v931 = vunpack.c.h.b16 %v864
        %v932 = vunpack.c.l.b16 %v865
        %v933 = vunpack.c.l.b16 %v866
        %v934 = vunpack.c.h.b16 %v866
        %v935 = vunpack.c.l.b16 %v867
        %v936 = vunpack.c.l.b16 %v868
        %v937 = vunpack.c.h.b16 %v868
        %v938 = vunpack.c.l.b16 %v869
        %v939 = vunpack.c.l.b16 %v870
        %v940 = vunpack.c.h.b16 %v870
        %v941 = vunpack.c.l.b16 %v871
        %v942 = vunpack.c.l.b16 %v872
        %v943 = vunpack.c.h.b16 %v872
        %v944 = vunpack.c.l.b16 %v873
        %v945 = vunpack.c.l.b16 %v874
        %v946 = vunpack.c.h.b16 %v874
        %v947 = vunpack.c.l.b16 %v875
        %v948 = vunpack.c.l.b16 %v876
        %v949 = vunpack.c.h.b16 %v876
        %v950 = vunpack.c.l.b16 %v877
        %v951 = vunpack.c.l.b16 %v878
        %v952 = vunpack.c.h.b16 %v878
        %v953 = vunpack.c.l.b16 %v879
        %v954 = vunpack.c.l.b16 %v880
        %v955 = vunpack.c.h.b16 %v880
        %v956 = vunpack.c.l.b16 %v881
        %v957 = vunpack.c.l.b16 %v882
        %v958 = vunpack.c.h.b16 %v882
        %v959 = vunpack.c.l.b16 %v883
        %v960 = vunpack.c.l.b16 %v884
        %v961 = vunpack.c.h.b16 %v884
        %v962 = vunpack.c.l.b16 %v885
        %v963 = vunpack.c.l.b16 %v886
        %v964 = vunpack.c.h.b16 %v886
        %v965 = vunpack.c.l.b16 %v887
        %v966 = vunpack.c.l.b16 %v888
        %v967 = vunpack.c.h.b16 %v888
        %v968 = vunpack.c.l.b16 %v889
        %v969 = vunpack.c.l.b16 %v890
        %v970 = vunpack.c.h.b16 %v890
        %v971 = vunpack.c.l.b16 %v891
        %v972 = vunpack.c.l.b16 %v892
        %v973 = vunpack.c.h.b16 %v892
        %v974 = vunpack.c.l.b16 %v893
        %v975 = vpack.c.b16 %v930, %v927
        %v976 = vpack.c.b16 %v931, %v928
        %v977 = vpack.c.b16 %v932, %v929
        %v978 = vpack.c.b16 %v936, %v933
        %v979 = vpack.c.b16 %v937, %v934
        %v980 = vpack.c.b16 %v938, %v935
        %v981 = vpack.c.b16 %v942, %v939
        %v982 = vpack.c.b16 %v943, %v940
        %v983 = vpack.c.b16 %v944, %v941
        %v984 = vpack.c.b16 %v948, %v945
        %v985 = vpack.c.b16 %v949, %v946
        %v986 = vpack.c.b16 %v950, %v947
        %v987 = vpack.c.b16 %v954, %v951
        %v988 = vpack.c.b16 %v955, %v952
        %v989 = vpack.c.b16 %v956, %v953
        %v990 = vpack.c.b16 %v960, %v957
        %v991 = vpack.c.b16 %v961, %v958
        %v992 = vpack.c.b16 %v962, %v959
        %v993 = vpack.c.b16 %v966, %v963
        %v994 = vpack.c.b16 %v967, %v964
        %v995 = vpack.c.b16 %v968, %v965
        %v996 = vpack.c.b16 %v972, %v969
        %v997 = vpack.c.b16 %v973, %v970
        %v998 = vpack.c.b16 %v974, %v971
        %v1024 = vlaneseq
        %v1025 = vshrl.u32 %v1024, 7
        %v1026 = vsub.s32 0, %v1025
        %v1027 = vrot.slane %v894, %v1026
        %v1028 = vlaneseq
        %v1029 = vshrl.u32 %v1028, 7
        %v1030 = vsub.s32 1, %v1029
        %v1031 = vrot.slane %v894, %v1030
        %v1032 = vlaneseq
        %v1033 = vshrl.u32 %v1032, 7
        %v1034 = vsub.s32 2, %v1033
        %v1035 = vrot.slane %v894, %v1034
        %1039 = vmatprep.subr.bf16.mxu0 %v997
        %1040 = vmatpush1.bf16.msra.mxu0 %v996
        %1041 = vmatprep.subr.bf16.mxu0 %v994
        %1042 = vmatpush1.bf16.msra.mxu0 %v993
        %1043 = vmatprep.subr.bf16.mxu0 %v991
        %1044 = vmatpush1.bf16.msra.mxu0 %v990
        %1045 = vmatprep.subr.bf16.mxu0 %v988
        %1046 = vmatpush1.bf16.msra.mxu0 %v987
        %1047 = vmatprep.subr.bf16.mxu0 %v985
        %1048 = vmatpush1.bf16.msra.mxu0 %v984
        %1049 = vmatprep.subr.bf16.mxu0 %v982
        %1050 = vmatpush1.bf16.msra.mxu0 %v981
        %1051 = vmatprep.subr.bf16.mxu0 %v979
        %1052 = vmatpush1.bf16.msra.mxu0 %v978
        %1053 = vmatprep.subr.bf16.mxu0 %v976
        %1054 = vmatpush1.bf16.msra.mxu0 %v975
        %1055 = vmatprep.subr.bf16.mxu0 0
        %1056 = vmatpush2.bf16.msra.mxu0 0
        %1057 = vmatprep.subr.bf16.mxu0 0
        %1058 = vmatpush2.bf16.msra.mxu0 0
        %1059 = vmatprep.subr.bf16.mxu0 0
        %1060 = vmatpush2.bf16.msra.mxu0 0
        %1061 = vmatprep.subr.bf16.mxu0 0
        %1062 = vmatpush2.bf16.msra.mxu0 0
        %1063 = vmatprep.subr.bf16.mxu0 0
        %1064 = vmatpush2.bf16.msra.mxu0 0
        %1065 = vmatprep.subr.bf16.mxu0 0
        %1066 = vmatpush2.bf16.msra.mxu0 0
        %1067 = vmatprep.subr.bf16.mxu0 0
        %1068 = vmatpush2.bf16.msra.mxu0 0
        %1069 = vmatprep.subr.bf16.mxu0 0
        %1070 = vmatpush2.bf16.msra.mxu0 0
        %1071 = vmatprep.mubr.bf16.mxu0 0
        %1072 = vmatmul.mubr.bf16.gmra.mxu0 %v861
        %v1073 = vpop.f32.mrf.mxu0
        %v1074 = vadd.f32 %v1027, %v1073
        %v1075 = vpop.f32.mrf.mxu0
        %v1076 = vadd.f32 %v1031, %v1075
        %v1077 = vpop.f32.mrf.mxu0
        %v1078 = vpop.f32.mrf.mxu0
        %1079 = vdwg.mxu0
        %1080 = vmatprep.subr.bf16.mxu0 0
        %1081 = vmatpush1.bf16.msra.mxu0 %v998
        %1082 = vmatprep.subr.bf16.mxu0 0
        %1083 = vmatpush1.bf16.msra.mxu0 %v995
        %1084 = vmatprep.subr.bf16.mxu0 0
        %1085 = vmatpush1.bf16.msra.mxu0 %v992
        %1086 = vmatprep.subr.bf16.mxu0 0
        %1087 = vmatpush1.bf16.msra.mxu0 %v989
        %1088 = vmatprep.subr.bf16.mxu0 0
        %1089 = vmatpush1.bf16.msra.mxu0 %v986
        %1090 = vmatprep.subr.bf16.mxu0 0
        %1091 = vmatpush1.bf16.msra.mxu0 %v983
        %1092 = vmatprep.subr.bf16.mxu0 0
        %1093 = vmatpush1.bf16.msra.mxu0 %v980
        %1094 = vmatprep.subr.bf16.mxu0 0
        %1095 = vmatpush1.bf16.msra.mxu0 %v977
        %1096 = vmatprep.subr.bf16.mxu0 0
        %1097 = vmatpush2.bf16.msra.mxu0 0
        %1098 = vmatprep.subr.bf16.mxu0 0
        %1099 = vmatpush2.bf16.msra.mxu0 0
        %1100 = vmatprep.subr.bf16.mxu0 0
        %1101 = vmatpush2.bf16.msra.mxu0 0
        %1102 = vmatprep.subr.bf16.mxu0 0
        %1103 = vmatpush2.bf16.msra.mxu0 0
        %1104 = vmatprep.subr.bf16.mxu0 0
        %1105 = vmatpush2.bf16.msra.mxu0 0
        %1106 = vmatprep.subr.bf16.mxu0 0
        %1107 = vmatpush2.bf16.msra.mxu0 0
        %1108 = vmatprep.subr.bf16.mxu0 0
        %1109 = vmatpush2.bf16.msra.mxu0 0
        %1110 = vmatprep.subr.bf16.mxu0 0
        %1111 = vmatpush2.bf16.msra.mxu0 0
        %1112 = vmatprep.mubr.bf16.mxu0 0
        %1113 = vmatmul.mubr.bf16.gmra.mxu0 %v861
        %v1114 = vpop.f32.mrf.mxu0
        %v1115 = vadd.f32 %v1035, %v1114
        %v1116 = vpop.f32.mrf.mxu0
        %v1117 = vpop.f32.mrf.mxu0
        %v1118 = vpop.f32.mrf.mxu0
        %1119 = vdwg.mxu0
        %v1120 = vadd.f32 %v860, %v1074
        %v1121 = vxor.u32 %v1120, 2147483648
        %v1122 = vmul.f32 %v1121, 1.442695
        %v1123 = vpow.pop %v1122
        %v1124 = vadd.f32 %v1123, 1.0
        %v1125 = vrcp.pop %v1124
        %v1126 = vmul.f32 1.0, %v1125
        %v1128 = vrot.slane %v860, 1
        %v1130 = vadd.f32 %v1128, %v1076
        %v1131 = vxor.u32 %v1130, 2147483648
        %v1132 = vmul.f32 %v1131, 1.442695
        %v1133 = vpow.pop %v1132
        %v1134 = vadd.f32 %v1133, 1.0
        %v1135 = vrcp.pop %v1134
        %v1136 = vmul.f32 1.0, %v1135
        %v1137 = vmul.f32 %v1126, %v1115
        %v1138 = vrot.slane %v860, 2
        %v1140 = vadd.f32 %v1138, %v1137
        %v1141 = vtanh.pop %v1140
        %v1142 = vsub.f32 1.0, %v1136
        %v1143 = vmul.f32 %v1142, %v1141
        %v1144 = vmul.f32 %v1136, %v857
        %v1145 = vadd.f32 %v1143, %v1144
        %s1146 = sadd.s32 %s852, 1
        %p1147 = scmp.lt.s32.totalorder %s1146, 10
        %s1148 = scalar_select %p1147, 1, 0
        %v1149 = vstv %s1148
        %vm1150 = vcmp.eq.s32.totalorder %v1149, 1
        %v1151 = vsel %vm1150, %v1145, %v857
        %1152 = vst [vmem:[%s295 + $0x1] sm:$0x1] %v1151
        %s1153 = scalar_lea.vmem [#allocation3], 2
        %v1154 = vld [vmem:[%s1153] ss:$8 sm:$0x7]
        %v1155 = vpack.c.bf16 %v1151, %v1151
        %v1156 = vld [vmem:[#allocation9] sm:$0xff]
        %v1157 = vld [vmem:[#allocation9 + $0x8] sm:$0xf]
        %v1158 = vld [vmem:[#allocation9 + $0xc] sm:$0xff]
        %v1159 = vld [vmem:[#allocation9 + $0x14] sm:$0xf]
        %v1160 = vld [vmem:[#allocation9 + $0x18] sm:$0xff]
        %v1161 = vld [vmem:[#allocation9 + $0x20] sm:$0xf]
        %v1162 = vld [vmem:[#allocation9 + $0x24] sm:$0xff]
        %v1163 = vld [vmem:[#allocation9 + $0x2c] sm:$0xf]
        %v1164 = vld [vmem:[#allocation9 + $0x30] sm:$0xff]
        %v1165 = vld [vmem:[#allocation9 + $0x38] sm:$0xf]
        %v1166 = vld [vmem:[#allocation9 + $0x3c] sm:$0xff]
        %v1167 = vld [vmem:[#allocation9 + $0x44] sm:$0xf]
        %v1168 = vld [vmem:[#allocation9 + $0x48] sm:$0xff]
        %v1169 = vld [vmem:[#allocation9 + $0x50] sm:$0xf]
        %v1170 = vld [vmem:[#allocation9 + $0x54] sm:$0xff]
        %v1171 = vld [vmem:[#allocation9 + $0x5c] sm:$0xf]
        %v1172 = vld [vmem:[#allocation9 + $0x60] sm:$0xff]
        %v1173 = vld [vmem:[#allocation9 + $0x68] sm:$0xf]
        %v1174 = vld [vmem:[#allocation9 + $0x6c] sm:$0xff]
        %v1175 = vld [vmem:[#allocation9 + $0x74] sm:$0xf]
        %v1176 = vld [vmem:[#allocation9 + $0x78] sm:$0xff]
        %v1177 = vld [vmem:[#allocation9 + $0x80] sm:$0xf]
        %v1178 = vld [vmem:[#allocation9 + $0x84] sm:$0xff]
        %v1179 = vld [vmem:[#allocation9 + $0x8c] sm:$0xf]
        %v1180 = vld [vmem:[#allocation9 + $0x90] sm:$0xff]
        %v1181 = vld [vmem:[#allocation9 + $0x98] sm:$0xf]
        %v1182 = vld [vmem:[#allocation9 + $0x9c] sm:$0xff]
        %v1183 = vld [vmem:[#allocation9 + $0xa4] sm:$0xf]
        %v1184 = vld [vmem:[#allocation9 + $0xa8] sm:$0xff]
        %v1185 = vld [vmem:[#allocation9 + $0xb0] sm:$0xf]
        %v1186 = vld [vmem:[#allocation9 + $0xb4] sm:$0xff]
        %v1187 = vld [vmem:[#allocation9 + $0xbc] sm:$0xf]
        %v1188 = vld [vmem:[%s5] sm:$0x7]
        %v1221 = vunpack.c.l.b16 %v1156
        %v1222 = vunpack.c.h.b16 %v1156
        %v1223 = vunpack.c.l.b16 %v1157
        %v1224 = vunpack.c.l.b16 %v1158
        %v1225 = vunpack.c.h.b16 %v1158
        %v1226 = vunpack.c.l.b16 %v1159
        %v1227 = vunpack.c.l.b16 %v1160
        %v1228 = vunpack.c.h.b16 %v1160
        %v1229 = vunpack.c.l.b16 %v1161
        %v1230 = vunpack.c.l.b16 %v1162
        %v1231 = vunpack.c.h.b16 %v1162
        %v1232 = vunpack.c.l.b16 %v1163
        %v1233 = vunpack.c.l.b16 %v1164
        %v1234 = vunpack.c.h.b16 %v1164
        %v1235 = vunpack.c.l.b16 %v1165
        %v1236 = vunpack.c.l.b16 %v1166
        %v1237 = vunpack.c.h.b16 %v1166
        %v1238 = vunpack.c.l.b16 %v1167
        %v1239 = vunpack.c.l.b16 %v1168
        %v1240 = vunpack.c.h.b16 %v1168
        %v1241 = vunpack.c.l.b16 %v1169
        %v1242 = vunpack.c.l.b16 %v1170
        %v1243 = vunpack.c.h.b16 %v1170
        %v1244 = vunpack.c.l.b16 %v1171
        %v1245 = vunpack.c.l.b16 %v1172
        %v1246 = vunpack.c.h.b16 %v1172
        %v1247 = vunpack.c.l.b16 %v1173
        %v1248 = vunpack.c.l.b16 %v1174
        %v1249 = vunpack.c.h.b16 %v1174
        %v1250 = vunpack.c.l.b16 %v1175
        %v1251 = vunpack.c.l.b16 %v1176
        %v1252 = vunpack.c.h.b16 %v1176
        %v1253 = vunpack.c.l.b16 %v1177
        %v1254 = vunpack.c.l.b16 %v1178
        %v1255 = vunpack.c.h.b16 %v1178
        %v1256 = vunpack.c.l.b16 %v1179
        %v1257 = vunpack.c.l.b16 %v1180
        %v1258 = vunpack.c.h.b16 %v1180
        %v1259 = vunpack.c.l.b16 %v1181
        %v1260 = vunpack.c.l.b16 %v1182
        %v1261 = vunpack.c.h.b16 %v1182
        %v1262 = vunpack.c.l.b16 %v1183
        %v1263 = vunpack.c.l.b16 %v1184
        %v1264 = vunpack.c.h.b16 %v1184
        %v1265 = vunpack.c.l.b16 %v1185
        %v1266 = vunpack.c.l.b16 %v1186
        %v1267 = vunpack.c.h.b16 %v1186
        %v1268 = vunpack.c.l.b16 %v1187
        %v1269 = vpack.c.b16 %v1224, %v1221
        %v1270 = vpack.c.b16 %v1225, %v1222
        %v1271 = vpack.c.b16 %v1226, %v1223
        %v1272 = vpack.c.b16 %v1230, %v1227
        %v1273 = vpack.c.b16 %v1231, %v1228
        %v1274 = vpack.c.b16 %v1232, %v1229
        %v1275 = vpack.c.b16 %v1236, %v1233
        %v1276 = vpack.c.b16 %v1237, %v1234
        %v1277 = vpack.c.b16 %v1238, %v1235
        %v1278 = vpack.c.b16 %v1242, %v1239
        %v1279 = vpack.c.b16 %v1243, %v1240
        %v1280 = vpack.c.b16 %v1244, %v1241
        %v1281 = vpack.c.b16 %v1248, %v1245
        %v1282 = vpack.c.b16 %v1249, %v1246
        %v1283 = vpack.c.b16 %v1250, %v1247
        %v1284 = vpack.c.b16 %v1254, %v1251
        %v1285 = vpack.c.b16 %v1255, %v1252
        %v1286 = vpack.c.b16 %v1256, %v1253
        %v1287 = vpack.c.b16 %v1260, %v1257
        %v1288 = vpack.c.b16 %v1261, %v1258
        %v1289 = vpack.c.b16 %v1262, %v1259
        %v1290 = vpack.c.b16 %v1266, %v1263
        %v1291 = vpack.c.b16 %v1267, %v1264
        %v1292 = vpack.c.b16 %v1268, %v1265
        %v1318 = vlaneseq
        %v1319 = vshrl.u32 %v1318, 7
        %v1320 = vsub.s32 0, %v1319
        %v1321 = vrot.slane %v1188, %v1320
        %v1322 = vlaneseq
        %v1323 = vshrl.u32 %v1322, 7
        %v1324 = vsub.s32 1, %v1323
        %v1325 = vrot.slane %v1188, %v1324
        %v1326 = vlaneseq
        %v1327 = vshrl.u32 %v1326, 7
        %v1328 = vsub.s32 2, %v1327
        %v1329 = vrot.slane %v1188, %v1328
        %1333 = vmatprep.subr.bf16.mxu0 %v1291
        %1334 = vmatpush1.bf16.msra.mxu0 %v1290
        %1335 = vmatprep.subr.bf16.mxu0 %v1288
        %1336 = vmatpush1.bf16.msra.mxu0 %v1287
        %1337 = vmatprep.subr.bf16.mxu0 %v1285
        %1338 = vmatpush1.bf16.msra.mxu0 %v1284
        %1339 = vmatprep.subr.bf16.mxu0 %v1282
        %1340 = vmatpush1.bf16.msra.mxu0 %v1281
        %1341 = vmatprep.subr.bf16.mxu0 %v1279
        %1342 = vmatpush1.bf16.msra.mxu0 %v1278
        %1343 = vmatprep.subr.bf16.mxu0 %v1276
        %1344 = vmatpush1.bf16.msra.mxu0 %v1275
        %1345 = vmatprep.subr.bf16.mxu0 %v1273
        %1346 = vmatpush1.bf16.msra.mxu0 %v1272
        %1347 = vmatprep.subr.bf16.mxu0 %v1270
        %1348 = vmatpush1.bf16.msra.mxu0 %v1269
        %1349 = vmatprep.subr.bf16.mxu0 0
        %1350 = vmatpush2.bf16.msra.mxu0 0
        %1351 = vmatprep.subr.bf16.mxu0 0
        %1352 = vmatpush2.bf16.msra.mxu0 0
        %1353 = vmatprep.subr.bf16.mxu0 0
        %1354 = vmatpush2.bf16.msra.mxu0 0
        %1355 = vmatprep.subr.bf16.mxu0 0
        %1356 = vmatpush2.bf16.msra.mxu0 0
        %1357 = vmatprep.subr.bf16.mxu0 0
        %1358 = vmatpush2.bf16.msra.mxu0 0
        %1359 = vmatprep.subr.bf16.mxu0 0
        %1360 = vmatpush2.bf16.msra.mxu0 0
        %1361 = vmatprep.subr.bf16.mxu0 0
        %1362 = vmatpush2.bf16.msra.mxu0 0
        %1363 = vmatprep.subr.bf16.mxu0 0
        %1364 = vmatpush2.bf16.msra.mxu0 0
        %1365 = vmatprep.mubr.bf16.mxu0 0
        %1366 = vmatmul.mubr.bf16.gmra.mxu0 %v1155
        %v1367 = vpop.f32.mrf.mxu0
        %v1368 = vadd.f32 %v1321, %v1367
        %v1369 = vpop.f32.mrf.mxu0
        %v1370 = vadd.f32 %v1325, %v1369
        %v1371 = vpop.f32.mrf.mxu0
        %v1372 = vpop.f32.mrf.mxu0
        %1373 = vdwg.mxu0
        %1374 = vmatprep.subr.bf16.mxu0 0
        %1375 = vmatpush1.bf16.msra.mxu0 %v1292
        %1376 = vmatprep.subr.bf16.mxu0 0
        %1377 = vmatpush1.bf16.msra.mxu0 %v1289
        %1378 = vmatprep.subr.bf16.mxu0 0
        %1379 = vmatpush1.bf16.msra.mxu0 %v1286
        %1380 = vmatprep.subr.bf16.mxu0 0
        %1381 = vmatpush1.bf16.msra.mxu0 %v1283
        %1382 = vmatprep.subr.bf16.mxu0 0
        %1383 = vmatpush1.bf16.msra.mxu0 %v1280
        %1384 = vmatprep.subr.bf16.mxu0 0
        %1385 = vmatpush1.bf16.msra.mxu0 %v1277
        %1386 = vmatprep.subr.bf16.mxu0 0
        %1387 = vmatpush1.bf16.msra.mxu0 %v1274
        %1388 = vmatprep.subr.bf16.mxu0 0
        %1389 = vmatpush1.bf16.msra.mxu0 %v1271
        %1390 = vmatprep.subr.bf16.mxu0 0
        %1391 = vmatpush2.bf16.msra.mxu0 0
        %1392 = vmatprep.subr.bf16.mxu0 0
        %1393 = vmatpush2.bf16.msra.mxu0 0
        %1394 = vmatprep.subr.bf16.mxu0 0
        %1395 = vmatpush2.bf16.msra.mxu0 0
        %1396 = vmatprep.subr.bf16.mxu0 0
        %1397 = vmatpush2.bf16.msra.mxu0 0
        %1398 = vmatprep.subr.bf16.mxu0 0
        %1399 = vmatpush2.bf16.msra.mxu0 0
        %1400 = vmatprep.subr.bf16.mxu0 0
        %1401 = vmatpush2.bf16.msra.mxu0 0
        %1402 = vmatprep.subr.bf16.mxu0 0
        %1403 = vmatpush2.bf16.msra.mxu0 0
        %1404 = vmatprep.subr.bf16.mxu0 0
        %1405 = vmatpush2.bf16.msra.mxu0 0
        %1406 = vmatprep.mubr.bf16.mxu0 0
        %1407 = vmatmul.mubr.bf16.gmra.mxu0 %v1155
        %v1408 = vpop.f32.mrf.mxu0
        %v1409 = vadd.f32 %v1329, %v1408
        %v1410 = vpop.f32.mrf.mxu0
        %v1411 = vpop.f32.mrf.mxu0
        %v1412 = vpop.f32.mrf.mxu0
        %1413 = vdwg.mxu0
        %v1414 = vadd.f32 %v1154, %v1368
        %v1415 = vxor.u32 %v1414, 2147483648
        %v1416 = vmul.f32 %v1415, 1.442695
        %v1417 = vpow.pop %v1416
        %v1418 = vadd.f32 %v1417, 1.0
        %v1419 = vrcp.pop %v1418
        %v1420 = vmul.f32 1.0, %v1419
        %v1422 = vrot.slane %v1154, 1
        %v1424 = vadd.f32 %v1422, %v1370
        %v1425 = vxor.u32 %v1424, 2147483648
        %v1426 = vmul.f32 %v1425, 1.442695
        %v1427 = vpow.pop %v1426
        %v1428 = vadd.f32 %v1427, 1.0
        %v1429 = vrcp.pop %v1428
        %v1430 = vmul.f32 1.0, %v1429
        %v1431 = vmul.f32 %v1420, %v1409
        %v1432 = vrot.slane %v1154, 2
        %v1434 = vadd.f32 %v1432, %v1431
        %v1435 = vtanh.pop %v1434
        %v1436 = vsub.f32 1.0, %v1430
        %v1437 = vmul.f32 %v1436, %v1435
        %v1438 = vmul.f32 %v1430, %v1151
        %v1439 = vadd.f32 %v1437, %v1438
        %s1440 = sadd.s32 %s852, 2
        %p1441 = scmp.lt.s32.totalorder %s1440, 10
        %s1442 = scalar_select %p1441, 1, 0
        %v1443 = vstv %s1442
        %vm1444 = vcmp.eq.s32.totalorder %v1443, 1
        %v1445 = vsel %vm1444, %v1439, %v1151
        %1446 = vst [vmem:[%s295 + $0x2] sm:$0x1] %v1445
        %s1447 = scalar_lea.vmem [#allocation3], 3
        %v1448 = vld [vmem:[%s1447] ss:$8 sm:$0x7]
        %v1449 = vpack.c.bf16 %v1445, %v1445
        %v1450 = vld [vmem:[#allocation9] sm:$0xff]
        %v1451 = vld [vmem:[#allocation9 + $0x8] sm:$0xf]
        %v1452 = vld [vmem:[#allocation9 + $0xc] sm:$0xff]
        %v1453 = vld [vmem:[#allocation9 + $0x14] sm:$0xf]
        %v1454 = vld [vmem:[#allocation9 + $0x18] sm:$0xff]
        %v1455 = vld [vmem:[#allocation9 + $0x20] sm:$0xf]
        %v1456 = vld [vmem:[#allocation9 + $0x24] sm:$0xff]
        %v1457 = vld [vmem:[#allocation9 + $0x2c] sm:$0xf]
        %v1458 = vld [vmem:[#allocation9 + $0x30] sm:$0xff]
        %v1459 = vld [vmem:[#allocation9 + $0x38] sm:$0xf]
        %v1460 = vld [vmem:[#allocation9 + $0x3c] sm:$0xff]
        %v1461 = vld [vmem:[#allocation9 + $0x44] sm:$0xf]
        %v1462 = vld [vmem:[#allocation9 + $0x48] sm:$0xff]
        %v1463 = vld [vmem:[#allocation9 + $0x50] sm:$0xf]
        %v1464 = vld [vmem:[#allocation9 + $0x54] sm:$0xff]
        %v1465 = vld [vmem:[#allocation9 + $0x5c] sm:$0xf]
        %v1466 = vld [vmem:[#allocation9 + $0x60] sm:$0xff]
        %v1467 = vld [vmem:[#allocation9 + $0x68] sm:$0xf]
        %v1468 = vld [vmem:[#allocation9 + $0x6c] sm:$0xff]
        %v1469 = vld [vmem:[#allocation9 + $0x74] sm:$0xf]
        %v1470 = vld [vmem:[#allocation9 + $0x78] sm:$0xff]
        %v1471 = vld [vmem:[#allocation9 + $0x80] sm:$0xf]
        %v1472 = vld [vmem:[#allocation9 + $0x84] sm:$0xff]
        %v1473 = vld [vmem:[#allocation9 + $0x8c] sm:$0xf]
        %v1474 = vld [vmem:[#allocation9 + $0x90] sm:$0xff]
        %v1475 = vld [vmem:[#allocation9 + $0x98] sm:$0xf]
        %v1476 = vld [vmem:[#allocation9 + $0x9c] sm:$0xff]
        %v1477 = vld [vmem:[#allocation9 + $0xa4] sm:$0xf]
        %v1478 = vld [vmem:[#allocation9 + $0xa8] sm:$0xff]
        %v1479 = vld [vmem:[#allocation9 + $0xb0] sm:$0xf]
        %v1480 = vld [vmem:[#allocation9 + $0xb4] sm:$0xff]
        %v1481 = vld [vmem:[#allocation9 + $0xbc] sm:$0xf]
        %v1482 = vld [vmem:[%s5] sm:$0x7]
        %v1515 = vunpack.c.l.b16 %v1450
        %v1516 = vunpack.c.h.b16 %v1450
        %v1517 = vunpack.c.l.b16 %v1451
        %v1518 = vunpack.c.l.b16 %v1452
        %v1519 = vunpack.c.h.b16 %v1452
        %v1520 = vunpack.c.l.b16 %v1453
        %v1521 = vunpack.c.l.b16 %v1454
        %v1522 = vunpack.c.h.b16 %v1454
        %v1523 = vunpack.c.l.b16 %v1455
        %v1524 = vunpack.c.l.b16 %v1456
        %v1525 = vunpack.c.h.b16 %v1456
        %v1526 = vunpack.c.l.b16 %v1457
        %v1527 = vunpack.c.l.b16 %v1458
        %v1528 = vunpack.c.h.b16 %v1458
        %v1529 = vunpack.c.l.b16 %v1459
        %v1530 = vunpack.c.l.b16 %v1460
        %v1531 = vunpack.c.h.b16 %v1460
        %v1532 = vunpack.c.l.b16 %v1461
        %v1533 = vunpack.c.l.b16 %v1462
        %v1534 = vunpack.c.h.b16 %v1462
        %v1535 = vunpack.c.l.b16 %v1463
        %v1536 = vunpack.c.l.b16 %v1464
        %v1537 = vunpack.c.h.b16 %v1464
        %v1538 = vunpack.c.l.b16 %v1465
        %v1539 = vunpack.c.l.b16 %v1466
        %v1540 = vunpack.c.h.b16 %v1466
        %v1541 = vunpack.c.l.b16 %v1467
        %v1542 = vunpack.c.l.b16 %v1468
        %v1543 = vunpack.c.h.b16 %v1468
        %v1544 = vunpack.c.l.b16 %v1469
        %v1545 = vunpack.c.l.b16 %v1470
        %v1546 = vunpack.c.h.b16 %v1470
        %v1547 = vunpack.c.l.b16 %v1471
        %v1548 = vunpack.c.l.b16 %v1472
        %v1549 = vunpack.c.h.b16 %v1472
        %v1550 = vunpack.c.l.b16 %v1473
        %v1551 = vunpack.c.l.b16 %v1474
        %v1552 = vunpack.c.h.b16 %v1474
        %v1553 = vunpack.c.l.b16 %v1475
        %v1554 = vunpack.c.l.b16 %v1476
        %v1555 = vunpack.c.h.b16 %v1476
        %v1556 = vunpack.c.l.b16 %v1477
        %v1557 = vunpack.c.l.b16 %v1478
        %v1558 = vunpack.c.h.b16 %v1478
        %v1559 = vunpack.c.l.b16 %v1479
        %v1560 = vunpack.c.l.b16 %v1480
        %v1561 = vunpack.c.h.b16 %v1480
        %v1562 = vunpack.c.l.b16 %v1481
        %v1563 = vpack.c.b16 %v1518, %v1515
        %v1564 = vpack.c.b16 %v1519, %v1516
        %v1565 = vpack.c.b16 %v1520, %v1517
        %v1566 = vpack.c.b16 %v1524, %v1521
        %v1567 = vpack.c.b16 %v1525, %v1522
        %v1568 = vpack.c.b16 %v1526, %v1523
        %v1569 = vpack.c.b16 %v1530, %v1527
        %v1570 = vpack.c.b16 %v1531, %v1528
        %v1571 = vpack.c.b16 %v1532, %v1529
        %v1572 = vpack.c.b16 %v1536, %v1533
        %v1573 = vpack.c.b16 %v1537, %v1534
        %v1574 = vpack.c.b16 %v1538, %v1535
        %v1575 = vpack.c.b16 %v1542, %v1539
        %v1576 = vpack.c.b16 %v1543, %v1540
        %v1577 = vpack.c.b16 %v1544, %v1541
        %v1578 = vpack.c.b16 %v1548, %v1545
        %v1579 = vpack.c.b16 %v1549, %v1546
        %v1580 = vpack.c.b16 %v1550, %v1547
        %v1581 = vpack.c.b16 %v1554, %v1551
        %v1582 = vpack.c.b16 %v1555, %v1552
        %v1583 = vpack.c.b16 %v1556, %v1553
        %v1584 = vpack.c.b16 %v1560, %v1557
        %v1585 = vpack.c.b16 %v1561, %v1558
        %v1586 = vpack.c.b16 %v1562, %v1559
        %v1612 = vlaneseq
        %v1613 = vshrl.u32 %v1612, 7
        %v1614 = vsub.s32 0, %v1613
        %v1615 = vrot.slane %v1482, %v1614
        %v1616 = vlaneseq
        %v1617 = vshrl.u32 %v1616, 7
        %v1618 = vsub.s32 1, %v1617
        %v1619 = vrot.slane %v1482, %v1618
        %v1620 = vlaneseq
        %v1621 = vshrl.u32 %v1620, 7
        %v1622 = vsub.s32 2, %v1621
        %v1623 = vrot.slane %v1482, %v1622
        %1627 = vmatprep.subr.bf16.mxu0 %v1585
        %1628 = vmatpush1.bf16.msra.mxu0 %v1584
        %1629 = vmatprep.subr.bf16.mxu0 %v1582
        %1630 = vmatpush1.bf16.msra.mxu0 %v1581
        %1631 = vmatprep.subr.bf16.mxu0 %v1579
        %1632 = vmatpush1.bf16.msra.mxu0 %v1578
        %1633 = vmatprep.subr.bf16.mxu0 %v1576
        %1634 = vmatpush1.bf16.msra.mxu0 %v1575
        %1635 = vmatprep.subr.bf16.mxu0 %v1573
        %1636 = vmatpush1.bf16.msra.mxu0 %v1572
        %1637 = vmatprep.subr.bf16.mxu0 %v1570
        %1638 = vmatpush1.bf16.msra.mxu0 %v1569
        %1639 = vmatprep.subr.bf16.mxu0 %v1567
        %1640 = vmatpush1.bf16.msra.mxu0 %v1566
        %1641 = vmatprep.subr.bf16.mxu0 %v1564
        %1642 = vmatpush1.bf16.msra.mxu0 %v1563
        %1643 = vmatprep.subr.bf16.mxu0 0
        %1644 = vmatpush2.bf16.msra.mxu0 0
        %1645 = vmatprep.subr.bf16.mxu0 0
        %1646 = vmatpush2.bf16.msra.mxu0 0
        %1647 = vmatprep.subr.bf16.mxu0 0
        %1648 = vmatpush2.bf16.msra.mxu0 0
        %1649 = vmatprep.subr.bf16.mxu0 0
        %1650 = vmatpush2.bf16.msra.mxu0 0
        %1651 = vmatprep.subr.bf16.mxu0 0
        %1652 = vmatpush2.bf16.msra.mxu0 0
        %1653 = vmatprep.subr.bf16.mxu0 0
        %1654 = vmatpush2.bf16.msra.mxu0 0
        %1655 = vmatprep.subr.bf16.mxu0 0
        %1656 = vmatpush2.bf16.msra.mxu0 0
        %1657 = vmatprep.subr.bf16.mxu0 0
        %1658 = vmatpush2.bf16.msra.mxu0 0
        %1659 = vmatprep.mubr.bf16.mxu0 0
        %1660 = vmatmul.mubr.bf16.gmra.mxu0 %v1449
        %v1661 = vpop.f32.mrf.mxu0
        %v1662 = vadd.f32 %v1615, %v1661
        %v1663 = vpop.f32.mrf.mxu0
        %v1664 = vadd.f32 %v1619, %v1663
        %v1665 = vpop.f32.mrf.mxu0
        %v1666 = vpop.f32.mrf.mxu0
        %1667 = vdwg.mxu0
        %1668 = vmatprep.subr.bf16.mxu0 0
        %1669 = vmatpush1.bf16.msra.mxu0 %v1586
        %1670 = vmatprep.subr.bf16.mxu0 0
        %1671 = vmatpush1.bf16.msra.mxu0 %v1583
        %1672 = vmatprep.subr.bf16.mxu0 0
        %1673 = vmatpush1.bf16.msra.mxu0 %v1580
        %1674 = vmatprep.subr.bf16.mxu0 0
        %1675 = vmatpush1.bf16.msra.mxu0 %v1577
        %1676 = vmatprep.subr.bf16.mxu0 0
        %1677 = vmatpush1.bf16.msra.mxu0 %v1574
        %1678 = vmatprep.subr.bf16.mxu0 0
        %1679 = vmatpush1.bf16.msra.mxu0 %v1571
        %1680 = vmatprep.subr.bf16.mxu0 0
        %1681 = vmatpush1.bf16.msra.mxu0 %v1568
        %1682 = vmatprep.subr.bf16.mxu0 0
        %1683 = vmatpush1.bf16.msra.mxu0 %v1565
        %1684 = vmatprep.subr.bf16.mxu0 0
        %1685 = vmatpush2.bf16.msra.mxu0 0
        %1686 = vmatprep.subr.bf16.mxu0 0
        %1687 = vmatpush2.bf16.msra.mxu0 0
        %1688 = vmatprep.subr.bf16.mxu0 0
        %1689 = vmatpush2.bf16.msra.mxu0 0
        %1690 = vmatprep.subr.bf16.mxu0 0
        %1691 = vmatpush2.bf16.msra.mxu0 0
        %1692 = vmatprep.subr.bf16.mxu0 0
        %1693 = vmatpush2.bf16.msra.mxu0 0
        %1694 = vmatprep.subr.bf16.mxu0 0
        %1695 = vmatpush2.bf16.msra.mxu0 0
        %1696 = vmatprep.subr.bf16.mxu0 0
        %1697 = vmatpush2.bf16.msra.mxu0 0
        %1698 = vmatprep.subr.bf16.mxu0 0
        %1699 = vmatpush2.bf16.msra.mxu0 0
        %1700 = vmatprep.mubr.bf16.mxu0 0
        %1701 = vmatmul.mubr.bf16.gmra.mxu0 %v1449
        %v1702 = vpop.f32.mrf.mxu0
        %v1703 = vadd.f32 %v1623, %v1702
        %v1704 = vpop.f32.mrf.mxu0
        %v1705 = vpop.f32.mrf.mxu0
        %v1706 = vpop.f32.mrf.mxu0
        %1707 = vdwg.mxu0
        %v1708 = vadd.f32 %v1448, %v1662
        %v1709 = vxor.u32 %v1708, 2147483648
        %v1710 = vmul.f32 %v1709, 1.442695
        %v1711 = vpow.pop %v1710
        %v1712 = vadd.f32 %v1711, 1.0
        %v1713 = vrcp.pop %v1712
        %v1714 = vmul.f32 1.0, %v1713
        %v1716 = vrot.slane %v1448, 1
        %v1718 = vadd.f32 %v1716, %v1664
        %v1719 = vxor.u32 %v1718, 2147483648
        %v1720 = vmul.f32 %v1719, 1.442695
        %v1721 = vpow.pop %v1720
        %v1722 = vadd.f32 %v1721, 1.0
        %v1723 = vrcp.pop %v1722
        %v1724 = vmul.f32 1.0, %v1723
        %v1725 = vmul.f32 %v1714, %v1703
        %v1726 = vrot.slane %v1448, 2
        %v1728 = vadd.f32 %v1726, %v1725
        %v1729 = vtanh.pop %v1728
        %v1730 = vsub.f32 1.0, %v1724
        %v1731 = vmul.f32 %v1730, %v1729
        %v1732 = vmul.f32 %v1724, %v1445
        %v1733 = vadd.f32 %v1731, %v1732
        %s1734 = sadd.s32 %s852, 3
        %p1735 = scmp.lt.s32.totalorder %s1734, 10
        %s1736 = scalar_select %p1735, 1, 0
        %v1737 = vstv %s1736
        %vm1738 = vcmp.eq.s32.totalorder %v1737, 1
        %v1739 = vsel %vm1738, %v1733, %v1445
        %1740 = vst [vmem:[%s295 + $0x3] sm:$0x1] %v1739
        %s1741 = scalar_lea.vmem [#allocation3], 4
        %v1742 = vld [vmem:[%s1741] ss:$8 sm:$0x7]
        %v1743 = vpack.c.bf16 %v1739, %v1739
        %v1744 = vld [vmem:[#allocation9] sm:$0xff]
        %v1745 = vld [vmem:[#allocation9 + $0x8] sm:$0xf]
        %v1746 = vld [vmem:[#allocation9 + $0xc] sm:$0xff]
        %v1747 = vld [vmem:[#allocation9 + $0x14] sm:$0xf]
        %v1748 = vld [vmem:[#allocation9 + $0x18] sm:$0xff]
        %v1749 = vld [vmem:[#allocation9 + $0x20] sm:$0xf]
        %v1750 = vld [vmem:[#allocation9 + $0x24] sm:$0xff]
        %v1751 = vld [vmem:[#allocation9 + $0x2c] sm:$0xf]
        %v1752 = vld [vmem:[#allocation9 + $0x30] sm:$0xff]
        %v1753 = vld [vmem:[#allocation9 + $0x38] sm:$0xf]
        %v1754 = vld [vmem:[#allocation9 + $0x3c] sm:$0xff]
        %v1755 = vld [vmem:[#allocation9 + $0x44] sm:$0xf]
        %v1756 = vld [vmem:[#allocation9 + $0x48] sm:$0xff]
        %v1757 = vld [vmem:[#allocation9 + $0x50] sm:$0xf]
        %v1758 = vld [vmem:[#allocation9 + $0x54] sm:$0xff]
        %v1759 = vld [vmem:[#allocation9 + $0x5c] sm:$0xf]
        %v1760 = vld [vmem:[#allocation9 + $0x60] sm:$0xff]
        %v1761 = vld [vmem:[#allocation9 + $0x68] sm:$0xf]
        %v1762 = vld [vmem:[#allocation9 + $0x6c] sm:$0xff]
        %v1763 = vld [vmem:[#allocation9 + $0x74] sm:$0xf]
        %v1764 = vld [vmem:[#allocation9 + $0x78] sm:$0xff]
        %v1765 = vld [vmem:[#allocation9 + $0x80] sm:$0xf]
        %v1766 = vld [vmem:[#allocation9 + $0x84] sm:$0xff]
        %v1767 = vld [vmem:[#allocation9 + $0x8c] sm:$0xf]
        %v1768 = vld [vmem:[#allocation9 + $0x90] sm:$0xff]
        %v1769 = vld [vmem:[#allocation9 + $0x98] sm:$0xf]
        %v1770 = vld [vmem:[#allocation9 + $0x9c] sm:$0xff]
        %v1771 = vld [vmem:[#allocation9 + $0xa4] sm:$0xf]
        %v1772 = vld [vmem:[#allocation9 + $0xa8] sm:$0xff]
        %v1773 = vld [vmem:[#allocation9 + $0xb0] sm:$0xf]
        %v1774 = vld [vmem:[#allocation9 + $0xb4] sm:$0xff]
        %v1775 = vld [vmem:[#allocation9 + $0xbc] sm:$0xf]
        %v1776 = vld [vmem:[%s5] sm:$0x7]
        %v1809 = vunpack.c.l.b16 %v1744
        %v1810 = vunpack.c.h.b16 %v1744
        %v1811 = vunpack.c.l.b16 %v1745
        %v1812 = vunpack.c.l.b16 %v1746
        %v1813 = vunpack.c.h.b16 %v1746
        %v1814 = vunpack.c.l.b16 %v1747
        %v1815 = vunpack.c.l.b16 %v1748
        %v1816 = vunpack.c.h.b16 %v1748
        %v1817 = vunpack.c.l.b16 %v1749
        %v1818 = vunpack.c.l.b16 %v1750
        %v1819 = vunpack.c.h.b16 %v1750
        %v1820 = vunpack.c.l.b16 %v1751
        %v1821 = vunpack.c.l.b16 %v1752
        %v1822 = vunpack.c.h.b16 %v1752
        %v1823 = vunpack.c.l.b16 %v1753
        %v1824 = vunpack.c.l.b16 %v1754
        %v1825 = vunpack.c.h.b16 %v1754
        %v1826 = vunpack.c.l.b16 %v1755
        %v1827 = vunpack.c.l.b16 %v1756
        %v1828 = vunpack.c.h.b16 %v1756
        %v1829 = vunpack.c.l.b16 %v1757
        %v1830 = vunpack.c.l.b16 %v1758
        %v1831 = vunpack.c.h.b16 %v1758
        %v1832 = vunpack.c.l.b16 %v1759
        %v1833 = vunpack.c.l.b16 %v1760
        %v1834 = vunpack.c.h.b16 %v1760
        %v1835 = vunpack.c.l.b16 %v1761
        %v1836 = vunpack.c.l.b16 %v1762
        %v1837 = vunpack.c.h.b16 %v1762
        %v1838 = vunpack.c.l.b16 %v1763
        %v1839 = vunpack.c.l.b16 %v1764
        %v1840 = vunpack.c.h.b16 %v1764
        %v1841 = vunpack.c.l.b16 %v1765
        %v1842 = vunpack.c.l.b16 %v1766
        %v1843 = vunpack.c.h.b16 %v1766
        %v1844 = vunpack.c.l.b16 %v1767
        %v1845 = vunpack.c.l.b16 %v1768
        %v1846 = vunpack.c.h.b16 %v1768
        %v1847 = vunpack.c.l.b16 %v1769
        %v1848 = vunpack.c.l.b16 %v1770
        %v1849 = vunpack.c.h.b16 %v1770
        %v1850 = vunpack.c.l.b16 %v1771
        %v1851 = vunpack.c.l.b16 %v1772
        %v1852 = vunpack.c.h.b16 %v1772
        %v1853 = vunpack.c.l.b16 %v1773
        %v1854 = vunpack.c.l.b16 %v1774
        %v1855 = vunpack.c.h.b16 %v1774
        %v1856 = vunpack.c.l.b16 %v1775
        %v1857 = vpack.c.b16 %v1812, %v1809
        %v1858 = vpack.c.b16 %v1813, %v1810
        %v1859 = vpack.c.b16 %v1814, %v1811
        %v1860 = vpack.c.b16 %v1818, %v1815
        %v1861 = vpack.c.b16 %v1819, %v1816
        %v1862 = vpack.c.b16 %v1820, %v1817
        %v1863 = vpack.c.b16 %v1824, %v1821
        %v1864 = vpack.c.b16 %v1825, %v1822
        %v1865 = vpack.c.b16 %v1826, %v1823
        %v1866 = vpack.c.b16 %v1830, %v1827
        %v1867 = vpack.c.b16 %v1831, %v1828
        %v1868 = vpack.c.b16 %v1832, %v1829
        %v1869 = vpack.c.b16 %v1836, %v1833
        %v1870 = vpack.c.b16 %v1837, %v1834
        %v1871 = vpack.c.b16 %v1838, %v1835
        %v1872 = vpack.c.b16 %v1842, %v1839
        %v1873 = vpack.c.b16 %v1843, %v1840
        %v1874 = vpack.c.b16 %v1844, %v1841
        %v1875 = vpack.c.b16 %v1848, %v1845
        %v1876 = vpack.c.b16 %v1849, %v1846
        %v1877 = vpack.c.b16 %v1850, %v1847
        %v1878 = vpack.c.b16 %v1854, %v1851
        %v1879 = vpack.c.b16 %v1855, %v1852
        %v1880 = vpack.c.b16 %v1856, %v1853
        %v1906 = vlaneseq
        %v1907 = vshrl.u32 %v1906, 7
        %v1908 = vsub.s32 0, %v1907
        %v1909 = vrot.slane %v1776, %v1908
        %v1910 = vlaneseq
        %v1911 = vshrl.u32 %v1910, 7
        %v1912 = vsub.s32 1, %v1911
        %v1913 = vrot.slane %v1776, %v1912
        %v1914 = vlaneseq
        %v1915 = vshrl.u32 %v1914, 7
        %v1916 = vsub.s32 2, %v1915
        %v1917 = vrot.slane %v1776, %v1916
        %1921 = vmatprep.subr.bf16.mxu0 %v1879
        %1922 = vmatpush1.bf16.msra.mxu0 %v1878
        %1923 = vmatprep.subr.bf16.mxu0 %v1876
        %1924 = vmatpush1.bf16.msra.mxu0 %v1875
        %1925 = vmatprep.subr.bf16.mxu0 %v1873
        %1926 = vmatpush1.bf16.msra.mxu0 %v1872
        %1927 = vmatprep.subr.bf16.mxu0 %v1870
        %1928 = vmatpush1.bf16.msra.mxu0 %v1869
        %1929 = vmatprep.subr.bf16.mxu0 %v1867
        %1930 = vmatpush1.bf16.msra.mxu0 %v1866
        %1931 = vmatprep.subr.bf16.mxu0 %v1864
        %1932 = vmatpush1.bf16.msra.mxu0 %v1863
        %1933 = vmatprep.subr.bf16.mxu0 %v1861
        %1934 = vmatpush1.bf16.msra.mxu0 %v1860
        %1935 = vmatprep.subr.bf16.mxu0 %v1858
        %1936 = vmatpush1.bf16.msra.mxu0 %v1857
        %1937 = vmatprep.subr.bf16.mxu0 0
        %1938 = vmatpush2.bf16.msra.mxu0 0
        %1939 = vmatprep.subr.bf16.mxu0 0
        %1940 = vmatpush2.bf16.msra.mxu0 0
        %1941 = vmatprep.subr.bf16.mxu0 0
        %1942 = vmatpush2.bf16.msra.mxu0 0
        %1943 = vmatprep.subr.bf16.mxu0 0
        %1944 = vmatpush2.bf16.msra.mxu0 0
        %1945 = vmatprep.subr.bf16.mxu0 0
        %1946 = vmatpush2.bf16.msra.mxu0 0
        %1947 = vmatprep.subr.bf16.mxu0 0
        %1948 = vmatpush2.bf16.msra.mxu0 0
        %1949 = vmatprep.subr.bf16.mxu0 0
        %1950 = vmatpush2.bf16.msra.mxu0 0
        %1951 = vmatprep.subr.bf16.mxu0 0
        %1952 = vmatpush2.bf16.msra.mxu0 0
        %1953 = vmatprep.mubr.bf16.mxu0 0
        %1954 = vmatmul.mubr.bf16.gmra.mxu0 %v1743
        %v1955 = vpop.f32.mrf.mxu0
        %v1956 = vadd.f32 %v1909, %v1955
        %v1957 = vpop.f32.mrf.mxu0
        %v1958 = vadd.f32 %v1913, %v1957
        %v1959 = vpop.f32.mrf.mxu0
        %v1960 = vpop.f32.mrf.mxu0
        %1961 = vdwg.mxu0
        %1962 = vmatprep.subr.bf16.mxu0 0
        %1963 = vmatpush1.bf16.msra.mxu0 %v1880
        %1964 = vmatprep.subr.bf16.mxu0 0
        %1965 = vmatpush1.bf16.msra.mxu0 %v1877
        %1966 = vmatprep.subr.bf16.mxu0 0
        %1967 = vmatpush1.bf16.msra.mxu0 %v1874
        %1968 = vmatprep.subr.bf16.mxu0 0
        %1969 = vmatpush1.bf16.msra.mxu0 %v1871
        %1970 = vmatprep.subr.bf16.mxu0 0
        %1971 = vmatpush1.bf16.msra.mxu0 %v1868
        %1972 = vmatprep.subr.bf16.mxu0 0
        %1973 = vmatpush1.bf16.msra.mxu0 %v1865
        %1974 = vmatprep.subr.bf16.mxu0 0
        %1975 = vmatpush1.bf16.msra.mxu0 %v1862
        %1976 = vmatprep.subr.bf16.mxu0 0
        %1977 = vmatpush1.bf16.msra.mxu0 %v1859
        %1978 = vmatprep.subr.bf16.mxu0 0
        %1979 = vmatpush2.bf16.msra.mxu0 0
        %1980 = vmatprep.subr.bf16.mxu0 0
        %1981 = vmatpush2.bf16.msra.mxu0 0
        %1982 = vmatprep.subr.bf16.mxu0 0
        %1983 = vmatpush2.bf16.msra.mxu0 0
        %1984 = vmatprep.subr.bf16.mxu0 0
        %1985 = vmatpush2.bf16.msra.mxu0 0
        %1986 = vmatprep.subr.bf16.mxu0 0
        %1987 = vmatpush2.bf16.msra.mxu0 0
        %1988 = vmatprep.subr.bf16.mxu0 0
        %1989 = vmatpush2.bf16.msra.mxu0 0
        %1990 = vmatprep.subr.bf16.mxu0 0
        %1991 = vmatpush2.bf16.msra.mxu0 0
        %1992 = vmatprep.subr.bf16.mxu0 0
        %1993 = vmatpush2.bf16.msra.mxu0 0
        %1994 = vmatprep.mubr.bf16.mxu0 0
        %1995 = vmatmul.mubr.bf16.gmra.mxu0 %v1743
        %v1996 = vpop.f32.mrf.mxu0
        %v1997 = vadd.f32 %v1917, %v1996
        %v1998 = vpop.f32.mrf.mxu0
        %v1999 = vpop.f32.mrf.mxu0
        %v2000 = vpop.f32.mrf.mxu0
        %2001 = vdwg.mxu0
        %v2002 = vadd.f32 %v1742, %v1956
        %v2003 = vxor.u32 %v2002, 2147483648
        %v2004 = vmul.f32 %v2003, 1.442695
        %v2005 = vpow.pop %v2004
        %v2006 = vadd.f32 %v2005, 1.0
        %v2007 = vrcp.pop %v2006
        %v2008 = vmul.f32 1.0, %v2007
        %v2010 = vrot.slane %v1742, 1
        %v2012 = vadd.f32 %v2010, %v1958
        %v2013 = vxor.u32 %v2012, 2147483648
        %v2014 = vmul.f32 %v2013, 1.442695
        %v2015 = vpow.pop %v2014
        %v2016 = vadd.f32 %v2015, 1.0
        %v2017 = vrcp.pop %v2016
        %v2018 = vmul.f32 1.0, %v2017
        %v2019 = vmul.f32 %v2008, %v1997
        %v2020 = vrot.slane %v1742, 2
        %v2022 = vadd.f32 %v2020, %v2019
        %v2023 = vtanh.pop %v2022
        %v2024 = vsub.f32 1.0, %v2018
        %v2025 = vmul.f32 %v2024, %v2023
        %v2026 = vmul.f32 %v2018, %v1739
        %v2027 = vadd.f32 %v2025, %v2026
        %s2028 = sadd.s32 %s852, 4
        %p2029 = scmp.lt.s32.totalorder %s2028, 10
        %s2030 = scalar_select %p2029, 1, 0
        %v2031 = vstv %s2030
        %vm2032 = vcmp.eq.s32.totalorder %v2031, 1
        %v2033 = vsel %vm2032, %v2027, %v1739
        %2034 = vst [vmem:[%s295 + $0x4] sm:$0x1] %v2033
        %s2035 = scalar_lea.vmem [#allocation3], 5
        %v2036 = vld [vmem:[%s2035] ss:$8 sm:$0x7]
        %v2037 = vpack.c.bf16 %v2033, %v2033
        %v2038 = vld [vmem:[#allocation9] sm:$0xff]
        %v2039 = vld [vmem:[#allocation9 + $0x8] sm:$0xf]
        %v2040 = vld [vmem:[#allocation9 + $0xc] sm:$0xff]
        %v2041 = vld [vmem:[#allocation9 + $0x14] sm:$0xf]
        %v2042 = vld [vmem:[#allocation9 + $0x18] sm:$0xff]
        %v2043 = vld [vmem:[#allocation9 + $0x20] sm:$0xf]
        %v2044 = vld [vmem:[#allocation9 + $0x24] sm:$0xff]
        %v2045 = vld [vmem:[#allocation9 + $0x2c] sm:$0xf]
        %v2046 = vld [vmem:[#allocation9 + $0x30] sm:$0xff]
        %v2047 = vld [vmem:[#allocation9 + $0x38] sm:$0xf]
        %v2048 = vld [vmem:[#allocation9 + $0x3c] sm:$0xff]
        %v2049 = vld [vmem:[#allocation9 + $0x44] sm:$0xf]
        %v2050 = vld [vmem:[#allocation9 + $0x48] sm:$0xff]
        %v2051 = vld [vmem:[#allocation9 + $0x50] sm:$0xf]
        %v2052 = vld [vmem:[#allocation9 + $0x54] sm:$0xff]
        %v2053 = vld [vmem:[#allocation9 + $0x5c] sm:$0xf]
        %v2054 = vld [vmem:[#allocation9 + $0x60] sm:$0xff]
        %v2055 = vld [vmem:[#allocation9 + $0x68] sm:$0xf]
        %v2056 = vld [vmem:[#allocation9 + $0x6c] sm:$0xff]
        %v2057 = vld [vmem:[#allocation9 + $0x74] sm:$0xf]
        %v2058 = vld [vmem:[#allocation9 + $0x78] sm:$0xff]
        %v2059 = vld [vmem:[#allocation9 + $0x80] sm:$0xf]
        %v2060 = vld [vmem:[#allocation9 + $0x84] sm:$0xff]
        %v2061 = vld [vmem:[#allocation9 + $0x8c] sm:$0xf]
        %v2062 = vld [vmem:[#allocation9 + $0x90] sm:$0xff]
        %v2063 = vld [vmem:[#allocation9 + $0x98] sm:$0xf]
        %v2064 = vld [vmem:[#allocation9 + $0x9c] sm:$0xff]
        %v2065 = vld [vmem:[#allocation9 + $0xa4] sm:$0xf]
        %v2066 = vld [vmem:[#allocation9 + $0xa8] sm:$0xff]
        %v2067 = vld [vmem:[#allocation9 + $0xb0] sm:$0xf]
        %v2068 = vld [vmem:[#allocation9 + $0xb4] sm:$0xff]
        %v2069 = vld [vmem:[#allocation9 + $0xbc] sm:$0xf]
        %v2070 = vld [vmem:[%s5] sm:$0x7]
        %v2103 = vunpack.c.l.b16 %v2038
        %v2104 = vunpack.c.h.b16 %v2038
        %v2105 = vunpack.c.l.b16 %v2039
        %v2106 = vunpack.c.l.b16 %v2040
        %v2107 = vunpack.c.h.b16 %v2040
        %v2108 = vunpack.c.l.b16 %v2041
        %v2109 = vunpack.c.l.b16 %v2042
        %v2110 = vunpack.c.h.b16 %v2042
        %v2111 = vunpack.c.l.b16 %v2043
        %v2112 = vunpack.c.l.b16 %v2044
        %v2113 = vunpack.c.h.b16 %v2044
        %v2114 = vunpack.c.l.b16 %v2045
        %v2115 = vunpack.c.l.b16 %v2046
        %v2116 = vunpack.c.h.b16 %v2046
        %v2117 = vunpack.c.l.b16 %v2047
        %v2118 = vunpack.c.l.b16 %v2048
        %v2119 = vunpack.c.h.b16 %v2048
        %v2120 = vunpack.c.l.b16 %v2049
        %v2121 = vunpack.c.l.b16 %v2050
        %v2122 = vunpack.c.h.b16 %v2050
        %v2123 = vunpack.c.l.b16 %v2051
        %v2124 = vunpack.c.l.b16 %v2052
        %v2125 = vunpack.c.h.b16 %v2052
        %v2126 = vunpack.c.l.b16 %v2053
        %v2127 = vunpack.c.l.b16 %v2054
        %v2128 = vunpack.c.h.b16 %v2054
        %v2129 = vunpack.c.l.b16 %v2055
        %v2130 = vunpack.c.l.b16 %v2056
        %v2131 = vunpack.c.h.b16 %v2056
        %v2132 = vunpack.c.l.b16 %v2057
        %v2133 = vunpack.c.l.b16 %v2058
        %v2134 = vunpack.c.h.b16 %v2058
        %v2135 = vunpack.c.l.b16 %v2059
        %v2136 = vunpack.c.l.b16 %v2060
        %v2137 = vunpack.c.h.b16 %v2060
        %v2138 = vunpack.c.l.b16 %v2061
        %v2139 = vunpack.c.l.b16 %v2062
        %v2140 = vunpack.c.h.b16 %v2062
        %v2141 = vunpack.c.l.b16 %v2063
        %v2142 = vunpack.c.l.b16 %v2064
        %v2143 = vunpack.c.h.b16 %v2064
        %v2144 = vunpack.c.l.b16 %v2065
        %v2145 = vunpack.c.l.b16 %v2066
        %v2146 = vunpack.c.h.b16 %v2066
        %v2147 = vunpack.c.l.b16 %v2067
        %v2148 = vunpack.c.l.b16 %v2068
        %v2149 = vunpack.c.h.b16 %v2068
        %v2150 = vunpack.c.l.b16 %v2069
        %v2151 = vpack.c.b16 %v2106, %v2103
        %v2152 = vpack.c.b16 %v2107, %v2104
        %v2153 = vpack.c.b16 %v2108, %v2105
        %v2154 = vpack.c.b16 %v2112, %v2109
        %v2155 = vpack.c.b16 %v2113, %v2110
        %v2156 = vpack.c.b16 %v2114, %v2111
        %v2157 = vpack.c.b16 %v2118, %v2115
        %v2158 = vpack.c.b16 %v2119, %v2116
        %v2159 = vpack.c.b16 %v2120, %v2117
        %v2160 = vpack.c.b16 %v2124, %v2121
        %v2161 = vpack.c.b16 %v2125, %v2122
        %v2162 = vpack.c.b16 %v2126, %v2123
        %v2163 = vpack.c.b16 %v2130, %v2127
        %v2164 = vpack.c.b16 %v2131, %v2128
        %v2165 = vpack.c.b16 %v2132, %v2129
        %v2166 = vpack.c.b16 %v2136, %v2133
        %v2167 = vpack.c.b16 %v2137, %v2134
        %v2168 = vpack.c.b16 %v2138, %v2135
        %v2169 = vpack.c.b16 %v2142, %v2139
        %v2170 = vpack.c.b16 %v2143, %v2140
        %v2171 = vpack.c.b16 %v2144, %v2141
        %v2172 = vpack.c.b16 %v2148, %v2145
        %v2173 = vpack.c.b16 %v2149, %v2146
        %v2174 = vpack.c.b16 %v2150, %v2147
        %v2200 = vlaneseq
        %v2201 = vshrl.u32 %v2200, 7
        %v2202 = vsub.s32 0, %v2201
        %v2203 = vrot.slane %v2070, %v2202
        %v2204 = vlaneseq
        %v2205 = vshrl.u32 %v2204, 7
        %v2206 = vsub.s32 1, %v2205
        %v2207 = vrot.slane %v2070, %v2206
        %v2208 = vlaneseq
        %v2209 = vshrl.u32 %v2208, 7
        %v2210 = vsub.s32 2, %v2209
        %v2211 = vrot.slane %v2070, %v2210
        %2215 = vmatprep.subr.bf16.mxu0 %v2173
        %2216 = vmatpush1.bf16.msra.mxu0 %v2172
        %2217 = vmatprep.subr.bf16.mxu0 %v2170
        %2218 = vmatpush1.bf16.msra.mxu0 %v2169
        %2219 = vmatprep.subr.bf16.mxu0 %v2167
        %2220 = vmatpush1.bf16.msra.mxu0 %v2166
        %2221 = vmatprep.subr.bf16.mxu0 %v2164
        %2222 = vmatpush1.bf16.msra.mxu0 %v2163
        %2223 = vmatprep.subr.bf16.mxu0 %v2161
        %2224 = vmatpush1.bf16.msra.mxu0 %v2160
        %2225 = vmatprep.subr.bf16.mxu0 %v2158
        %2226 = vmatpush1.bf16.msra.mxu0 %v2157
        %2227 = vmatprep.subr.bf16.mxu0 %v2155
        %2228 = vmatpush1.bf16.msra.mxu0 %v2154
        %2229 = vmatprep.subr.bf16.mxu0 %v2152
        %2230 = vmatpush1.bf16.msra.mxu0 %v2151
        %2231 = vmatprep.subr.bf16.mxu0 0
        %2232 = vmatpush2.bf16.msra.mxu0 0
        %2233 = vmatprep.subr.bf16.mxu0 0
        %2234 = vmatpush2.bf16.msra.mxu0 0
        %2235 = vmatprep.subr.bf16.mxu0 0
        %2236 = vmatpush2.bf16.msra.mxu0 0
        %2237 = vmatprep.subr.bf16.mxu0 0
        %2238 = vmatpush2.bf16.msra.mxu0 0
        %2239 = vmatprep.subr.bf16.mxu0 0
        %2240 = vmatpush2.bf16.msra.mxu0 0
        %2241 = vmatprep.subr.bf16.mxu0 0
        %2242 = vmatpush2.bf16.msra.mxu0 0
        %2243 = vmatprep.subr.bf16.mxu0 0
        %2244 = vmatpush2.bf16.msra.mxu0 0
        %2245 = vmatprep.subr.bf16.mxu0 0
        %2246 = vmatpush2.bf16.msra.mxu0 0
        %2247 = vmatprep.mubr.bf16.mxu0 0
        %2248 = vmatmul.mubr.bf16.gmra.mxu0 %v2037
        %v2249 = vpop.f32.mrf.mxu0
        %v2250 = vadd.f32 %v2203, %v2249
        %v2251 = vpop.f32.mrf.mxu0
        %v2252 = vadd.f32 %v2207, %v2251
        %v2253 = vpop.f32.mrf.mxu0
        %v2254 = vpop.f32.mrf.mxu0
        %2255 = vdwg.mxu0
        %2256 = vmatprep.subr.bf16.mxu0 0
        %2257 = vmatpush1.bf16.msra.mxu0 %v2174
        %2258 = vmatprep.subr.bf16.mxu0 0
        %2259 = vmatpush1.bf16.msra.mxu0 %v2171
        %2260 = vmatprep.subr.bf16.mxu0 0
        %2261 = vmatpush1.bf16.msra.mxu0 %v2168
        %2262 = vmatprep.subr.bf16.mxu0 0
        %2263 = vmatpush1.bf16.msra.mxu0 %v2165
        %2264 = vmatprep.subr.bf16.mxu0 0
        %2265 = vmatpush1.bf16.msra.mxu0 %v2162
        %2266 = vmatprep.subr.bf16.mxu0 0
        %2267 = vmatpush1.bf16.msra.mxu0 %v2159
        %2268 = vmatprep.subr.bf16.mxu0 0
        %2269 = vmatpush1.bf16.msra.mxu0 %v2156
        %2270 = vmatprep.subr.bf16.mxu0 0
        %2271 = vmatpush1.bf16.msra.mxu0 %v2153
        %2272 = vmatprep.subr.bf16.mxu0 0
        %2273 = vmatpush2.bf16.msra.mxu0 0
        %2274 = vmatprep.subr.bf16.mxu0 0
        %2275 = vmatpush2.bf16.msra.mxu0 0
        %2276 = vmatprep.subr.bf16.mxu0 0
        %2277 = vmatpush2.bf16.msra.mxu0 0
        %2278 = vmatprep.subr.bf16.mxu0 0
        %2279 = vmatpush2.bf16.msra.mxu0 0
        %2280 = vmatprep.subr.bf16.mxu0 0
        %2281 = vmatpush2.bf16.msra.mxu0 0
        %2282 = vmatprep.subr.bf16.mxu0 0
        %2283 = vmatpush2.bf16.msra.mxu0 0
        %2284 = vmatprep.subr.bf16.mxu0 0
        %2285 = vmatpush2.bf16.msra.mxu0 0
        %2286 = vmatprep.subr.bf16.mxu0 0
        %2287 = vmatpush2.bf16.msra.mxu0 0
        %2288 = vmatprep.mubr.bf16.mxu0 0
        %2289 = vmatmul.mubr.bf16.gmra.mxu0 %v2037
        %v2290 = vpop.f32.mrf.mxu0
        %v2291 = vadd.f32 %v2211, %v2290
        %v2292 = vpop.f32.mrf.mxu0
        %v2293 = vpop.f32.mrf.mxu0
        %v2294 = vpop.f32.mrf.mxu0
        %2295 = vdwg.mxu0
        %v2296 = vadd.f32 %v2036, %v2250
        %v2297 = vxor.u32 %v2296, 2147483648
        %v2298 = vmul.f32 %v2297, 1.442695
        %v2299 = vpow.pop %v2298
        %v2300 = vadd.f32 %v2299, 1.0
        %v2301 = vrcp.pop %v2300
        %v2302 = vmul.f32 1.0, %v2301
        %v2304 = vrot.slane %v2036, 1
        %v2306 = vadd.f32 %v2304, %v2252
        %v2307 = vxor.u32 %v2306, 2147483648
        %v2308 = vmul.f32 %v2307, 1.442695
        %v2309 = vpow.pop %v2308
        %v2310 = vadd.f32 %v2309, 1.0
        %v2311 = vrcp.pop %v2310
        %v2312 = vmul.f32 1.0, %v2311
        %v2313 = vmul.f32 %v2302, %v2291
        %v2314 = vrot.slane %v2036, 2
        %v2316 = vadd.f32 %v2314, %v2313
        %v2317 = vtanh.pop %v2316
        %v2318 = vsub.f32 1.0, %v2312
        %v2319 = vmul.f32 %v2318, %v2317
        %v2320 = vmul.f32 %v2312, %v2033
        %v2321 = vadd.f32 %v2319, %v2320
        %s2322 = sadd.s32 %s852, 5
        %p2323 = scmp.lt.s32.totalorder %s2322, 10
        %s2324 = scalar_select %p2323, 1, 0
        %v2325 = vstv %s2324
        %vm2326 = vcmp.eq.s32.totalorder %v2325, 1
        %v2327 = vsel %vm2326, %v2321, %v2033
        %2328 = vst [vmem:[%s295 + $0x5] sm:$0x1] %v2327
        %s2329 = scalar_lea.vmem [#allocation3], 6
        %v2330 = vld [vmem:[%s2329] ss:$8 sm:$0x7]
        %v2331 = vpack.c.bf16 %v2327, %v2327
        %v2332 = vld [vmem:[#allocation9] sm:$0xff]
        %v2333 = vld [vmem:[#allocation9 + $0x8] sm:$0xf]
        %v2334 = vld [vmem:[#allocation9 + $0xc] sm:$0xff]
        %v2335 = vld [vmem:[#allocation9 + $0x14] sm:$0xf]
        %v2336 = vld [vmem:[#allocation9 + $0x18] sm:$0xff]
        %v2337 = vld [vmem:[#allocation9 + $0x20] sm:$0xf]
        %v2338 = vld [vmem:[#allocation9 + $0x24] sm:$0xff]
        %v2339 = vld [vmem:[#allocation9 + $0x2c] sm:$0xf]
        %v2340 = vld [vmem:[#allocation9 + $0x30] sm:$0xff]
        %v2341 = vld [vmem:[#allocation9 + $0x38] sm:$0xf]
        %v2342 = vld [vmem:[#allocation9 + $0x3c] sm:$0xff]
        %v2343 = vld [vmem:[#allocation9 + $0x44] sm:$0xf]
        %v2344 = vld [vmem:[#allocation9 + $0x48] sm:$0xff]
        %v2345 = vld [vmem:[#allocation9 + $0x50] sm:$0xf]
        %v2346 = vld [vmem:[#allocation9 + $0x54] sm:$0xff]
        %v2347 = vld [vmem:[#allocation9 + $0x5c] sm:$0xf]
        %v2348 = vld [vmem:[#allocation9 + $0x60] sm:$0xff]
        %v2349 = vld [vmem:[#allocation9 + $0x68] sm:$0xf]
        %v2350 = vld [vmem:[#allocation9 + $0x6c] sm:$0xff]
        %v2351 = vld [vmem:[#allocation9 + $0x74] sm:$0xf]
        %v2352 = vld [vmem:[#allocation9 + $0x78] sm:$0xff]
        %v2353 = vld [vmem:[#allocation9 + $0x80] sm:$0xf]
        %v2354 = vld [vmem:[#allocation9 + $0x84] sm:$0xff]
        %v2355 = vld [vmem:[#allocation9 + $0x8c] sm:$0xf]
        %v2356 = vld [vmem:[#allocation9 + $0x90] sm:$0xff]
        %v2357 = vld [vmem:[#allocation9 + $0x98] sm:$0xf]
        %v2358 = vld [vmem:[#allocation9 + $0x9c] sm:$0xff]
        %v2359 = vld [vmem:[#allocation9 + $0xa4] sm:$0xf]
        %v2360 = vld [vmem:[#allocation9 + $0xa8] sm:$0xff]
        %v2361 = vld [vmem:[#allocation9 + $0xb0] sm:$0xf]
        %v2362 = vld [vmem:[#allocation9 + $0xb4] sm:$0xff]
        %v2363 = vld [vmem:[#allocation9 + $0xbc] sm:$0xf]
        %v2364 = vld [vmem:[%s5] sm:$0x7]
        %v2397 = vunpack.c.l.b16 %v2332
        %v2398 = vunpack.c.h.b16 %v2332
        %v2399 = vunpack.c.l.b16 %v2333
        %v2400 = vunpack.c.l.b16 %v2334
        %v2401 = vunpack.c.h.b16 %v2334
        %v2402 = vunpack.c.l.b16 %v2335
        %v2403 = vunpack.c.l.b16 %v2336
        %v2404 = vunpack.c.h.b16 %v2336
        %v2405 = vunpack.c.l.b16 %v2337
        %v2406 = vunpack.c.l.b16 %v2338
        %v2407 = vunpack.c.h.b16 %v2338
        %v2408 = vunpack.c.l.b16 %v2339
        %v2409 = vunpack.c.l.b16 %v2340
        %v2410 = vunpack.c.h.b16 %v2340
        %v2411 = vunpack.c.l.b16 %v2341
        %v2412 = vunpack.c.l.b16 %v2342
        %v2413 = vunpack.c.h.b16 %v2342
        %v2414 = vunpack.c.l.b16 %v2343
        %v2415 = vunpack.c.l.b16 %v2344
        %v2416 = vunpack.c.h.b16 %v2344
        %v2417 = vunpack.c.l.b16 %v2345
        %v2418 = vunpack.c.l.b16 %v2346
        %v2419 = vunpack.c.h.b16 %v2346
        %v2420 = vunpack.c.l.b16 %v2347
        %v2421 = vunpack.c.l.b16 %v2348
        %v2422 = vunpack.c.h.b16 %v2348
        %v2423 = vunpack.c.l.b16 %v2349
        %v2424 = vunpack.c.l.b16 %v2350
        %v2425 = vunpack.c.h.b16 %v2350
        %v2426 = vunpack.c.l.b16 %v2351
        %v2427 = vunpack.c.l.b16 %v2352
        %v2428 = vunpack.c.h.b16 %v2352
        %v2429 = vunpack.c.l.b16 %v2353
        %v2430 = vunpack.c.l.b16 %v2354
        %v2431 = vunpack.c.h.b16 %v2354
        %v2432 = vunpack.c.l.b16 %v2355
        %v2433 = vunpack.c.l.b16 %v2356
        %v2434 = vunpack.c.h.b16 %v2356
        %v2435 = vunpack.c.l.b16 %v2357
        %v2436 = vunpack.c.l.b16 %v2358
        %v2437 = vunpack.c.h.b16 %v2358
        %v2438 = vunpack.c.l.b16 %v2359
        %v2439 = vunpack.c.l.b16 %v2360
        %v2440 = vunpack.c.h.b16 %v2360
        %v2441 = vunpack.c.l.b16 %v2361
        %v2442 = vunpack.c.l.b16 %v2362
        %v2443 = vunpack.c.h.b16 %v2362
        %v2444 = vunpack.c.l.b16 %v2363
        %v2445 = vpack.c.b16 %v2400, %v2397
        %v2446 = vpack.c.b16 %v2401, %v2398
        %v2447 = vpack.c.b16 %v2402, %v2399
        %v2448 = vpack.c.b16 %v2406, %v2403
        %v2449 = vpack.c.b16 %v2407, %v2404
        %v2450 = vpack.c.b16 %v2408, %v2405
        %v2451 = vpack.c.b16 %v2412, %v2409
        %v2452 = vpack.c.b16 %v2413, %v2410
        %v2453 = vpack.c.b16 %v2414, %v2411
        %v2454 = vpack.c.b16 %v2418, %v2415
        %v2455 = vpack.c.b16 %v2419, %v2416
        %v2456 = vpack.c.b16 %v2420, %v2417
        %v2457 = vpack.c.b16 %v2424, %v2421
        %v2458 = vpack.c.b16 %v2425, %v2422
        %v2459 = vpack.c.b16 %v2426, %v2423
        %v2460 = vpack.c.b16 %v2430, %v2427
        %v2461 = vpack.c.b16 %v2431, %v2428
        %v2462 = vpack.c.b16 %v2432, %v2429
        %v2463 = vpack.c.b16 %v2436, %v2433
        %v2464 = vpack.c.b16 %v2437, %v2434
        %v2465 = vpack.c.b16 %v2438, %v2435
        %v2466 = vpack.c.b16 %v2442, %v2439
        %v2467 = vpack.c.b16 %v2443, %v2440
        %v2468 = vpack.c.b16 %v2444, %v2441
        %v2494 = vlaneseq
        %v2495 = vshrl.u32 %v2494, 7
        %v2496 = vsub.s32 0, %v2495
        %v2497 = vrot.slane %v2364, %v2496
        %v2498 = vlaneseq
        %v2499 = vshrl.u32 %v2498, 7
        %v2500 = vsub.s32 1, %v2499
        %v2501 = vrot.slane %v2364, %v2500
        %v2502 = vlaneseq
        %v2503 = vshrl.u32 %v2502, 7
        %v2504 = vsub.s32 2, %v2503
        %v2505 = vrot.slane %v2364, %v2504
        %2509 = vmatprep.subr.bf16.mxu0 %v2467
        %2510 = vmatpush1.bf16.msra.mxu0 %v2466
        %2511 = vmatprep.subr.bf16.mxu0 %v2464
        %2512 = vmatpush1.bf16.msra.mxu0 %v2463
        %2513 = vmatprep.subr.bf16.mxu0 %v2461
        %2514 = vmatpush1.bf16.msra.mxu0 %v2460
        %2515 = vmatprep.subr.bf16.mxu0 %v2458
        %2516 = vmatpush1.bf16.msra.mxu0 %v2457
        %2517 = vmatprep.subr.bf16.mxu0 %v2455
        %2518 = vmatpush1.bf16.msra.mxu0 %v2454
        %2519 = vmatprep.subr.bf16.mxu0 %v2452
        %2520 = vmatpush1.bf16.msra.mxu0 %v2451
        %2521 = vmatprep.subr.bf16.mxu0 %v2449
        %2522 = vmatpush1.bf16.msra.mxu0 %v2448
        %2523 = vmatprep.subr.bf16.mxu0 %v2446
        %2524 = vmatpush1.bf16.msra.mxu0 %v2445
        %2525 = vmatprep.subr.bf16.mxu0 0
        %2526 = vmatpush2.bf16.msra.mxu0 0
        %2527 = vmatprep.subr.bf16.mxu0 0
        %2528 = vmatpush2.bf16.msra.mxu0 0
        %2529 = vmatprep.subr.bf16.mxu0 0
        %2530 = vmatpush2.bf16.msra.mxu0 0
        %2531 = vmatprep.subr.bf16.mxu0 0
        %2532 = vmatpush2.bf16.msra.mxu0 0
        %2533 = vmatprep.subr.bf16.mxu0 0
        %2534 = vmatpush2.bf16.msra.mxu0 0
        %2535 = vmatprep.subr.bf16.mxu0 0
        %2536 = vmatpush2.bf16.msra.mxu0 0
        %2537 = vmatprep.subr.bf16.mxu0 0
        %2538 = vmatpush2.bf16.msra.mxu0 0
        %2539 = vmatprep.subr.bf16.mxu0 0
        %2540 = vmatpush2.bf16.msra.mxu0 0
        %2541 = vmatprep.mubr.bf16.mxu0 0
        %2542 = vmatmul.mubr.bf16.gmra.mxu0 %v2331
        %v2543 = vpop.f32.mrf.mxu0
        %v2544 = vadd.f32 %v2497, %v2543
        %v2545 = vpop.f32.mrf.mxu0
        %v2546 = vadd.f32 %v2501, %v2545
        %v2547 = vpop.f32.mrf.mxu0
        %v2548 = vpop.f32.mrf.mxu0
        %2549 = vdwg.mxu0
        %2550 = vmatprep.subr.bf16.mxu0 0
        %2551 = vmatpush1.bf16.msra.mxu0 %v2468
        %2552 = vmatprep.subr.bf16.mxu0 0
        %2553 = vmatpush1.bf16.msra.mxu0 %v2465
        %2554 = vmatprep.subr.bf16.mxu0 0
        %2555 = vmatpush1.bf16.msra.mxu0 %v2462
        %2556 = vmatprep.subr.bf16.mxu0 0
        %2557 = vmatpush1.bf16.msra.mxu0 %v2459
        %2558 = vmatprep.subr.bf16.mxu0 0
        %2559 = vmatpush1.bf16.msra.mxu0 %v2456
        %2560 = vmatprep.subr.bf16.mxu0 0
        %2561 = vmatpush1.bf16.msra.mxu0 %v2453
        %2562 = vmatprep.subr.bf16.mxu0 0
        %2563 = vmatpush1.bf16.msra.mxu0 %v2450
        %2564 = vmatprep.subr.bf16.mxu0 0
        %2565 = vmatpush1.bf16.msra.mxu0 %v2447
        %2566 = vmatprep.subr.bf16.mxu0 0
        %2567 = vmatpush2.bf16.msra.mxu0 0
        %2568 = vmatprep.subr.bf16.mxu0 0
        %2569 = vmatpush2.bf16.msra.mxu0 0
        %2570 = vmatprep.subr.bf16.mxu0 0
        %2571 = vmatpush2.bf16.msra.mxu0 0
        %2572 = vmatprep.subr.bf16.mxu0 0
        %2573 = vmatpush2.bf16.msra.mxu0 0
        %2574 = vmatprep.subr.bf16.mxu0 0
        %2575 = vmatpush2.bf16.msra.mxu0 0
        %2576 = vmatprep.subr.bf16.mxu0 0
        %2577 = vmatpush2.bf16.msra.mxu0 0
        %2578 = vmatprep.subr.bf16.mxu0 0
        %2579 = vmatpush2.bf16.msra.mxu0 0
        %2580 = vmatprep.subr.bf16.mxu0 0
        %2581 = vmatpush2.bf16.msra.mxu0 0
        %2582 = vmatprep.mubr.bf16.mxu0 0
        %2583 = vmatmul.mubr.bf16.gmra.mxu0 %v2331
        %v2584 = vpop.f32.mrf.mxu0
        %v2585 = vadd.f32 %v2505, %v2584
        %v2586 = vpop.f32.mrf.mxu0
        %v2587 = vpop.f32.mrf.mxu0
        %v2588 = vpop.f32.mrf.mxu0
        %2589 = vdwg.mxu0
        %v2590 = vadd.f32 %v2330, %v2544
        %v2591 = vxor.u32 %v2590, 2147483648
        %v2592 = vmul.f32 %v2591, 1.442695
        %v2593 = vpow.pop %v2592
        %v2594 = vadd.f32 %v2593, 1.0
        %v2595 = vrcp.pop %v2594
        %v2596 = vmul.f32 1.0, %v2595
        %v2598 = vrot.slane %v2330, 1
        %v2600 = vadd.f32 %v2598, %v2546
        %v2601 = vxor.u32 %v2600, 2147483648
        %v2602 = vmul.f32 %v2601, 1.442695
        %v2603 = vpow.pop %v2602
        %v2604 = vadd.f32 %v2603, 1.0
        %v2605 = vrcp.pop %v2604
        %v2606 = vmul.f32 1.0, %v2605
        %v2607 = vmul.f32 %v2596, %v2585
        %v2608 = vrot.slane %v2330, 2
        %v2610 = vadd.f32 %v2608, %v2607
        %v2611 = vtanh.pop %v2610
        %v2612 = vsub.f32 1.0, %v2606
        %v2613 = vmul.f32 %v2612, %v2611
        %v2614 = vmul.f32 %v2606, %v2327
        %v2615 = vadd.f32 %v2613, %v2614
        %s2616 = sadd.s32 %s852, 6
        %p2617 = scmp.lt.s32.totalorder %s2616, 10
        %s2618 = scalar_select %p2617, 1, 0
        %v2619 = vstv %s2618
        %vm2620 = vcmp.eq.s32.totalorder %v2619, 1
        %v2621 = vsel %vm2620, %v2615, %v2327
        %2622 = vst [vmem:[%s295 + $0x6] sm:$0x1] %v2621
        %s2623 = scalar_lea.vmem [#allocation3], 7
        %v2624 = vld [vmem:[%s2623] ss:$8 sm:$0x7]
        %v2625 = vpack.c.bf16 %v2621, %v2621
        %v2626 = vld [vmem:[#allocation9] sm:$0xff]
        %v2627 = vld [vmem:[#allocation9 + $0x8] sm:$0xf]
        %v2628 = vld [vmem:[#allocation9 + $0xc] sm:$0xff]
        %v2629 = vld [vmem:[#allocation9 + $0x14] sm:$0xf]
        %v2630 = vld [vmem:[#allocation9 + $0x18] sm:$0xff]
        %v2631 = vld [vmem:[#allocation9 + $0x20] sm:$0xf]
        %v2632 = vld [vmem:[#allocation9 + $0x24] sm:$0xff]
        %v2633 = vld [vmem:[#allocation9 + $0x2c] sm:$0xf]
        %v2634 = vld [vmem:[#allocation9 + $0x30] sm:$0xff]
        %v2635 = vld [vmem:[#allocation9 + $0x38] sm:$0xf]
        %v2636 = vld [vmem:[#allocation9 + $0x3c] sm:$0xff]
        %v2637 = vld [vmem:[#allocation9 + $0x44] sm:$0xf]
        %v2638 = vld [vmem:[#allocation9 + $0x48] sm:$0xff]
        %v2639 = vld [vmem:[#allocation9 + $0x50] sm:$0xf]
        %v2640 = vld [vmem:[#allocation9 + $0x54] sm:$0xff]
        %v2641 = vld [vmem:[#allocation9 + $0x5c] sm:$0xf]
        %v2642 = vld [vmem:[#allocation9 + $0x60] sm:$0xff]
        %v2643 = vld [vmem:[#allocation9 + $0x68] sm:$0xf]
        %v2644 = vld [vmem:[#allocation9 + $0x6c] sm:$0xff]
        %v2645 = vld [vmem:[#allocation9 + $0x74] sm:$0xf]
        %v2646 = vld [vmem:[#allocation9 + $0x78] sm:$0xff]
        %v2647 = vld [vmem:[#allocation9 + $0x80] sm:$0xf]
        %v2648 = vld [vmem:[#allocation9 + $0x84] sm:$0xff]
        %v2649 = vld [vmem:[#allocation9 + $0x8c] sm:$0xf]
        %v2650 = vld [vmem:[#allocation9 + $0x90] sm:$0xff]
        %v2651 = vld [vmem:[#allocation9 + $0x98] sm:$0xf]
        %v2652 = vld [vmem:[#allocation9 + $0x9c] sm:$0xff]
        %v2653 = vld [vmem:[#allocation9 + $0xa4] sm:$0xf]
        %v2654 = vld [vmem:[#allocation9 + $0xa8] sm:$0xff]
        %v2655 = vld [vmem:[#allocation9 + $0xb0] sm:$0xf]
        %v2656 = vld [vmem:[#allocation9 + $0xb4] sm:$0xff]
        %v2657 = vld [vmem:[#allocation9 + $0xbc] sm:$0xf]
        %v2658 = vld [vmem:[%s5] sm:$0x7]
        %v2691 = vunpack.c.l.b16 %v2626
        %v2692 = vunpack.c.h.b16 %v2626
        %v2693 = vunpack.c.l.b16 %v2627
        %v2694 = vunpack.c.l.b16 %v2628
        %v2695 = vunpack.c.h.b16 %v2628
        %v2696 = vunpack.c.l.b16 %v2629
        %v2697 = vunpack.c.l.b16 %v2630
        %v2698 = vunpack.c.h.b16 %v2630
        %v2699 = vunpack.c.l.b16 %v2631
        %v2700 = vunpack.c.l.b16 %v2632
        %v2701 = vunpack.c.h.b16 %v2632
        %v2702 = vunpack.c.l.b16 %v2633
        %v2703 = vunpack.c.l.b16 %v2634
        %v2704 = vunpack.c.h.b16 %v2634
        %v2705 = vunpack.c.l.b16 %v2635
        %v2706 = vunpack.c.l.b16 %v2636
        %v2707 = vunpack.c.h.b16 %v2636
        %v2708 = vunpack.c.l.b16 %v2637
        %v2709 = vunpack.c.l.b16 %v2638
        %v2710 = vunpack.c.h.b16 %v2638
        %v2711 = vunpack.c.l.b16 %v2639
        %v2712 = vunpack.c.l.b16 %v2640
        %v2713 = vunpack.c.h.b16 %v2640
        %v2714 = vunpack.c.l.b16 %v2641
        %v2715 = vunpack.c.l.b16 %v2642
        %v2716 = vunpack.c.h.b16 %v2642
        %v2717 = vunpack.c.l.b16 %v2643
        %v2718 = vunpack.c.l.b16 %v2644
        %v2719 = vunpack.c.h.b16 %v2644
        %v2720 = vunpack.c.l.b16 %v2645
        %v2721 = vunpack.c.l.b16 %v2646
        %v2722 = vunpack.c.h.b16 %v2646
        %v2723 = vunpack.c.l.b16 %v2647
        %v2724 = vunpack.c.l.b16 %v2648
        %v2725 = vunpack.c.h.b16 %v2648
        %v2726 = vunpack.c.l.b16 %v2649
        %v2727 = vunpack.c.l.b16 %v2650
        %v2728 = vunpack.c.h.b16 %v2650
        %v2729 = vunpack.c.l.b16 %v2651
        %v2730 = vunpack.c.l.b16 %v2652
        %v2731 = vunpack.c.h.b16 %v2652
        %v2732 = vunpack.c.l.b16 %v2653
        %v2733 = vunpack.c.l.b16 %v2654
        %v2734 = vunpack.c.h.b16 %v2654
        %v2735 = vunpack.c.l.b16 %v2655
        %v2736 = vunpack.c.l.b16 %v2656
        %v2737 = vunpack.c.h.b16 %v2656
        %v2738 = vunpack.c.l.b16 %v2657
        %v2739 = vpack.c.b16 %v2694, %v2691
        %v2740 = vpack.c.b16 %v2695, %v2692
        %v2741 = vpack.c.b16 %v2696, %v2693
        %v2742 = vpack.c.b16 %v2700, %v2697
        %v2743 = vpack.c.b16 %v2701, %v2698
        %v2744 = vpack.c.b16 %v2702, %v2699
        %v2745 = vpack.c.b16 %v2706, %v2703
        %v2746 = vpack.c.b16 %v2707, %v2704
        %v2747 = vpack.c.b16 %v2708, %v2705
        %v2748 = vpack.c.b16 %v2712, %v2709
        %v2749 = vpack.c.b16 %v2713, %v2710
        %v2750 = vpack.c.b16 %v2714, %v2711
        %v2751 = vpack.c.b16 %v2718, %v2715
        %v2752 = vpack.c.b16 %v2719, %v2716
        %v2753 = vpack.c.b16 %v2720, %v2717
        %v2754 = vpack.c.b16 %v2724, %v2721
        %v2755 = vpack.c.b16 %v2725, %v2722
        %v2756 = vpack.c.b16 %v2726, %v2723
        %v2757 = vpack.c.b16 %v2730, %v2727
        %v2758 = vpack.c.b16 %v2731, %v2728
        %v2759 = vpack.c.b16 %v2732, %v2729
        %v2760 = vpack.c.b16 %v2736, %v2733
        %v2761 = vpack.c.b16 %v2737, %v2734
        %v2762 = vpack.c.b16 %v2738, %v2735
        %v2788 = vlaneseq
        %v2789 = vshrl.u32 %v2788, 7
        %v2790 = vsub.s32 0, %v2789
        %v2791 = vrot.slane %v2658, %v2790
        %v2792 = vlaneseq
        %v2793 = vshrl.u32 %v2792, 7
        %v2794 = vsub.s32 1, %v2793
        %v2795 = vrot.slane %v2658, %v2794
        %v2796 = vlaneseq
        %v2797 = vshrl.u32 %v2796, 7
        %v2798 = vsub.s32 2, %v2797
        %v2799 = vrot.slane %v2658, %v2798
        %2803 = vmatprep.subr.bf16.mxu0 %v2761
        %2804 = vmatpush1.bf16.msra.mxu0 %v2760
        %2805 = vmatprep.subr.bf16.mxu0 %v2758
        %2806 = vmatpush1.bf16.msra.mxu0 %v2757
        %2807 = vmatprep.subr.bf16.mxu0 %v2755
        %2808 = vmatpush1.bf16.msra.mxu0 %v2754
        %2809 = vmatprep.subr.bf16.mxu0 %v2752
        %2810 = vmatpush1.bf16.msra.mxu0 %v2751
        %2811 = vmatprep.subr.bf16.mxu0 %v2749
        %2812 = vmatpush1.bf16.msra.mxu0 %v2748
        %2813 = vmatprep.subr.bf16.mxu0 %v2746
        %2814 = vmatpush1.bf16.msra.mxu0 %v2745
        %2815 = vmatprep.subr.bf16.mxu0 %v2743
        %2816 = vmatpush1.bf16.msra.mxu0 %v2742
        %2817 = vmatprep.subr.bf16.mxu0 %v2740
        %2818 = vmatpush1.bf16.msra.mxu0 %v2739
        %2819 = vmatprep.subr.bf16.mxu0 0
        %2820 = vmatpush2.bf16.msra.mxu0 0
        %2821 = vmatprep.subr.bf16.mxu0 0
        %2822 = vmatpush2.bf16.msra.mxu0 0
        %2823 = vmatprep.subr.bf16.mxu0 0
        %2824 = vmatpush2.bf16.msra.mxu0 0
        %2825 = vmatprep.subr.bf16.mxu0 0
        %2826 = vmatpush2.bf16.msra.mxu0 0
        %2827 = vmatprep.subr.bf16.mxu0 0
        %2828 = vmatpush2.bf16.msra.mxu0 0
        %2829 = vmatprep.subr.bf16.mxu0 0
        %2830 = vmatpush2.bf16.msra.mxu0 0
        %2831 = vmatprep.subr.bf16.mxu0 0
        %2832 = vmatpush2.bf16.msra.mxu0 0
        %2833 = vmatprep.subr.bf16.mxu0 0
        %2834 = vmatpush2.bf16.msra.mxu0 0
        %2835 = vmatprep.mubr.bf16.mxu0 0
        %2836 = vmatmul.mubr.bf16.gmra.mxu0 %v2625
        %v2837 = vpop.f32.mrf.mxu0
        %v2838 = vadd.f32 %v2791, %v2837
        %v2839 = vpop.f32.mrf.mxu0
        %v2840 = vadd.f32 %v2795, %v2839
        %v2841 = vpop.f32.mrf.mxu0
        %v2842 = vpop.f32.mrf.mxu0
        %2843 = vdwg.mxu0
        %2844 = vmatprep.subr.bf16.mxu0 0
        %2845 = vmatpush1.bf16.msra.mxu0 %v2762
        %2846 = vmatprep.subr.bf16.mxu0 0
        %2847 = vmatpush1.bf16.msra.mxu0 %v2759
        %2848 = vmatprep.subr.bf16.mxu0 0
        %2849 = vmatpush1.bf16.msra.mxu0 %v2756
        %2850 = vmatprep.subr.bf16.mxu0 0
        %2851 = vmatpush1.bf16.msra.mxu0 %v2753
        %2852 = vmatprep.subr.bf16.mxu0 0
        %2853 = vmatpush1.bf16.msra.mxu0 %v2750
        %2854 = vmatprep.subr.bf16.mxu0 0
        %2855 = vmatpush1.bf16.msra.mxu0 %v2747
        %2856 = vmatprep.subr.bf16.mxu0 0
        %2857 = vmatpush1.bf16.msra.mxu0 %v2744
        %2858 = vmatprep.subr.bf16.mxu0 0
        %2859 = vmatpush1.bf16.msra.mxu0 %v2741
        %2860 = vmatprep.subr.bf16.mxu0 0
        %2861 = vmatpush2.bf16.msra.mxu0 0
        %2862 = vmatprep.subr.bf16.mxu0 0
        %2863 = vmatpush2.bf16.msra.mxu0 0
        %2864 = vmatprep.subr.bf16.mxu0 0
        %2865 = vmatpush2.bf16.msra.mxu0 0
        %2866 = vmatprep.subr.bf16.mxu0 0
        %2867 = vmatpush2.bf16.msra.mxu0 0
        %2868 = vmatprep.subr.bf16.mxu0 0
        %2869 = vmatpush2.bf16.msra.mxu0 0
        %2870 = vmatprep.subr.bf16.mxu0 0
        %2871 = vmatpush2.bf16.msra.mxu0 0
        %2872 = vmatprep.subr.bf16.mxu0 0
        %2873 = vmatpush2.bf16.msra.mxu0 0
        %2874 = vmatprep.subr.bf16.mxu0 0
        %2875 = vmatpush2.bf16.msra.mxu0 0
        %2876 = vmatprep.mubr.bf16.mxu0 0
        %2877 = vmatmul.mubr.bf16.gmra.mxu0 %v2625
        %v2878 = vpop.f32.mrf.mxu0
        %v2879 = vadd.f32 %v2799, %v2878
        %v2880 = vpop.f32.mrf.mxu0
        %v2881 = vpop.f32.mrf.mxu0
        %v2882 = vpop.f32.mrf.mxu0
        %2883 = vdwg.mxu0
        %v2884 = vadd.f32 %v2624, %v2838
        %v2885 = vxor.u32 %v2884, 2147483648
        %v2886 = vmul.f32 %v2885, 1.442695
        %v2887 = vpow.pop %v2886
        %v2888 = vadd.f32 %v2887, 1.0
        %v2889 = vrcp.pop %v2888
        %v2890 = vmul.f32 1.0, %v2889
        %v2892 = vrot.slane %v2624, 1
        %v2894 = vadd.f32 %v2892, %v2840
        %v2895 = vxor.u32 %v2894, 2147483648
        %v2896 = vmul.f32 %v2895, 1.442695
        %v2897 = vpow.pop %v2896
        %v2898 = vadd.f32 %v2897, 1.0
        %v2899 = vrcp.pop %v2898
        %v2900 = vmul.f32 1.0, %v2899
        %v2901 = vmul.f32 %v2890, %v2879
        %v2902 = vrot.slane %v2624, 2
        %v2904 = vadd.f32 %v2902, %v2901
        %v2905 = vtanh.pop %v2904
        %v2906 = vsub.f32 1.0, %v2900
        %v2907 = vmul.f32 %v2906, %v2905
        %v2908 = vmul.f32 %v2900, %v2621
        %v2909 = vadd.f32 %v2907, %v2908
        %s2910 = sadd.s32 %s852, 7
        %p2911 = scmp.lt.s32.totalorder %s2910, 10
        %s2912 = scalar_select %p2911, 1, 0
        %v2913 = vstv %s2912
        %vm2914 = vcmp.eq.s32.totalorder %v2913, 1
        %v2915 = vsel %vm2914, %v2909, %v2621
        %2916 = vst [vmem:[%s295 + $0x7] sm:$0x1] %v2915
        %2917 = vst [vmem:[#allocation2] sm:$0x1] %v2915
        %s2918 = sand.u32 %s163, 1
        %s2919 = scalar_lea.sflag [#allocation6], %s2918
        %s2920 = sand.u32 %s163, 1
        %s2921 = smul.addr %s2920, 8
        %s2922 = scalar_lea.vmem [#allocation10], %s2921
        // Predicated region
        $region61: #{tpu_custom_call.1} parent=43 // pred_check
          %p2923 = pneg %p173
        $region62: #{tpu_custom_call.1} parent=43 // pred_check_branch
          %2925 = sbr.rel (%p2923) target = $region64
        $region63: #{tpu_custom_call.1} parent=43 // pred_region
          %s2927 = ssub.s32 128, 128
          %2928 = vsyncadd %s2919, %s2927
          %s2929 = smul.addr %s24, 128
          %s2930 = scalar_lea.hbm %s6, %s2929
          %s2932 = sshll.u32 %s2922, 4
          %s2933 = int_to_ptr.vmem [resolvable:$true] %s2932
          %2935 = dma.vmem_to_hbm [thread:$0]  %s2933, 128, %s2930, %s2919
        $region64: #{tpu_custom_call.1} parent=43 // pred_fallthru
          _
      $region44: #{tpu_custom_call.1} parent=5 // pred_fallthru
        _
      %p2936 = scmp.le.s32.totalorder 2, %s19
      // Predicated region
      $region65: #{tpu_custom_call.1} parent=5 // pred_check
        %p2937 = pneg %p2936
      $region66: #{tpu_custom_call.1} parent=5 // pred_check_branch
        %2939 = sbr.rel (%p2937) target = $region68
      $region67: #{tpu_custom_call.1} parent=5 // pred_region
        %s2940 = ssub.s32 %s19, 2
        // Predicated region
        $region69: #{tpu_custom_call.1} parent=67 // pred_check
          %p2941 = pneg %p179
        $region70: #{tpu_custom_call.1} parent=67 // pred_check_branch
          %2943 = sbr.rel (%p2941) target = $region72
        $region71: #{tpu_custom_call.1} parent=67 // pred_region
          %s2944 = sand.u32 %s164, 1
          %s2945 = scalar_lea.sflag [#allocation6], %s2944
          %s2946 = sand.u32 %s164, 1
          %s2947 = smul.addr %s2946, 8
          %s2948 = scalar_lea.vmem [#allocation10], %s2947
          %2949 = dma.done %s2945, 128
        $region72: #{tpu_custom_call.1} parent=67 // pred_fallthru
          _
      $region68: #{tpu_custom_call.1} parent=5 // pred_fallthru
        _
    $region6: #{tpu_custom_call.1} parent=1 // loop_footer
      %s23 = sadd.s32 1, %s19
    $region7: #{tpu_custom_call.1} parent=1 // loop_footer_branch
      %18 = sbr.rel target = $region3
    $region8: #{tpu_custom_call.1} parent=1 // loop_exit
      _
    %2950 = vsyncpa [#allocation5], 1
    %s2951 = scalar_lea.sflag [#allocation5], 1
    %2952 = vsyncpa %s2951, 1
    %2953 = vsyncpa [#allocation8], 1
    %2954 = vsyncpa [#allocation6], 1
    %s2955 = scalar_lea.sflag [#allocation6], 1
    %2956 = vsyncpa %s2955, 1

// kernel: tpu_custom_call.1
$region0: #{tpu_custom_call.1}
  #allocation0 [shape = 'u32[]', space=smem, size = 0x4, offset = 0x4, fixed_abs, tag = 'smem constant byte address 0x4 - core index']
  #allocation1 [shape = 'u32[144,128]{1,0:T(1,128)}', space=vmem, size = 0x12000, scoped, tag = 'internal scratch']
  #allocation2 [shape = 'f32[1,128]{1,0:T(1,128)}', space=vmem, size = 0x200, scoped, tag = 'scratch operand']
  #allocation3 [shape = 'f32[8,384]{1,0:T(8,128)}', space=vmem, size = 0x3000, scoped, tag = 'scratch operand']
  %s0 = inlined_call_operand.hbm [shape: bf16[16,128], index: 0, kind: input, shape index: {}]
  %s1 = inlined_call_operand.vmem [shape: f32[1,128], index: 1, kind: input, shape index: {}]
  %s2 = inlined_call_operand.hbm [shape: bf16[128,384], index: 2, kind: input, shape index: {}]
  %s3 = inlined_call_operand.hbm [shape: bf16[128,384], index: 3, kind: input, shape index: {}]
  %s4 = inlined_call_operand.vmem [shape: f32[1,384], index: 4, kind: input, shape index: {}]
  %s5 = inlined_call_operand.vmem [shape: f32[1,384], index: 5, kind: input, shape index: {}]
  %s6 = inlined_call_operand.hbm [shape: f32[16,128], index: 6, kind: output, shape index: {}]
  %s7 = sld [smem:[#allocation0]]
  $region73: #{tpu_custom_call.1} parent=0
    _
  %s9 = ssub.s32 1, %s7
  %s10 = scalar_select 0, %s9, %s7
  $region1: #{tpu_custom_call.1} parent=0
    #allocation4 [shape = 'u8[4096]{0}', space=vmem, size = 0x1000, scoped, tag = 'input window, operand 0']
    #allocation5 [shape = 's32[2]{0}', space=sflag, size = 0x8, scoped, tag = 'scoped memory for tpu_custom_call.1']
    #allocation6 [shape = 's32[2]{0}', space=sflag, size = 0x8, scoped, tag = 'scoped memory for tpu_custom_call.1']
    #allocation7 [shape = 'u8[98304]{0}', space=vmem, size = 0x18000, scoped, tag = 'input window, operand 2, single buffered']
    #allocation8 [shape = 's32[1]{0}', space=sflag, size = 0x4, scoped, tag = 'scoped memory for tpu_custom_call.1']
    #allocation9 [shape = 'u8[98304]{0}', space=vmem, size = 0x18000, scoped, tag = 'input window, operand 3, single buffered']
    #allocation10 [shape = 'u8[8192]{0}', space=vmem, size = 0x2000, scoped, tag = 'output window, operand 0']
    %11 = vsyncpa [#allocation5], 0
    %s12 = scalar_lea.sflag [#allocation5], 1
    %13 = vsyncpa %s12, 0
    %14 = vsyncpa [#allocation8], 0
    %15 = vsyncpa [#allocation6], 0
    %s16 = scalar_lea.sflag [#allocation6], 1
    %17 = vsyncpa %s16, 0
    loop: start=0, step=1, limit=4
    $region2: #{tpu_custom_call.1} parent=1 // loop_pre_header
      _
    $region3: #{tpu_custom_call.1} parent=1 // loop_header
      %s19 = sphi 0, %s23
      %p20 = scmp.ge.s32.totalorder %s19, 4
      %s29 = sphi 0, %s31
      %s32 = sphi 0, %s29
      %s33 = sphi 0, %s32
      %s49 = sphi 0, %s33
      %s53 = sphi 0, %s53
      %s55 = sphi 0, %s53
      %s56 = sphi 0, %s55
      %s70 = sphi 0, %s56
      %s74 = sphi 0, %s74
      %s76 = sphi 0, %s74
      %s77 = sphi 0, %s76
      %s91 = sphi 0, %s77
      %s95 = sphi 0, %s95
      %s97 = sphi 0, %s95
      %s98 = sphi 0, %s97
      %s112 = sphi 0, %s98
      %s116 = sphi 0, %s116
      %s118 = sphi 0, %s116
      %s119 = sphi 0, %s118
      %s133 = sphi 0, %s119
      %s137 = sphi 0, %s137
      %s139 = sphi 0, %s137
      %s140 = sphi 0, %s139
      %s154 = sphi 0, %s140
      %s160 = sphi 0, %s162
      %s163 = sphi 0, %s160
      %s164 = sphi 0, %s163
      %s180 = sphi 0, %s164
    $region4: #{tpu_custom_call.1} parent=1 // loop_header_branch
      %22 = sbr.rel (%p20) target = $region8
    $region5: #{tpu_custom_call.1} parent=1 // loop_body
      %s24 = ssub.s32 %s19, 1
      %s25 = ssub.s32 %s19, 2
      %s26 = sadd.s32 %s19, 1
      %s27 = ssub.s32 %s19, %s26
      %p28 = scmp.eq.s32.totalorder %s27, 0
      %s30 = sadd.s32 %s29, 1
      %s31 = scalar_select %p28, %s29, %s30
      %p34 = pneg %p28
      %p35 = scmp.eq.s32.totalorder %s19, 1
      %p36 = por %p34, %p35
      %p37 = scmp.ne.s32.totalorder %s29, %s32
      %p38 = scmp.eq.s32.totalorder %s19, 0
      %p39 = por %p37, %p38
      %p40 = scmp.ne.s32.totalorder %s29, %s32
      %p41 = scmp.eq.s32.totalorder %s24, 1
      %p42 = por %p40, %p41
      %p43 = scmp.ne.s32.totalorder %s32, %s33
      %p44 = scmp.eq.s32.totalorder %s24, 0
      %p45 = por %p43, %p44
      %p46 = scmp.ne.s32.totalorder %s32, %s33
      %p47 = scmp.eq.s32.totalorder %s25, 1
      %p48 = por %p46, %p47
      %p50 = scmp.ne.s32.totalorder %s33, %s49
      %p51 = scmp.eq.s32.totalorder %s25, 0
      %p52 = por %p50, %p51
      %s54 = sadd.s32 %s53, 1
      %p57 = scmp.eq.s32.totalorder %s19, 1
      %p58 = scmp.ne.s32.totalorder %s53, %s55
      %p59 = scmp.eq.s32.totalorder %s19, 0
      %p60 = por %p58, %p59
      %p61 = scmp.ne.s32.totalorder %s53, %s55
      %p62 = scmp.eq.s32.totalorder %s24, 1
      %p63 = por %p61, %p62
      %p64 = scmp.ne.s32.totalorder %s55, %s56
      %p65 = scmp.eq.s32.totalorder %s24, 0
      %p66 = por %p64, %p65
      %p67 = scmp.ne.s32.totalorder %s55, %s56
      %p68 = scmp.eq.s32.totalorder %s25, 1
      %p69 = por %p67, %p68
      %p71 = scmp.ne.s32.totalorder %s56, %s70
      %p72 = scmp.eq.s32.totalorder %s25, 0
      %p73 = por %p71, %p72
      %s75 = sadd.s32 %s74, 1
      %p78 = scmp.eq.s32.totalorder %s19, 1
      %p79 = scmp.ne.s32.totalorder %s74, %s76
      %p80 = scmp.eq.s32.totalorder %s19, 0
      %p81 = por %p79, %p80
      %p82 = scmp.ne.s32.totalorder %s74, %s76
      %p83 = scmp.eq.s32.totalorder %s24, 1
      %p84 = por %p82, %p83
      %p85 = scmp.ne.s32.totalorder %s76, %s77
      %p86 = scmp.eq.s32.totalorder %s24, 0
      %p87 = por %p85, %p86
      %p88 = scmp.ne.s32.totalorder %s76, %s77
      %p89 = scmp.eq.s32.totalorder %s25, 1
      %p90 = por %p88, %p89
      %p92 = scmp.ne.s32.totalorder %s77, %s91
      %p93 = scmp.eq.s32.totalorder %s25, 0
      %p94 = por %p92, %p93
      %s96 = sadd.s32 %s95, 1
      %p99 = scmp.eq.s32.totalorder %s19, 1
      %p100 = scmp.ne.s32.totalorder %s95, %s97
      %p101 = scmp.eq.s32.totalorder %s19, 0
      %p102 = por %p100, %p101
      %p103 = scmp.ne.s32.totalorder %s95, %s97
      %p104 = scmp.eq.s32.totalorder %s24, 1
      %p105 = por %p103, %p104
      %p106 = scmp.ne.s32.totalorder %s97, %s98
      %p107 = scmp.eq.s32.totalorder %s24, 0
      %p108 = por %p106, %p107
      %p109 = scmp.ne.s32.totalorder %s97, %s98
      %p110 = scmp.eq.s32.totalorder %s25, 1
      %p111 = por %p109, %p110
      %p113 = scmp.ne.s32.totalorder %s98, %s112
      %p114 = scmp.eq.s32.totalorder %s25, 0
      %p115 = por %p113, %p114
      %s117 = sadd.s32 %s116, 1
      %p120 = scmp.eq.s32.totalorder %s19, 1
      %p121 = scmp.ne.s32.totalorder %s116, %s118
      %p122 = scmp.eq.s32.totalorder %s19, 0
      %p123 = por %p121, %p122
      %p124 = scmp.ne.s32.totalorder %s116, %s118
      %p125 = scmp.eq.s32.totalorder %s24, 1
      %p126 = por %p124, %p125
      %p127 = scmp.ne.s32.totalorder %s118, %s119
      %p128 = scmp.eq.s32.totalorder %s24, 0
      %p129 = por %p127, %p128
      %p130 = scmp.ne.s32.totalorder %s118, %s119
      %p131 = scmp.eq.s32.totalorder %s25, 1
      %p132 = por %p130, %p131
      %p134 = scmp.ne.s32.totalorder %s119, %s133
      %p135 = scmp.eq.s32.totalorder %s25, 0
      %p136 = por %p134, %p135
      %s138 = sadd.s32 %s137, 1
      %p141 = scmp.eq.s32.totalorder %s19, 1
      %p142 = scmp.ne.s32.totalorder %s137, %s139
      %p143 = scmp.eq.s32.totalorder %s19, 0
      %p144 = por %p142, %p143
      %p145 = scmp.ne.s32.totalorder %s137, %s139
      %p146 = scmp.eq.s32.totalorder %s24, 1
      %p147 = por %p145, %p146
      %p148 = scmp.ne.s32.totalorder %s139, %s140
      %p149 = scmp.eq.s32.totalorder %s24, 0
      %p150 = por %p148, %p149
      %p151 = scmp.ne.s32.totalorder %s139, %s140
      %p152 = scmp.eq.s32.totalorder %s25, 1
      %p153 = por %p151, %p152
      %p155 = scmp.ne.s32.totalorder %s140, %s154
      %p156 = scmp.eq.s32.totalorder %s25, 0
      %p157 = por %p155, %p156
      %s158 = ssub.s32 %s19, %s26
      %p159 = scmp.eq.s32.totalorder %s158, 0
      %s161 = sadd.s32 %s160, 1
      %s162 = scalar_select %p159, %s160, %s161
      %p165 = pneg %p159
      %p166 = scmp.eq.s32.totalorder %s19, 1
      %p167 = por %p165, %p166
      %p168 = scmp.ne.s32.totalorder %s160, %s163
      %p169 = scmp.eq.s32.totalorder %s19, 0
      %p170 = por %p168, %p169
      %p171 = scmp.ne.s32.totalorder %s160, %s163
      %p172 = scmp.eq.s32.totalorder %s24, 1
      %p173 = por %p171, %p172
      %p174 = scmp.ne.s32.totalorder %s163, %s164
      %p175 = scmp.eq.s32.totalorder %s24, 0
      %p176 = por %p174, %p175
      %p177 = scmp.ne.s32.totalorder %s163, %s164
      %p178 = scmp.eq.s32.totalorder %s25, 1
      %p179 = por %p177, %p178
      %p181 = scmp.ne.s32.totalorder %s164, %s180
      %p182 = scmp.eq.s32.totalorder %s25, 0
      %p183 = por %p181, %p182
      %p184 = scmp.le.s32.totalorder 1, %s19
      %p185 = scmp.lt.s32.totalorder %s19, 3
      %p186 = pnand %p184, %p185
      %p187 = pneg %p186
      // Predicated region
      $region9: #{tpu_custom_call.1} parent=5 // pred_check
        _
      $region10: #{tpu_custom_call.1} parent=5 // pred_check_branch
        %189 = sbr.rel (%p186) target = $region12
      $region11: #{tpu_custom_call.1} parent=5 // pred_region
        %s190 = ssub.s32 %s19, 1
        // Predicated region
        $region13: #{tpu_custom_call.1} parent=11 // pred_check
          %p191 = pneg %p66
        $region14: #{tpu_custom_call.1} parent=11 // pred_check_branch
          %193 = sbr.rel (%p191) target = $region16
        $region15: #{tpu_custom_call.1} parent=11 // pred_region
          _
        $region16: #{tpu_custom_call.1} parent=11 // pred_fallthru
          _
        // Predicated region
        $region17: #{tpu_custom_call.1} parent=11 // pred_check
          %p194 = pneg %p87
        $region18: #{tpu_custom_call.1} parent=11 // pred_check_branch
          %196 = sbr.rel (%p194) target = $region20
        $region19: #{tpu_custom_call.1} parent=11 // pred_region
          %s198 = ssub.s32 3072, 3072
          %199 = vsyncadd [#allocation8], %s198
          %s200 = sshll.u32 [#allocation7], 4
          %s201 = int_to_ptr.vmem [resolvable:$true] %s200
          %206 = dma.hbm_to_vmem [thread:$0]  %s2, 3072, %s201, [#allocation8], 192, 192, 12
        $region20: #{tpu_custom_call.1} parent=11 // pred_fallthru
          _
        // Predicated region
        $region21: #{tpu_custom_call.1} parent=11 // pred_check
          %p207 = pneg %p108
        $region22: #{tpu_custom_call.1} parent=11 // pred_check_branch
          %209 = sbr.rel (%p207) target = $region24
        $region23: #{tpu_custom_call.1} parent=11 // pred_region
          %s211 = ssub.s32 3072, 3072
          %212 = vsyncadd [#allocation8], %s211
          %s213 = sshll.u32 [#allocation9], 4
          %s214 = int_to_ptr.vmem [resolvable:$true] %s213
          %219 = dma.hbm_to_vmem [thread:$0]  %s3, 3072, %s214, [#allocation8], 192, 192, 12
        $region24: #{tpu_custom_call.1} parent=11 // pred_fallthru
          _
        // Predicated region
        $region25: #{tpu_custom_call.1} parent=11 // pred_check
          %p220 = pneg %p129
        $region26: #{tpu_custom_call.1} parent=11 // pred_check_branch
          %222 = sbr.rel (%p220) target = $region28
        $region27: #{tpu_custom_call.1} parent=11 // pred_region
          _
        $region28: #{tpu_custom_call.1} parent=11 // pred_fallthru
          _
        // Predicated region
        $region29: #{tpu_custom_call.1} parent=11 // pred_check
          %p223 = pneg %p150
        $region30: #{tpu_custom_call.1} parent=11 // pred_check_branch
          %225 = sbr.rel (%p223) target = $region32
        $region31: #{tpu_custom_call.1} parent=11 // pred_region
          _
        $region32: #{tpu_custom_call.1} parent=11 // pred_fallthru
          _
      $region12: #{tpu_custom_call.1} parent=5 // pred_fallthru
        _
      %p226 = scmp.lt.s32.totalorder %s19, 2
      // Predicated region
      $region33: #{tpu_custom_call.1} parent=5 // pred_check
        %p227 = pneg %p226
      $region34: #{tpu_custom_call.1} parent=5 // pred_check_branch
        %229 = sbr.rel (%p227) target = $region36
      $region35: #{tpu_custom_call.1} parent=5 // pred_region
        // Predicated region
        $region37: #{tpu_custom_call.1} parent=35 // pred_check
          %p230 = pneg %p39
        $region38: #{tpu_custom_call.1} parent=35 // pred_check_branch
          %232 = sbr.rel (%p230) target = $region40
        $region39: #{tpu_custom_call.1} parent=35 // pred_region
          %s233 = sand.u32 %s29, 1
          %s234 = scalar_lea.sflag [#allocation5], %s233
          %s235 = sand.u32 %s29, 1
          %s236 = smul.addr %s235, 4
          %s237 = scalar_lea.vmem [#allocation4], %s236
          %s239 = ssub.s32 64, 64
          %240 = vsyncadd %s234, %s239
          %s241 = smul.addr %s19, 64
          %s242 = scalar_lea.hbm %s0, %s241
          %s244 = sshll.u32 %s237, 4
          %s245 = int_to_ptr.vmem [resolvable:$true] %s244
          %247 = dma.hbm_to_vmem [thread:$0]  %s242, 64, %s245, %s234
        $region40: #{tpu_custom_call.1} parent=35 // pred_fallthru
          _
      $region36: #{tpu_custom_call.1} parent=5 // pred_fallthru
        _
      %p248 = scmp.le.s32.totalorder 1, %s19
      %p249 = scmp.lt.s32.totalorder %s19, 3
      %p250 = pnand %p248, %p249
      %p251 = pneg %p250
      // Predicated region
      $region41: #{tpu_custom_call.1} parent=5 // pred_check
        _
      $region42: #{tpu_custom_call.1} parent=5 // pred_check_branch
        %253 = sbr.rel (%p250) target = $region44
      $region43: #{tpu_custom_call.1} parent=5 // pred_region
        %s254 = ssub.s32 %s19, 1
        %s255 = sand.u32 %s32, 1
        %s256 = scalar_lea.sflag [#allocation5], %s255
        %s257 = sand.u32 %s32, 1
        %s258 = smul.addr %s257, 4
        %s259 = scalar_lea.vmem [#allocation4], %s258
        // Predicated region
        $region45: #{tpu_custom_call.1} parent=43 // pred_check
          %p260 = pneg %p45
        $region46: #{tpu_custom_call.1} parent=43 // pred_check_branch
          %262 = sbr.rel (%p260) target = $region48
        $region47: #{tpu_custom_call.1} parent=43 // pred_region
          %263 = dma.done %s256, 64
        $region48: #{tpu_custom_call.1} parent=43 // pred_fallthru
          _
        // Predicated region
        $region49: #{tpu_custom_call.1} parent=43 // pred_check
          %p264 = pneg %p87
        $region50: #{tpu_custom_call.1} parent=43 // pred_check_branch
          %266 = sbr.rel (%p264) target = $region52
        $region51: #{tpu_custom_call.1} parent=43 // pred_region
          %267 = dma.done [#allocation8], 3072
        $region52: #{tpu_custom_call.1} parent=43 // pred_fallthru
          _
        // Predicated region
        $region53: #{tpu_custom_call.1} parent=43 // pred_check
          %p268 = pneg %p108
        $region54: #{tpu_custom_call.1} parent=43 // pred_check_branch
          %270 = sbr.rel (%p268) target = $region56
        $region55: #{tpu_custom_call.1} parent=43 // pred_region
          %271 = dma.done [#allocation8], 3072
        $region56: #{tpu_custom_call.1} parent=43 // pred_fallthru
          _
        %s272 = sand.u32 %s32, 1
        %s273 = scalar_lea.sflag [#allocation5], %s272
        %s274 = sand.u32 %s32, 1
        %s275 = smul.addr %s274, 4
        %s276 = scalar_lea.vmem [#allocation4], %s275
        %p277 = pneg %p45
        %p278 = pneg %p42
        %p279 = pneg %p66
        %p280 = pneg %p63
        %p281 = pneg %p87
        %p282 = pneg %p84
        %p283 = pneg %p108
        %p284 = pneg %p105
        %p285 = pneg %p129
        %p286 = pneg %p126
        %p287 = pneg %p150
        %p288 = pneg %p147
        %p289 = pneg %p176
        %p290 = pneg %p173
        %s291 = sand.u32 %s163, 1
        %s292 = scalar_lea.sflag [#allocation6], %s291
        %s293 = sand.u32 %s163, 1
        %s294 = smul.addr %s293, 8
        %s295 = scalar_lea.vmem [#allocation10], %s294
        %p297 = scmp.eq.s32.totalorder %s24, 0
        // Predicated region
        $region57: #{tpu_custom_call.1} parent=43 // pred_check
          %p298 = pneg %p297
        $region58: #{tpu_custom_call.1} parent=43 // pred_check_branch
          %300 = sbr.rel (%p298) target = $region60
        $region59: #{tpu_custom_call.1} parent=43 // pred_region
          %v301 = vld [vmem:[%s1] sm:$0x1]
          %302 = vst [vmem:[#allocation2] sm:$0x1] %v301
        $region60: #{tpu_custom_call.1} parent=43 // pred_fallthru
          _
        %v303 = vld [vmem:[%s259] sm:$0xf]
        %v304 = vld [vmem:[#allocation7] sm:$0xff]
        %v305 = vld [vmem:[#allocation7 + $0x8] sm:$0xf]
        %v306 = vld [vmem:[#allocation7 + $0xc] sm:$0xff]
        %v307 = vld [vmem:[#allocation7 + $0x14] sm:$0xf]
        %v308 = vld [vmem:[#allocation7 + $0x18] sm:$0xff]
        %v309 = vld [vmem:[#allocation7 + $0x20] sm:$0xf]
        %v310 = vld [vmem:[#allocation7 + $0x24] sm:$0xff]
        %v311 = vld [vmem:[#allocation7 + $0x2c] sm:$0xf]
        %v312 = vld [vmem:[#allocation7 + $0x30] sm:$0xff]
        %v313 = vld [vmem:[#allocation7 + $0x38] sm:$0xf]
        %v314 = vld [vmem:[#allocation7 + $0x3c] sm:$0xff]
        %v315 = vld [vmem:[#allocation7 + $0x44] sm:$0xf]
        %v316 = vld [vmem:[#allocation7 + $0x48] sm:$0xff]
        %v317 = vld [vmem:[#allocation7 + $0x50] sm:$0xf]
        %v318 = vld [vmem:[#allocation7 + $0x54] sm:$0xff]
        %v319 = vld [vmem:[#allocation7 + $0x5c] sm:$0xf]
        %v320 = vld [vmem:[#allocation7 + $0x60] sm:$0xff]
        %v321 = vld [vmem:[#allocation7 + $0x68] sm:$0xf]
        %v322 = vld [vmem:[#allocation7 + $0x6c] sm:$0xff]
        %v323 = vld [vmem:[#allocation7 + $0x74] sm:$0xf]
        %v324 = vld [vmem:[#allocation7 + $0x78] sm:$0xff]
        %v325 = vld [vmem:[#allocation7 + $0x80] sm:$0xf]
        %v326 = vld [vmem:[#allocation7 + $0x84] sm:$0xff]
        %v327 = vld [vmem:[#allocation7 + $0x8c] sm:$0xf]
        %v328 = vld [vmem:[#allocation7 + $0x90] sm:$0xff]
        %v329 = vld [vmem:[#allocation7 + $0x98] sm:$0xf]
        %v330 = vld [vmem:[#allocation7 + $0x9c] sm:$0xff]
        %v331 = vld [vmem:[#allocation7 + $0xa4] sm:$0xf]
        %v332 = vld [vmem:[#allocation7 + $0xa8] sm:$0xff]
        %v333 = vld [vmem:[#allocation7 + $0xb0] sm:$0xf]
        %v334 = vld [vmem:[#allocation7 + $0xb4] sm:$0xff]
        %v335 = vld [vmem:[#allocation7 + $0xbc] sm:$0xf]
        %v336 = vld [vmem:[%s4] sm:$0x7]
        %v338 = vlaneseq
        %v339 = vshrl.u32 %v338, 7
        %v340 = vsub.s32 0, %v339
        %v341 = vrot.slane %v336, %v340
        %v342 = vlaneseq
        %v343 = vshrl.u32 %v342, 7
        %v344 = vsub.s32 1, %v343
        %v345 = vrot.slane %v336, %v344
        %v346 = vlaneseq
        %v347 = vshrl.u32 %v346, 7
        %v348 = vsub.s32 2, %v347
        %v349 = vrot.slane %v336, %v348
        %v385 = vunpack.c.l.b16 %v304
        %v386 = vunpack.c.h.b16 %v304
        %v387 = vunpack.c.l.b16 %v305
        %v388 = vunpack.c.l.b16 %v306
        %v389 = vunpack.c.h.b16 %v306
        %v390 = vunpack.c.l.b16 %v307
        %v391 = vunpack.c.l.b16 %v308
        %v392 = vunpack.c.h.b16 %v308
        %v393 = vunpack.c.l.b16 %v309
        %v394 = vunpack.c.l.b16 %v310
        %v395 = vunpack.c.h.b16 %v310
        %v396 = vunpack.c.l.b16 %v311
        %v397 = vunpack.c.l.b16 %v312
        %v398 = vunpack.c.h.b16 %v312
        %v399 = vunpack.c.l.b16 %v313
        %v400 = vunpack.c.l.b16 %v314
        %v401 = vunpack.c.h.b16 %v314
        %v402 = vunpack.c.l.b16 %v315
        %v403 = vunpack.c.l.b16 %v316
        %v404 = vunpack.c.h.b16 %v316
        %v405 = vunpack.c.l.b16 %v317
        %v406 = vunpack.c.l.b16 %v318
        %v407 = vunpack.c.h.b16 %v318
        %v408 = vunpack.c.l.b16 %v319
        %v409 = vunpack.c.l.b16 %v320
        %v410 = vunpack.c.h.b16 %v320
        %v411 = vunpack.c.l.b16 %v321
        %v412 = vunpack.c.l.b16 %v322
        %v413 = vunpack.c.h.b16 %v322
        %v414 = vunpack.c.l.b16 %v323
        %v415 = vunpack.c.l.b16 %v324
        %v416 = vunpack.c.h.b16 %v324
        %v417 = vunpack.c.l.b16 %v325
        %v418 = vunpack.c.l.b16 %v326
        %v419 = vunpack.c.h.b16 %v326
        %v420 = vunpack.c.l.b16 %v327
        %v421 = vunpack.c.l.b16 %v328
        %v422 = vunpack.c.h.b16 %v328
        %v423 = vunpack.c.l.b16 %v329
        %v424 = vunpack.c.l.b16 %v330
        %v425 = vunpack.c.h.b16 %v330
        %v426 = vunpack.c.l.b16 %v331
        %v427 = vunpack.c.l.b16 %v332
        %v428 = vunpack.c.h.b16 %v332
        %v429 = vunpack.c.l.b16 %v333
        %v430 = vunpack.c.l.b16 %v334
        %v431 = vunpack.c.h.b16 %v334
        %v432 = vunpack.c.l.b16 %v335
        %v433 = vpack.c.b16 %v388, %v385
        %v434 = vpack.c.b16 %v389, %v386
        %v435 = vpack.c.b16 %v390, %v387
        %v436 = vpack.c.b16 %v394, %v391
        %v437 = vpack.c.b16 %v395, %v392
        %v438 = vpack.c.b16 %v396, %v393
        %v439 = vpack.c.b16 %v400, %v397
        %v440 = vpack.c.b16 %v401, %v398
        %v441 = vpack.c.b16 %v402, %v399
        %v442 = vpack.c.b16 %v406, %v403
        %v443 = vpack.c.b16 %v407, %v404
        %v444 = vpack.c.b16 %v408, %v405
        %v445 = vpack.c.b16 %v412, %v409
        %v446 = vpack.c.b16 %v413, %v410
        %v447 = vpack.c.b16 %v414, %v411
        %v448 = vpack.c.b16 %v418, %v415
        %v449 = vpack.c.b16 %v419, %v416
        %v450 = vpack.c.b16 %v420, %v417
        %v451 = vpack.c.b16 %v424, %v421
        %v452 = vpack.c.b16 %v425, %v422
        %v453 = vpack.c.b16 %v426, %v423
        %v454 = vpack.c.b16 %v430, %v427
        %v455 = vpack.c.b16 %v431, %v428
        %v456 = vpack.c.b16 %v432, %v429
        %481 = vmatprep.subr.bf16.mxu0 %v455
        %482 = vmatpush1.bf16.msra.mxu0 %v454
        %483 = vmatprep.subr.bf16.mxu0 %v452
        %484 = vmatpush1.bf16.msra.mxu0 %v451
        %485 = vmatprep.subr.bf16.mxu0 %v449
        %486 = vmatpush1.bf16.msra.mxu0 %v448
        %487 = vmatprep.subr.bf16.mxu0 %v446
        %488 = vmatpush1.bf16.msra.mxu0 %v445
        %489 = vmatprep.subr.bf16.mxu0 %v443
        %490 = vmatpush1.bf16.msra.mxu0 %v442
        %491 = vmatprep.subr.bf16.mxu0 %v440
        %492 = vmatpush1.bf16.msra.mxu0 %v439
        %493 = vmatprep.subr.bf16.mxu0 %v437
        %494 = vmatpush1.bf16.msra.mxu0 %v436
        %495 = vmatprep.subr.bf16.mxu0 %v434
        %496 = vmatpush1.bf16.msra.mxu0 %v433
        %497 = vmatprep.subr.bf16.mxu0 0
        %498 = vmatpush2.bf16.msra.mxu0 0
        %499 = vmatprep.subr.bf16.mxu0 0
        %500 = vmatpush2.bf16.msra.mxu0 0
        %501 = vmatprep.subr.bf16.mxu0 0
        %502 = vmatpush2.bf16.msra.mxu0 0
        %503 = vmatprep.subr.bf16.mxu0 0
        %504 = vmatpush2.bf16.msra.mxu0 0
        %505 = vmatprep.subr.bf16.mxu0 0
        %506 = vmatpush2.bf16.msra.mxu0 0
        %507 = vmatprep.subr.bf16.mxu0 0
        %508 = vmatpush2.bf16.msra.mxu0 0
        %509 = vmatprep.subr.bf16.mxu0 0
        %510 = vmatpush2.bf16.msra.mxu0 0
        %511 = vmatprep.subr.bf16.mxu0 0
        %512 = vmatpush2.bf16.msra.mxu0 0
        %513 = vmatprep.mubr.bf16.mxu0 0
        %514 = vmatmul.mubr.bf16.gmra.mxu0 %v303
        %v515 = vpop.f32.mrf.mxu0
        %v516 = vadd.f32 %v341, %v515
        %v517 = vpop.f32.mrf.mxu0
        %v518 = vadd.f32 %v345, %v517
        %v519 = vpop.f32.mrf.mxu0
        %v520 = vpop.f32.mrf.mxu0
        %521 = vdwg.mxu0
        %522 = vmatprep.subr.bf16.mxu0 0
        %523 = vmatpush1.bf16.msra.mxu0 %v456
        %524 = vmatprep.subr.bf16.mxu0 0
        %525 = vmatpush1.bf16.msra.mxu0 %v453
        %526 = vmatprep.subr.bf16.mxu0 0
        %527 = vmatpush1.bf16.msra.mxu0 %v450
        %528 = vmatprep.subr.bf16.mxu0 0
        %529 = vmatpush1.bf16.msra.mxu0 %v447
        %530 = vmatprep.subr.bf16.mxu0 0
        %531 = vmatpush1.bf16.msra.mxu0 %v444
        %532 = vmatprep.subr.bf16.mxu0 0
        %533 = vmatpush1.bf16.msra.mxu0 %v441
        %534 = vmatprep.subr.bf16.mxu0 0
        %535 = vmatpush1.bf16.msra.mxu0 %v438
        %536 = vmatprep.subr.bf16.mxu0 0
        %537 = vmatpush1.bf16.msra.mxu0 %v435
        %538 = vmatprep.subr.bf16.mxu0 0
        %539 = vmatpush2.bf16.msra.mxu0 0
        %540 = vmatprep.subr.bf16.mxu0 0
        %541 = vmatpush2.bf16.msra.mxu0 0
        %542 = vmatprep.subr.bf16.mxu0 0
        %543 = vmatpush2.bf16.msra.mxu0 0
        %544 = vmatprep.subr.bf16.mxu0 0
        %545 = vmatpush2.bf16.msra.mxu0 0
        %546 = vmatprep.subr.bf16.mxu0 0
        %547 = vmatpush2.bf16.msra.mxu0 0
        %548 = vmatprep.subr.bf16.mxu0 0
        %549 = vmatpush2.bf16.msra.mxu0 0
        %550 = vmatprep.subr.bf16.mxu0 0
        %551 = vmatpush2.bf16.msra.mxu0 0
        %552 = vmatprep.subr.bf16.mxu0 0
        %553 = vmatpush2.bf16.msra.mxu0 0
        %554 = vmatprep.mubr.bf16.mxu0 0
        %555 = vmatmul.mubr.bf16.gmra.mxu0 %v303
        %v556 = vpop.f32.mrf.mxu0
        %v557 = vadd.f32 %v349, %v556
        %v558 = vpop.f32.mrf.mxu0
        %v559 = vpop.f32.mrf.mxu0
        %v560 = vpop.f32.mrf.mxu0
        %561 = vdwg.mxu0
        %562 = vst [vmem:[#allocation3] sm:$0xff] %v516
        %563 = vst [vmem:[#allocation3 + $0x8] sm:$0xff] %v518
        %564 = vst [vmem:[#allocation3 + $0x10] sm:$0xff] %v557
        %v565 = vld [vmem:[#allocation2] sm:$0x1]
        %v566 = vld [vmem:[#allocation3] ss:$8 sm:$0x7]
        %v567 = vpack.c.bf16 %v565, %v565
        %v568 = vld [vmem:[#allocation9] sm:$0xff]
        %v569 = vld [vmem:[#allocation9 + $0x8] sm:$0xf]
        %v570 = vld [vmem:[#allocation9 + $0xc] sm:$0xff]
        %v571 = vld [vmem:[#allocation9 + $0x14] sm:$0xf]
        %v572 = vld [vmem:[#allocation9 + $0x18] sm:$0xff]
        %v573 = vld [vmem:[#allocation9 + $0x20] sm:$0xf]
        %v574 = vld [vmem:[#allocation9 + $0x24] sm:$0xff]
        %v575 = vld [vmem:[#allocation9 + $0x2c] sm:$0xf]
        %v576 = vld [vmem:[#allocation9 + $0x30] sm:$0xff]
        %v577 = vld [vmem:[#allocation9 + $0x38] sm:$0xf]
        %v578 = vld [vmem:[#allocation9 + $0x3c] sm:$0xff]
        %v579 = vld [vmem:[#allocation9 + $0x44] sm:$0xf]
        %v580 = vld [vmem:[#allocation9 + $0x48] sm:$0xff]
        %v581 = vld [vmem:[#allocation9 + $0x50] sm:$0xf]
        %v582 = vld [vmem:[#allocation9 + $0x54] sm:$0xff]
        %v583 = vld [vmem:[#allocation9 + $0x5c] sm:$0xf]
        %v584 = vld [vmem:[#allocation9 + $0x60] sm:$0xff]
        %v585 = vld [vmem:[#allocation9 + $0x68] sm:$0xf]
        %v586 = vld [vmem:[#allocation9 + $0x6c] sm:$0xff]
        %v587 = vld [vmem:[#allocation9 + $0x74] sm:$0xf]
        %v588 = vld [vmem:[#allocation9 + $0x78] sm:$0xff]
        %v589 = vld [vmem:[#allocation9 + $0x80] sm:$0xf]
        %v590 = vld [vmem:[#allocation9 + $0x84] sm:$0xff]
        %v591 = vld [vmem:[#allocation9 + $0x8c] sm:$0xf]
        %v592 = vld [vmem:[#allocation9 + $0x90] sm:$0xff]
        %v593 = vld [vmem:[#allocation9 + $0x98] sm:$0xf]
        %v594 = vld [vmem:[#allocation9 + $0x9c] sm:$0xff]
        %v595 = vld [vmem:[#allocation9 + $0xa4] sm:$0xf]
        %v596 = vld [vmem:[#allocation9 + $0xa8] sm:$0xff]
        %v597 = vld [vmem:[#allocation9 + $0xb0] sm:$0xf]
        %v598 = vld [vmem:[#allocation9 + $0xb4] sm:$0xff]
        %v599 = vld [vmem:[#allocation9 + $0xbc] sm:$0xf]
        %v600 = vld [vmem:[%s5] sm:$0x7]
        %v633 = vunpack.c.l.b16 %v568
        %v634 = vunpack.c.h.b16 %v568
        %v635 = vunpack.c.l.b16 %v569
        %v636 = vunpack.c.l.b16 %v570
        %v637 = vunpack.c.h.b16 %v570
        %v638 = vunpack.c.l.b16 %v571
        %v639 = vunpack.c.l.b16 %v572
        %v640 = vunpack.c.h.b16 %v572
        %v641 = vunpack.c.l.b16 %v573
        %v642 = vunpack.c.l.b16 %v574
        %v643 = vunpack.c.h.b16 %v574
        %v644 = vunpack.c.l.b16 %v575
        %v645 = vunpack.c.l.b16 %v576
        %v646 = vunpack.c.h.b16 %v576
        %v647 = vunpack.c.l.b16 %v577
        %v648 = vunpack.c.l.b16 %v578
        %v649 = vunpack.c.h.b16 %v578
        %v650 = vunpack.c.l.b16 %v579
        %v651 = vunpack.c.l.b16 %v580
        %v652 = vunpack.c.h.b16 %v580
        %v653 = vunpack.c.l.b16 %v581
        %v654 = vunpack.c.l.b16 %v582
        %v655 = vunpack.c.h.b16 %v582
        %v656 = vunpack.c.l.b16 %v583
        %v657 = vunpack.c.l.b16 %v584
        %v658 = vunpack.c.h.b16 %v584
        %v659 = vunpack.c.l.b16 %v585
        %v660 = vunpack.c.l.b16 %v586
        %v661 = vunpack.c.h.b16 %v586
        %v662 = vunpack.c.l.b16 %v587
        %v663 = vunpack.c.l.b16 %v588
        %v664 = vunpack.c.h.b16 %v588
        %v665 = vunpack.c.l.b16 %v589
        %v666 = vunpack.c.l.b16 %v590
        %v667 = vunpack.c.h.b16 %v590
        %v668 = vunpack.c.l.b16 %v591
        %v669 = vunpack.c.l.b16 %v592
        %v670 = vunpack.c.h.b16 %v592
        %v671 = vunpack.c.l.b16 %v593
        %v672 = vunpack.c.l.b16 %v594
        %v673 = vunpack.c.h.b16 %v594
        %v674 = vunpack.c.l.b16 %v595
        %v675 = vunpack.c.l.b16 %v596
        %v676 = vunpack.c.h.b16 %v596
        %v677 = vunpack.c.l.b16 %v597
        %v678 = vunpack.c.l.b16 %v598
        %v679 = vunpack.c.h.b16 %v598
        %v680 = vunpack.c.l.b16 %v599
        %v681 = vpack.c.b16 %v636, %v633
        %v682 = vpack.c.b16 %v637, %v634
        %v683 = vpack.c.b16 %v638, %v635
        %v684 = vpack.c.b16 %v642, %v639
        %v685 = vpack.c.b16 %v643, %v640
        %v686 = vpack.c.b16 %v644, %v641
        %v687 = vpack.c.b16 %v648, %v645
        %v688 = vpack.c.b16 %v649, %v646
        %v689 = vpack.c.b16 %v650, %v647
        %v690 = vpack.c.b16 %v654, %v651
        %v691 = vpack.c.b16 %v655, %v652
        %v692 = vpack.c.b16 %v656, %v653
        %v693 = vpack.c.b16 %v660, %v657
        %v694 = vpack.c.b16 %v661, %v658
        %v695 = vpack.c.b16 %v662, %v659
        %v696 = vpack.c.b16 %v666, %v663
        %v697 = vpack.c.b16 %v667, %v664
        %v698 = vpack.c.b16 %v668, %v665
        %v699 = vpack.c.b16 %v672, %v669
        %v700 = vpack.c.b16 %v673, %v670
        %v701 = vpack.c.b16 %v674, %v671
        %v702 = vpack.c.b16 %v678, %v675
        %v703 = vpack.c.b16 %v679, %v676
        %v704 = vpack.c.b16 %v680, %v677
        %v730 = vlaneseq
        %v731 = vshrl.u32 %v730, 7
        %v732 = vsub.s32 0, %v731
        %v733 = vrot.slane %v600, %v732
        %v734 = vlaneseq
        %v735 = vshrl.u32 %v734, 7
        %v736 = vsub.s32 1, %v735
        %v737 = vrot.slane %v600, %v736
        %v738 = vlaneseq
        %v739 = vshrl.u32 %v738, 7
        %v740 = vsub.s32 2, %v739
        %v741 = vrot.slane %v600, %v740
        %745 = vmatprep.subr.bf16.mxu0 %v703
        %746 = vmatpush1.bf16.msra.mxu0 %v702
        %747 = vmatprep.subr.bf16.mxu0 %v700
        %748 = vmatpush1.bf16.msra.mxu0 %v699
        %749 = vmatprep.subr.bf16.mxu0 %v697
        %750 = vmatpush1.bf16.msra.mxu0 %v696
        %751 = vmatprep.subr.bf16.mxu0 %v694
        %752 = vmatpush1.bf16.msra.mxu0 %v693
        %753 = vmatprep.subr.bf16.mxu0 %v691
        %754 = vmatpush1.bf16.msra.mxu0 %v690
        %755 = vmatprep.subr.bf16.mxu0 %v688
        %756 = vmatpush1.bf16.msra.mxu0 %v687
        %757 = vmatprep.subr.bf16.mxu0 %v685
        %758 = vmatpush1.bf16.msra.mxu0 %v684
        %759 = vmatprep.subr.bf16.mxu0 %v682
        %760 = vmatpush1.bf16.msra.mxu0 %v681
        %761 = vmatprep.subr.bf16.mxu0 0
        %762 = vmatpush2.bf16.msra.mxu0 0
        %763 = vmatprep.subr.bf16.mxu0 0
        %764 = vmatpush2.bf16.msra.mxu0 0
        %765 = vmatprep.subr.bf16.mxu0 0
        %766 = vmatpush2.bf16.msra.mxu0 0
        %767 = vmatprep.subr.bf16.mxu0 0
        %768 = vmatpush2.bf16.msra.mxu0 0
        %769 = vmatprep.subr.bf16.mxu0 0
        %770 = vmatpush2.bf16.msra.mxu0 0
        %771 = vmatprep.subr.bf16.mxu0 0
        %772 = vmatpush2.bf16.msra.mxu0 0
        %773 = vmatprep.subr.bf16.mxu0 0
        %774 = vmatpush2.bf16.msra.mxu0 0
        %775 = vmatprep.subr.bf16.mxu0 0
        %776 = vmatpush2.bf16.msra.mxu0 0
        %777 = vmatprep.mubr.bf16.mxu0 0
        %778 = vmatmul.mubr.bf16.gmra.mxu0 %v567
        %v779 = vpop.f32.mrf.mxu0
        %v780 = vadd.f32 %v733, %v779
        %v781 = vpop.f32.mrf.mxu0
        %v782 = vadd.f32 %v737, %v781
        %v783 = vpop.f32.mrf.mxu0
        %v784 = vpop.f32.mrf.mxu0
        %785 = vdwg.mxu0
        %786 = vmatprep.subr.bf16.mxu0 0
        %787 = vmatpush1.bf16.msra.mxu0 %v704
        %788 = vmatprep.subr.bf16.mxu0 0
        %789 = vmatpush1.bf16.msra.mxu0 %v701
        %790 = vmatprep.subr.bf16.mxu0 0
        %791 = vmatpush1.bf16.msra.mxu0 %v698
        %792 = vmatprep.subr.bf16.mxu0 0
        %793 = vmatpush1.bf16.msra.mxu0 %v695
        %794 = vmatprep.subr.bf16.mxu0 0
        %795 = vmatpush1.bf16.msra.mxu0 %v692
        %796 = vmatprep.subr.bf16.mxu0 0
        %797 = vmatpush1.bf16.msra.mxu0 %v689
        %798 = vmatprep.subr.bf16.mxu0 0
        %799 = vmatpush1.bf16.msra.mxu0 %v686
        %800 = vmatprep.subr.bf16.mxu0 0
        %801 = vmatpush1.bf16.msra.mxu0 %v683
        %802 = vmatprep.subr.bf16.mxu0 0
        %803 = vmatpush2.bf16.msra.mxu0 0
        %804 = vmatprep.subr.bf16.mxu0 0
        %805 = vmatpush2.bf16.msra.mxu0 0
        %806 = vmatprep.subr.bf16.mxu0 0
        %807 = vmatpush2.bf16.msra.mxu0 0
        %808 = vmatprep.subr.bf16.mxu0 0
        %809 = vmatpush2.bf16.msra.mxu0 0
        %810 = vmatprep.subr.bf16.mxu0 0
        %811 = vmatpush2.bf16.msra.mxu0 0
        %812 = vmatprep.subr.bf16.mxu0 0
        %813 = vmatpush2.bf16.msra.mxu0 0
        %814 = vmatprep.subr.bf16.mxu0 0
        %815 = vmatpush2.bf16.msra.mxu0 0
        %816 = vmatprep.subr.bf16.mxu0 0
        %817 = vmatpush2.bf16.msra.mxu0 0
        %818 = vmatprep.mubr.bf16.mxu0 0
        %819 = vmatmul.mubr.bf16.gmra.mxu0 %v567
        %v820 = vpop.f32.mrf.mxu0
        %v821 = vadd.f32 %v741, %v820
        %v822 = vpop.f32.mrf.mxu0
        %v823 = vpop.f32.mrf.mxu0
        %v824 = vpop.f32.mrf.mxu0
        %825 = vdwg.mxu0
        %v826 = vadd.f32 %v566, %v780
        %v827 = vxor.u32 %v826, 2147483648
        %v828 = vmul.f32 %v827, 1.442695
        %v829 = vpow.pop %v828
        %v830 = vadd.f32 %v829, 1.0
        %v831 = vrcp.pop %v830
        %v832 = vmul.f32 1.0, %v831
        %v834 = vrot.slane %v566, 1
        %v836 = vadd.f32 %v834, %v782
        %v837 = vxor.u32 %v836, 2147483648
        %v838 = vmul.f32 %v837, 1.442695
        %v839 = vpow.pop %v838
        %v840 = vadd.f32 %v839, 1.0
        %v841 = vrcp.pop %v840
        %v842 = vmul.f32 1.0, %v841
        %v843 = vmul.f32 %v832, %v821
        %v844 = vrot.slane %v566, 2
        %v846 = vadd.f32 %v844, %v843
        %v847 = vtanh.pop %v846
        %v848 = vsub.f32 1.0, %v842
        %v849 = vmul.f32 %v848, %v847
        %v850 = vmul.f32 %v842, %v565
        %v851 = vadd.f32 %v849, %v850
        %s852 = smul.u32 %s24, 8
        %p853 = scmp.lt.s32.totalorder %s852, 10
        %s854 = scalar_select %p853, 1, 0
        %v855 = vstv %s854
        %vm856 = vcmp.eq.s32.totalorder %v855, 1
        %v857 = vsel %vm856, %v851, %v565
        %858 = vst [vmem:[%s295] sm:$0x1] %v857
        %s859 = scalar_lea.vmem [#allocation3], 1
        %v860 = vld [vmem:[%s859] ss:$8 sm:$0x7]
        %v861 = vpack.c.bf16 %v857, %v857
        %v862 = vld [vmem:[#allocation9] sm:$0xff]
        %v863 = vld [vmem:[#allocation9 + $0x8] sm:$0xf]
        %v864 = vld [vmem:[#allocation9 + $0xc] sm:$0xff]
        %v865 = vld [vmem:[#allocation9 + $0x14] sm:$0xf]
        %v866 = vld [vmem:[#allocation9 + $0x18] sm:$0xff]
        %v867 = vld [vmem:[#allocation9 + $0x20] sm:$0xf]
        %v868 = vld [vmem:[#allocation9 + $0x24] sm:$0xff]
        %v869 = vld [vmem:[#allocation9 + $0x2c] sm:$0xf]
        %v870 = vld [vmem:[#allocation9 + $0x30] sm:$0xff]
        %v871 = vld [vmem:[#allocation9 + $0x38] sm:$0xf]
        %v872 = vld [vmem:[#allocation9 + $0x3c] sm:$0xff]
        %v873 = vld [vmem:[#allocation9 + $0x44] sm:$0xf]
        %v874 = vld [vmem:[#allocation9 + $0x48] sm:$0xff]
        %v875 = vld [vmem:[#allocation9 + $0x50] sm:$0xf]
        %v876 = vld [vmem:[#allocation9 + $0x54] sm:$0xff]
        %v877 = vld [vmem:[#allocation9 + $0x5c] sm:$0xf]
        %v878 = vld [vmem:[#allocation9 + $0x60] sm:$0xff]
        %v879 = vld [vmem:[#allocation9 + $0x68] sm:$0xf]
        %v880 = vld [vmem:[#allocation9 + $0x6c] sm:$0xff]
        %v881 = vld [vmem:[#allocation9 + $0x74] sm:$0xf]
        %v882 = vld [vmem:[#allocation9 + $0x78] sm:$0xff]
        %v883 = vld [vmem:[#allocation9 + $0x80] sm:$0xf]
        %v884 = vld [vmem:[#allocation9 + $0x84] sm:$0xff]
        %v885 = vld [vmem:[#allocation9 + $0x8c] sm:$0xf]
        %v886 = vld [vmem:[#allocation9 + $0x90] sm:$0xff]
        %v887 = vld [vmem:[#allocation9 + $0x98] sm:$0xf]
        %v888 = vld [vmem:[#allocation9 + $0x9c] sm:$0xff]
        %v889 = vld [vmem:[#allocation9 + $0xa4] sm:$0xf]
        %v890 = vld [vmem:[#allocation9 + $0xa8] sm:$0xff]
        %v891 = vld [vmem:[#allocation9 + $0xb0] sm:$0xf]
        %v892 = vld [vmem:[#allocation9 + $0xb4] sm:$0xff]
        %v893 = vld [vmem:[#allocation9 + $0xbc] sm:$0xf]
        %v894 = vld [vmem:[%s5] sm:$0x7]
        %v927 = vunpack.c.l.b16 %v862
        %v928 = vunpack.c.h.b16 %v862
        %v929 = vunpack.c.l.b16 %v863
        %v930 = vunpack.c.l.b16 %v864
        %v931 = vunpack.c.h.b16 %v864
        %v932 = vunpack.c.l.b16 %v865
        %v933 = vunpack.c.l.b16 %v866
        %v934 = vunpack.c.h.b16 %v866
        %v935 = vunpack.c.l.b16 %v867
        %v936 = vunpack.c.l.b16 %v868
        %v937 = vunpack.c.h.b16 %v868
        %v938 = vunpack.c.l.b16 %v869
        %v939 = vunpack.c.l.b16 %v870
        %v940 = vunpack.c.h.b16 %v870
        %v941 = vunpack.c.l.b16 %v871
        %v942 = vunpack.c.l.b16 %v872
        %v943 = vunpack.c.h.b16 %v872
        %v944 = vunpack.c.l.b16 %v873
        %v945 = vunpack.c.l.b16 %v874
        %v946 = vunpack.c.h.b16 %v874
        %v947 = vunpack.c.l.b16 %v875
        %v948 = vunpack.c.l.b16 %v876
        %v949 = vunpack.c.h.b16 %v876
        %v950 = vunpack.c.l.b16 %v877
        %v951 = vunpack.c.l.b16 %v878
        %v952 = vunpack.c.h.b16 %v878
        %v953 = vunpack.c.l.b16 %v879
        %v954 = vunpack.c.l.b16 %v880
        %v955 = vunpack.c.h.b16 %v880
        %v956 = vunpack.c.l.b16 %v881
        %v957 = vunpack.c.l.b16 %v882
        %v958 = vunpack.c.h.b16 %v882
        %v959 = vunpack.c.l.b16 %v883
        %v960 = vunpack.c.l.b16 %v884
        %v961 = vunpack.c.h.b16 %v884
        %v962 = vunpack.c.l.b16 %v885
        %v963 = vunpack.c.l.b16 %v886
        %v964 = vunpack.c.h.b16 %v886
        %v965 = vunpack.c.l.b16 %v887
        %v966 = vunpack.c.l.b16 %v888
        %v967 = vunpack.c.h.b16 %v888
        %v968 = vunpack.c.l.b16 %v889
        %v969 = vunpack.c.l.b16 %v890
        %v970 = vunpack.c.h.b16 %v890
        %v971 = vunpack.c.l.b16 %v891
        %v972 = vunpack.c.l.b16 %v892
        %v973 = vunpack.c.h.b16 %v892
        %v974 = vunpack.c.l.b16 %v893
        %v975 = vpack.c.b16 %v930, %v927
        %v976 = vpack.c.b16 %v931, %v928
        %v977 = vpack.c.b16 %v932, %v929
        %v978 = vpack.c.b16 %v936, %v933
        %v979 = vpack.c.b16 %v937, %v934
        %v980 = vpack.c.b16 %v938, %v935
        %v981 = vpack.c.b16 %v942, %v939
        %v982 = vpack.c.b16 %v943, %v940
        %v983 = vpack.c.b16 %v944, %v941
        %v984 = vpack.c.b16 %v948, %v945
        %v985 = vpack.c.b16 %v949, %v946
        %v986 = vpack.c.b16 %v950, %v947
        %v987 = vpack.c.b16 %v954, %v951
        %v988 = vpack.c.b16 %v955, %v952
        %v989 = vpack.c.b16 %v956, %v953
        %v990 = vpack.c.b16 %v960, %v957
        %v991 = vpack.c.b16 %v961, %v958
        %v992 = vpack.c.b16 %v962, %v959
        %v993 = vpack.c.b16 %v966, %v963
        %v994 = vpack.c.b16 %v967, %v964
        %v995 = vpack.c.b16 %v968, %v965
        %v996 = vpack.c.b16 %v972, %v969
        %v997 = vpack.c.b16 %v973, %v970
        %v998 = vpack.c.b16 %v974, %v971
        %v1024 = vlaneseq
        %v1025 = vshrl.u32 %v1024, 7
        %v1026 = vsub.s32 0, %v1025
        %v1027 = vrot.slane %v894, %v1026
        %v1028 = vlaneseq
        %v1029 = vshrl.u32 %v1028, 7
        %v1030 = vsub.s32 1, %v1029
        %v1031 = vrot.slane %v894, %v1030
        %v1032 = vlaneseq
        %v1033 = vshrl.u32 %v1032, 7
        %v1034 = vsub.s32 2, %v1033
        %v1035 = vrot.slane %v894, %v1034
        %1039 = vmatprep.subr.bf16.mxu0 %v997
        %1040 = vmatpush1.bf16.msra.mxu0 %v996
        %1041 = vmatprep.subr.bf16.mxu0 %v994
        %1042 = vmatpush1.bf16.msra.mxu0 %v993
        %1043 = vmatprep.subr.bf16.mxu0 %v991
        %1044 = vmatpush1.bf16.msra.mxu0 %v990
        %1045 = vmatprep.subr.bf16.mxu0 %v988
        %1046 = vmatpush1.bf16.msra.mxu0 %v987
        %1047 = vmatprep.subr.bf16.mxu0 %v985
        %1048 = vmatpush1.bf16.msra.mxu0 %v984
        %1049 = vmatprep.subr.bf16.mxu0 %v982
        %1050 = vmatpush1.bf16.msra.mxu0 %v981
        %1051 = vmatprep.subr.bf16.mxu0 %v979
        %1052 = vmatpush1.bf16.msra.mxu0 %v978
        %1053 = vmatprep.subr.bf16.mxu0 %v976
        %1054 = vmatpush1.bf16.msra.mxu0 %v975
        %1055 = vmatprep.subr.bf16.mxu0 0
        %1056 = vmatpush2.bf16.msra.mxu0 0
        %1057 = vmatprep.subr.bf16.mxu0 0
        %1058 = vmatpush2.bf16.msra.mxu0 0
        %1059 = vmatprep.subr.bf16.mxu0 0
        %1060 = vmatpush2.bf16.msra.mxu0 0
        %1061 = vmatprep.subr.bf16.mxu0 0
        %1062 = vmatpush2.bf16.msra.mxu0 0
        %1063 = vmatprep.subr.bf16.mxu0 0
        %1064 = vmatpush2.bf16.msra.mxu0 0
        %1065 = vmatprep.subr.bf16.mxu0 0
        %1066 = vmatpush2.bf16.msra.mxu0 0
        %1067 = vmatprep.subr.bf16.mxu0 0
        %1068 = vmatpush2.bf16.msra.mxu0 0
        %1069 = vmatprep.subr.bf16.mxu0 0
        %1070 = vmatpush2.bf16.msra.mxu0 0
        %1071 = vmatprep.mubr.bf16.mxu0 0
        %1072 = vmatmul.mubr.bf16.gmra.mxu0 %v861
        %v1073 = vpop.f32.mrf.mxu0
        %v1074 = vadd.f32 %v1027, %v1073
        %v1075 = vpop.f32.mrf.mxu0
        %v1076 = vadd.f32 %v1031, %v1075
        %v1077 = vpop.f32.mrf.mxu0
        %v1078 = vpop.f32.mrf.mxu0
        %1079 = vdwg.mxu0
        %1080 = vmatprep.subr.bf16.mxu0 0
        %1081 = vmatpush1.bf16.msra.mxu0 %v998
        %1082 = vmatprep.subr.bf16.mxu0 0
        %1083 = vmatpush1.bf16.msra.mxu0 %v995
        %1084 = vmatprep.subr.bf16.mxu0 0
        %1085 = vmatpush1.bf16.msra.mxu0 %v992
        %1086 = vmatprep.subr.bf16.mxu0 0
        %1087 = vmatpush1.bf16.msra.mxu0 %v989
        %1088 = vmatprep.subr.bf16.mxu0 0
        %1089 = vmatpush1.bf16.msra.mxu0 %v986
        %1090 = vmatprep.subr.bf16.mxu0 0
        %1091 = vmatpush1.bf16.msra.mxu0 %v983
        %1092 = vmatprep.subr.bf16.mxu0 0
        %1093 = vmatpush1.bf16.msra.mxu0 %v980
        %1094 = vmatprep.subr.bf16.mxu0 0
        %1095 = vmatpush1.bf16.msra.mxu0 %v977
        %1096 = vmatprep.subr.bf16.mxu0 0
        %1097 = vmatpush2.bf16.msra.mxu0 0
        %1098 = vmatprep.subr.bf16.mxu0 0
        %1099 = vmatpush2.bf16.msra.mxu0 0
        %1100 = vmatprep.subr.bf16.mxu0 0
        %1101 = vmatpush2.bf16.msra.mxu0 0
        %1102 = vmatprep.subr.bf16.mxu0 0
        %1103 = vmatpush2.bf16.msra.mxu0 0
        %1104 = vmatprep.subr.bf16.mxu0 0
        %1105 = vmatpush2.bf16.msra.mxu0 0
        %1106 = vmatprep.subr.bf16.mxu0 0
        %1107 = vmatpush2.bf16.msra.mxu0 0
        %1108 = vmatprep.subr.bf16.mxu0 0
        %1109 = vmatpush2.bf16.msra.mxu0 0
        %1110 = vmatprep.subr.bf16.mxu0 0
        %1111 = vmatpush2.bf16.msra.mxu0 0
        %1112 = vmatprep.mubr.bf16.mxu0 0
        %1113 = vmatmul.mubr.bf16.gmra.mxu0 %v861
        %v1114 = vpop.f32.mrf.mxu0
        %v1115 = vadd.f32 %v1035, %v1114
        %v1116 = vpop.f32.mrf.mxu0
        %v1117 = vpop.f32.mrf.mxu0
        %v1118 = vpop.f32.mrf.mxu0
        %1119 = vdwg.mxu0
        %v1120 = vadd.f32 %v860, %v1074
        %v1121 = vxor.u32 %v1120, 2147483648
        %v1122 = vmul.f32 %v1121, 1.442695
        %v1123 = vpow.pop %v1122
        %v1124 = vadd.f32 %v1123, 1.0
        %v1125 = vrcp.pop %v1124
        %v1126 = vmul.f32 1.0, %v1125
        %v1128 = vrot.slane %v860, 1
        %v1130 = vadd.f32 %v1128, %v1076
        %v1131 = vxor.u32 %v1130, 2147483648
        %v1132 = vmul.f32 %v1131, 1.442695
        %v1133 = vpow.pop %v1132
        %v1134 = vadd.f32 %v1133, 1.0
        %v1135 = vrcp.pop %v1134
        %v1136 = vmul.f32 1.0, %v1135
        %v1137 = vmul.f32 %v1126, %v1115
        %v1138 = vrot.slane %v860, 2
        %v1140 = vadd.f32 %v1138, %v1137
        %v1141 = vtanh.pop %v1140
        %v1142 = vsub.f32 1.0, %v1136
        %v1143 = vmul.f32 %v1142, %v1141
        %v1144 = vmul.f32 %v1136, %v857
        %v1145 = vadd.f32 %v1143, %v1144
        %s1146 = sadd.s32 %s852, 1
        %p1147 = scmp.lt.s32.totalorder %s1146, 10
        %s1148 = scalar_select %p1147, 1, 0
        %v1149 = vstv %s1148
        %vm1150 = vcmp.eq.s32.totalorder %v1149, 1
        %v1151 = vsel %vm1150, %v1145, %v857
        %1152 = vst [vmem:[%s295 + $0x1] sm:$0x1] %v1151
        %s1153 = scalar_lea.vmem [#allocation3], 2
        %v1154 = vld [vmem:[%s1153] ss:$8 sm:$0x7]
        %v1155 = vpack.c.bf16 %v1151, %v1151
        %v1156 = vld [vmem:[#allocation9] sm:$0xff]
        %v1157 = vld [vmem:[#allocation9 + $0x8] sm:$0xf]
        %v1158 = vld [vmem:[#allocation9 + $0xc] sm:$0xff]
        %v1159 = vld [vmem:[#allocation9 + $0x14] sm:$0xf]
        %v1160 = vld [vmem:[#allocation9 + $0x18] sm:$0xff]
        %v1161 = vld [vmem:[#allocation9 + $0x20] sm:$0xf]
        %v1162 = vld [vmem:[#allocation9 + $0x24] sm:$0xff]
        %v1163 = vld [vmem:[#allocation9 + $0x2c] sm:$0xf]
        %v1164 = vld [vmem:[#allocation9 + $0x30] sm:$0xff]
        %v1165 = vld [vmem:[#allocation9 + $0x38] sm:$0xf]
        %v1166 = vld [vmem:[#allocation9 + $0x3c] sm:$0xff]
        %v1167 = vld [vmem:[#allocation9 + $0x44] sm:$0xf]
        %v1168 = vld [vmem:[#allocation9 + $0x48] sm:$0xff]
        %v1169 = vld [vmem:[#allocation9 + $0x50] sm:$0xf]
        %v1170 = vld [vmem:[#allocation9 + $0x54] sm:$0xff]
        %v1171 = vld [vmem:[#allocation9 + $0x5c] sm:$0xf]
        %v1172 = vld [vmem:[#allocation9 + $0x60] sm:$0xff]
        %v1173 = vld [vmem:[#allocation9 + $0x68] sm:$0xf]
        %v1174 = vld [vmem:[#allocation9 + $0x6c] sm:$0xff]
        %v1175 = vld [vmem:[#allocation9 + $0x74] sm:$0xf]
        %v1176 = vld [vmem:[#allocation9 + $0x78] sm:$0xff]
        %v1177 = vld [vmem:[#allocation9 + $0x80] sm:$0xf]
        %v1178 = vld [vmem:[#allocation9 + $0x84] sm:$0xff]
        %v1179 = vld [vmem:[#allocation9 + $0x8c] sm:$0xf]
        %v1180 = vld [vmem:[#allocation9 + $0x90] sm:$0xff]
        %v1181 = vld [vmem:[#allocation9 + $0x98] sm:$0xf]
        %v1182 = vld [vmem:[#allocation9 + $0x9c] sm:$0xff]
        %v1183 = vld [vmem:[#allocation9 + $0xa4] sm:$0xf]
        %v1184 = vld [vmem:[#allocation9 + $0xa8] sm:$0xff]
        %v1185 = vld [vmem:[#allocation9 + $0xb0] sm:$0xf]
        %v1186 = vld [vmem:[#allocation9 + $0xb4] sm:$0xff]
        %v1187 = vld [vmem:[#allocation9 + $0xbc] sm:$0xf]
        %v1188 = vld [vmem:[%s5] sm:$0x7]
        %v1221 = vunpack.c.l.b16 %v1156
        %v1222 = vunpack.c.h.b16 %v1156
        %v1223 = vunpack.c.l.b16 %v1157
        %v1224 = vunpack.c.l.b16 %v1158
        %v1225 = vunpack.c.h.b16 %v1158
        %v1226 = vunpack.c.l.b16 %v1159
        %v1227 = vunpack.c.l.b16 %v1160
        %v1228 = vunpack.c.h.b16 %v1160
        %v1229 = vunpack.c.l.b16 %v1161
        %v1230 = vunpack.c.l.b16 %v1162
        %v1231 = vunpack.c.h.b16 %v1162
        %v1232 = vunpack.c.l.b16 %v1163
        %v1233 = vunpack.c.l.b16 %v1164
        %v1234 = vunpack.c.h.b16 %v1164
        %v1235 = vunpack.c.l.b16 %v1165
        %v1236 = vunpack.c.l.b16 %v1166
        %v1237 = vunpack.c.h.b16 %v1166
        %v1238 = vunpack.c.l.b16 %v1167
        %v1239 = vunpack.c.l.b16 %v1168
        %v1240 = vunpack.c.h.b16 %v1168
        %v1241 = vunpack.c.l.b16 %v1169
        %v1242 = vunpack.c.l.b16 %v1170
        %v1243 = vunpack.c.h.b16 %v1170
        %v1244 = vunpack.c.l.b16 %v1171
        %v1245 = vunpack.c.l.b16 %v1172
        %v1246 = vunpack.c.h.b16 %v1172
        %v1247 = vunpack.c.l.b16 %v1173
        %v1248 = vunpack.c.l.b16 %v1174
        %v1249 = vunpack.c.h.b16 %v1174
        %v1250 = vunpack.c.l.b16 %v1175
        %v1251 = vunpack.c.l.b16 %v1176
        %v1252 = vunpack.c.h.b16 %v1176
        %v1253 = vunpack.c.l.b16 %v1177
        %v1254 = vunpack.c.l.b16 %v1178
        %v1255 = vunpack.c.h.b16 %v1178
        %v1256 = vunpack.c.l.b16 %v1179
        %v1257 = vunpack.c.l.b16 %v1180
        %v1258 = vunpack.c.h.b16 %v1180
        %v1259 = vunpack.c.l.b16 %v1181
        %v1260 = vunpack.c.l.b16 %v1182
        %v1261 = vunpack.c.h.b16 %v1182
        %v1262 = vunpack.c.l.b16 %v1183
        %v1263 = vunpack.c.l.b16 %v1184
        %v1264 = vunpack.c.h.b16 %v1184
        %v1265 = vunpack.c.l.b16 %v1185
        %v1266 = vunpack.c.l.b16 %v1186
        %v1267 = vunpack.c.h.b16 %v1186
        %v1268 = vunpack.c.l.b16 %v1187
        %v1269 = vpack.c.b16 %v1224, %v1221
        %v1270 = vpack.c.b16 %v1225, %v1222
        %v1271 = vpack.c.b16 %v1226, %v1223
        %v1272 = vpack.c.b16 %v1230, %v1227
        %v1273 = vpack.c.b16 %v1231, %v1228
        %v1274 = vpack.c.b16 %v1232, %v1229
        %v1275 = vpack.c.b16 %v1236, %v1233
        %v1276 = vpack.c.b16 %v1237, %v1234
        %v1277 = vpack.c.b16 %v1238, %v1235
        %v1278 = vpack.c.b16 %v1242, %v1239
        %v1279 = vpack.c.b16 %v1243, %v1240
        %v1280 = vpack.c.b16 %v1244, %v1241
        %v1281 = vpack.c.b16 %v1248, %v1245
        %v1282 = vpack.c.b16 %v1249, %v1246
        %v1283 = vpack.c.b16 %v1250, %v1247
        %v1284 = vpack.c.b16 %v1254, %v1251
        %v1285 = vpack.c.b16 %v1255, %v1252
        %v1286 = vpack.c.b16 %v1256, %v1253
        %v1287 = vpack.c.b16 %v1260, %v1257
        %v1288 = vpack.c.b16 %v1261, %v1258
        %v1289 = vpack.c.b16 %v1262, %v1259
        %v1290 = vpack.c.b16 %v1266, %v1263
        %v1291 = vpack.c.b16 %v1267, %v1264
        %v1292 = vpack.c.b16 %v1268, %v1265
        %v1318 = vlaneseq
        %v1319 = vshrl.u32 %v1318, 7
        %v1320 = vsub.s32 0, %v1319
        %v1321 = vrot.slane %v1188, %v1320
        %v1322 = vlaneseq
        %v1323 = vshrl.u32 %v1322, 7
        %v1324 = vsub.s32 1, %v1323
        %v1325 = vrot.slane %v1188, %v1324
        %v1326 = vlaneseq
        %v1327 = vshrl.u32 %v1326, 7
        %v1328 = vsub.s32 2, %v1327
        %v1329 = vrot.slane %v1188, %v1328
        %1333 = vmatprep.subr.bf16.mxu0 %v1291
        %1334 = vmatpush1.bf16.msra.mxu0 %v1290
        %1335 = vmatprep.subr.bf16.mxu0 %v1288
        %1336 = vmatpush1.bf16.msra.mxu0 %v1287
        %1337 = vmatprep.subr.bf16.mxu0 %v1285
        %1338 = vmatpush1.bf16.msra.mxu0 %v1284
        %1339 = vmatprep.subr.bf16.mxu0 %v1282
        %1340 = vmatpush1.bf16.msra.mxu0 %v1281
        %1341 = vmatprep.subr.bf16.mxu0 %v1279
        %1342 = vmatpush1.bf16.msra.mxu0 %v1278
        %1343 = vmatprep.subr.bf16.mxu0 %v1276
        %1344 = vmatpush1.bf16.msra.mxu0 %v1275
        %1345 = vmatprep.subr.bf16.mxu0 %v1273
        %1346 = vmatpush1.bf16.msra.mxu0 %v1272
        %1347 = vmatprep.subr.bf16.mxu0 %v1270
        %1348 = vmatpush1.bf16.msra.mxu0 %v1269
        %1349 = vmatprep.subr.bf16.mxu0 0
        %1350 = vmatpush2.bf16.msra.mxu0 0
        %1351 = vmatprep.subr.bf16.mxu0 0
        %1352 = vmatpush2.bf16.msra.mxu0 0
        %1353 = vmatprep.subr.bf16.mxu0 0
        %1354 = vmatpush2.bf16.msra.mxu0 0
        %1355 = vmatprep.subr.bf16.mxu0 0
        %1356 = vmatpush2.bf16.msra.mxu0 0
        %1357 = vmatprep.subr.bf16.mxu0 0
        %1358 = vmatpush2.bf16.msra.mxu0 0
        %1359 = vmatprep.subr.bf16.mxu0 0
        %1360 = vmatpush2.bf16.msra.mxu0 0
        %1361 = vmatprep.subr.bf16.mxu0 0
        %1362 = vmatpush2.bf16.msra.mxu0 0
        %1363 = vmatprep.subr.bf16.mxu0 0
        %1364 = vmatpush2.bf16.msra.mxu0 0
        %1365 = vmatprep.mubr.bf16.mxu0 0
        %1366 = vmatmul.mubr.bf16.gmra.mxu0 %v1155
        %v1367 = vpop.f32.mrf.mxu0
        %v1368 = vadd.f32 %v1321, %v1367
        %v1369 = vpop.f32.mrf.mxu0
        %v1370 = vadd.f32 %v1325, %v1369
        %v1371 = vpop.f32.mrf.mxu0
        %v1372 = vpop.f32.mrf.mxu0
        %1373 = vdwg.mxu0
        %1374 = vmatprep.subr.bf16.mxu0 0
        %1375 = vmatpush1.bf16.msra.mxu0 %v1292
        %1376 = vmatprep.subr.bf16.mxu0 0
        %1377 = vmatpush1.bf16.msra.mxu0 %v1289
        %1378 = vmatprep.subr.bf16.mxu0 0
        %1379 = vmatpush1.bf16.msra.mxu0 %v1286
        %1380 = vmatprep.subr.bf16.mxu0 0
        %1381 = vmatpush1.bf16.msra.mxu0 %v1283
        %1382 = vmatprep.subr.bf16.mxu0 0
        %1383 = vmatpush1.bf16.msra.mxu0 %v1280
        %1384 = vmatprep.subr.bf16.mxu0 0
        %1385 = vmatpush1.bf16.msra.mxu0 %v1277
        %1386 = vmatprep.subr.bf16.mxu0 0
        %1387 = vmatpush1.bf16.msra.mxu0 %v1274
        %1388 = vmatprep.subr.bf16.mxu0 0
        %1389 = vmatpush1.bf16.msra.mxu0 %v1271
        %1390 = vmatprep.subr.bf16.mxu0 0
        %1391 = vmatpush2.bf16.msra.mxu0 0
        %1392 = vmatprep.subr.bf16.mxu0 0
        %1393 = vmatpush2.bf16.msra.mxu0 0
        %1394 = vmatprep.subr.bf16.mxu0 0
        %1395 = vmatpush2.bf16.msra.mxu0 0
        %1396 = vmatprep.subr.bf16.mxu0 0
        %1397 = vmatpush2.bf16.msra.mxu0 0
        %1398 = vmatprep.subr.bf16.mxu0 0
        %1399 = vmatpush2.bf16.msra.mxu0 0
        %1400 = vmatprep.subr.bf16.mxu0 0
        %1401 = vmatpush2.bf16.msra.mxu0 0
        %1402 = vmatprep.subr.bf16.mxu0 0
        %1403 = vmatpush2.bf16.msra.mxu0 0
        %1404 = vmatprep.subr.bf16.mxu0 0
        %1405 = vmatpush2.bf16.msra.mxu0 0
        %1406 = vmatprep.mubr.bf16.mxu0 0
        %1407 = vmatmul.mubr.bf16.gmra.mxu0 %v1155
        %v1408 = vpop.f32.mrf.mxu0
        %v1409 = vadd.f32 %v1329, %v1408
        %v1410 = vpop.f32.mrf.mxu0
        %v1411 = vpop.f32.mrf.mxu0
        %v1412 = vpop.f32.mrf.mxu0
        %1413 = vdwg.mxu0
        %v1414 = vadd.f32 %v1154, %v1368
        %v1415 = vxor.u32 %v1414, 2147483648
        %v1416 = vmul.f32 %v1415, 1.442695
        %v1417 = vpow.pop %v1416
        %v1418 = vadd.f32 %v1417, 1.0
        %v1419 = vrcp.pop %v1418
        %v1420 = vmul.f32 1.0, %v1419
        %v1422 = vrot.slane %v1154, 1
        %v1424 = vadd.f32 %v1422, %v1370
        %v1425 = vxor.u32 %v1424, 2147483648
        %v1426 = vmul.f32 %v1425, 1.442695
        %v1427 = vpow.pop %v1426
        %v1428 = vadd.f32 %v1427, 1.0
        %v1429 = vrcp.pop %v1428
        %v1430 = vmul.f32 1.0, %v1429
        %v1431 = vmul.f32 %v1420, %v1409
        %v1432 = vrot.slane %v1154, 2
        %v1434 = vadd.f32 %v1432, %v1431
        %v1435 = vtanh.pop %v1434
        %v1436 = vsub.f32 1.0, %v1430
        %v1437 = vmul.f32 %v1436, %v1435
        %v1438 = vmul.f32 %v1430, %v1151
        %v1439 = vadd.f32 %v1437, %v1438
        %s1440 = sadd.s32 %s852, 2
        %p1441 = scmp.lt.s32.totalorder %s1440, 10
        %s1442 = scalar_select %p1441, 1, 0
        %v1443 = vstv %s1442
        %vm1444 = vcmp.eq.s32.totalorder %v1443, 1
        %v1445 = vsel %vm1444, %v1439, %v1151
        %1446 = vst [vmem:[%s295 + $0x2] sm:$0x1] %v1445
        %s1447 = scalar_lea.vmem [#allocation3], 3
        %v1448 = vld [vmem:[%s1447] ss:$8 sm:$0x7]
        %v1449 = vpack.c.bf16 %v1445, %v1445
        %v1450 = vld [vmem:[#allocation9] sm:$0xff]
        %v1451 = vld [vmem:[#allocation9 + $0x8] sm:$0xf]
        %v1452 = vld [vmem:[#allocation9 + $0xc] sm:$0xff]
        %v1453 = vld [vmem:[#allocation9 + $0x14] sm:$0xf]
        %v1454 = vld [vmem:[#allocation9 + $0x18] sm:$0xff]
        %v1455 = vld [vmem:[#allocation9 + $0x20] sm:$0xf]
        %v1456 = vld [vmem:[#allocation9 + $0x24] sm:$0xff]
        %v1457 = vld [vmem:[#allocation9 + $0x2c] sm:$0xf]
        %v1458 = vld [vmem:[#allocation9 + $0x30] sm:$0xff]
        %v1459 = vld [vmem:[#allocation9 + $0x38] sm:$0xf]
        %v1460 = vld [vmem:[#allocation9 + $0x3c] sm:$0xff]
        %v1461 = vld [vmem:[#allocation9 + $0x44] sm:$0xf]
        %v1462 = vld [vmem:[#allocation9 + $0x48] sm:$0xff]
        %v1463 = vld [vmem:[#allocation9 + $0x50] sm:$0xf]
        %v1464 = vld [vmem:[#allocation9 + $0x54] sm:$0xff]
        %v1465 = vld [vmem:[#allocation9 + $0x5c] sm:$0xf]
        %v1466 = vld [vmem:[#allocation9 + $0x60] sm:$0xff]
        %v1467 = vld [vmem:[#allocation9 + $0x68] sm:$0xf]
        %v1468 = vld [vmem:[#allocation9 + $0x6c] sm:$0xff]
        %v1469 = vld [vmem:[#allocation9 + $0x74] sm:$0xf]
        %v1470 = vld [vmem:[#allocation9 + $0x78] sm:$0xff]
        %v1471 = vld [vmem:[#allocation9 + $0x80] sm:$0xf]
        %v1472 = vld [vmem:[#allocation9 + $0x84] sm:$0xff]
        %v1473 = vld [vmem:[#allocation9 + $0x8c] sm:$0xf]
        %v1474 = vld [vmem:[#allocation9 + $0x90] sm:$0xff]
        %v1475 = vld [vmem:[#allocation9 + $0x98] sm:$0xf]
        %v1476 = vld [vmem:[#allocation9 + $0x9c] sm:$0xff]
        %v1477 = vld [vmem:[#allocation9 + $0xa4] sm:$0xf]
        %v1478 = vld [vmem:[#allocation9 + $0xa8] sm:$0xff]
        %v1479 = vld [vmem:[#allocation9 + $0xb0] sm:$0xf]
        %v1480 = vld [vmem:[#allocation9 + $0xb4] sm:$0xff]
        %v1481 = vld [vmem:[#allocation9 + $0xbc] sm:$0xf]
        %v1482 = vld [vmem:[%s5] sm:$0x7]
        %v1515 = vunpack.c.l.b16 %v1450
        %v1516 = vunpack.c.h.b16 %v1450
        %v1517 = vunpack.c.l.b16 %v1451
        %v1518 = vunpack.c.l.b16 %v1452
        %v1519 = vunpack.c.h.b16 %v1452
        %v1520 = vunpack.c.l.b16 %v1453
        %v1521 = vunpack.c.l.b16 %v1454
        %v1522 = vunpack.c.h.b16 %v1454
        %v1523 = vunpack.c.l.b16 %v1455
        %v1524 = vunpack.c.l.b16 %v1456
        %v1525 = vunpack.c.h.b16 %v1456
        %v1526 = vunpack.c.l.b16 %v1457
        %v1527 = vunpack.c.l.b16 %v1458
        %v1528 = vunpack.c.h.b16 %v1458
        %v1529 = vunpack.c.l.b16 %v1459
        %v1530 = vunpack.c.l.b16 %v1460
        %v1531 = vunpack.c.h.b16 %v1460
        %v1532 = vunpack.c.l.b16 %v1461
        %v1533 = vunpack.c.l.b16 %v1462
        %v1534 = vunpack.c.h.b16 %v1462
        %v1535 = vunpack.c.l.b16 %v1463
        %v1536 = vunpack.c.l.b16 %v1464
        %v1537 = vunpack.c.h.b16 %v1464
        %v1538 = vunpack.c.l.b16 %v1465
        %v1539 = vunpack.c.l.b16 %v1466
        %v1540 = vunpack.c.h.b16 %v1466
        %v1541 = vunpack.c.l.b16 %v1467
        %v1542 = vunpack.c.l.b16 %v1468
        %v1543 = vunpack.c.h.b16 %v1468
        %v1544 = vunpack.c.l.b16 %v1469
        %v1545 = vunpack.c.l.b16 %v1470
        %v1546 = vunpack.c.h.b16 %v1470
        %v1547 = vunpack.c.l.b16 %v1471
        %v1548 = vunpack.c.l.b16 %v1472
        %v1549 = vunpack.c.h.b16 %v1472
        %v1550 = vunpack.c.l.b16 %v1473
        %v1551 = vunpack.c.l.b16 %v1474
        %v1552 = vunpack.c.h.b16 %v1474
        %v1553 = vunpack.c.l.b16 %v1475
        %v1554 = vunpack.c.l.b16 %v1476
        %v1555 = vunpack.c.h.b16 %v1476
        %v1556 = vunpack.c.l.b16 %v1477
        %v1557 = vunpack.c.l.b16 %v1478
        %v1558 = vunpack.c.h.b16 %v1478
        %v1559 = vunpack.c.l.b16 %v1479
        %v1560 = vunpack.c.l.b16 %v1480
        %v1561 = vunpack.c.h.b16 %v1480
        %v1562 = vunpack.c.l.b16 %v1481
        %v1563 = vpack.c.b16 %v1518, %v1515
        %v1564 = vpack.c.b16 %v1519, %v1516
        %v1565 = vpack.c.b16 %v1520, %v1517
        %v1566 = vpack.c.b16 %v1524, %v1521
        %v1567 = vpack.c.b16 %v1525, %v1522
        %v1568 = vpack.c.b16 %v1526, %v1523
        %v1569 = vpack.c.b16 %v1530, %v1527
        %v1570 = vpack.c.b16 %v1531, %v1528
        %v1571 = vpack.c.b16 %v1532, %v1529
        %v1572 = vpack.c.b16 %v1536, %v1533
        %v1573 = vpack.c.b16 %v1537, %v1534
        %v1574 = vpack.c.b16 %v1538, %v1535
        %v1575 = vpack.c.b16 %v1542, %v1539
        %v1576 = vpack.c.b16 %v1543, %v1540
        %v1577 = vpack.c.b16 %v1544, %v1541
        %v1578 = vpack.c.b16 %v1548, %v1545
        %v1579 = vpack.c.b16 %v1549, %v1546
        %v1580 = vpack.c.b16 %v1550, %v1547
        %v1581 = vpack.c.b16 %v1554, %v1551
        %v1582 = vpack.c.b16 %v1555, %v1552
        %v1583 = vpack.c.b16 %v1556, %v1553
        %v1584 = vpack.c.b16 %v1560, %v1557
        %v1585 = vpack.c.b16 %v1561, %v1558
        %v1586 = vpack.c.b16 %v1562, %v1559
        %v1612 = vlaneseq
        %v1613 = vshrl.u32 %v1612, 7
        %v1614 = vsub.s32 0, %v1613
        %v1615 = vrot.slane %v1482, %v1614
        %v1616 = vlaneseq
        %v1617 = vshrl.u32 %v1616, 7
        %v1618 = vsub.s32 1, %v1617
        %v1619 = vrot.slane %v1482, %v1618
        %v1620 = vlaneseq
        %v1621 = vshrl.u32 %v1620, 7
        %v1622 = vsub.s32 2, %v1621
        %v1623 = vrot.slane %v1482, %v1622
        %1627 = vmatprep.subr.bf16.mxu0 %v1585
        %1628 = vmatpush1.bf16.msra.mxu0 %v1584
        %1629 = vmatprep.subr.bf16.mxu0 %v1582
        %1630 = vmatpush1.bf16.msra.mxu0 %v1581
        %1631 = vmatprep.subr.bf16.mxu0 %v1579
        %1632 = vmatpush1.bf16.msra.mxu0 %v1578
        %1633 = vmatprep.subr.bf16.mxu0 %v1576
        %1634 = vmatpush1.bf16.msra.mxu0 %v1575
        %1635 = vmatprep.subr.bf16.mxu0 %v1573
        %1636 = vmatpush1.bf16.msra.mxu0 %v1572
        %1637 = vmatprep.subr.bf16.mxu0 %v1570
        %1638 = vmatpush1.bf16.msra.mxu0 %v1569
        %1639 = vmatprep.subr.bf16.mxu0 %v1567
        %1640 = vmatpush1.bf16.msra.mxu0 %v1566
        %1641 = vmatprep.subr.bf16.mxu0 %v1564
        %1642 = vmatpush1.bf16.msra.mxu0 %v1563
        %1643 = vmatprep.subr.bf16.mxu0 0
        %1644 = vmatpush2.bf16.msra.mxu0 0
        %1645 = vmatprep.subr.bf16.mxu0 0
        %1646 = vmatpush2.bf16.msra.mxu0 0
        %1647 = vmatprep.subr.bf16.mxu0 0
        %1648 = vmatpush2.bf16.msra.mxu0 0
        %1649 = vmatprep.subr.bf16.mxu0 0
        %1650 = vmatpush2.bf16.msra.mxu0 0
        %1651 = vmatprep.subr.bf16.mxu0 0
        %1652 = vmatpush2.bf16.msra.mxu0 0
        %1653 = vmatprep.subr.bf16.mxu0 0
        %1654 = vmatpush2.bf16.msra.mxu0 0
        %1655 = vmatprep.subr.bf16.mxu0 0
        %1656 = vmatpush2.bf16.msra.mxu0 0
        %1657 = vmatprep.subr.bf16.mxu0 0
        %1658 = vmatpush2.bf16.msra.mxu0 0
        %1659 = vmatprep.mubr.bf16.mxu0 0
        %1660 = vmatmul.mubr.bf16.gmra.mxu0 %v1449
        %v1661 = vpop.f32.mrf.mxu0
        %v1662 = vadd.f32 %v1615, %v1661
        %v1663 = vpop.f32.mrf.mxu0
        %v1664 = vadd.f32 %v1619, %v1663
        %v1665 = vpop.f32.mrf.mxu0
        %v1666 = vpop.f32.mrf.mxu0
        %1667 = vdwg.mxu0
        %1668 = vmatprep.subr.bf16.mxu0 0
        %1669 = vmatpush1.bf16.msra.mxu0 %v1586
        %1670 = vmatprep.subr.bf16.mxu0 0
        %1671 = vmatpush1.bf16.msra.mxu0 %v1583
        %1672 = vmatprep.subr.bf16.mxu0 0
        %1673 = vmatpush1.bf16.msra.mxu0 %v1580
        %1674 = vmatprep.subr.bf16.mxu0 0
        %1675 = vmatpush1.bf16.msra.mxu0 %v1577
        %1676 = vmatprep.subr.bf16.mxu0 0
        %1677 = vmatpush1.bf16.msra.mxu0 %v1574
        %1678 = vmatprep.subr.bf16.mxu0 0
        %1679 = vmatpush1.bf16.msra.mxu0 %v1571
        %1680 = vmatprep.subr.bf16.mxu0 0
        %1681 = vmatpush1.bf16.msra.mxu0 %v1568
        %1682 = vmatprep.subr.bf16.mxu0 0
        %1683 = vmatpush1.bf16.msra.mxu0 %v1565
        %1684 = vmatprep.subr.bf16.mxu0 0
        %1685 = vmatpush2.bf16.msra.mxu0 0
        %1686 = vmatprep.subr.bf16.mxu0 0
        %1687 = vmatpush2.bf16.msra.mxu0 0
        %1688 = vmatprep.subr.bf16.mxu0 0
        %1689 = vmatpush2.bf16.msra.mxu0 0
        %1690 = vmatprep.subr.bf16.mxu0 0
        %1691 = vmatpush2.bf16.msra.mxu0 0
        %1692 = vmatprep.subr.bf16.mxu0 0
        %1693 = vmatpush2.bf16.msra.mxu0 0
        %1694 = vmatprep.subr.bf16.mxu0 0
        %1695 = vmatpush2.bf16.msra.mxu0 0
        %1696 = vmatprep.subr.bf16.mxu0 0
        %1697 = vmatpush2.bf16.msra.mxu0 0
        %1698 = vmatprep.subr.bf16.mxu0 0
        %1699 = vmatpush2.bf16.msra.mxu0 0
        %1700 = vmatprep.mubr.bf16.mxu0 0
        %1701 = vmatmul.mubr.bf16.gmra.mxu0 %v1449
        %v1702 = vpop.f32.mrf.mxu0
        %v1703 = vadd.f32 %v1623, %v1702
        %v1704 = vpop.f32.mrf.mxu0
        %v1705 = vpop.f32.mrf.mxu0
        %v1706 = vpop.f32.mrf.mxu0
        %1707 = vdwg.mxu0
        %v1708 = vadd.f32 %v1448, %v1662
        %v1709 = vxor.u32 %v1708, 2147483648
        %v1710 = vmul.f32 %v1709, 1.442695
        %v1711 = vpow.pop %v1710
        %v1712 = vadd.f32 %v1711, 1.0
        %v1713 = vrcp.pop %v1712
        %v1714 = vmul.f32 1.0, %v1713
        %v1716 = vrot.slane %v1448, 1
        %v1718 = vadd.f32 %v1716, %v1664
        %v1719 = vxor.u32 %v1718, 2147483648
        %v1720 = vmul.f32 %v1719, 1.442695
        %v1721 = vpow.pop %v1720
        %v1722 = vadd.f32 %v1721, 1.0
        %v1723 = vrcp.pop %v1722
        %v1724 = vmul.f32 1.0, %v1723
        %v1725 = vmul.f32 %v1714, %v1703
        %v1726 = vrot.slane %v1448, 2
        %v1728 = vadd.f32 %v1726, %v1725
        %v1729 = vtanh.pop %v1728
        %v1730 = vsub.f32 1.0, %v1724
        %v1731 = vmul.f32 %v1730, %v1729
        %v1732 = vmul.f32 %v1724, %v1445
        %v1733 = vadd.f32 %v1731, %v1732
        %s1734 = sadd.s32 %s852, 3
        %p1735 = scmp.lt.s32.totalorder %s1734, 10
        %s1736 = scalar_select %p1735, 1, 0
        %v1737 = vstv %s1736
        %vm1738 = vcmp.eq.s32.totalorder %v1737, 1
        %v1739 = vsel %vm1738, %v1733, %v1445
        %1740 = vst [vmem:[%s295 + $0x3] sm:$0x1] %v1739
        %s1741 = scalar_lea.vmem [#allocation3], 4
        %v1742 = vld [vmem:[%s1741] ss:$8 sm:$0x7]
        %v1743 = vpack.c.bf16 %v1739, %v1739
        %v1744 = vld [vmem:[#allocation9] sm:$0xff]
        %v1745 = vld [vmem:[#allocation9 + $0x8] sm:$0xf]
        %v1746 = vld [vmem:[#allocation9 + $0xc] sm:$0xff]
        %v1747 = vld [vmem:[#allocation9 + $0x14] sm:$0xf]
        %v1748 = vld [vmem:[#allocation9 + $0x18] sm:$0xff]
        %v1749 = vld [vmem:[#allocation9 + $0x20] sm:$0xf]
        %v1750 = vld [vmem:[#allocation9 + $0x24] sm:$0xff]
        %v1751 = vld [vmem:[#allocation9 + $0x2c] sm:$0xf]
        %v1752 = vld [vmem:[#allocation9 + $0x30] sm:$0xff]
        %v1753 = vld [vmem:[#allocation9 + $0x38] sm:$0xf]
        %v1754 = vld [vmem:[#allocation9 + $0x3c] sm:$0xff]
        %v1755 = vld [vmem:[#allocation9 + $0x44] sm:$0xf]
        %v1756 = vld [vmem:[#allocation9 + $0x48] sm:$0xff]
        %v1757 = vld [vmem:[#allocation9 + $0x50] sm:$0xf]
        %v1758 = vld [vmem:[#allocation9 + $0x54] sm:$0xff]
        %v1759 = vld [vmem:[#allocation9 + $0x5c] sm:$0xf]
        %v1760 = vld [vmem:[#allocation9 + $0x60] sm:$0xff]
        %v1761 = vld [vmem:[#allocation9 + $0x68] sm:$0xf]
        %v1762 = vld [vmem:[#allocation9 + $0x6c] sm:$0xff]
        %v1763 = vld [vmem:[#allocation9 + $0x74] sm:$0xf]
        %v1764 = vld [vmem:[#allocation9 + $0x78] sm:$0xff]
        %v1765 = vld [vmem:[#allocation9 + $0x80] sm:$0xf]
        %v1766 = vld [vmem:[#allocation9 + $0x84] sm:$0xff]
        %v1767 = vld [vmem:[#allocation9 + $0x8c] sm:$0xf]
        %v1768 = vld [vmem:[#allocation9 + $0x90] sm:$0xff]
        %v1769 = vld [vmem:[#allocation9 + $0x98] sm:$0xf]
        %v1770 = vld [vmem:[#allocation9 + $0x9c] sm:$0xff]
        %v1771 = vld [vmem:[#allocation9 + $0xa4] sm:$0xf]
        %v1772 = vld [vmem:[#allocation9 + $0xa8] sm:$0xff]
        %v1773 = vld [vmem:[#allocation9 + $0xb0] sm:$0xf]
        %v1774 = vld [vmem:[#allocation9 + $0xb4] sm:$0xff]
        %v1775 = vld [vmem:[#allocation9 + $0xbc] sm:$0xf]
        %v1776 = vld [vmem:[%s5] sm:$0x7]
        %v1809 = vunpack.c.l.b16 %v1744
        %v1810 = vunpack.c.h.b16 %v1744
        %v1811 = vunpack.c.l.b16 %v1745
        %v1812 = vunpack.c.l.b16 %v1746
        %v1813 = vunpack.c.h.b16 %v1746
        %v1814 = vunpack.c.l.b16 %v1747
        %v1815 = vunpack.c.l.b16 %v1748
        %v1816 = vunpack.c.h.b16 %v1748
        %v1817 = vunpack.c.l.b16 %v1749
        %v1818 = vunpack.c.l.b16 %v1750
        %v1819 = vunpack.c.h.b16 %v1750
        %v1820 = vunpack.c.l.b16 %v1751
        %v1821 = vunpack.c.l.b16 %v1752
        %v1822 = vunpack.c.h.b16 %v1752
        %v1823 = vunpack.c.l.b16 %v1753
        %v1824 = vunpack.c.l.b16 %v1754
        %v1825 = vunpack.c.h.b16 %v1754
        %v1826 = vunpack.c.l.b16 %v1755
        %v1827 = vunpack.c.l.b16 %v1756
        %v1828 = vunpack.c.h.b16 %v1756
        %v1829 = vunpack.c.l.b16 %v1757
        %v1830 = vunpack.c.l.b16 %v1758
        %v1831 = vunpack.c.h.b16 %v1758
        %v1832 = vunpack.c.l.b16 %v1759
        %v1833 = vunpack.c.l.b16 %v1760
        %v1834 = vunpack.c.h.b16 %v1760
        %v1835 = vunpack.c.l.b16 %v1761
        %v1836 = vunpack.c.l.b16 %v1762
        %v1837 = vunpack.c.h.b16 %v1762
        %v1838 = vunpack.c.l.b16 %v1763
        %v1839 = vunpack.c.l.b16 %v1764
        %v1840 = vunpack.c.h.b16 %v1764
        %v1841 = vunpack.c.l.b16 %v1765
        %v1842 = vunpack.c.l.b16 %v1766
        %v1843 = vunpack.c.h.b16 %v1766
        %v1844 = vunpack.c.l.b16 %v1767
        %v1845 = vunpack.c.l.b16 %v1768
        %v1846 = vunpack.c.h.b16 %v1768
        %v1847 = vunpack.c.l.b16 %v1769
        %v1848 = vunpack.c.l.b16 %v1770
        %v1849 = vunpack.c.h.b16 %v1770
        %v1850 = vunpack.c.l.b16 %v1771
        %v1851 = vunpack.c.l.b16 %v1772
        %v1852 = vunpack.c.h.b16 %v1772
        %v1853 = vunpack.c.l.b16 %v1773
        %v1854 = vunpack.c.l.b16 %v1774
        %v1855 = vunpack.c.h.b16 %v1774
        %v1856 = vunpack.c.l.b16 %v1775
        %v1857 = vpack.c.b16 %v1812, %v1809
        %v1858 = vpack.c.b16 %v1813, %v1810
        %v1859 = vpack.c.b16 %v1814, %v1811
        %v1860 = vpack.c.b16 %v1818, %v1815
        %v1861 = vpack.c.b16 %v1819, %v1816
        %v1862 = vpack.c.b16 %v1820, %v1817
        %v1863 = vpack.c.b16 %v1824, %v1821
        %v1864 = vpack.c.b16 %v1825, %v1822
        %v1865 = vpack.c.b16 %v1826, %v1823
        %v1866 = vpack.c.b16 %v1830, %v1827
        %v1867 = vpack.c.b16 %v1831, %v1828
        %v1868 = vpack.c.b16 %v1832, %v1829
        %v1869 = vpack.c.b16 %v1836, %v1833
        %v1870 = vpack.c.b16 %v1837, %v1834
        %v1871 = vpack.c.b16 %v1838, %v1835
        %v1872 = vpack.c.b16 %v1842, %v1839
        %v1873 = vpack.c.b16 %v1843, %v1840
        %v1874 = vpack.c.b16 %v1844, %v1841
        %v1875 = vpack.c.b16 %v1848, %v1845
        %v1876 = vpack.c.b16 %v1849, %v1846
        %v1877 = vpack.c.b16 %v1850, %v1847
        %v1878 = vpack.c.b16 %v1854, %v1851
        %v1879 = vpack.c.b16 %v1855, %v1852
        %v1880 = vpack.c.b16 %v1856, %v1853
        %v1906 = vlaneseq
        %v1907 = vshrl.u32 %v1906, 7
        %v1908 = vsub.s32 0, %v1907
        %v1909 = vrot.slane %v1776, %v1908
        %v1910 = vlaneseq
        %v1911 = vshrl.u32 %v1910, 7
        %v1912 = vsub.s32 1, %v1911
        %v1913 = vrot.slane %v1776, %v1912
        %v1914 = vlaneseq
        %v1915 = vshrl.u32 %v1914, 7
        %v1916 = vsub.s32 2, %v1915
        %v1917 = vrot.slane %v1776, %v1916
        %1921 = vmatprep.subr.bf16.mxu0 %v1879
        %1922 = vmatpush1.bf16.msra.mxu0 %v1878
        %1923 = vmatprep.subr.bf16.mxu0 %v1876
        %1924 = vmatpush1.bf16.msra.mxu0 %v1875
        %1925 = vmatprep.subr.bf16.mxu0 %v1873
        %1926 = vmatpush1.bf16.msra.mxu0 %v1872
        %1927 = vmatprep.subr.bf16.mxu0 %v1870
        %1928 = vmatpush1.bf16.msra.mxu0 %v1869
        %1929 = vmatprep.subr.bf16.mxu0 %v1867
        %1930 = vmatpush1.bf16.msra.mxu0 %v1866
        %1931 = vmatprep.subr.bf16.mxu0 %v1864
        %1932 = vmatpush1.bf16.msra.mxu0 %v1863
        %1933 = vmatprep.subr.bf16.mxu0 %v1861
        %1934 = vmatpush1.bf16.msra.mxu0 %v1860
        %1935 = vmatprep.subr.bf16.mxu0 %v1858
        %1936 = vmatpush1.bf16.msra.mxu0 %v1857
        %1937 = vmatprep.subr.bf16.mxu0 0
        %1938 = vmatpush2.bf16.msra.mxu0 0
        %1939 = vmatprep.subr.bf16.mxu0 0
        %1940 = vmatpush2.bf16.msra.mxu0 0
        %1941 = vmatprep.subr.bf16.mxu0 0
        %1942 = vmatpush2.bf16.msra.mxu0 0
        %1943 = vmatprep.subr.bf16.mxu0 0
        %1944 = vmatpush2.bf16.msra.mxu0 0
        %1945 = vmatprep.subr.bf16.mxu0 0
        %1946 = vmatpush2.bf16.msra.mxu0 0
        %1947 = vmatprep.subr.bf16.mxu0 0
        %1948 = vmatpush2.bf16.msra.mxu0 0
        %1949 = vmatprep.subr.bf16.mxu0 0
        %1950 = vmatpush2.bf16.msra.mxu0 0
        %1951 = vmatprep.subr.bf16.mxu0 0
        %1952 = vmatpush2.bf16.msra.mxu0 0
        %1953 = vmatprep.mubr.bf16.mxu0 0
        %1954 = vmatmul.mubr.bf16.gmra.mxu0 %v1743
        %v1955 = vpop.f32.mrf.mxu0
        %v1956 = vadd.f32 %v1909, %v1955
        %v1957 = vpop.f32.mrf.mxu0
        %v1958 = vadd.f32 %v1913, %v1957
        %v1959 = vpop.f32.mrf.mxu0
        %v1960 = vpop.f32.mrf.mxu0
        %1961 = vdwg.mxu0
        %1962 = vmatprep.subr.bf16.mxu0 0
        %1963 = vmatpush1.bf16.msra.mxu0 %v1880
        %1964 = vmatprep.subr.bf16.mxu0 0
        %1965 = vmatpush1.bf16.msra.mxu0 %v1877
        %1966 = vmatprep.subr.bf16.mxu0 0
        %1967 = vmatpush1.bf16.msra.mxu0 %v1874
        %1968 = vmatprep.subr.bf16.mxu0 0
        %1969 = vmatpush1.bf16.msra.mxu0 %v1871
        %1970 = vmatprep.subr.bf16.mxu0 0
        %1971 = vmatpush1.bf16.msra.mxu0 %v1868
        %1972 = vmatprep.subr.bf16.mxu0 0
        %1973 = vmatpush1.bf16.msra.mxu0 %v1865
        %1974 = vmatprep.subr.bf16.mxu0 0
        %1975 = vmatpush1.bf16.msra.mxu0 %v1862
        %1976 = vmatprep.subr.bf16.mxu0 0
        %1977 = vmatpush1.bf16.msra.mxu0 %v1859
        %1978 = vmatprep.subr.bf16.mxu0 0
        %1979 = vmatpush2.bf16.msra.mxu0 0
        %1980 = vmatprep.subr.bf16.mxu0 0
        %1981 = vmatpush2.bf16.msra.mxu0 0
        %1982 = vmatprep.subr.bf16.mxu0 0
        %1983 = vmatpush2.bf16.msra.mxu0 0
        %1984 = vmatprep.subr.bf16.mxu0 0
        %1985 = vmatpush2.bf16.msra.mxu0 0
        %1986 = vmatprep.subr.bf16.mxu0 0
        %1987 = vmatpush2.bf16.msra.mxu0 0
        %1988 = vmatprep.subr.bf16.mxu0 0
        %1989 = vmatpush2.bf16.msra.mxu0 0
        %1990 = vmatprep.subr.bf16.mxu0 0
        %1991 = vmatpush2.bf16.msra.mxu0 0
        %1992 = vmatprep.subr.bf16.mxu0 0
        %1993 = vmatpush2.bf16.msra.mxu0 0
        %1994 = vmatprep.mubr.bf16.mxu0 0
        %1995 = vmatmul.mubr.bf16.gmra.mxu0 %v1743
        %v1996 = vpop.f32.mrf.mxu0
        %v1997 = vadd.f32 %v1917, %v1996
        %v1998 = vpop.f32.mrf.mxu0
        %v1999 = vpop.f32.mrf.mxu0
        %v2000 = vpop.f32.mrf.mxu0
        %2001 = vdwg.mxu0
        %v2002 = vadd.f32 %v1742, %v1956
        %v2003 = vxor.u32 %v2002, 2147483648
        %v2004 = vmul.f32 %v2003, 1.442695
        %v2005 = vpow.pop %v2004
        %v2006 = vadd.f32 %v2005, 1.0
        %v2007 = vrcp.pop %v2006
        %v2008 = vmul.f32 1.0, %v2007
        %v2010 = vrot.slane %v1742, 1
        %v2012 = vadd.f32 %v2010, %v1958
        %v2013 = vxor.u32 %v2012, 2147483648
        %v2014 = vmul.f32 %v2013, 1.442695
        %v2015 = vpow.pop %v2014
        %v2016 = vadd.f32 %v2015, 1.0
        %v2017 = vrcp.pop %v2016
        %v2018 = vmul.f32 1.0, %v2017
        %v2019 = vmul.f32 %v2008, %v1997
        %v2020 = vrot.slane %v1742, 2
        %v2022 = vadd.f32 %v2020, %v2019
        %v2023 = vtanh.pop %v2022
        %v2024 = vsub.f32 1.0, %v2018
        %v2025 = vmul.f32 %v2024, %v2023
        %v2026 = vmul.f32 %v2018, %v1739
        %v2027 = vadd.f32 %v2025, %v2026
        %s2028 = sadd.s32 %s852, 4
        %p2029 = scmp.lt.s32.totalorder %s2028, 10
        %s2030 = scalar_select %p2029, 1, 0
        %v2031 = vstv %s2030
        %vm2032 = vcmp.eq.s32.totalorder %v2031, 1
        %v2033 = vsel %vm2032, %v2027, %v1739
        %2034 = vst [vmem:[%s295 + $0x4] sm:$0x1] %v2033
        %s2035 = scalar_lea.vmem [#allocation3], 5
        %v2036 = vld [vmem:[%s2035] ss:$8 sm:$0x7]
        %v2037 = vpack.c.bf16 %v2033, %v2033
        %v2038 = vld [vmem:[#allocation9] sm:$0xff]
        %v2039 = vld [vmem:[#allocation9 + $0x8] sm:$0xf]
        %v2040 = vld [vmem:[#allocation9 + $0xc] sm:$0xff]
        %v2041 = vld [vmem:[#allocation9 + $0x14] sm:$0xf]
        %v2042 = vld [vmem:[#allocation9 + $0x18] sm:$0xff]
        %v2043 = vld [vmem:[#allocation9 + $0x20] sm:$0xf]
        %v2044 = vld [vmem:[#allocation9 + $0x24] sm:$0xff]
        %v2045 = vld [vmem:[#allocation9 + $0x2c] sm:$0xf]
        %v2046 = vld [vmem:[#allocation9 + $0x30] sm:$0xff]
        %v2047 = vld [vmem:[#allocation9 + $0x38] sm:$0xf]
        %v2048 = vld [vmem:[#allocation9 + $0x3c] sm:$0xff]
        %v2049 = vld [vmem:[#allocation9 + $0x44] sm:$0xf]
        %v2050 = vld [vmem:[#allocation9 + $0x48] sm:$0xff]
        %v2051 = vld [vmem:[#allocation9 + $0x50] sm:$0xf]
        %v2052 = vld [vmem:[#allocation9 + $0x54] sm:$0xff]
        %v2053 = vld [vmem:[#allocation9 + $0x5c] sm:$0xf]
        %v2054 = vld [vmem:[#allocation9 + $0x60] sm:$0xff]
        %v2055 = vld [vmem:[#allocation9 + $0x68] sm:$0xf]
        %v2056 = vld [vmem:[#allocation9 + $0x6c] sm:$0xff]
        %v2057 = vld [vmem:[#allocation9 + $0x74] sm:$0xf]
        %v2058 = vld [vmem:[#allocation9 + $0x78] sm:$0xff]
        %v2059 = vld [vmem:[#allocation9 + $0x80] sm:$0xf]
        %v2060 = vld [vmem:[#allocation9 + $0x84] sm:$0xff]
        %v2061 = vld [vmem:[#allocation9 + $0x8c] sm:$0xf]
        %v2062 = vld [vmem:[#allocation9 + $0x90] sm:$0xff]
        %v2063 = vld [vmem:[#allocation9 + $0x98] sm:$0xf]
        %v2064 = vld [vmem:[#allocation9 + $0x9c] sm:$0xff]
        %v2065 = vld [vmem:[#allocation9 + $0xa4] sm:$0xf]
        %v2066 = vld [vmem:[#allocation9 + $0xa8] sm:$0xff]
        %v2067 = vld [vmem:[#allocation9 + $0xb0] sm:$0xf]
        %v2068 = vld [vmem:[#allocation9 + $0xb4] sm:$0xff]
        %v2069 = vld [vmem:[#allocation9 + $0xbc] sm:$0xf]
        %v2070 = vld [vmem:[%s5] sm:$0x7]
        %v2103 = vunpack.c.l.b16 %v2038
        %v2104 = vunpack.c.h.b16 %v2038
        %v2105 = vunpack.c.l.b16 %v2039
        %v2106 = vunpack.c.l.b16 %v2040
        %v2107 = vunpack.c.h.b16 %v2040
        %v2108 = vunpack.c.l.b16 %v2041
        %v2109 = vunpack.c.l.b16 %v2042
        %v2110 = vunpack.c.h.b16 %v2042
        %v2111 = vunpack.c.l.b16 %v2043
        %v2112 = vunpack.c.l.b16 %v2044
        %v2113 = vunpack.c.h.b16 %v2044
        %v2114 = vunpack.c.l.b16 %v2045
        %v2115 = vunpack.c.l.b16 %v2046
        %v2116 = vunpack.c.h.b16 %v2046
        %v2117 = vunpack.c.l.b16 %v2047
        %v2118 = vunpack.c.l.b16 %v2048
        %v2119 = vunpack.c.h.b16 %v2048
        %v2120 = vunpack.c.l.b16 %v2049
        %v2121 = vunpack.c.l.b16 %v2050
        %v2122 = vunpack.c.h.b16 %v2050
        %v2123 = vunpack.c.l.b16 %v2051
        %v2124 = vunpack.c.l.b16 %v2052
        %v2125 = vunpack.c.h.b16 %v2052
        %v2126 = vunpack.c.l.b16 %v2053
        %v2127 = vunpack.c.l.b16 %v2054
        %v2128 = vunpack.c.h.b16 %v2054
        %v2129 = vunpack.c.l.b16 %v2055
        %v2130 = vunpack.c.l.b16 %v2056
        %v2131 = vunpack.c.h.b16 %v2056
        %v2132 = vunpack.c.l.b16 %v2057
        %v2133 = vunpack.c.l.b16 %v2058
        %v2134 = vunpack.c.h.b16 %v2058
        %v2135 = vunpack.c.l.b16 %v2059
        %v2136 = vunpack.c.l.b16 %v2060
        %v2137 = vunpack.c.h.b16 %v2060
        %v2138 = vunpack.c.l.b16 %v2061
        %v2139 = vunpack.c.l.b16 %v2062
        %v2140 = vunpack.c.h.b16 %v2062
        %v2141 = vunpack.c.l.b16 %v2063
        %v2142 = vunpack.c.l.b16 %v2064
        %v2143 = vunpack.c.h.b16 %v2064
        %v2144 = vunpack.c.l.b16 %v2065
        %v2145 = vunpack.c.l.b16 %v2066
        %v2146 = vunpack.c.h.b16 %v2066
        %v2147 = vunpack.c.l.b16 %v2067
        %v2148 = vunpack.c.l.b16 %v2068
        %v2149 = vunpack.c.h.b16 %v2068
        %v2150 = vunpack.c.l.b16 %v2069
        %v2151 = vpack.c.b16 %v2106, %v2103
        %v2152 = vpack.c.b16 %v2107, %v2104
        %v2153 = vpack.c.b16 %v2108, %v2105
        %v2154 = vpack.c.b16 %v2112, %v2109
        %v2155 = vpack.c.b16 %v2113, %v2110
        %v2156 = vpack.c.b16 %v2114, %v2111
        %v2157 = vpack.c.b16 %v2118, %v2115
        %v2158 = vpack.c.b16 %v2119, %v2116
        %v2159 = vpack.c.b16 %v2120, %v2117
        %v2160 = vpack.c.b16 %v2124, %v2121
        %v2161 = vpack.c.b16 %v2125, %v2122
        %v2162 = vpack.c.b16 %v2126, %v2123
        %v2163 = vpack.c.b16 %v2130, %v2127
        %v2164 = vpack.c.b16 %v2131, %v2128
        %v2165 = vpack.c.b16 %v2132, %v2129
        %v2166 = vpack.c.b16 %v2136, %v2133
        %v2167 = vpack.c.b16 %v2137, %v2134
        %v2168 = vpack.c.b16 %v2138, %v2135
        %v2169 = vpack.c.b16 %v2142, %v2139
        %v2170 = vpack.c.b16 %v2143, %v2140
        %v2171 = vpack.c.b16 %v2144, %v2141
        %v2172 = vpack.c.b16 %v2148, %v2145
        %v2173 = vpack.c.b16 %v2149, %v2146
        %v2174 = vpack.c.b16 %v2150, %v2147
        %v2200 = vlaneseq
        %v2201 = vshrl.u32 %v2200, 7
        %v2202 = vsub.s32 0, %v2201
        %v2203 = vrot.slane %v2070, %v2202
        %v2204 = vlaneseq
        %v2205 = vshrl.u32 %v2204, 7
        %v2206 = vsub.s32 1, %v2205
        %v2207 = vrot.slane %v2070, %v2206
        %v2208 = vlaneseq
        %v2209 = vshrl.u32 %v2208, 7
        %v2210 = vsub.s32 2, %v2209
        %v2211 = vrot.slane %v2070, %v2210
        %2215 = vmatprep.subr.bf16.mxu0 %v2173
        %2216 = vmatpush1.bf16.msra.mxu0 %v2172
        %2217 = vmatprep.subr.bf16.mxu0 %v2170
        %2218 = vmatpush1.bf16.msra.mxu0 %v2169
        %2219 = vmatprep.subr.bf16.mxu0 %v2167
        %2220 = vmatpush1.bf16.msra.mxu0 %v2166
        %2221 = vmatprep.subr.bf16.mxu0 %v2164
        %2222 = vmatpush1.bf16.msra.mxu0 %v2163
        %2223 = vmatprep.subr.bf16.mxu0 %v2161
        %2224 = vmatpush1.bf16.msra.mxu0 %v2160
        %2225 = vmatprep.subr.bf16.mxu0 %v2158
        %2226 = vmatpush1.bf16.msra.mxu0 %v2157
        %2227 = vmatprep.subr.bf16.mxu0 %v2155
        %2228 = vmatpush1.bf16.msra.mxu0 %v2154
        %2229 = vmatprep.subr.bf16.mxu0 %v2152
        %2230 = vmatpush1.bf16.msra.mxu0 %v2151
        %2231 = vmatprep.subr.bf16.mxu0 0
        %2232 = vmatpush2.bf16.msra.mxu0 0
        %2233 = vmatprep.subr.bf16.mxu0 0
        %2234 = vmatpush2.bf16.msra.mxu0 0
        %2235 = vmatprep.subr.bf16.mxu0 0
        %2236 = vmatpush2.bf16.msra.mxu0 0
        %2237 = vmatprep.subr.bf16.mxu0 0
        %2238 = vmatpush2.bf16.msra.mxu0 0
        %2239 = vmatprep.subr.bf16.mxu0 0
        %2240 = vmatpush2.bf16.msra.mxu0 0
        %2241 = vmatprep.subr.bf16.mxu0 0
        %2242 = vmatpush2.bf16.msra.mxu0 0
        %2243 = vmatprep.subr.bf16.mxu0 0
        %2244 = vmatpush2.bf16.msra.mxu0 0
        %2245 = vmatprep.subr.bf16.mxu0 0
        %2246 = vmatpush2.bf16.msra.mxu0 0
        %2247 = vmatprep.mubr.bf16.mxu0 0
        %2248 = vmatmul.mubr.bf16.gmra.mxu0 %v2037
        %v2249 = vpop.f32.mrf.mxu0
        %v2250 = vadd.f32 %v2203, %v2249
        %v2251 = vpop.f32.mrf.mxu0
        %v2252 = vadd.f32 %v2207, %v2251
        %v2253 = vpop.f32.mrf.mxu0
        %v2254 = vpop.f32.mrf.mxu0
        %2255 = vdwg.mxu0
        %2256 = vmatprep.subr.bf16.mxu0 0
        %2257 = vmatpush1.bf16.msra.mxu0 %v2174
        %2258 = vmatprep.subr.bf16.mxu0 0
        %2259 = vmatpush1.bf16.msra.mxu0 %v2171
        %2260 = vmatprep.subr.bf16.mxu0 0
        %2261 = vmatpush1.bf16.msra.mxu0 %v2168
        %2262 = vmatprep.subr.bf16.mxu0 0
        %2263 = vmatpush1.bf16.msra.mxu0 %v2165
        %2264 = vmatprep.subr.bf16.mxu0 0
        %2265 = vmatpush1.bf16.msra.mxu0 %v2162
        %2266 = vmatprep.subr.bf16.mxu0 0
        %2267 = vmatpush1.bf16.msra.mxu0 %v2159
        %2268 = vmatprep.subr.bf16.mxu0 0
        %2269 = vmatpush1.bf16.msra.mxu0 %v2156
        %2270 = vmatprep.subr.bf16.mxu0 0
        %2271 = vmatpush1.bf16.msra.mxu0 %v2153
        %2272 = vmatprep.subr.bf16.mxu0 0
        %2273 = vmatpush2.bf16.msra.mxu0 0
        %2274 = vmatprep.subr.bf16.mxu0 0
        %2275 = vmatpush2.bf16.msra.mxu0 0
        %2276 = vmatprep.subr.bf16.mxu0 0
        %2277 = vmatpush2.bf16.msra.mxu0 0
        %2278 = vmatprep.subr.bf16.mxu0 0
        %2279 = vmatpush2.bf16.msra.mxu0 0
        %2280 = vmatprep.subr.bf16.mxu0 0
        %2281 = vmatpush2.bf16.msra.mxu0 0
        %2282 = vmatprep.subr.bf16.mxu0 0
        %2283 = vmatpush2.bf16.msra.mxu0 0
        %2284 = vmatprep.subr.bf16.mxu0 0
        %2285 = vmatpush2.bf16.msra.mxu0 0
        %2286 = vmatprep.subr.bf16.mxu0 0
        %2287 = vmatpush2.bf16.msra.mxu0 0
        %2288 = vmatprep.mubr.bf16.mxu0 0
        %2289 = vmatmul.mubr.bf16.gmra.mxu0 %v2037
        %v2290 = vpop.f32.mrf.mxu0
        %v2291 = vadd.f32 %v2211, %v2290
        %v2292 = vpop.f32.mrf.mxu0
        %v2293 = vpop.f32.mrf.mxu0
        %v2294 = vpop.f32.mrf.mxu0
        %2295 = vdwg.mxu0
        %v2296 = vadd.f32 %v2036, %v2250
        %v2297 = vxor.u32 %v2296, 2147483648
        %v2298 = vmul.f32 %v2297, 1.442695
        %v2299 = vpow.pop %v2298
        %v2300 = vadd.f32 %v2299, 1.0
        %v2301 = vrcp.pop %v2300
        %v2302 = vmul.f32 1.0, %v2301
        %v2304 = vrot.slane %v2036, 1
        %v2306 = vadd.f32 %v2304, %v2252
        %v2307 = vxor.u32 %v2306, 2147483648
        %v2308 = vmul.f32 %v2307, 1.442695
        %v2309 = vpow.pop %v2308
        %v2310 = vadd.f32 %v2309, 1.0
        %v2311 = vrcp.pop %v2310
        %v2312 = vmul.f32 1.0, %v2311
        %v2313 = vmul.f32 %v2302, %v2291
        %v2314 = vrot.slane %v2036, 2
        %v2316 = vadd.f32 %v2314, %v2313
        %v2317 = vtanh.pop %v2316
        %v2318 = vsub.f32 1.0, %v2312
        %v2319 = vmul.f32 %v2318, %v2317
        %v2320 = vmul.f32 %v2312, %v2033
        %v2321 = vadd.f32 %v2319, %v2320
        %s2322 = sadd.s32 %s852, 5
        %p2323 = scmp.lt.s32.totalorder %s2322, 10
        %s2324 = scalar_select %p2323, 1, 0
        %v2325 = vstv %s2324
        %vm2326 = vcmp.eq.s32.totalorder %v2325, 1
        %v2327 = vsel %vm2326, %v2321, %v2033
        %2328 = vst [vmem:[%s295 + $0x5] sm:$0x1] %v2327
        %s2329 = scalar_lea.vmem [#allocation3], 6
        %v2330 = vld [vmem:[%s2329] ss:$8 sm:$0x7]
        %v2331 = vpack.c.bf16 %v2327, %v2327
        %v2332 = vld [vmem:[#allocation9] sm:$0xff]
        %v2333 = vld [vmem:[#allocation9 + $0x8] sm:$0xf]
        %v2334 = vld [vmem:[#allocation9 + $0xc] sm:$0xff]
        %v2335 = vld [vmem:[#allocation9 + $0x14] sm:$0xf]
        %v2336 = vld [vmem:[#allocation9 + $0x18] sm:$0xff]
        %v2337 = vld [vmem:[#allocation9 + $0x20] sm:$0xf]
        %v2338 = vld [vmem:[#allocation9 + $0x24] sm:$0xff]
        %v2339 = vld [vmem:[#allocation9 + $0x2c] sm:$0xf]
        %v2340 = vld [vmem:[#allocation9 + $0x30] sm:$0xff]
        %v2341 = vld [vmem:[#allocation9 + $0x38] sm:$0xf]
        %v2342 = vld [vmem:[#allocation9 + $0x3c] sm:$0xff]
        %v2343 = vld [vmem:[#allocation9 + $0x44] sm:$0xf]
        %v2344 = vld [vmem:[#allocation9 + $0x48] sm:$0xff]
        %v2345 = vld [vmem:[#allocation9 + $0x50] sm:$0xf]
        %v2346 = vld [vmem:[#allocation9 + $0x54] sm:$0xff]
        %v2347 = vld [vmem:[#allocation9 + $0x5c] sm:$0xf]
        %v2348 = vld [vmem:[#allocation9 + $0x60] sm:$0xff]
        %v2349 = vld [vmem:[#allocation9 + $0x68] sm:$0xf]
        %v2350 = vld [vmem:[#allocation9 + $0x6c] sm:$0xff]
        %v2351 = vld [vmem:[#allocation9 + $0x74] sm:$0xf]
        %v2352 = vld [vmem:[#allocation9 + $0x78] sm:$0xff]
        %v2353 = vld [vmem:[#allocation9 + $0x80] sm:$0xf]
        %v2354 = vld [vmem:[#allocation9 + $0x84] sm:$0xff]
        %v2355 = vld [vmem:[#allocation9 + $0x8c] sm:$0xf]
        %v2356 = vld [vmem:[#allocation9 + $0x90] sm:$0xff]
        %v2357 = vld [vmem:[#allocation9 + $0x98] sm:$0xf]
        %v2358 = vld [vmem:[#allocation9 + $0x9c] sm:$0xff]
        %v2359 = vld [vmem:[#allocation9 + $0xa4] sm:$0xf]
        %v2360 = vld [vmem:[#allocation9 + $0xa8] sm:$0xff]
        %v2361 = vld [vmem:[#allocation9 + $0xb0] sm:$0xf]
        %v2362 = vld [vmem:[#allocation9 + $0xb4] sm:$0xff]
        %v2363 = vld [vmem:[#allocation9 + $0xbc] sm:$0xf]
        %v2364 = vld [vmem:[%s5] sm:$0x7]
        %v2397 = vunpack.c.l.b16 %v2332
        %v2398 = vunpack.c.h.b16 %v2332
        %v2399 = vunpack.c.l.b16 %v2333
        %v2400 = vunpack.c.l.b16 %v2334
        %v2401 = vunpack.c.h.b16 %v2334
        %v2402 = vunpack.c.l.b16 %v2335
        %v2403 = vunpack.c.l.b16 %v2336
        %v2404 = vunpack.c.h.b16 %v2336
        %v2405 = vunpack.c.l.b16 %v2337
        %v2406 = vunpack.c.l.b16 %v2338
        %v2407 = vunpack.c.h.b16 %v2338
        %v2408 = vunpack.c.l.b16 %v2339
        %v2409 = vunpack.c.l.b16 %v2340
        %v2410 = vunpack.c.h.b16 %v2340
        %v2411 = vunpack.c.l.b16 %v2341
        %v2412 = vunpack.c.l.b16 %v2342
        %v2413 = vunpack.c.h.b16 %v2342
        %v2414 = vunpack.c.l.b16 %v2343
        %v2415 = vunpack.c.l.b16 %v2344
        %v2416 = vunpack.c.h.b16 %v2344
        %v2417 = vunpack.c.l.b16 %v2345
        %v2418 = vunpack.c.l.b16 %v2346
        %v2419 = vunpack.c.h.b16 %v2346
        %v2420 = vunpack.c.l.b16 %v2347
        %v2421 = vunpack.c.l.b16 %v2348
        %v2422 = vunpack.c.h.b16 %v2348
        %v2423 = vunpack.c.l.b16 %v2349
        %v2424 = vunpack.c.l.b16 %v2350
        %v2425 = vunpack.c.h.b16 %v2350
        %v2426 = vunpack.c.l.b16 %v2351
        %v2427 = vunpack.c.l.b16 %v2352
        %v2428 = vunpack.c.h.b16 %v2352
        %v2429 = vunpack.c.l.b16 %v2353
        %v2430 = vunpack.c.l.b16 %v2354
        %v2431 = vunpack.c.h.b16 %v2354
        %v2432 = vunpack.c.l.b16 %v2355
        %v2433 = vunpack.c.l.b16 %v2356
        %v2434 = vunpack.c.h.b16 %v2356
        %v2435 = vunpack.c.l.b16 %v2357
        %v2436 = vunpack.c.l.b16 %v2358
        %v2437 = vunpack.c.h.b16 %v2358
        %v2438 = vunpack.c.l.b16 %v2359
        %v2439 = vunpack.c.l.b16 %v2360
        %v2440 = vunpack.c.h.b16 %v2360
        %v2441 = vunpack.c.l.b16 %v2361
        %v2442 = vunpack.c.l.b16 %v2362
        %v2443 = vunpack.c.h.b16 %v2362
        %v2444 = vunpack.c.l.b16 %v2363
        %v2445 = vpack.c.b16 %v2400, %v2397
        %v2446 = vpack.c.b16 %v2401, %v2398
        %v2447 = vpack.c.b16 %v2402, %v2399
        %v2448 = vpack.c.b16 %v2406, %v2403
        %v2449 = vpack.c.b16 %v2407, %v2404
        %v2450 = vpack.c.b16 %v2408, %v2405
        %v2451 = vpack.c.b16 %v2412, %v2409
        %v2452 = vpack.c.b16 %v2413, %v2410
        %v2453 = vpack.c.b16 %v2414, %v2411
        %v2454 = vpack.c.b16 %v2418, %v2415
        %v2455 = vpack.c.b16 %v2419, %v2416
        %v2456 = vpack.c.b16 %v2420, %v2417
        %v2457 = vpack.c.b16 %v2424, %v2421
        %v2458 = vpack.c.b16 %v2425, %v2422
        %v2459 = vpack.c.b16 %v2426, %v2423
        %v2460 = vpack.c.b16 %v2430, %v2427
        %v2461 = vpack.c.b16 %v2431, %v2428
        %v2462 = vpack.c.b16 %v2432, %v2429
        %v2463 = vpack.c.b16 %v2436, %v2433
        %v2464 = vpack.c.b16 %v2437, %v2434
        %v2465 = vpack.c.b16 %v2438, %v2435
        %v2466 = vpack.c.b16 %v2442, %v2439
        %v2467 = vpack.c.b16 %v2443, %v2440
        %v2468 = vpack.c.b16 %v2444, %v2441
        %v2494 = vlaneseq
        %v2495 = vshrl.u32 %v2494, 7
        %v2496 = vsub.s32 0, %v2495
        %v2497 = vrot.slane %v2364, %v2496
        %v2498 = vlaneseq
        %v2499 = vshrl.u32 %v2498, 7
        %v2500 = vsub.s32 1, %v2499
        %v2501 = vrot.slane %v2364, %v2500
        %v2502 = vlaneseq
        %v2503 = vshrl.u32 %v2502, 7
        %v2504 = vsub.s32 2, %v2503
        %v2505 = vrot.slane %v2364, %v2504
        %2509 = vmatprep.subr.bf16.mxu0 %v2467
        %2510 = vmatpush1.bf16.msra.mxu0 %v2466
        %2511 = vmatprep.subr.bf16.mxu0 %v2464
        %2512 = vmatpush1.bf16.msra.mxu0 %v2463
        %2513 = vmatprep.subr.bf16.mxu0 %v2461
        %2514 = vmatpush1.bf16.msra.mxu0 %v2460
        %2515 = vmatprep.subr.bf16.mxu0 %v2458
        %2516 = vmatpush1.bf16.msra.mxu0 %v2457
        %2517 = vmatprep.subr.bf16.mxu0 %v2455
        %2518 = vmatpush1.bf16.msra.mxu0 %v2454
        %2519 = vmatprep.subr.bf16.mxu0 %v2452
        %2520 = vmatpush1.bf16.msra.mxu0 %v2451
        %2521 = vmatprep.subr.bf16.mxu0 %v2449
        %2522 = vmatpush1.bf16.msra.mxu0 %v2448
        %2523 = vmatprep.subr.bf16.mxu0 %v2446
        %2524 = vmatpush1.bf16.msra.mxu0 %v2445
        %2525 = vmatprep.subr.bf16.mxu0 0
        %2526 = vmatpush2.bf16.msra.mxu0 0
        %2527 = vmatprep.subr.bf16.mxu0 0
        %2528 = vmatpush2.bf16.msra.mxu0 0
        %2529 = vmatprep.subr.bf16.mxu0 0
        %2530 = vmatpush2.bf16.msra.mxu0 0
        %2531 = vmatprep.subr.bf16.mxu0 0
        %2532 = vmatpush2.bf16.msra.mxu0 0
        %2533 = vmatprep.subr.bf16.mxu0 0
        %2534 = vmatpush2.bf16.msra.mxu0 0
        %2535 = vmatprep.subr.bf16.mxu0 0
        %2536 = vmatpush2.bf16.msra.mxu0 0
        %2537 = vmatprep.subr.bf16.mxu0 0
        %2538 = vmatpush2.bf16.msra.mxu0 0
        %2539 = vmatprep.subr.bf16.mxu0 0
        %2540 = vmatpush2.bf16.msra.mxu0 0
        %2541 = vmatprep.mubr.bf16.mxu0 0
        %2542 = vmatmul.mubr.bf16.gmra.mxu0 %v2331
        %v2543 = vpop.f32.mrf.mxu0
        %v2544 = vadd.f32 %v2497, %v2543
        %v2545 = vpop.f32.mrf.mxu0
        %v2546 = vadd.f32 %v2501, %v2545
        %v2547 = vpop.f32.mrf.mxu0
        %v2548 = vpop.f32.mrf.mxu0
        %2549 = vdwg.mxu0
        %2550 = vmatprep.subr.bf16.mxu0 0
        %2551 = vmatpush1.bf16.msra.mxu0 %v2468
        %2552 = vmatprep.subr.bf16.mxu0 0
        %2553 = vmatpush1.bf16.msra.mxu0 %v2465
        %2554 = vmatprep.subr.bf16.mxu0 0
        %2555 = vmatpush1.bf16.msra.mxu0 %v2462
        %2556 = vmatprep.subr.bf16.mxu0 0
        %2557 = vmatpush1.bf16.msra.mxu0 %v2459
        %2558 = vmatprep.subr.bf16.mxu0 0
        %2559 = vmatpush1.bf16.msra.mxu0 %v2456
        %2560 = vmatprep.subr.bf16.mxu0 0
        %2561 = vmatpush1.bf16.msra.mxu0 %v2453
        %2562 = vmatprep.subr.bf16.mxu0 0
        %2563 = vmatpush1.bf16.msra.mxu0 %v2450
        %2564 = vmatprep.subr.bf16.mxu0 0
        %2565 = vmatpush1.bf16.msra.mxu0 %v2447
        %2566 = vmatprep.subr.bf16.mxu0 0
        %2567 = vmatpush2.bf16.msra.mxu0 0
        %2568 = vmatprep.subr.bf16.mxu0 0
        %2569 = vmatpush2.bf16.msra.mxu0 0
        %2570 = vmatprep.subr.bf16.mxu0 0
        %2571 = vmatpush2.bf16.msra.mxu0 0
        %2572 = vmatprep.subr.bf16.mxu0 0
        %2573 = vmatpush2.bf16.msra.mxu0 0
        %2574 = vmatprep.subr.bf16.mxu0 0
        %2575 = vmatpush2.bf16.msra.mxu0 0
        %2576 = vmatprep.subr.bf16.mxu0 0
        %2577 = vmatpush2.bf16.msra.mxu0 0
        %2578 = vmatprep.subr.bf16.mxu0 0
        %2579 = vmatpush2.bf16.msra.mxu0 0
        %2580 = vmatprep.subr.bf16.mxu0 0
        %2581 = vmatpush2.bf16.msra.mxu0 0
        %2582 = vmatprep.mubr.bf16.mxu0 0
        %2583 = vmatmul.mubr.bf16.gmra.mxu0 %v2331
        %v2584 = vpop.f32.mrf.mxu0
        %v2585 = vadd.f32 %v2505, %v2584
        %v2586 = vpop.f32.mrf.mxu0
        %v2587 = vpop.f32.mrf.mxu0
        %v2588 = vpop.f32.mrf.mxu0
        %2589 = vdwg.mxu0
        %v2590 = vadd.f32 %v2330, %v2544
        %v2591 = vxor.u32 %v2590, 2147483648
        %v2592 = vmul.f32 %v2591, 1.442695
        %v2593 = vpow.pop %v2592
        %v2594 = vadd.f32 %v2593, 1.0
        %v2595 = vrcp.pop %v2594
        %v2596 = vmul.f32 1.0, %v2595
        %v2598 = vrot.slane %v2330, 1
        %v2600 = vadd.f32 %v2598, %v2546
        %v2601 = vxor.u32 %v2600, 2147483648
        %v2602 = vmul.f32 %v2601, 1.442695
        %v2603 = vpow.pop %v2602
        %v2604 = vadd.f32 %v2603, 1.0
        %v2605 = vrcp.pop %v2604
        %v2606 = vmul.f32 1.0, %v2605
        %v2607 = vmul.f32 %v2596, %v2585
        %v2608 = vrot.slane %v2330, 2
        %v2610 = vadd.f32 %v2608, %v2607
        %v2611 = vtanh.pop %v2610
        %v2612 = vsub.f32 1.0, %v2606
        %v2613 = vmul.f32 %v2612, %v2611
        %v2614 = vmul.f32 %v2606, %v2327
        %v2615 = vadd.f32 %v2613, %v2614
        %s2616 = sadd.s32 %s852, 6
        %p2617 = scmp.lt.s32.totalorder %s2616, 10
        %s2618 = scalar_select %p2617, 1, 0
        %v2619 = vstv %s2618
        %vm2620 = vcmp.eq.s32.totalorder %v2619, 1
        %v2621 = vsel %vm2620, %v2615, %v2327
        %2622 = vst [vmem:[%s295 + $0x6] sm:$0x1] %v2621
        %s2623 = scalar_lea.vmem [#allocation3], 7
        %v2624 = vld [vmem:[%s2623] ss:$8 sm:$0x7]
        %v2625 = vpack.c.bf16 %v2621, %v2621
        %v2626 = vld [vmem:[#allocation9] sm:$0xff]
        %v2627 = vld [vmem:[#allocation9 + $0x8] sm:$0xf]
        %v2628 = vld [vmem:[#allocation9 + $0xc] sm:$0xff]
        %v2629 = vld [vmem:[#allocation9 + $0x14] sm:$0xf]
        %v2630 = vld [vmem:[#allocation9 + $0x18] sm:$0xff]
        %v2631 = vld [vmem:[#allocation9 + $0x20] sm:$0xf]
        %v2632 = vld [vmem:[#allocation9 + $0x24] sm:$0xff]
        %v2633 = vld [vmem:[#allocation9 + $0x2c] sm:$0xf]
        %v2634 = vld [vmem:[#allocation9 + $0x30] sm:$0xff]
        %v2635 = vld [vmem:[#allocation9 + $0x38] sm:$0xf]
        %v2636 = vld [vmem:[#allocation9 + $0x3c] sm:$0xff]
        %v2637 = vld [vmem:[#allocation9 + $0x44] sm:$0xf]
        %v2638 = vld [vmem:[#allocation9 + $0x48] sm:$0xff]
        %v2639 = vld [vmem:[#allocation9 + $0x50] sm:$0xf]
        %v2640 = vld [vmem:[#allocation9 + $0x54] sm:$0xff]
        %v2641 = vld [vmem:[#allocation9 + $0x5c] sm:$0xf]
        %v2642 = vld [vmem:[#allocation9 + $0x60] sm:$0xff]
        %v2643 = vld [vmem:[#allocation9 + $0x68] sm:$0xf]
        %v2644 = vld [vmem:[#allocation9 + $0x6c] sm:$0xff]
        %v2645 = vld [vmem:[#allocation9 + $0x74] sm:$0xf]
        %v2646 = vld [vmem:[#allocation9 + $0x78] sm:$0xff]
        %v2647 = vld [vmem:[#allocation9 + $0x80] sm:$0xf]
        %v2648 = vld [vmem:[#allocation9 + $0x84] sm:$0xff]
        %v2649 = vld [vmem:[#allocation9 + $0x8c] sm:$0xf]
        %v2650 = vld [vmem:[#allocation9 + $0x90] sm:$0xff]
        %v2651 = vld [vmem:[#allocation9 + $0x98] sm:$0xf]
        %v2652 = vld [vmem:[#allocation9 + $0x9c] sm:$0xff]
        %v2653 = vld [vmem:[#allocation9 + $0xa4] sm:$0xf]
        %v2654 = vld [vmem:[#allocation9 + $0xa8] sm:$0xff]
        %v2655 = vld [vmem:[#allocation9 + $0xb0] sm:$0xf]
        %v2656 = vld [vmem:[#allocation9 + $0xb4] sm:$0xff]
        %v2657 = vld [vmem:[#allocation9 + $0xbc] sm:$0xf]
        %v2658 = vld [vmem:[%s5] sm:$0x7]
        %v2691 = vunpack.c.l.b16 %v2626
        %v2692 = vunpack.c.h.b16 %v2626
        %v2693 = vunpack.c.l.b16 %v2627
        %v2694 = vunpack.c.l.b16 %v2628
        %v2695 = vunpack.c.h.b16 %v2628
        %v2696 = vunpack.c.l.b16 %v2629
        %v2697 = vunpack.c.l.b16 %v2630
        %v2698 = vunpack.c.h.b16 %v2630
        %v2699 = vunpack.c.l.b16 %v2631
        %v2700 = vunpack.c.l.b16 %v2632
        %v2701 = vunpack.c.h.b16 %v2632
        %v2702 = vunpack.c.l.b16 %v2633
        %v2703 = vunpack.c.l.b16 %v2634
        %v2704 = vunpack.c.h.b16 %v2634
        %v2705 = vunpack.c.l.b16 %v2635
        %v2706 = vunpack.c.l.b16 %v2636
        %v2707 = vunpack.c.h.b16 %v2636
        %v2708 = vunpack.c.l.b16 %v2637
        %v2709 = vunpack.c.l.b16 %v2638
        %v2710 = vunpack.c.h.b16 %v2638
        %v2711 = vunpack.c.l.b16 %v2639
        %v2712 = vunpack.c.l.b16 %v2640
        %v2713 = vunpack.c.h.b16 %v2640
        %v2714 = vunpack.c.l.b16 %v2641
        %v2715 = vunpack.c.l.b16 %v2642
        %v2716 = vunpack.c.h.b16 %v2642
        %v2717 = vunpack.c.l.b16 %v2643
        %v2718 = vunpack.c.l.b16 %v2644
        %v2719 = vunpack.c.h.b16 %v2644
        %v2720 = vunpack.c.l.b16 %v2645
        %v2721 = vunpack.c.l.b16 %v2646
        %v2722 = vunpack.c.h.b16 %v2646
        %v2723 = vunpack.c.l.b16 %v2647
        %v2724 = vunpack.c.l.b16 %v2648
        %v2725 = vunpack.c.h.b16 %v2648
        %v2726 = vunpack.c.l.b16 %v2649
        %v2727 = vunpack.c.l.b16 %v2650
        %v2728 = vunpack.c.h.b16 %v2650
        %v2729 = vunpack.c.l.b16 %v2651
        %v2730 = vunpack.c.l.b16 %v2652
        %v2731 = vunpack.c.h.b16 %v2652
        %v2732 = vunpack.c.l.b16 %v2653
        %v2733 = vunpack.c.l.b16 %v2654
        %v2734 = vunpack.c.h.b16 %v2654
        %v2735 = vunpack.c.l.b16 %v2655
        %v2736 = vunpack.c.l.b16 %v2656
        %v2737 = vunpack.c.h.b16 %v2656
        %v2738 = vunpack.c.l.b16 %v2657
        %v2739 = vpack.c.b16 %v2694, %v2691
        %v2740 = vpack.c.b16 %v2695, %v2692
        %v2741 = vpack.c.b16 %v2696, %v2693
        %v2742 = vpack.c.b16 %v2700, %v2697
        %v2743 = vpack.c.b16 %v2701, %v2698
        %v2744 = vpack.c.b16 %v2702, %v2699
        %v2745 = vpack.c.b16 %v2706, %v2703
        %v2746 = vpack.c.b16 %v2707, %v2704
        %v2747 = vpack.c.b16 %v2708, %v2705
        %v2748 = vpack.c.b16 %v2712, %v2709
        %v2749 = vpack.c.b16 %v2713, %v2710
        %v2750 = vpack.c.b16 %v2714, %v2711
        %v2751 = vpack.c.b16 %v2718, %v2715
        %v2752 = vpack.c.b16 %v2719, %v2716
        %v2753 = vpack.c.b16 %v2720, %v2717
        %v2754 = vpack.c.b16 %v2724, %v2721
        %v2755 = vpack.c.b16 %v2725, %v2722
        %v2756 = vpack.c.b16 %v2726, %v2723
        %v2757 = vpack.c.b16 %v2730, %v2727
        %v2758 = vpack.c.b16 %v2731, %v2728
        %v2759 = vpack.c.b16 %v2732, %v2729
        %v2760 = vpack.c.b16 %v2736, %v2733
        %v2761 = vpack.c.b16 %v2737, %v2734
        %v2762 = vpack.c.b16 %v2738, %v2735
        %v2788 = vlaneseq
        %v2789 = vshrl.u32 %v2788, 7
        %v2790 = vsub.s32 0, %v2789
        %v2791 = vrot.slane %v2658, %v2790
        %v2792 = vlaneseq
        %v2793 = vshrl.u32 %v2792, 7
        %v2794 = vsub.s32 1, %v2793
        %v2795 = vrot.slane %v2658, %v2794
        %v2796 = vlaneseq
        %v2797 = vshrl.u32 %v2796, 7
        %v2798 = vsub.s32 2, %v2797
        %v2799 = vrot.slane %v2658, %v2798
        %2803 = vmatprep.subr.bf16.mxu0 %v2761
        %2804 = vmatpush1.bf16.msra.mxu0 %v2760
        %2805 = vmatprep.subr.bf16.mxu0 %v2758
        %2806 = vmatpush1.bf16.msra.mxu0 %v2757
        %2807 = vmatprep.subr.bf16.mxu0 %v2755
        %2808 = vmatpush1.bf16.msra.mxu0 %v2754
        %2809 = vmatprep.subr.bf16.mxu0 %v2752
        %2810 = vmatpush1.bf16.msra.mxu0 %v2751
        %2811 = vmatprep.subr.bf16.mxu0 %v2749
        %2812 = vmatpush1.bf16.msra.mxu0 %v2748
        %2813 = vmatprep.subr.bf16.mxu0 %v2746
        %2814 = vmatpush1.bf16.msra.mxu0 %v2745
        %2815 = vmatprep.subr.bf16.mxu0 %v2743
        %2816 = vmatpush1.bf16.msra.mxu0 %v2742
        %2817 = vmatprep.subr.bf16.mxu0 %v2740
        %2818 = vmatpush1.bf16.msra.mxu0 %v2739
        %2819 = vmatprep.subr.bf16.mxu0 0
        %2820 = vmatpush2.bf16.msra.mxu0 0
        %2821 = vmatprep.subr.bf16.mxu0 0
        %2822 = vmatpush2.bf16.msra.mxu0 0
        %2823 = vmatprep.subr.bf16.mxu0 0
        %2824 = vmatpush2.bf16.msra.mxu0 0
        %2825 = vmatprep.subr.bf16.mxu0 0
        %2826 = vmatpush2.bf16.msra.mxu0 0
        %2827 = vmatprep.subr.bf16.mxu0 0
        %2828 = vmatpush2.bf16.msra.mxu0 0
        %2829 = vmatprep.subr.bf16.mxu0 0
        %2830 = vmatpush2.bf16.msra.mxu0 0
        %2831 = vmatprep.subr.bf16.mxu0 0
        %2832 = vmatpush2.bf16.msra.mxu0 0
        %2833 = vmatprep.subr.bf16.mxu0 0
        %2834 = vmatpush2.bf16.msra.mxu0 0
        %2835 = vmatprep.mubr.bf16.mxu0 0
        %2836 = vmatmul.mubr.bf16.gmra.mxu0 %v2625
        %v2837 = vpop.f32.mrf.mxu0
        %v2838 = vadd.f32 %v2791, %v2837
        %v2839 = vpop.f32.mrf.mxu0
        %v2840 = vadd.f32 %v2795, %v2839
        %v2841 = vpop.f32.mrf.mxu0
        %v2842 = vpop.f32.mrf.mxu0
        %2843 = vdwg.mxu0
        %2844 = vmatprep.subr.bf16.mxu0 0
        %2845 = vmatpush1.bf16.msra.mxu0 %v2762
        %2846 = vmatprep.subr.bf16.mxu0 0
        %2847 = vmatpush1.bf16.msra.mxu0 %v2759
        %2848 = vmatprep.subr.bf16.mxu0 0
        %2849 = vmatpush1.bf16.msra.mxu0 %v2756
        %2850 = vmatprep.subr.bf16.mxu0 0
        %2851 = vmatpush1.bf16.msra.mxu0 %v2753
        %2852 = vmatprep.subr.bf16.mxu0 0
        %2853 = vmatpush1.bf16.msra.mxu0 %v2750
        %2854 = vmatprep.subr.bf16.mxu0 0
        %2855 = vmatpush1.bf16.msra.mxu0 %v2747
        %2856 = vmatprep.subr.bf16.mxu0 0
        %2857 = vmatpush1.bf16.msra.mxu0 %v2744
        %2858 = vmatprep.subr.bf16.mxu0 0
        %2859 = vmatpush1.bf16.msra.mxu0 %v2741
        %2860 = vmatprep.subr.bf16.mxu0 0
        %2861 = vmatpush2.bf16.msra.mxu0 0
        %2862 = vmatprep.subr.bf16.mxu0 0
        %2863 = vmatpush2.bf16.msra.mxu0 0
        %2864 = vmatprep.subr.bf16.mxu0 0
        %2865 = vmatpush2.bf16.msra.mxu0 0
        %2866 = vmatprep.subr.bf16.mxu0 0
        %2867 = vmatpush2.bf16.msra.mxu0 0
        %2868 = vmatprep.subr.bf16.mxu0 0
        %2869 = vmatpush2.bf16.msra.mxu0 0
        %2870 = vmatprep.subr.bf16.mxu0 0
        %2871 = vmatpush2.bf16.msra.mxu0 0
        %2872 = vmatprep.subr.bf16.mxu0 0
        %2873 = vmatpush2.bf16.msra.mxu0 0
        %2874 = vmatprep.subr.bf16.mxu0 0
        %2875 = vmatpush2.bf16.msra.mxu0 0
        %2876 = vmatprep.mubr.bf16.mxu0 0
        %2877 = vmatmul.mubr.bf16.gmra.mxu0 %v2625
        %v2878 = vpop.f32.mrf.mxu0
        %v2879 = vadd.f32 %v2799, %v2878
        %v2880 = vpop.f32.mrf.mxu0
        %v2881 = vpop.f32.mrf.mxu0
        %v2882 = vpop.f32.mrf.mxu0
        %2883 = vdwg.mxu0
        %v2884 = vadd.f32 %v2624, %v2838
        %v2885 = vxor.u32 %v2884, 2147483648
        %v2886 = vmul.f32 %v2885, 1.442695
        %v2887 = vpow.pop %v2886
        %v2888 = vadd.f32 %v2887, 1.0
        %v2889 = vrcp.pop %v2888
        %v2890 = vmul.f32 1.0, %v2889
        %v2892 = vrot.slane %v2624, 1
        %v2894 = vadd.f32 %v2892, %v2840
        %v2895 = vxor.u32 %v2894, 2147483648
        %v2896 = vmul.f32 %v2895, 1.442695
        %v2897 = vpow.pop %v2896
        %v2898 = vadd.f32 %v2897, 1.0
        %v2899 = vrcp.pop %v2898
        %v2900 = vmul.f32 1.0, %v2899
        %v2901 = vmul.f32 %v2890, %v2879
        %v2902 = vrot.slane %v2624, 2
        %v2904 = vadd.f32 %v2902, %v2901
        %v2905 = vtanh.pop %v2904
        %v2906 = vsub.f32 1.0, %v2900
        %v2907 = vmul.f32 %v2906, %v2905
        %v2908 = vmul.f32 %v2900, %v2621
        %v2909 = vadd.f32 %v2907, %v2908
        %s2910 = sadd.s32 %s852, 7
        %p2911 = scmp.lt.s32.totalorder %s2910, 10
        %s2912 = scalar_select %p2911, 1, 0
        %v2913 = vstv %s2912
        %vm2914 = vcmp.eq.s32.totalorder %v2913, 1
        %v2915 = vsel %vm2914, %v2909, %v2621
        %2916 = vst [vmem:[%s295 + $0x7] sm:$0x1] %v2915
        %2917 = vst [vmem:[#allocation2] sm:$0x1] %v2915
        %s2918 = sand.u32 %s163, 1
        %s2919 = scalar_lea.sflag [#allocation6], %s2918
        %s2920 = sand.u32 %s163, 1
        %s2921 = smul.addr %s2920, 8
        %s2922 = scalar_lea.vmem [#allocation10], %s2921
        // Predicated region
        $region61: #{tpu_custom_call.1} parent=43 // pred_check
          %p2923 = pneg %p173
        $region62: #{tpu_custom_call.1} parent=43 // pred_check_branch
          %2925 = sbr.rel (%p2923) target = $region64
        $region63: #{tpu_custom_call.1} parent=43 // pred_region
          %s2927 = ssub.s32 128, 128
          %2928 = vsyncadd %s2919, %s2927
          %s2929 = smul.addr %s24, 128
          %s2930 = scalar_lea.hbm %s6, %s2929
          %s2932 = sshll.u32 %s2922, 4
          %s2933 = int_to_ptr.vmem [resolvable:$true] %s2932
          %2935 = dma.vmem_to_hbm [thread:$0]  %s2933, 128, %s2930, %s2919
        $region64: #{tpu_custom_call.1} parent=43 // pred_fallthru
          _
      $region44: #{tpu_custom_call.1} parent=5 // pred_fallthru
        _
      %p2936 = scmp.le.s32.totalorder 2, %s19
      // Predicated region
      $region65: #{tpu_custom_call.1} parent=5 // pred_check
        %p2937 = pneg %p2936
      $region66: #{tpu_custom_call.1} parent=5 // pred_check_branch
        %2939 = sbr.rel (%p2937) target = $region68
      $region67: #{tpu_custom_call.1} parent=5 // pred_region
        %s2940 = ssub.s32 %s19, 2
        // Predicated region
        $region69: #{tpu_custom_call.1} parent=67 // pred_check
          %p2941 = pneg %p179
        $region70: #{tpu_custom_call.1} parent=67 // pred_check_branch
          %2943 = sbr.rel (%p2941) target = $region72
        $region71: #{tpu_custom_call.1} parent=67 // pred_region
          %s2944 = sand.u32 %s164, 1
          %s2945 = scalar_lea.sflag [#allocation6], %s2944
          %s2946 = sand.u32 %s164, 1
          %s2947 = smul.addr %s2946, 8
          %s2948 = scalar_lea.vmem [#allocation10], %s2947
          %2949 = dma.done %s2945, 128
        $region72: #{tpu_custom_call.1} parent=67 // pred_fallthru
          _
      $region68: #{tpu_custom_call.1} parent=5 // pred_fallthru
        _
    $region6: #{tpu_custom_call.1} parent=1 // loop_footer
      %s23 = sadd.s32 1, %s19
    $region7: #{tpu_custom_call.1} parent=1 // loop_footer_branch
      %18 = sbr.rel target = $region3
    $region8: #{tpu_custom_call.1} parent=1 // loop_exit
      _
    %2950 = vsyncpa [#allocation5], 1
    %s2951 = scalar_lea.sflag [#allocation5], 1
    %2952 = vsyncpa %s2951, 1
    %2953 = vsyncpa [#allocation8], 1
    %2954 = vsyncpa [#allocation6], 1
    %s2955 = scalar_lea.sflag [#allocation6], 1
    %2956 = vsyncpa %s2955, 1

</llo_original>
